<compile_context>
chip_gen: v5e
topology: v5e:2x2
jax: 0.10.0
libtpu: 0.0.40
codegen_flags: <defaults>
</compile_context>

<pallas_src>
import math
import functools

import jax
import jax.numpy as jnp
from jax.experimental import pallas as pl
from jax.experimental.pallas import tpu as pltpu


def _round_up(x, m):
    return ((x + m - 1) // m) * m


# ----------------------------- in-kernel helpers -----------------------------

def _ln_rows(x, g, b, e_real):
    """LayerNorm over the first `e_real` columns of a zero-padded (R, E_pad) f32 slab."""
    lane = jax.lax.broadcasted_iota(jnp.int32, x.shape, 1)
    valid = lane < e_real
    mean = jnp.sum(x, axis=-1, keepdims=True) * (1.0 / e_real)
    diff = jnp.where(valid, x - mean, 0.0)
    var = jnp.sum(diff * diff, axis=-1, keepdims=True) * (1.0 / e_real)
    inv = jax.lax.rsqrt(var + 1e-5)
    return diff * inv * g + b  # padded cols: g=b=0 -> stay exactly zero


def _attn_core(q, k, v, mask, nheads, dh_pad, scale):
    """Per-head softmax attention. q:(Lq,H*dh_pad) k,v:(Lk,H*dh_pad) f32; padded head dims zero."""
    outs = []
    for h in range(nheads):  # static, unrolled (H is tiny)
        s0 = h * dh_pad
        qh = q[:, s0:s0 + dh_pad].astype(jnp.bfloat16)
        kh = k[:, s0:s0 + dh_pad].astype(jnp.bfloat16)
        vh = v[:, s0:s0 + dh_pad].astype(jnp.bfloat16)
        s = jax.lax.dot_general(qh, kh, (((1,), (1,)), ((), ())),
                                preferred_element_type=jnp.float32)
        s = s * scale + mask
        s = s - jnp.max(s, axis=-1, keepdims=True)
        p = jnp.exp(s)
        p = p * pl.reciprocal(jnp.sum(p, axis=-1, keepdims=True), approx=True)
        outs.append(jnp.dot(p.astype(jnp.bfloat16), vh,
                            preferred_element_type=jnp.float32))
    return jnp.concatenate(outs, axis=-1)  # (Lq, E_pad) f32


# ----------------------------- Pallas kernels -----------------------------

def _encoder_stack_kernel(x_ref, amask_ref, kbias_ref,
                          wqkv_ref, bqkv_ref, wo_ref, bo_ref, g1_ref, b1_ref,
                          w1_ref, fb1_ref, w2_ref, fb2_ref, g2_ref, b2_ref,
                          gf_ref, bf_ref, o_ref, *, nheads, dh, e_real):
    """One encoder layer per grid step along axis 1; activation carried in the resident output."""
    l = pl.program_id(1)

    @pl.when(l == 0)
    def _():
        o_ref[...] = x_ref[...]          # seed the carry with the embedded input

    x = o_ref[...]                       # (L, Ep) f32, one batch element
    ep = x.shape[-1]
    dh_pad = ep // nheads
    scale = 1.0 / math.sqrt(dh)

    # --- self attention block ---
    qkv = jnp.dot(x.astype(jnp.bfloat16), wqkv_ref[0],
                  preferred_element_type=jnp.float32) + bqkv_ref[0]
    q, k, v = qkv[:, :ep], qkv[:, ep:2 * ep], qkv[:, 2 * ep:]
    mask = jnp.maximum(amask_ref[...] + kbias_ref[0], -1e9)
    attn = _attn_core(q, k, v, mask, nheads, dh_pad, scale)
    proj = jnp.dot(attn.astype(jnp.bfloat16), wo_ref[0],
                   preferred_element_type=jnp.float32) + bo_ref[0]
    x = _ln_rows(x + proj, g1_ref[0], b1_ref[0], e_real)

    # --- FFN block ---
    h = jnp.maximum(jnp.dot(x.astype(jnp.bfloat16), w1_ref[0],
                            preferred_element_type=jnp.float32) + fb1_ref[0], 0.0)
    ff = jnp.dot(h.astype(jnp.bfloat16), w2_ref[0],
                 preferred_element_type=jnp.float32) + fb2_ref[0]
    x = _ln_rows(x + ff, g2_ref[0], b2_ref[0], e_real)

    o_ref[...] = x

    @pl.when(l == pl.num_programs(1) - 1)
    def _():                             # fused final encoder LayerNorm -> memory
        o_ref[...] = _ln_rows(x, gf_ref[...], bf_ref[...], e_real)


def _decoder_stack_kernel(y_ref, mem_ref, amask_ref, tkb_ref, mkb_ref,
                          sa_wqkv_ref, sa_bqkv_ref, sa_wo_ref, sa_bo_ref, g1_ref, b1_ref,
                          ca_wq_ref, ca_bq_ref, ca_wkv_ref, ca_bkv_ref, ca_wo_ref, ca_bo_ref,
                          g2_ref, b2_ref,
                          w1_ref, fb1_ref, w2_ref, fb2_ref, g3_ref, b3_ref,
                          gf_ref, bf_ref, o_ref, *, nheads, dh, e_real):
    """One decoder layer per grid step along axis 1; activation carried in the resident output."""
    l = pl.program_id(1)

    @pl.when(l == 0)
    def _():
        o_ref[...] = y_ref[...]

    y = o_ref[...]                       # (T, Ep) f32, one batch element
    ep = y.shape[-1]
    dh_pad = ep // nheads
    scale = 1.0 / math.sqrt(dh)

    # --- masked self attention ---
    qkv = jnp.dot(y.astype(jnp.bfloat16), sa_wqkv_ref[0],
                  preferred_element_type=jnp.float32) + sa_bqkv_ref[0]
    q, k, v = qkv[:, :ep], qkv[:, ep:2 * ep], qkv[:, 2 * ep:]
    mask = jnp.maximum(amask_ref[...] + tkb_ref[0], -1e9)
    attn = _attn_core(q, k, v, mask, nheads, dh_pad, scale)
    proj = jnp.dot(attn.astype(jnp.bfloat16), sa_wo_ref[0],
                   preferred_element_type=jnp.float32) + sa_bo_ref[0]
    y = _ln_rows(y + proj, g1_ref[0], b1_ref[0], e_real)

    # --- cross attention over encoder memory ---
    q = jnp.dot(y.astype(jnp.bfloat16), ca_wq_ref[0],
                preferred_element_type=jnp.float32) + ca_bq_ref[0]
    kv = jnp.dot(mem_ref[...].astype(jnp.bfloat16), ca_wkv_ref[0],
                 preferred_element_type=jnp.float32) + ca_bkv_ref[0]
    k, v = kv[:, :ep], kv[:, ep:]
    attn = _attn_core(q, k, v, mkb_ref[0], nheads, dh_pad, scale)
    proj = jnp.dot(attn.astype(jnp.bfloat16), ca_wo_ref[0],
                   preferred_element_type=jnp.float32) + ca_bo_ref[0]
    y = _ln_rows(y + proj, g2_ref[0], b2_ref[0], e_real)

    # --- FFN block ---
    h = jnp.maximum(jnp.dot(y.astype(jnp.bfloat16), w1_ref[0],
                            preferred_element_type=jnp.float32) + fb1_ref[0], 0.0)
    ff = jnp.dot(h.astype(jnp.bfloat16), w2_ref[0],
                 preferred_element_type=jnp.float32) + fb2_ref[0]
    y = _ln_rows(y + ff, g3_ref[0], b3_ref[0], e_real)

    o_ref[...] = y

    @pl.when(l == pl.num_programs(1) - 1)
    def _():                             # fused final decoder LayerNorm
        o_ref[...] = _ln_rows(y, gf_ref[...], bf_ref[...], e_real)


def _linear_kernel(x_ref, w_ref, b_ref, o_ref):
    o_ref[...] = (jnp.dot(x_ref[...].astype(jnp.bfloat16), w_ref[...],
                          preferred_element_type=jnp.float32) + b_ref[...]).astype(o_ref.dtype)


# ----------------------------- Pallas wrappers -----------------------------

def _encoder_stack(x, enc, enc_norm, amask, kbias, N, L, H, dh, e_real, n_layers):
    Ep = x.shape[-1]
    Fp = enc["w1"].shape[-1]
    kern = functools.partial(_encoder_stack_kernel, nheads=H, dh=dh, e_real=e_real)

    pb = lambda i, l: (i, 0)        # per-batch 2-D blocks (same across layers -> stay resident)
    pb3 = lambda i, l: (i, 0, 0)    # per-batch 3-D blocks
    pw = lambda i, l: (l, 0, 0)     # per-layer stacked weights
    cst = lambda i, l: (0, 0)       # broadcast constants

    return pl.pallas_call(
        kern,
        out_shape=jax.ShapeDtypeStruct((N * L, Ep), jnp.float32),
        grid=(N, n_layers),
        in_specs=[
            pl.BlockSpec((L, Ep), pb),              # x (rows of batch i)
            pl.BlockSpec((L, L), cst),              # additive attn mask
            pl.BlockSpec((1, 1, L), pb3),           # key-padding bias (batch i)
            pl.BlockSpec((1, Ep, 3 * Ep), pw),      # fused QKV weight (layer l)
            pl.BlockSpec((1, 1, 3 * Ep), pw),       # fused QKV bias
            pl.BlockSpec((1, Ep, Ep), pw),          # out-proj weight
            pl.BlockSpec((1, 1, Ep), pw),           # out-proj bias
            pl.BlockSpec((1, 1, Ep), pw),           # norm1 gamma
            pl.BlockSpec((1, 1, Ep), pw),           # norm1 beta
            pl.BlockSpec((1, Ep, Fp), pw),          # ffn lin1 weight
            pl.BlockSpec((1, 1, Fp), pw),           # ffn lin1 bias
            pl.BlockSpec((1, Fp, Ep), pw),          # ffn lin2 weight
            pl.BlockSpec((1, 1, Ep), pw),           # ffn lin2 bias
            pl.BlockSpec((1, 1, Ep), pw),           # norm2 gamma
            pl.BlockSpec((1, 1, Ep), pw),           # norm2 beta
            pl.BlockSpec((1, Ep), cst),             # final encoder norm gamma
            pl.BlockSpec((1, Ep), cst),             # final encoder norm beta
        ],
        out_specs=pl.BlockSpec((L, Ep), pb),
        compiler_params=pltpu.CompilerParams(
            dimension_semantics=("parallel", "arbitrary")),
    )(x, amask, kbias,
      enc["wqkv"], enc["bqkv"], enc["wo"], enc["bo"], enc["g1"], enc["b1"],
      enc["w1"], enc["fb1"], enc["w2"], enc["fb2"], enc["g2"], enc["b2"],
      enc_norm["g"], enc_norm["b"])


def _decoder_stack(y, memory, dec, dec_norm, amask, tkb, mkb,
                   N, T, S, H, dh, e_real, n_layers):
    Ep = y.shape[-1]
    Fp = dec["w1"].shape[-1]
    kern = functools.partial(_decoder_stack_kernel, nheads=H, dh=dh, e_real=e_real)

    pb = lambda i, l: (i, 0)
    pb3 = lambda i, l: (i, 0, 0)
    pw = lambda i, l: (l, 0, 0)
    cst = lambda i, l: (0, 0)

    in_specs = [
        pl.BlockSpec((T, Ep), pb),              # target stream (batch i)
        pl.BlockSpec((S, Ep), pb),              # encoder memory (batch i)
        pl.BlockSpec((T, T), cst),              # causal attn mask
        pl.BlockSpec((1, 1, T), pb3),           # target key-padding bias
        pl.BlockSpec((1, 1, S), pb3),           # memory key-padding bias
        pl.BlockSpec((1, Ep, 3 * Ep), pw),      # self-attn fused QKV weight
        pl.BlockSpec((1, 1, 3 * Ep), pw),       # self-attn fused QKV bias
        pl.BlockSpec((1, Ep, Ep), pw),          # self-attn out-proj weight
        pl.BlockSpec((1, 1, Ep), pw),           # self-attn out-proj bias
        pl.BlockSpec((1, 1, Ep), pw),           # norm1 gamma
        pl.BlockSpec((1, 1, Ep), pw),           # norm1 beta
        pl.BlockSpec((1, Ep, Ep), pw),          # cross-attn Wq
        pl.BlockSpec((1, 1, Ep), pw),           # cross-attn bq
        pl.BlockSpec((1, Ep, 2 * Ep), pw),      # cross-attn fused KV weight
        pl.BlockSpec((1, 1, 2 * Ep), pw),       # cross-attn fused KV bias
        pl.BlockSpec((1, Ep, Ep), pw),          # cross-attn out-proj weight
        pl.BlockSpec((1, 1, Ep), pw),           # cross-attn out-proj bias
        pl.BlockSpec((1, 1, Ep), pw),           # norm2 gamma
        pl.BlockSpec((1, 1, Ep), pw),           # norm2 beta
        pl.BlockSpec((1, Ep, Fp), pw),          # ffn lin1 weight
        pl.BlockSpec((1, 1, Fp), pw),           # ffn lin1 bias
        pl.BlockSpec((1, Fp, Ep), pw),          # ffn lin2 weight
        pl.BlockSpec((1, 1, Ep), pw),           # ffn lin2 bias
        pl.BlockSpec((1, 1, Ep), pw),           # norm3 gamma
        pl.BlockSpec((1, 1, Ep), pw),           # norm3 beta
        pl.BlockSpec((1, Ep), cst),             # final decoder norm gamma
        pl.BlockSpec((1, Ep), cst),             # final decoder norm beta
    ]
    return pl.pallas_call(
        kern,
        out_shape=jax.ShapeDtypeStruct((N * T, Ep), jnp.float32),
        grid=(N, n_layers),
        in_specs=in_specs,
        out_specs=pl.BlockSpec((T, Ep), pb),
        compiler_params=pltpu.CompilerParams(
            dimension_semantics=("parallel", "arbitrary")),
    )(y, memory, amask, tkb, mkb,
      dec["sa_wqkv"], dec["sa_bqkv"], dec["sa_wo"], dec["sa_bo"], dec["g1"], dec["b1"],
      dec["ca_wq"], dec["ca_bq"], dec["ca_wkv"], dec["ca_bkv"], dec["ca_wo"], dec["ca_bo"],
      dec["g2"], dec["b2"],
      dec["w1"], dec["fb1"], dec["w2"], dec["fb2"], dec["g3"], dec["b3"],
      dec_norm["g"], dec_norm["b"])


def _vocab_proj(y, w, b, N, L):
    Ep = y.shape[-1]
    Vp = w.shape[-1]
    return pl.pallas_call(
        _linear_kernel,
        out_shape=jax.ShapeDtypeStruct((N * L, Vp), jnp.float32),
        grid=(N,),
        in_specs=[
            pl.BlockSpec((L, Ep), lambda i: (i, 0)),
            pl.BlockSpec((Ep, Vp), lambda i: (0, 0)),
            pl.BlockSpec((1, Vp), lambda i: (0, 0)),
        ],
        out_specs=pl.BlockSpec((L, Vp), lambda i: (i, 0)),
        compiler_params=pltpu.CompilerParams(dimension_semantics=("parallel",)),
    )(y, w, b)


# ----------------------------- parameter prep (pad / pre-transpose / bf16 / stack) ----

def _positional_table(max_len, emb_size):
    denom = jnp.exp(-jnp.arange(0, emb_size, 2, dtype=jnp.float32)
                    * math.log(10000.0) / emb_size)
    pos = jnp.arange(max_len, dtype=jnp.float32)[:, None]
    pe = jnp.zeros((max_len, emb_size), jnp.float32)
    pe = pe.at[:, 0::2].set(jnp.sin(pos * denom))
    pe = pe.at[:, 1::2].set(jnp.cos(pos * denom))
    return pe


def prepare_params(params, cfg):
    """One-time conversion of PyTorch-layout params into padded, pre-transposed, layer-stacked
    bf16 weights consumed by the fused encoder / decoder stack kernels."""
    E, H = cfg["emb_size"], cfg["num_heads"]
    Ep, Fp, Vp = cfg["e_pad"], cfg["f_pad"], cfg["v_pad"]
    Dh, Dhp = E // H, Ep // H

    def pad2(w, r, c):
        return jnp.pad(w, ((0, r - w.shape[0]), (0, c - w.shape[1])))

    def pad1(v, n):
        return jnp.pad(v, (0, n - v.shape[0]))

    def head_in(w_t, bias):  # (E, H*Dh) -> (Ep, H*Dhp), per-head zero padding
        w3 = jnp.pad(w_t.reshape(E, H, Dh), ((0, Ep - E), (0, 0), (0, Dhp - Dh)))
        b3 = jnp.pad(bias.reshape(H, Dh), ((0, 0), (0, Dhp - Dh)))
        return w3.reshape(Ep, H * Dhp), b3.reshape(H * Dhp)

    def mha(p):
        w_in, b_in = p["in_proj_w"], p["in_proj_b"]
        wq, bq = head_in(w_in[:E].T, b_in[:E])
        wk, bk = head_in(w_in[E:2 * E].T, b_in[E:2 * E])
        wv, bv = head_in(w_in[2 * E:].T, b_in[2 * E:])
        wo3 = jnp.pad(p["out_proj_w"].T.reshape(H, Dh, E),
                      ((0, 0), (0, Dhp - Dh), (0, Ep - E)))
        return dict(
            wqkv=jnp.concatenate([wq, wk, wv], axis=1).astype(jnp.bfloat16),
            bqkv=jnp.concatenate([bq, bk, bv]).reshape(1, 3 * Ep),
            wq=wq.astype(jnp.bfloat16),
            bq=bq.reshape(1, Ep),
            wkv=jnp.concatenate([wk, wv], axis=1).astype(jnp.bfloat16),
            bkv=jnp.concatenate([bk, bv]).reshape(1, 2 * Ep),
            wo=wo3.reshape(H * Dhp, Ep).astype(jnp.bfloat16),
            bo=pad1(p["out_proj_b"], Ep).reshape(1, Ep),
        )

    def ln(p):  # gamma/beta padded with zeros so padded columns stay exactly zero
        return dict(g=pad1(p["w"], Ep).reshape(1, Ep), b=pad1(p["b"], Ep).reshape(1, Ep))

    def ffn(p):
        return dict(
            w1=pad2(p["lin1_w"].T, Ep, Fp).astype(jnp.bfloat16),
            b1=pad1(p["lin1_b"], Fp).reshape(1, Fp),
            w2=pad2(p["lin2_w"].T, Fp, Ep).astype(jnp.bfloat16),
            b2=pad1(p["lin2_b"], Ep).reshape(1, Ep),
        )

    stack = lambda items: jnp.stack(items, axis=0)

    # Encoder: stack per-layer weights along a leading "layer" axis.
    e_attn = [mha(l["self_attn"]) for l in params["enc_layers"]]
    e_ffn = [ffn(l) for l in params["enc_layers"]]
    e_n1 = [ln(l["norm1"]) for l in params["enc_layers"]]
    e_n2 = [ln(l["norm2"]) for l in params["enc_layers"]]
    enc = dict(
        wqkv=stack([a["wqkv"] for a in e_attn]), bqkv=stack([a["bqkv"] for a in e_attn]),
        wo=stack([a["wo"] for a in e_attn]), bo=stack([a["bo"] for a in e_attn]),
        g1=stack([n["g"] for n in e_n1]), b1=stack([n["b"] for n in e_n1]),
        w1=stack([f["w1"] for f in e_ffn]), fb1=stack([f["b1"] for f in e_ffn]),
        w2=stack([f["w2"] for f in e_ffn]), fb2=stack([f["b2"] for f in e_ffn]),
        g2=stack([n["g"] for n in e_n2]), b2=stack([n["b"] for n in e_n2]),
    )

    # Decoder: same idea with self-attn, cross-attn, FFN and three norms.
    d_sa = [mha(l["self_attn"]) for l in params["dec_layers"]]
    d_ca = [mha(l["cross_attn"]) for l in params["dec_layers"]]
    d_ffn = [ffn(l) for l in params["dec_layers"]]
    d_n1 = [ln(l["norm1"]) for l in params["dec_layers"]]
    d_n2 = [ln(l["norm2"]) for l in params["dec_layers"]]
    d_n3 = [ln(l["norm3"]) for l in params["dec_layers"]]
    dec = dict(
        sa_wqkv=stack([a["wqkv"] for a in d_sa]), sa_bqkv=stack([a["bqkv"] for a in d_sa]),
        sa_wo=stack([a["wo"] for a in d_sa]), sa_bo=stack([a["bo"] for a in d_sa]),
        g1=stack([n["g"] for n in d_n1]), b1=stack([n["b"] for n in d_n1]),
        ca_wq=stack([a["wq"] for a in d_ca]), ca_bq=stack([a["bq"] for a in d_ca]),
        ca_wkv=stack([a["wkv"] for a in d_ca]), ca_bkv=stack([a["bkv"] for a in d_ca]),
        ca_wo=stack([a["wo"] for a in d_ca]), ca_bo=stack([a["bo"] for a in d_ca]),
        g2=stack([n["g"] for n in d_n2]), b2=stack([n["b"] for n in d_n2]),
        w1=stack([f["w1"] for f in d_ffn]), fb1=stack([f["b1"] for f in d_ffn]),
        w2=stack([f["w2"] for f in d_ffn]), fb2=stack([f["b2"] for f in d_ffn]),
        g3=stack([n["g"] for n in d_n3]), b3=stack([n["b"] for n in d_n3]),
    )

    return dict(
        src_emb=jnp.pad(params["src_emb"], ((0, 0), (0, Ep - E))),
        tgt_emb=jnp.pad(params["tgt_emb"], ((0, 0), (0, Ep - E))),
        pe=jnp.pad(_positional_table(cfg["max_len"], E), ((0, 0), (0, Ep - E))),
        enc=enc, dec=dec,
        enc_norm=ln(params["enc_norm"]), dec_norm=ln(params["dec_norm"]),
        w_out=pad2(params["out_w"].T, Ep, Vp).astype(jnp.bfloat16),
        b_out=pad1(params["out_b"], Vp).reshape(1, Vp),
    )


# ----------------------------- forward pass -----------------------------

def seq2seq_transformer_forward(prep, cfg, source, target, source_mask, target_mask,
                                source_padding_mask, target_padding_mask,
                                memory_key_padding_mask):
    E, H = cfg["emb_size"], cfg["num_heads"]
    Ep = cfg["e_pad"]
    dh = E // H
    S, N = source.shape
    T = target.shape[0]
    NEG = jnp.float32(-1e9)

    # Embedding gather + positional add (XLA glue), batch-major layout (N*L, Ep).
    def embed(tokens, table, L):
        x = table[tokens.T] * math.sqrt(E) + prep["pe"][None, :L, :]
        return x.reshape(N * L, Ep).astype(jnp.float32)

    x = embed(source, prep["src_emb"], S)
    y = embed(target, prep["tgt_emb"], T)

    src_amask = source_mask.astype(jnp.float32)                      # (S, S) additive
    tgt_amask = target_mask.astype(jnp.float32)                      # (T, T) additive (causal)
    src_kb = jnp.where(source_padding_mask, NEG, 0.0).reshape(N, 1, S).astype(jnp.float32)
    tgt_kb = jnp.where(target_padding_mask, NEG, 0.0).reshape(N, 1, T).astype(jnp.float32)
    mem_kb = jnp.where(memory_key_padding_mask, NEG, 0.0).reshape(N, 1, S).astype(jnp.float32)

    # Encoder stack (all layers + final encoder norm) in ONE pallas_call.
    memory = _encoder_stack(x, prep["enc"], prep["enc_norm"], src_amask, src_kb,
                            N, S, H, dh, E, cfg["n_enc"])

    # Decoder stack (all layers + final decoder norm) in ONE pallas_call.
    dec_out = _decoder_stack(y, memory, prep["dec"], prep["dec_norm"],
                             tgt_amask, tgt_kb, mem_kb, N, T, S, H, dh, E, cfg["n_dec"])

    # Final vocab projection (lane-dense padded vocab), then slice back to the real vocab.
    logits = _vocab_proj(dec_out, prep["w_out"], prep["b_out"], N, T)   # (N*T, Vp)
    logits = logits.reshape(N, T, -1)[:, :, :cfg["tgt_vocab"]]
    return jnp.transpose(logits, (1, 0, 2))                            # (T, N, V) like PyTorch


# ----------------------------- PyTorch-layout parameter init -----------------------------

def init_params(key, cfg):
    E, F = cfg["emb_size"], cfg["dim_ff"]
    keys = iter(jax.random.split(key, 512))

    def dense(shape, scale=0.02):
        return scale * jax.random.normal(next(keys), shape, jnp.float32)

    def mha():
        return dict(in_proj_w=dense((3 * E, E)), in_proj_b=jnp.zeros((3 * E,), jnp.float32),
                    out_proj_w=dense((E, E)), out_proj_b=jnp.zeros((E,), jnp.float32))

    def ln():
        return dict(w=jnp.ones((E,), jnp.float32), b=jnp.zeros((E,), jnp.float32))

    def enc_layer():
        return dict(self_attn=mha(),
                    lin1_w=dense((F, E)), lin1_b=jnp.zeros((F,), jnp.float32),
                    lin2_w=dense((E, F)), lin2_b=jnp.zeros((E,), jnp.float32),
                    norm1=ln(), norm2=ln())

    def dec_layer():
        return dict(self_attn=mha(), cross_attn=mha(),
                    lin1_w=dense((F, E)), lin1_b=jnp.zeros((F,), jnp.float32),
                    lin2_w=dense((E, F)), lin2_b=jnp.zeros((E,), jnp.float32),
                    norm1=ln(), norm2=ln(), norm3=ln())

    return dict(
        src_emb=dense((cfg["src_vocab"], E), 1.0),
        tgt_emb=dense((cfg["tgt_vocab"], E), 1.0),
        enc_layers=[enc_layer() for _ in range(cfg["n_enc"])],
        dec_layers=[dec_layer() for _ in range(cfg["n_dec"])],
        enc_norm=ln(), dec_norm=ln(),
        out_w=dense((cfg["tgt_vocab"], E)), out_b=jnp.zeros((cfg["tgt_vocab"],), jnp.float32),
    )


# ----------------------------- Main -----------------------------

if __name__ == "__main__":
    cfg = dict(
        n_enc=2, n_dec=2, emb_size=32, max_len=16, num_heads=4,
        src_vocab=48, tgt_vocab=56, dim_ff=64, dropout=0.0,  # dropout inactive (eval mode)
    )
    cfg["e_pad"] = _round_up(cfg["emb_size"], 128)
    cfg["f_pad"] = _round_up(cfg["dim_ff"], 128)
    cfg["v_pad"] = _round_up(cfg["tgt_vocab"], 128)

    S, T, N = 8, 8, 2  # source len, target len, batch

    key = jax.random.PRNGKey(0)
    k_par, k_src, k_tgt = jax.random.split(key, 3)
    params = init_params(k_par, cfg)
    prep = prepare_params(params, cfg)

    source = jax.random.randint(k_src, (S, N), 0, cfg["src_vocab"], dtype=jnp.int32)
    target = jax.random.randint(k_tgt, (T, N), 0, cfg["tgt_vocab"], dtype=jnp.int32)

    # masks exactly as used with nn.Transformer (additive float attn masks, bool padding masks)
    source_mask = jnp.zeros((S, S), jnp.float32)
    target_mask = jnp.triu(jnp.full((T, T), -1e9, jnp.float32), k=1)  # causal
    source_padding_mask = jnp.zeros((N, S), bool)
    target_padding_mask = jnp.zeros((N, T), bool)
    memory_key_padding_mask = jnp.zeros((N, S), bool)

    fwd = jax.jit(functools.partial(seq2seq_transformer_forward, prep, cfg))
    logits = fwd(source, target, source_mask, target_mask,
                 source_padding_mask, target_padding_mask, memory_key_padding_mask)
    jax.block_until_ready(logits)

    assert logits.shape == (T, N, cfg["tgt_vocab"])
    assert bool(jnp.all(jnp.isfinite(logits)))
    print("KERNEL_OK")
</pallas_src>

<mosaic_0001>
module attributes {stable_mosaic.version = 11 : i64} {
  func.func @_linear_kernel(%arg0: i32, %arg1: memref<8x128xf32, #tpu.memory_space<vmem>>, %arg2: memref<128x128xbf16, #tpu.memory_space<vmem>>, %arg3: memref<1x128xf32, #tpu.memory_space<vmem>>, %arg4: memref<8x128xf32, #tpu.memory_space<vmem>>) attributes {dimension_semantics = [#tpu.dimension_semantics<parallel>], iteration_bounds = array<i64: 2>, scalar_prefetch = 0 : i64, scratch_operands = 0 : i64, tpu.core_type = #tpu.core_type<tc>, window_params = [{transform_indices = @transform_0, window_bounds = array<i64: 8, 128>}, {pipeline_mode = #tpu.pipeline_mode<synchronous>, transform_indices = @transform_1, window_bounds = array<i64: 128, 128>}, {pipeline_mode = #tpu.pipeline_mode<synchronous>, transform_indices = @transform_2, window_bounds = array<i64: 1, 128>}, {transform_indices = @transform_3, window_bounds = array<i64: 8, 128>}]} {
    %c0 = arith.constant 0 : index
    %c0_0 = arith.constant 0 : index
    %0 = vector.load %arg1[%c0, %c0_0] : memref<8x128xf32, #tpu.memory_space<vmem>>, vector<8x128xf32>
    %1 = arith.truncf %0 : vector<8x128xf32> to vector<8x128xbf16>
    %c0_1 = arith.constant 0 : index
    %c0_2 = arith.constant 0 : index
    %2 = vector.load %arg2[%c0_1, %c0_2] : memref<128x128xbf16, #tpu.memory_space<vmem>>, vector<128x128xbf16>
    %cst = arith.constant dense<0.000000e+00> : vector<8x128xf32>
    %3 = tpu.matmul %1, %2, %cst {dimension_numbers = #tpu.dot_dimension_numbers<[1], [0], [0], [1], [0, 0, 1, 1], [], []>} : vector<8x128xbf16>, vector<128x128xbf16>, vector<8x128xf32> -> vector<8x128xf32>
    %c0_3 = arith.constant 0 : index
    %c0_4 = arith.constant 0 : index
    %4 = vector.load %arg3[%c0_3, %c0_4] : memref<1x128xf32, #tpu.memory_space<vmem>>, vector<1x128xf32>
    %5 = vector.broadcast %4 : vector<1x128xf32> to vector<8x128xf32>
    %6 = arith.addf %3, %5 : vector<8x128xf32>
    %c0_5 = arith.constant 0 : index
    %c0_6 = arith.constant 0 : index
    %7 = vector.load %arg4[%c0_5, %c0_6] : memref<8x128xf32, #tpu.memory_space<vmem>>, vector<8x128xf32>
    tpu.vector_store %arg4[%c0_5, %c0_6], %6 {strides = array<i32>} : memref<8x128xf32, #tpu.memory_space<vmem>>, vector<8x128xf32>,
    return
  }
  func.func @transform_0(%arg0: i32) -> (i32, i32) {
    %c0_i32 = arith.constant 0 : i32
    %c0_i32_0 = arith.constant 0 : i32
    return %arg0, %c0_i32 : i32, i32
  }
  func.func @transform_1(%arg0: i32) -> (i32, i32) {
    %c0_i32 = arith.constant 0 : i32
    %c0_i32_0 = arith.constant 0 : i32
    %c0_i32_1 = arith.constant 0 : i32
    return %c0_i32, %c0_i32_0 : i32, i32
  }
  func.func @transform_2(%arg0: i32) -> (i32, i32) {
    %c0_i32 = arith.constant 0 : i32
    %c0_i32_0 = arith.constant 0 : i32
    %c0_i32_1 = arith.constant 0 : i32
    return %c0_i32, %c0_i32_0 : i32, i32
  }
  func.func @transform_3(%arg0: i32) -> (i32, i32) {
    %c0_i32 = arith.constant 0 : i32
    %c0_i32_0 = arith.constant 0 : i32
    return %arg0, %c0_i32 : i32, i32
  }
}

module attributes {stable_mosaic.version = 11 : i64} {
  func.func @_encoder_stack_kernel(%arg0: i32, %arg1: i32, %arg2: memref<8x128xf32, #tpu.memory_space<vmem>>, %arg3: memref<8x8xf32, #tpu.memory_space<vmem>>, %arg4: memref<1x1x8xf32, #tpu.memory_space<vmem>>, %arg5: memref<1x128x384xbf16, #tpu.memory_space<vmem>>, %arg6: memref<1x1x384xf32, #tpu.memory_space<vmem>>, %arg7: memref<1x128x128xbf16, #tpu.memory_space<vmem>>, %arg8: memref<1x1x128xf32, #tpu.memory_space<vmem>>, %arg9: memref<1x1x128xf32, #tpu.memory_space<vmem>>, %arg10: memref<1x1x128xf32, #tpu.memory_space<vmem>>, %arg11: memref<1x128x128xbf16, #tpu.memory_space<vmem>>, %arg12: memref<1x1x128xf32, #tpu.memory_space<vmem>>, %arg13: memref<1x128x128xbf16, #tpu.memory_space<vmem>>, %arg14: memref<1x1x128xf32, #tpu.memory_space<vmem>>, %arg15: memref<1x1x128xf32, #tpu.memory_space<vmem>>, %arg16: memref<1x1x128xf32, #tpu.memory_space<vmem>>, %arg17: memref<1x128xf32, #tpu.memory_space<vmem>>, %arg18: memref<1x128xf32, #tpu.memory_space<vmem>>, %arg19: memref<8x128xf32, #tpu.memory_space<vmem>>) attributes {dimension_semantics = [#tpu.dimension_semantics<parallel>, #tpu.dimension_semantics<arbitrary>], iteration_bounds = array<i64: 2, 2>, scalar_prefetch = 0 : i64, scratch_operands = 0 : i64, tpu.core_type = #tpu.core_type<tc>, window_params = [{transform_indices = @transform_0, window_bounds = array<i64: 8, 128>}, {pipeline_mode = #tpu.pipeline_mode<synchronous>, transform_indices = @transform_1, window_bounds = array<i64: 8, 8>}, {transform_indices = @transform_2, window_bounds = array<i64: 1, 1, 8>}, {transform_indices = @transform_3, window_bounds = array<i64: 1, 128, 384>}, {transform_indices = @transform_4, window_bounds = array<i64: 1, 1, 384>}, {transform_indices = @transform_5, window_bounds = array<i64: 1, 128, 128>}, {transform_indices = @transform_6, window_bounds = array<i64: 1, 1, 128>}, {transform_indices = @transform_7, window_bounds = array<i64: 1, 1, 128>}, {transform_indices = @transform_8, window_bounds = array<i64: 1, 1, 128>}, {transform_indices = @transform_9, window_bounds = array<i64: 1, 128, 128>}, {transform_indices = @transform_10, window_bounds = array<i64: 1, 1, 128>}, {transform_indices = @transform_11, window_bounds = array<i64: 1, 128, 128>}, {transform_indices = @transform_12, window_bounds = array<i64: 1, 1, 128>}, {transform_indices = @transform_13, window_bounds = array<i64: 1, 1, 128>}, {transform_indices = @transform_14, window_bounds = array<i64: 1, 1, 128>}, {pipeline_mode = #tpu.pipeline_mode<synchronous>, transform_indices = @transform_15, window_bounds = array<i64: 1, 128>}, {pipeline_mode = #tpu.pipeline_mode<synchronous>, transform_indices = @transform_16, window_bounds = array<i64: 1, 128>}, {transform_indices = @transform_17, window_bounds = array<i64: 8, 128>}]} {
    %c0_i32 = arith.constant 0 : i32
    %0 = arith.cmpi eq, %arg1, %c0_i32 : i32
    %1 = arith.extui %0 : i1 to i32
    %c0_i32_0 = arith.constant 0 : i32
    %2 = arith.cmpi ne, %1, %c0_i32_0 : i32
    scf.if %2 {
      %c0_84 = arith.constant 0 : index
      %c0_85 = arith.constant 0 : index
      %201 = vector.load %arg2[%c0_84, %c0_85] : memref<8x128xf32, #tpu.memory_space<vmem>>, vector<8x128xf32>
      %c0_86 = arith.constant 0 : index
      %c0_87 = arith.constant 0 : index
      %202 = vector.load %arg19[%c0_86, %c0_87] : memref<8x128xf32, #tpu.memory_space<vmem>>, vector<8x128xf32>
      tpu.vector_store %arg19[%c0_86, %c0_87], %201 {strides = array<i32>} : memref<8x128xf32, #tpu.memory_space<vmem>>, vector<8x128xf32>,
    } else {
    }
    %c0 = arith.constant 0 : index
    %c0_1 = arith.constant 0 : index
    %3 = vector.load %arg19[%c0, %c0_1] : memref<8x128xf32, #tpu.memory_space<vmem>>, vector<8x128xf32>
    %4 = arith.truncf %3 : vector<8x128xf32> to vector<8x128xbf16>
    %c0_2 = arith.constant 0 : index
    %c0_3 = arith.constant 0 : index
    %c0_4 = arith.constant 0 : index
    %5 = vector.load %arg5[%c0_2, %c0_3, %c0_4] : memref<1x128x384xbf16, #tpu.memory_space<vmem>>, vector<1x128x384xbf16>
    %6 = vector.shape_cast %5 : vector<1x128x384xbf16> to vector<128x384xbf16>
    %cst = arith.constant dense<0.000000e+00> : vector<8x384xf32>
    %7 = tpu.matmul %4, %6, %cst {dimension_numbers = #tpu.dot_dimension_numbers<[1], [0], [0], [1], [0, 0, 1, 1], [], []>} : vector<8x128xbf16>, vector<128x384xbf16>, vector<8x384xf32> -> vector<8x384xf32>
    %c0_5 = arith.constant 0 : index
    %c0_6 = arith.constant 0 : index
    %c0_7 = arith.constant 0 : index
    %8 = vector.load %arg6[%c0_5, %c0_6, %c0_7] : memref<1x1x384xf32, #tpu.memory_space<vmem>>, vector<1x1x384xf32>
    %9 = vector.shape_cast %8 : vector<1x1x384xf32> to vector<1x384xf32>
    %10 = vector.broadcast %9 : vector<1x384xf32> to vector<8x384xf32>
    %11 = arith.addf %7, %10 : vector<8x384xf32>
    %12 = vector.extract_strided_slice %11 {offsets = [0, 0], sizes = [8, 128], strides = [1, 1]} : vector<8x384xf32> to vector<8x128xf32>
    %13 = vector.extract_strided_slice %11 {offsets = [0, 128], sizes = [8, 128], strides = [1, 1]} : vector<8x384xf32> to vector<8x128xf32>
    %14 = vector.extract_strided_slice %11 {offsets = [0, 256], sizes = [8, 128], strides = [1, 1]} : vector<8x384xf32> to vector<8x128xf32>
    %c0_8 = arith.constant 0 : index
    %c0_9 = arith.constant 0 : index
    %15 = vector.load %arg3[%c0_8, %c0_9] : memref<8x8xf32, #tpu.memory_space<vmem>>, vector<8x8xf32>
    %c0_10 = arith.constant 0 : index
    %c0_11 = arith.constant 0 : index
    %c0_12 = arith.constant 0 : index
    %16 = vector.load %arg4[%c0_10, %c0_11, %c0_12] : memref<1x1x8xf32, #tpu.memory_space<vmem>>, vector<1x1x8xf32>
    %17 = vector.shape_cast %16 : vector<1x1x8xf32> to vector<1x8xf32>
    %18 = vector.broadcast %17 : vector<1x8xf32> to vector<8x8xf32>
    %19 = arith.addf %15, %18 : vector<8x8xf32>
    %cst_13 = arith.constant -1.000000e+09 : f32
    %20 = vector.broadcast %cst_13 : f32 to vector<8x8xf32>
    %21 = arith.maximumf %19, %20 : vector<8x8xf32>
    %22 = vector.extract_strided_slice %12 {offsets = [0, 0], sizes = [8, 32], strides = [1, 1]} : vector<8x128xf32> to vector<8x32xf32>
    %23 = arith.truncf %22 : vector<8x32xf32> to vector<8x32xbf16>
    %24 = vector.extract_strided_slice %13 {offsets = [0, 0], sizes = [8, 32], strides = [1, 1]} : vector<8x128xf32> to vector<8x32xf32>
    %25 = arith.truncf %24 : vector<8x32xf32> to vector<8x32xbf16>
    %26 = vector.extract_strided_slice %14 {offsets = [0, 0], sizes = [8, 32], strides = [1, 1]} : vector<8x128xf32> to vector<8x32xf32>
    %27 = arith.truncf %26 : vector<8x32xf32> to vector<8x32xbf16>
    %cst_14 = arith.constant dense<0.000000e+00> : vector<8x8xf32>
    %28 = tpu.matmul %23, %25, %cst_14 {dimension_numbers = #tpu.dot_dimension_numbers<[1], [1], [0], [0], [0, 0, 1, 0], [], []>} : vector<8x32xbf16>, vector<8x32xbf16>, vector<8x8xf32> -> vector<8x8xf32>
    %cst_15 = arith.constant 0.353553385 : f32
    %29 = vector.broadcast %cst_15 : f32 to vector<8x8xf32>
    %30 = arith.mulf %28, %29 : vector<8x8xf32>
    %31 = arith.addf %30, %21 : vector<8x8xf32>
    %cst_16 = arith.constant dense<0xFF800000> : vector<8xf32>
    %32 = vector.multi_reduction <maximumf>, %31, %cst_16 [1] : vector<8x8xf32> to vector<8xf32>
    %33 = vector.shape_cast %32 : vector<8xf32> to vector<8x1xf32>
    %34 = vector.broadcast %33 : vector<8x1xf32> to vector<8x8xf32>
    %35 = arith.subf %31, %34 : vector<8x8xf32>
    %36 = math.exp %35 : vector<8x8xf32>
    %cst_17 = arith.constant dense<0.000000e+00> : vector<8xf32>
    %37 = vector.multi_reduction <add>, %36, %cst_17 [1] : vector<8x8xf32> to vector<8xf32>
    %38 = vector.shape_cast %37 : vector<8xf32> to vector<8x1xf32>
    %39 = tpu.reciprocal %38 {approx = true} : vector<8x1xf32> -> vector<8x1xf32>
    %40 = vector.broadcast %39 : vector<8x1xf32> to vector<8x8xf32>
    %41 = arith.mulf %36, %40 : vector<8x8xf32>
    %42 = arith.truncf %41 : vector<8x8xf32> to vector<8x8xbf16>
    %cst_18 = arith.constant dense<0.000000e+00> : vector<8x32xf32>
    %43 = tpu.matmul %42, %27, %cst_18 {dimension_numbers = #tpu.dot_dimension_numbers<[1], [0], [0], [1], [0, 0, 1, 1], [], []>} : vector<8x8xbf16>, vector<8x32xbf16>, vector<8x32xf32> -> vector<8x32xf32>
    %44 = vector.extract_strided_slice %12 {offsets = [0, 32], sizes = [8, 32], strides = [1, 1]} : vector<8x128xf32> to vector<8x32xf32>
    %45 = arith.truncf %44 : vector<8x32xf32> to vector<8x32xbf16>
    %46 = vector.extract_strided_slice %13 {offsets = [0, 32], sizes = [8, 32], strides = [1, 1]} : vector<8x128xf32> to vector<8x32xf32>
    %47 = arith.truncf %46 : vector<8x32xf32> to vector<8x32xbf16>
    %48 = vector.extract_strided_slice %14 {offsets = [0, 32], sizes = [8, 32], strides = [1, 1]} : vector<8x128xf32> to vector<8x32xf32>
    %49 = arith.truncf %48 : vector<8x32xf32> to vector<8x32xbf16>
    %cst_19 = arith.constant dense<0.000000e+00> : vector<8x8xf32>
    %50 = tpu.matmul %45, %47, %cst_19 {dimension_numbers = #tpu.dot_dimension_numbers<[1], [1], [0], [0], [0, 0, 1, 0], [], []>} : vector<8x32xbf16>, vector<8x32xbf16>, vector<8x8xf32> -> vector<8x8xf32>
    %cst_20 = arith.constant 0.353553385 : f32
    %51 = vector.broadcast %cst_20 : f32 to vector<8x8xf32>
    %52 = arith.mulf %50, %51 : vector<8x8xf32>
    %53 = arith.addf %52, %21 : vector<8x8xf32>
    %cst_21 = arith.constant dense<0xFF800000> : vector<8xf32>
    %54 = vector.multi_reduction <maximumf>, %53, %cst_21 [1] : vector<8x8xf32> to vector<8xf32>
    %55 = vector.shape_cast %54 : vector<8xf32> to vector<8x1xf32>
    %56 = vector.broadcast %55 : vector<8x1xf32> to vector<8x8xf32>
    %57 = arith.subf %53, %56 : vector<8x8xf32>
    %58 = math.exp %57 : vector<8x8xf32>
    %cst_22 = arith.constant dense<0.000000e+00> : vector<8xf32>
    %59 = vector.multi_reduction <add>, %58, %cst_22 [1] : vector<8x8xf32> to vector<8xf32>
    %60 = vector.shape_cast %59 : vector<8xf32> to vector<8x1xf32>
    %61 = tpu.reciprocal %60 {approx = true} : vector<8x1xf32> -> vector<8x1xf32>
    %62 = vector.broadcast %61 : vector<8x1xf32> to vector<8x8xf32>
    %63 = arith.mulf %58, %62 : vector<8x8xf32>
    %64 = arith.truncf %63 : vector<8x8xf32> to vector<8x8xbf16>
    %cst_23 = arith.constant dense<0.000000e+00> : vector<8x32xf32>
    %65 = tpu.matmul %64, %49, %cst_23 {dimension_numbers = #tpu.dot_dimension_numbers<[1], [0], [0], [1], [0, 0, 1, 1], [], []>} : vector<8x8xbf16>, vector<8x32xbf16>, vector<8x32xf32> -> vector<8x32xf32>
    %66 = vector.extract_strided_slice %12 {offsets = [0, 64], sizes = [8, 32], strides = [1, 1]} : vector<8x128xf32> to vector<8x32xf32>
    %67 = arith.truncf %66 : vector<8x32xf32> to vector<8x32xbf16>
    %68 = vector.extract_strided_slice %13 {offsets = [0, 64], sizes = [8, 32], strides = [1, 1]} : vector<8x128xf32> to vector<8x32xf32>
    %69 = arith.truncf %68 : vector<8x32xf32> to vector<8x32xbf16>
    %70 = vector.extract_strided_slice %14 {offsets = [0, 64], sizes = [8, 32], strides = [1, 1]} : vector<8x128xf32> to vector<8x32xf32>
    %71 = arith.truncf %70 : vector<8x32xf32> to vector<8x32xbf16>
    %cst_24 = arith.constant dense<0.000000e+00> : vector<8x8xf32>
    %72 = tpu.matmul %67, %69, %cst_24 {dimension_numbers = #tpu.dot_dimension_numbers<[1], [1], [0], [0], [0, 0, 1, 0], [], []>} : vector<8x32xbf16>, vector<8x32xbf16>, vector<8x8xf32> -> vector<8x8xf32>
    %cst_25 = arith.constant 0.353553385 : f32
    %73 = vector.broadcast %cst_25 : f32 to vector<8x8xf32>
    %74 = arith.mulf %72, %73 : vector<8x8xf32>
    %75 = arith.addf %74, %21 : vector<8x8xf32>
    %cst_26 = arith.constant dense<0xFF800000> : vector<8xf32>
    %76 = vector.multi_reduction <maximumf>, %75, %cst_26 [1] : vector<8x8xf32> to vector<8xf32>
    %77 = vector.shape_cast %76 : vector<8xf32> to vector<8x1xf32>
    %78 = vector.broadcast %77 : vector<8x1xf32> to vector<8x8xf32>
    %79 = arith.subf %75, %78 : vector<8x8xf32>
    %80 = math.exp %79 : vector<8x8xf32>
    %cst_27 = arith.constant dense<0.000000e+00> : vector<8xf32>
    %81 = vector.multi_reduction <add>, %80, %cst_27 [1] : vector<8x8xf32> to vector<8xf32>
    %82 = vector.shape_cast %81 : vector<8xf32> to vector<8x1xf32>
    %83 = tpu.reciprocal %82 {approx = true} : vector<8x1xf32> -> vector<8x1xf32>
    %84 = vector.broadcast %83 : vector<8x1xf32> to vector<8x8xf32>
    %85 = arith.mulf %80, %84 : vector<8x8xf32>
    %86 = arith.truncf %85 : vector<8x8xf32> to vector<8x8xbf16>
    %cst_28 = arith.constant dense<0.000000e+00> : vector<8x32xf32>
    %87 = tpu.matmul %86, %71, %cst_28 {dimension_numbers = #tpu.dot_dimension_numbers<[1], [0], [0], [1], [0, 0, 1, 1], [], []>} : vector<8x8xbf16>, vector<8x32xbf16>, vector<8x32xf32> -> vector<8x32xf32>
    %88 = vector.extract_strided_slice %12 {offsets = [0, 96], sizes = [8, 32], strides = [1, 1]} : vector<8x128xf32> to vector<8x32xf32>
    %89 = arith.truncf %88 : vector<8x32xf32> to vector<8x32xbf16>
    %90 = vector.extract_strided_slice %13 {offsets = [0, 96], sizes = [8, 32], strides = [1, 1]} : vector<8x128xf32> to vector<8x32xf32>
    %91 = arith.truncf %90 : vector<8x32xf32> to vector<8x32xbf16>
    %92 = vector.extract_strided_slice %14 {offsets = [0, 96], sizes = [8, 32], strides = [1, 1]} : vector<8x128xf32> to vector<8x32xf32>
    %93 = arith.truncf %92 : vector<8x32xf32> to vector<8x32xbf16>
    %cst_29 = arith.constant dense<0.000000e+00> : vector<8x8xf32>
    %94 = tpu.matmul %89, %91, %cst_29 {dimension_numbers = #tpu.dot_dimension_numbers<[1], [1], [0], [0], [0, 0, 1, 0], [], []>} : vector<8x32xbf16>, vector<8x32xbf16>, vector<8x8xf32> -> vector<8x8xf32>
    %cst_30 = arith.constant 0.353553385 : f32
    %95 = vector.broadcast %cst_30 : f32 to vector<8x8xf32>
    %96 = arith.mulf %94, %95 : vector<8x8xf32>
    %97 = arith.addf %96, %21 : vector<8x8xf32>
    %cst_31 = arith.constant dense<0xFF800000> : vector<8xf32>
    %98 = vector.multi_reduction <maximumf>, %97, %cst_31 [1] : vector<8x8xf32> to vector<8xf32>
    %99 = vector.shape_cast %98 : vector<8xf32> to vector<8x1xf32>
    %100 = vector.broadcast %99 : vector<8x1xf32> to vector<8x8xf32>
    %101 = arith.subf %97, %100 : vector<8x8xf32>
    %102 = math.exp %101 : vector<8x8xf32>
    %cst_32 = arith.constant dense<0.000000e+00> : vector<8xf32>
    %103 = vector.multi_reduction <add>, %102, %cst_32 [1] : vector<8x8xf32> to vector<8xf32>
    %104 = vector.shape_cast %103 : vector<8xf32> to vector<8x1xf32>
    %105 = tpu.reciprocal %104 {approx = true} : vector<8x1xf32> -> vector<8x1xf32>
    %106 = vector.broadcast %105 : vector<8x1xf32> to vector<8x8xf32>
    %107 = arith.mulf %102, %106 : vector<8x8xf32>
    %108 = arith.truncf %107 : vector<8x8xf32> to vector<8x8xbf16>
    %cst_33 = arith.constant dense<0.000000e+00> : vector<8x32xf32>
    %109 = tpu.matmul %108, %93, %cst_33 {dimension_numbers = #tpu.dot_dimension_numbers<[1], [0], [0], [1], [0, 0, 1, 1], [], []>} : vector<8x8xbf16>, vector<8x32xbf16>, vector<8x32xf32> -> vector<8x32xf32>
    %110 = tpu.concatenate %43, %65, %87, %109 in 1 : vector<8x32xf32>, vector<8x32xf32>, vector<8x32xf32>, vector<8x32xf32> -> vector<8x128xf32>
    %111 = arith.truncf %110 : vector<8x128xf32> to vector<8x128xbf16>
    %c0_34 = arith.constant 0 : index
    %c0_35 = arith.constant 0 : index
    %c0_36 = arith.constant 0 : index
    %112 = vector.load %arg7[%c0_34, %c0_35, %c0_36] : memref<1x128x128xbf16, #tpu.memory_space<vmem>>, vector<1x128x128xbf16>
    %113 = vector.shape_cast %112 : vector<1x128x128xbf16> to vector<128x128xbf16>
    %cst_37 = arith.constant dense<0.000000e+00> : vector<8x128xf32>
    %114 = tpu.matmul %111, %113, %cst_37 {dimension_numbers = #tpu.dot_dimension_numbers<[1], [0], [0], [1], [0, 0, 1, 1], [], []>} : vector<8x128xbf16>, vector<128x128xbf16>, vector<8x128xf32> -> vector<8x128xf32>
    %c0_38 = arith.constant 0 : index
    %c0_39 = arith.constant 0 : index
    %c0_40 = arith.constant 0 : index
    %115 = vector.load %arg8[%c0_38, %c0_39, %c0_40] : memref<1x1x128xf32, #tpu.memory_space<vmem>>, vector<1x1x128xf32>
    %116 = vector.shape_cast %115 : vector<1x1x128xf32> to vector<1x128xf32>
    %117 = vector.broadcast %116 : vector<1x128xf32> to vector<8x128xf32>
    %118 = arith.addf %114, %117 : vector<8x128xf32>
    %119 = arith.addf %3, %118 : vector<8x128xf32>
    %c0_41 = arith.constant 0 : index
    %c0_42 = arith.constant 0 : index
    %c0_43 = arith.constant 0 : index
    %120 = vector.load %arg9[%c0_41, %c0_42, %c0_43] : memref<1x1x128xf32, #tpu.memory_space<vmem>>, vector<1x1x128xf32>
    %121 = vector.shape_cast %120 : vector<1x1x128xf32> to vector<1x128xf32>
    %c0_44 = arith.constant 0 : index
    %c0_45 = arith.constant 0 : index
    %c0_46 = arith.constant 0 : index
    %122 = vector.load %arg10[%c0_44, %c0_45, %c0_46] : memref<1x1x128xf32, #tpu.memory_space<vmem>>, vector<1x1x128xf32>
    %123 = vector.shape_cast %122 : vector<1x1x128xf32> to vector<1x128xf32>
    %124 = tpu.iota {dimensions = array<i32: 1>} : vector<8x128xi32>
    %c32_i32 = arith.constant 32 : i32
    %125 = vector.broadcast %c32_i32 : i32 to vector<8x128xi32>
    %126 = arith.cmpi slt, %124, %125 : vector<8x128xi32>
    %cst_47 = arith.constant dense<0.000000e+00> : vector<8xf32>
    %127 = vector.multi_reduction <add>, %119, %cst_47 [1] : vector<8x128xf32> to vector<8xf32>
    %128 = vector.shape_cast %127 : vector<8xf32> to vector<8x1xf32>
    %cst_48 = arith.constant 3.125000e-02 : f32
    %129 = vector.broadcast %cst_48 : f32 to vector<8x1xf32>
    %130 = arith.mulf %128, %129 : vector<8x1xf32>
    %131 = vector.broadcast %130 : vector<8x1xf32> to vector<8x128xf32>
    %132 = arith.subf %119, %131 : vector<8x128xf32>
    %cst_49 = arith.constant 0.000000e+00 : f32
    %133 = vector.broadcast %cst_49 : f32 to vector<8x128xf32>
    %134 = arith.select %126, %132, %133 : vector<8x128xi1>, vector<8x128xf32>
    %135 = arith.mulf %134, %134 : vector<8x128xf32>
    %cst_50 = arith.constant dense<0.000000e+00> : vector<8xf32>
    %136 = vector.multi_reduction <add>, %135, %cst_50 [1] : vector<8x128xf32> to vector<8xf32>
    %137 = vector.shape_cast %136 : vector<8xf32> to vector<8x1xf32>
    %cst_51 = arith.constant 3.125000e-02 : f32
    %138 = vector.broadcast %cst_51 : f32 to vector<8x1xf32>
    %139 = arith.mulf %137, %138 : vector<8x1xf32>
    %cst_52 = arith.constant 9.99999974E-6 : f32
    %140 = vector.broadcast %cst_52 : f32 to vector<8x1xf32>
    %141 = arith.addf %139, %140 : vector<8x1xf32>
    %142 = math.rsqrt %141 : vector<8x1xf32>
    %143 = vector.broadcast %142 : vector<8x1xf32> to vector<8x128xf32>
    %144 = arith.mulf %134, %143 : vector<8x128xf32>
    %145 = vector.broadcast %121 : vector<1x128xf32> to vector<8x128xf32>
    %146 = arith.mulf %144, %145 : vector<8x128xf32>
    %147 = vector.broadcast %123 : vector<1x128xf32> to vector<8x128xf32>
    %148 = arith.addf %146, %147 : vector<8x128xf32>
    %149 = arith.truncf %148 : vector<8x128xf32> to vector<8x128xbf16>
    %c0_53 = arith.constant 0 : index
    %c0_54 = arith.constant 0 : index
    %c0_55 = arith.constant 0 : index
    %150 = vector.load %arg11[%c0_53, %c0_54, %c0_55] : memref<1x128x128xbf16, #tpu.memory_space<vmem>>, vector<1x128x128xbf16>
    %151 = vector.shape_cast %150 : vector<1x128x128xbf16> to vector<128x128xbf16>
    %cst_56 = arith.constant dense<0.000000e+00> : vector<8x128xf32>
    %152 = tpu.matmul %149, %151, %cst_56 {dimension_numbers = #tpu.dot_dimension_numbers<[1], [0], [0], [1], [0, 0, 1, 1], [], []>} : vector<8x128xbf16>, vector<128x128xbf16>, vector<8x128xf32> -> vector<8x128xf32>
    %c0_57 = arith.constant 0 : index
    %c0_58 = arith.constant 0 : index
    %c0_59 = arith.constant 0 : index
    %153 = vector.load %arg12[%c0_57, %c0_58, %c0_59] : memref<1x1x128xf32, #tpu.memory_space<vmem>>, vector<1x1x128xf32>
    %154 = vector.shape_cast %153 : vector<1x1x128xf32> to vector<1x128xf32>
    %155 = vector.broadcast %154 : vector<1x128xf32> to vector<8x128xf32>
    %156 = arith.addf %152, %155 : vector<8x128xf32>
    %cst_60 = arith.constant 0.000000e+00 : f32
    %157 = vector.broadcast %cst_60 : f32 to vector<8x128xf32>
    %158 = arith.maximumf %156, %157 : vector<8x128xf32>
    %159 = arith.truncf %158 : vector<8x128xf32> to vector<8x128xbf16>
    %c0_61 = arith.constant 0 : index
    %c0_62 = arith.constant 0 : index
    %c0_63 = arith.constant 0 : index
    %160 = vector.load %arg13[%c0_61, %c0_62, %c0_63] : memref<1x128x128xbf16, #tpu.memory_space<vmem>>, vector<1x128x128xbf16>
    %161 = vector.shape_cast %160 : vector<1x128x128xbf16> to vector<128x128xbf16>
    %cst_64 = arith.constant dense<0.000000e+00> : vector<8x128xf32>
    %162 = tpu.matmul %159, %161, %cst_64 {dimension_numbers = #tpu.dot_dimension_numbers<[1], [0], [0], [1], [0, 0, 1, 1], [], []>} : vector<8x128xbf16>, vector<128x128xbf16>, vector<8x128xf32> -> vector<8x128xf32>
    %c0_65 = arith.constant 0 : index
    %c0_66 = arith.constant 0 : index
    %c0_67 = arith.constant 0 : index
    %163 = vector.load %arg14[%c0_65, %c0_66, %c0_67] : memref<1x1x128xf32, #tpu.memory_space<vmem>>, vector<1x1x128xf32>
    %164 = vector.shape_cast %163 : vector<1x1x128xf32> to vector<1x128xf32>
    %165 = vector.broadcast %164 : vector<1x128xf32> to vector<8x128xf32>
    %166 = arith.addf %162, %165 : vector<8x128xf32>
    %167 = arith.addf %148, %166 : vector<8x128xf32>
    %c0_68 = arith.constant 0 : index
    %c0_69 = arith.constant 0 : index
    %c0_70 = arith.constant 0 : index
    %168 = vector.load %arg15[%c0_68, %c0_69, %c0_70] : memref<1x1x128xf32, #tpu.memory_space<vmem>>, vector<1x1x128xf32>
    %169 = vector.shape_cast %168 : vector<1x1x128xf32> to vector<1x128xf32>
    %c0_71 = arith.constant 0 : index
    %c0_72 = arith.constant 0 : index
    %c0_73 = arith.constant 0 : index
    %170 = vector.load %arg16[%c0_71, %c0_72, %c0_73] : memref<1x1x128xf32, #tpu.memory_space<vmem>>, vector<1x1x128xf32>
    %171 = vector.shape_cast %170 : vector<1x1x128xf32> to vector<1x128xf32>
    %172 = tpu.iota {dimensions = array<i32: 1>} : vector<8x128xi32>
    %c32_i32_74 = arith.constant 32 : i32
    %173 = vector.broadcast %c32_i32_74 : i32 to vector<8x128xi32>
    %174 = arith.cmpi slt, %172, %173 : vector<8x128xi32>
    %cst_75 = arith.constant dense<0.000000e+00> : vector<8xf32>
    %175 = vector.multi_reduction <add>, %167, %cst_75 [1] : vector<8x128xf32> to vector<8xf32>
    %176 = vector.shape_cast %175 : vector<8xf32> to vector<8x1xf32>
    %cst_76 = arith.constant 3.125000e-02 : f32
    %177 = vector.broadcast %cst_76 : f32 to vector<8x1xf32>
    %178 = arith.mulf %176, %177 : vector<8x1xf32>
    %179 = vector.broadcast %178 : vector<8x1xf32> to vector<8x128xf32>
    %180 = arith.subf %167, %179 : vector<8x128xf32>
    %cst_77 = arith.constant 0.000000e+00 : f32
    %181 = vector.broadcast %cst_77 : f32 to vector<8x128xf32>
    %182 = arith.select %174, %180, %181 : vector<8x128xi1>, vector<8x128xf32>
    %183 = arith.mulf %182, %182 : vector<8x128xf32>
    %cst_78 = arith.constant dense<0.000000e+00> : vector<8xf32>
    %184 = vector.multi_reduction <add>, %183, %cst_78 [1] : vector<8x128xf32> to vector<8xf32>
    %185 = vector.shape_cast %184 : vector<8xf32> to vector<8x1xf32>
    %cst_79 = arith.constant 3.125000e-02 : f32
    %186 = vector.broadcast %cst_79 : f32 to vector<8x1xf32>
    %187 = arith.mulf %185, %186 : vector<8x1xf32>
    %cst_80 = arith.constant 9.99999974E-6 : f32
    %188 = vector.broadcast %cst_80 : f32 to vector<8x1xf32>
    %189 = arith.addf %187, %188 : vector<8x1xf32>
    %190 = math.rsqrt %189 : vector<8x1xf32>
    %191 = vector.broadcast %190 : vector<8x1xf32> to vector<8x128xf32>
    %192 = arith.mulf %182, %191 : vector<8x128xf32>
    %193 = vector.broadcast %169 : vector<1x128xf32> to vector<8x128xf32>
    %194 = arith.mulf %192, %193 : vector<8x128xf32>
    %195 = vector.broadcast %171 : vector<1x128xf32> to vector<8x128xf32>
    %196 = arith.addf %194, %195 : vector<8x128xf32>
    %c0_81 = arith.constant 0 : index
    %c0_82 = arith.constant 0 : index
    %197 = vector.load %arg19[%c0_81, %c0_82] : memref<8x128xf32, #tpu.memory_space<vmem>>, vector<8x128xf32>
    tpu.vector_store %arg19[%c0_81, %c0_82], %196 {strides = array<i32>} : memref<8x128xf32, #tpu.memory_space<vmem>>, vector<8x128xf32>,
    %c1_i32 = arith.constant 1 : i32
    %198 = arith.cmpi eq, %arg1, %c1_i32 : i32
    %199 = arith.extui %198 : i1 to i32
    %c0_i32_83 = arith.constant 0 : i32
    %200 = arith.cmpi ne, %199, %c0_i32_83 : i32
    scf.if %200 {
      %c0_84 = arith.constant 0 : index
      %c0_85 = arith.constant 0 : index
      %201 = vector.load %arg17[%c0_84, %c0_85] : memref<1x128xf32, #tpu.memory_space<vmem>>, vector<1x128xf32>
      %c0_86 = arith.constant 0 : index
      %c0_87 = arith.constant 0 : index
      %202 = vector.load %arg18[%c0_86, %c0_87] : memref<1x128xf32, #tpu.memory_space<vmem>>, vector<1x128xf32>
      %203 = tpu.iota {dimensions = array<i32: 1>} : vector<8x128xi32>
      %c32_i32_88 = arith.constant 32 : i32
      %204 = vector.broadcast %c32_i32_88 : i32 to vector<8x128xi32>
      %205 = arith.cmpi slt, %203, %204 : vector<8x128xi32>
      %cst_89 = arith.constant dense<0.000000e+00> : vector<8xf32>
      %206 = vector.multi_reduction <add>, %196, %cst_89 [1] : vector<8x128xf32> to vector<8xf32>
      %207 = vector.shape_cast %206 : vector<8xf32> to vector<8x1xf32>
      %cst_90 = arith.constant 3.125000e-02 : f32
      %208 = vector.broadcast %cst_90 : f32 to vector<8x1xf32>
      %209 = arith.mulf %207, %208 : vector<8x1xf32>
      %210 = vector.broadcast %209 : vector<8x1xf32> to vector<8x128xf32>
      %211 = arith.subf %196, %210 : vector<8x128xf32>
      %cst_91 = arith.constant 0.000000e+00 : f32
      %212 = vector.broadcast %cst_91 : f32 to vector<8x128xf32>
      %213 = arith.select %205, %211, %212 : vector<8x128xi1>, vector<8x128xf32>
      %214 = arith.mulf %213, %213 : vector<8x128xf32>
      %cst_92 = arith.constant dense<0.000000e+00> : vector<8xf32>
      %215 = vector.multi_reduction <add>, %214, %cst_92 [1] : vector<8x128xf32> to vector<8xf32>
      %216 = vector.shape_cast %215 : vector<8xf32> to vector<8x1xf32>
      %cst_93 = arith.constant 3.125000e-02 : f32
      %217 = vector.broadcast %cst_93 : f32 to vector<8x1xf32>
      %218 = arith.mulf %216, %217 : vector<8x1xf32>
      %cst_94 = arith.constant 9.99999974E-6 : f32
      %219 = vector.broadcast %cst_94 : f32 to vector<8x1xf32>
      %220 = arith.addf %218, %219 : vector<8x1xf32>
      %221 = math.rsqrt %220 : vector<8x1xf32>
      %222 = vector.broadcast %221 : vector<8x1xf32> to vector<8x128xf32>
      %223 = arith.mulf %213, %222 : vector<8x128xf32>
      %224 = vector.broadcast %201 : vector<1x128xf32> to vector<8x128xf32>
      %225 = arith.mulf %223, %224 : vector<8x128xf32>
      %226 = vector.broadcast %202 : vector<1x128xf32> to vector<8x128xf32>
      %227 = arith.addf %225, %226 : vector<8x128xf32>
      %c0_95 = arith.constant 0 : index
      %c0_96 = arith.constant 0 : index
      %228 = vector.load %arg19[%c0_95, %c0_96] : memref<8x128xf32, #tpu.memory_space<vmem>>, vector<8x128xf32>
      tpu.vector_store %arg19[%c0_95, %c0_96], %227 {strides = array<i32>} : memref<8x128xf32, #tpu.memory_space<vmem>>, vector<8x128xf32>,
    } else {
    }
    return
  }
  func.func @transform_0(%arg0: i32, %arg1: i32) -> (i32, i32) {
    %c0_i32 = arith.constant 0 : i32
    %c0_i32_0 = arith.constant 0 : i32
    return %arg0, %c0_i32 : i32, i32
  }
  func.func @transform_1(%arg0: i32, %arg1: i32) -> (i32, i32) {
    %c0_i32 = arith.constant 0 : i32
    %c0_i32_0 = arith.constant 0 : i32
    %c0_i32_1 = arith.constant 0 : i32
    return %c0_i32, %c0_i32_0 : i32, i32
  }
  func.func @transform_2(%arg0: i32, %arg1: i32) -> (i32, i32, i32) {
    %c0_i32 = arith.constant 0 : i32
    %c0_i32_0 = arith.constant 0 : i32
    %c0_i32_1 = arith.constant 0 : i32
    return %arg0, %c0_i32, %c0_i32_0 : i32, i32, i32
  }
  func.func @transform_3(%arg0: i32, %arg1: i32) -> (i32, i32, i32) {
    %c0_i32 = arith.constant 0 : i32
    %c0_i32_0 = arith.constant 0 : i32
    %c0_i32_1 = arith.constant 0 : i32
    return %arg1, %c0_i32, %c0_i32_0 : i32, i32, i32
  }
  func.func @transform_4(%arg0: i32, %arg1: i32) -> (i32, i32, i32) {
    %c0_i32 = arith.constant 0 : i32
    %c0_i32_0 = arith.constant 0 : i32
    %c0_i32_1 = arith.constant 0 : i32
    return %arg1, %c0_i32, %c0_i32_0 : i32, i32, i32
  }
  func.func @transform_5(%arg0: i32, %arg1: i32) -> (i32, i32, i32) {
    %c0_i32 = arith.constant 0 : i32
    %c0_i32_0 = arith.constant 0 : i32
    %c0_i32_1 = arith.constant 0 : i32
    return %arg1, %c0_i32, %c0_i32_0 : i32, i32, i32
  }
  func.func @transform_6(%arg0: i32, %arg1: i32) -> (i32, i32, i32) {
    %c0_i32 = arith.constant 0 : i32
    %c0_i32_0 = arith.constant 0 : i32
    %c0_i32_1 = arith.constant 0 : i32
    return %arg1, %c0_i32, %c0_i32_0 : i32, i32, i32
  }
  func.func @transform_7(%arg0: i32, %arg1: i32) -> (i32, i32, i32) {
    %c0_i32 = arith.constant 0 : i32
    %c0_i32_0 = arith.constant 0 : i32
    %c0_i32_1 = arith.constant 0 : i32
    return %arg1, %c0_i32, %c0_i32_0 : i32, i32, i32
  }
  func.func @transform_8(%arg0: i32, %arg1: i32) -> (i32, i32, i32) {
    %c0_i32 = arith.constant 0 : i32
    %c0_i32_0 = arith.constant 0 : i32
    %c0_i32_1 = arith.constant 0 : i32
    return %arg1, %c0_i32, %c0_i32_0 : i32, i32, i32
  }
  func.func @transform_9(%arg0: i32, %arg1: i32) -> (i32, i32, i32) {
    %c0_i32 = arith.constant 0 : i32
    %c0_i32_0 = arith.constant 0 : i32
    %c0_i32_1 = arith.constant 0 : i32
    return %arg1, %c0_i32, %c0_i32_0 : i32, i32, i32
  }
  func.func @transform_10(%arg0: i32, %arg1: i32) -> (i32, i32, i32) {
    %c0_i32 = arith.constant 0 : i32
    %c0_i32_0 = arith.constant 0 : i32
    %c0_i32_1 = arith.constant 0 : i32
    return %arg1, %c0_i32, %c0_i32_0 : i32, i32, i32
  }
  func.func @transform_11(%arg0: i32, %arg1: i32) -> (i32, i32, i32) {
    %c0_i32 = arith.constant 0 : i32
    %c0_i32_0 = arith.constant 0 : i32
    %c0_i32_1 = arith.constant 0 : i32
    return %arg1, %c0_i32, %c0_i32_0 : i32, i32, i32
  }
  func.func @transform_12(%arg0: i32, %arg1: i32) -> (i32, i32, i32) {
    %c0_i32 = arith.constant 0 : i32
    %c0_i32_0 = arith.constant 0 : i32
    %c0_i32_1 = arith.constant 0 : i32
    return %arg1, %c0_i32, %c0_i32_0 : i32, i32, i32
  }
  func.func @transform_13(%arg0: i32, %arg1: i32) -> (i32, i32, i32) {
    %c0_i32 = arith.constant 0 : i32
    %c0_i32_0 = arith.constant 0 : i32
    %c0_i32_1 = arith.constant 0 : i32
    return %arg1, %c0_i32, %c0_i32_0 : i32, i32, i32
  }
  func.func @transform_14(%arg0: i32, %arg1: i32) -> (i32, i32, i32) {
    %c0_i32 = arith.constant 0 : i32
    %c0_i32_0 = arith.constant 0 : i32
    %c0_i32_1 = arith.constant 0 : i32
    return %arg1, %c0_i32, %c0_i32_0 : i32, i32, i32
  }
  func.func @transform_15(%arg0: i32, %arg1: i32) -> (i32, i32) {
    %c0_i32 = arith.constant 0 : i32
    %c0_i32_0 = arith.constant 0 : i32
    %c0_i32_1 = arith.constant 0 : i32
    return %c0_i32, %c0_i32_0 : i32, i32
  }
  func.func @transform_16(%arg0: i32, %arg1: i32) -> (i32, i32) {
    %c0_i32 = arith.constant 0 : i32
    %c0_i32_0 = arith.constant 0 : i32
    %c0_i32_1 = arith.constant 0 : i32
    return %c0_i32, %c0_i32_0 : i32, i32
  }
  func.func @transform_17(%arg0: i32, %arg1: i32) -> (i32, i32) {
    %c0_i32 = arith.constant 0 : i32
    %c0_i32_0 = arith.constant 0 : i32
    return %arg0, %c0_i32 : i32, i32
  }
}

module attributes {stable_mosaic.version = 11 : i64} {
  func.func @_decoder_stack_kernel(%arg0: i32, %arg1: i32, %arg2: memref<8x128xf32, #tpu.memory_space<vmem>>, %arg3: memref<8x128xf32, #tpu.memory_space<vmem>>, %arg4: memref<8x8xf32, #tpu.memory_space<vmem>>, %arg5: memref<1x1x8xf32, #tpu.memory_space<vmem>>, %arg6: memref<1x1x8xf32, #tpu.memory_space<vmem>>, %arg7: memref<1x128x384xbf16, #tpu.memory_space<vmem>>, %arg8: memref<1x1x384xf32, #tpu.memory_space<vmem>>, %arg9: memref<1x128x128xbf16, #tpu.memory_space<vmem>>, %arg10: memref<1x1x128xf32, #tpu.memory_space<vmem>>, %arg11: memref<1x1x128xf32, #tpu.memory_space<vmem>>, %arg12: memref<1x1x128xf32, #tpu.memory_space<vmem>>, %arg13: memref<1x128x128xbf16, #tpu.memory_space<vmem>>, %arg14: memref<1x1x128xf32, #tpu.memory_space<vmem>>, %arg15: memref<1x128x256xbf16, #tpu.memory_space<vmem>>, %arg16: memref<1x1x256xf32, #tpu.memory_space<vmem>>, %arg17: memref<1x128x128xbf16, #tpu.memory_space<vmem>>, %arg18: memref<1x1x128xf32, #tpu.memory_space<vmem>>, %arg19: memref<1x1x128xf32, #tpu.memory_space<vmem>>, %arg20: memref<1x1x128xf32, #tpu.memory_space<vmem>>, %arg21: memref<1x128x128xbf16, #tpu.memory_space<vmem>>, %arg22: memref<1x1x128xf32, #tpu.memory_space<vmem>>, %arg23: memref<1x128x128xbf16, #tpu.memory_space<vmem>>, %arg24: memref<1x1x128xf32, #tpu.memory_space<vmem>>, %arg25: memref<1x1x128xf32, #tpu.memory_space<vmem>>, %arg26: memref<1x1x128xf32, #tpu.memory_space<vmem>>, %arg27: memref<1x128xf32, #tpu.memory_space<vmem>>, %arg28: memref<1x128xf32, #tpu.memory_space<vmem>>, %arg29: memref<8x128xf32, #tpu.memory_space<vmem>>) attributes {dimension_semantics = [#tpu.dimension_semantics<parallel>, #tpu.dimension_semantics<arbitrary>], iteration_bounds = array<i64: 2, 2>, scalar_prefetch = 0 : i64, scratch_operands = 0 : i64, tpu.core_type = #tpu.core_type<tc>, window_params = [{transform_indices = @transform_0, window_bounds = array<i64: 8, 128>}, {transform_indices = @transform_1, window_bounds = array<i64: 8, 128>}, {pipeline_mode = #tpu.pipeline_mode<synchronous>, transform_indices = @transform_2, window_bounds = array<i64: 8, 8>}, {transform_indices = @transform_3, window_bounds = array<i64: 1, 1, 8>}, {transform_indices = @transform_4, window_bounds = array<i64: 1, 1, 8>}, {transform_indices = @transform_5, window_bounds = array<i64: 1, 128, 384>}, {transform_indices = @transform_6, window_bounds = array<i64: 1, 1, 384>}, {transform_indices = @transform_7, window_bounds = array<i64: 1, 128, 128>}, {transform_indices = @transform_8, window_bounds = array<i64: 1, 1, 128>}, {transform_indices = @transform_9, window_bounds = array<i64: 1, 1, 128>}, {transform_indices = @transform_10, window_bounds = array<i64: 1, 1, 128>}, {transform_indices = @transform_11, window_bounds = array<i64: 1, 128, 128>}, {transform_indices = @transform_12, window_bounds = array<i64: 1, 1, 128>}, {transform_indices = @transform_13, window_bounds = array<i64: 1, 128, 256>}, {transform_indices = @transform_14, window_bounds = array<i64: 1, 1, 256>}, {transform_indices = @transform_15, window_bounds = array<i64: 1, 128, 128>}, {transform_indices = @transform_16, window_bounds = array<i64: 1, 1, 128>}, {transform_indices = @transform_17, window_bounds = array<i64: 1, 1, 128>}, {transform_indices = @transform_18, window_bounds = array<i64: 1, 1, 128>}, {transform_indices = @transform_19, window_bounds = array<i64: 1, 128, 128>}, {transform_indices = @transform_20, window_bounds = array<i64: 1, 1, 128>}, {transform_indices = @transform_21, window_bounds = array<i64: 1, 128, 128>}, {transform_indices = @transform_22, window_bounds = array<i64: 1, 1, 128>}, {transform_indices = @transform_23, window_bounds = array<i64: 1, 1, 128>}, {transform_indices = @transform_24, window_bounds = array<i64: 1, 1, 128>}, {pipeline_mode = #tpu.pipeline_mode<synchronous>, transform_indices = @transform_25, window_bounds = array<i64: 1, 128>}, {pipeline_mode = #tpu.pipeline_mode<synchronous>, transform_indices = @transform_26, window_bounds = array<i64: 1, 128>}, {transform_indices = @transform_27, window_bounds = array<i64: 8, 128>}]} {
    %c0_i32 = arith.constant 0 : i32
    %0 = arith.cmpi eq, %arg1, %c0_i32 : i32
    %1 = arith.extui %0 : i1 to i32
    %c0_i32_0 = arith.constant 0 : i32
    %2 = arith.cmpi ne, %1, %c0_i32_0 : i32
    scf.if %2 {
      %c0_143 = arith.constant 0 : index
      %c0_144 = arith.constant 0 : index
      %353 = vector.load %arg2[%c0_143, %c0_144] : memref<8x128xf32, #tpu.memory_space<vmem>>, vector<8x128xf32>
      %c0_145 = arith.constant 0 : index
      %c0_146 = arith.constant 0 : index
      %354 = vector.load %arg29[%c0_145, %c0_146] : memref<8x128xf32, #tpu.memory_space<vmem>>, vector<8x128xf32>
      tpu.vector_store %arg29[%c0_145, %c0_146], %353 {strides = array<i32>} : memref<8x128xf32, #tpu.memory_space<vmem>>, vector<8x128xf32>,
    } else {
    }
    %c0 = arith.constant 0 : index
    %c0_1 = arith.constant 0 : index
    %3 = vector.load %arg29[%c0, %c0_1] : memref<8x128xf32, #tpu.memory_space<vmem>>, vector<8x128xf32>
    %4 = arith.truncf %3 : vector<8x128xf32> to vector<8x128xbf16>
    %c0_2 = arith.constant 0 : index
    %c0_3 = arith.constant 0 : index
    %c0_4 = arith.constant 0 : index
    %5 = vector.load %arg7[%c0_2, %c0_3, %c0_4] : memref<1x128x384xbf16, #tpu.memory_space<vmem>>, vector<1x128x384xbf16>
    %6 = vector.shape_cast %5 : vector<1x128x384xbf16> to vector<128x384xbf16>
    %cst = arith.constant dense<0.000000e+00> : vector<8x384xf32>
    %7 = tpu.matmul %4, %6, %cst {dimension_numbers = #tpu.dot_dimension_numbers<[1], [0], [0], [1], [0, 0, 1, 1], [], []>} : vector<8x128xbf16>, vector<128x384xbf16>, vector<8x384xf32> -> vector<8x384xf32>
    %c0_5 = arith.constant 0 : index
    %c0_6 = arith.constant 0 : index
    %c0_7 = arith.constant 0 : index
    %8 = vector.load %arg8[%c0_5, %c0_6, %c0_7] : memref<1x1x384xf32, #tpu.memory_space<vmem>>, vector<1x1x384xf32>
    %9 = vector.shape_cast %8 : vector<1x1x384xf32> to vector<1x384xf32>
    %10 = vector.broadcast %9 : vector<1x384xf32> to vector<8x384xf32>
    %11 = arith.addf %7, %10 : vector<8x384xf32>
    %12 = vector.extract_strided_slice %11 {offsets = [0, 0], sizes = [8, 128], strides = [1, 1]} : vector<8x384xf32> to vector<8x128xf32>
    %13 = vector.extract_strided_slice %11 {offsets = [0, 128], sizes = [8, 128], strides = [1, 1]} : vector<8x384xf32> to vector<8x128xf32>
    %14 = vector.extract_strided_slice %11 {offsets = [0, 256], sizes = [8, 128], strides = [1, 1]} : vector<8x384xf32> to vector<8x128xf32>
    %c0_8 = arith.constant 0 : index
    %c0_9 = arith.constant 0 : index
    %15 = vector.load %arg4[%c0_8, %c0_9] : memref<8x8xf32, #tpu.memory_space<vmem>>, vector<8x8xf32>
    %c0_10 = arith.constant 0 : index
    %c0_11 = arith.constant 0 : index
    %c0_12 = arith.constant 0 : index
    %16 = vector.load %arg5[%c0_10, %c0_11, %c0_12] : memref<1x1x8xf32, #tpu.memory_space<vmem>>, vector<1x1x8xf32>
    %17 = vector.shape_cast %16 : vector<1x1x8xf32> to vector<1x8xf32>
    %18 = vector.broadcast %17 : vector<1x8xf32> to vector<8x8xf32>
    %19 = arith.addf %15, %18 : vector<8x8xf32>
    %cst_13 = arith.constant -1.000000e+09 : f32
    %20 = vector.broadcast %cst_13 : f32 to vector<8x8xf32>
    %21 = arith.maximumf %19, %20 : vector<8x8xf32>
    %22 = vector.extract_strided_slice %12 {offsets = [0, 0], sizes = [8, 32], strides = [1, 1]} : vector<8x128xf32> to vector<8x32xf32>
    %23 = arith.truncf %22 : vector<8x32xf32> to vector<8x32xbf16>
    %24 = vector.extract_strided_slice %13 {offsets = [0, 0], sizes = [8, 32], strides = [1, 1]} : vector<8x128xf32> to vector<8x32xf32>
    %25 = arith.truncf %24 : vector<8x32xf32> to vector<8x32xbf16>
    %26 = vector.extract_strided_slice %14 {offsets = [0, 0], sizes = [8, 32], strides = [1, 1]} : vector<8x128xf32> to vector<8x32xf32>
    %27 = arith.truncf %26 : vector<8x32xf32> to vector<8x32xbf16>
    %cst_14 = arith.constant dense<0.000000e+00> : vector<8x8xf32>
    %28 = tpu.matmul %23, %25, %cst_14 {dimension_numbers = #tpu.dot_dimension_numbers<[1], [1], [0], [0], [0, 0, 1, 0], [], []>} : vector<8x32xbf16>, vector<8x32xbf16>, vector<8x8xf32> -> vector<8x8xf32>
    %cst_15 = arith.constant 0.353553385 : f32
    %29 = vector.broadcast %cst_15 : f32 to vector<8x8xf32>
    %30 = arith.mulf %28, %29 : vector<8x8xf32>
    %31 = arith.addf %30, %21 : vector<8x8xf32>
    %cst_16 = arith.constant dense<0xFF800000> : vector<8xf32>
    %32 = vector.multi_reduction <maximumf>, %31, %cst_16 [1] : vector<8x8xf32> to vector<8xf32>
    %33 = vector.shape_cast %32 : vector<8xf32> to vector<8x1xf32>
    %34 = vector.broadcast %33 : vector<8x1xf32> to vector<8x8xf32>
    %35 = arith.subf %31, %34 : vector<8x8xf32>
    %36 = math.exp %35 : vector<8x8xf32>
    %cst_17 = arith.constant dense<0.000000e+00> : vector<8xf32>
    %37 = vector.multi_reduction <add>, %36, %cst_17 [1] : vector<8x8xf32> to vector<8xf32>
    %38 = vector.shape_cast %37 : vector<8xf32> to vector<8x1xf32>
    %39 = tpu.reciprocal %38 {approx = true} : vector<8x1xf32> -> vector<8x1xf32>
    %40 = vector.broadcast %39 : vector<8x1xf32> to vector<8x8xf32>
    %41 = arith.mulf %36, %40 : vector<8x8xf32>
    %42 = arith.truncf %41 : vector<8x8xf32> to vector<8x8xbf16>
    %cst_18 = arith.constant dense<0.000000e+00> : vector<8x32xf32>
    %43 = tpu.matmul %42, %27, %cst_18 {dimension_numbers = #tpu.dot_dimension_numbers<[1], [0], [0], [1], [0, 0, 1, 1], [], []>} : vector<8x8xbf16>, vector<8x32xbf16>, vector<8x32xf32> -> vector<8x32xf32>
    %44 = vector.extract_strided_slice %12 {offsets = [0, 32], sizes = [8, 32], strides = [1, 1]} : vector<8x128xf32> to vector<8x32xf32>
    %45 = arith.truncf %44 : vector<8x32xf32> to vector<8x32xbf16>
    %46 = vector.extract_strided_slice %13 {offsets = [0, 32], sizes = [8, 32], strides = [1, 1]} : vector<8x128xf32> to vector<8x32xf32>
    %47 = arith.truncf %46 : vector<8x32xf32> to vector<8x32xbf16>
    %48 = vector.extract_strided_slice %14 {offsets = [0, 32], sizes = [8, 32], strides = [1, 1]} : vector<8x128xf32> to vector<8x32xf32>
    %49 = arith.truncf %48 : vector<8x32xf32> to vector<8x32xbf16>
    %cst_19 = arith.constant dense<0.000000e+00> : vector<8x8xf32>
    %50 = tpu.matmul %45, %47, %cst_19 {dimension_numbers = #tpu.dot_dimension_numbers<[1], [1], [0], [0], [0, 0, 1, 0], [], []>} : vector<8x32xbf16>, vector<8x32xbf16>, vector<8x8xf32> -> vector<8x8xf32>
    %cst_20 = arith.constant 0.353553385 : f32
    %51 = vector.broadcast %cst_20 : f32 to vector<8x8xf32>
    %52 = arith.mulf %50, %51 : vector<8x8xf32>
    %53 = arith.addf %52, %21 : vector<8x8xf32>
    %cst_21 = arith.constant dense<0xFF800000> : vector<8xf32>
    %54 = vector.multi_reduction <maximumf>, %53, %cst_21 [1] : vector<8x8xf32> to vector<8xf32>
    %55 = vector.shape_cast %54 : vector<8xf32> to vector<8x1xf32>
    %56 = vector.broadcast %55 : vector<8x1xf32> to vector<8x8xf32>
    %57 = arith.subf %53, %56 : vector<8x8xf32>
    %58 = math.exp %57 : vector<8x8xf32>
    %cst_22 = arith.constant dense<0.000000e+00> : vector<8xf32>
    %59 = vector.multi_reduction <add>, %58, %cst_22 [1] : vector<8x8xf32> to vector<8xf32>
    %60 = vector.shape_cast %59 : vector<8xf32> to vector<8x1xf32>
    %61 = tpu.reciprocal %60 {approx = true} : vector<8x1xf32> -> vector<8x1xf32>
    %62 = vector.broadcast %61 : vector<8x1xf32> to vector<8x8xf32>
    %63 = arith.mulf %58, %62 : vector<8x8xf32>
    %64 = arith.truncf %63 : vector<8x8xf32> to vector<8x8xbf16>
    %cst_23 = arith.constant dense<0.000000e+00> : vector<8x32xf32>
    %65 = tpu.matmul %64, %49, %cst_23 {dimension_numbers = #tpu.dot_dimension_numbers<[1], [0], [0], [1], [0, 0, 1, 1], [], []>} : vector<8x8xbf16>, vector<8x32xbf16>, vector<8x32xf32> -> vector<8x32xf32>
    %66 = vector.extract_strided_slice %12 {offsets = [0, 64], sizes = [8, 32], strides = [1, 1]} : vector<8x128xf32> to vector<8x32xf32>
    %67 = arith.truncf %66 : vector<8x32xf32> to vector<8x32xbf16>
    %68 = vector.extract_strided_slice %13 {offsets = [0, 64], sizes = [8, 32], strides = [1, 1]} : vector<8x128xf32> to vector<8x32xf32>
    %69 = arith.truncf %68 : vector<8x32xf32> to vector<8x32xbf16>
    %70 = vector.extract_strided_slice %14 {offsets = [0, 64], sizes = [8, 32], strides = [1, 1]} : vector<8x128xf32> to vector<8x32xf32>
    %71 = arith.truncf %70 : vector<8x32xf32> to vector<8x32xbf16>
    %cst_24 = arith.constant dense<0.000000e+00> : vector<8x8xf32>
    %72 = tpu.matmul %67, %69, %cst_24 {dimension_numbers = #tpu.dot_dimension_numbers<[1], [1], [0], [0], [0, 0, 1, 0], [], []>} : vector<8x32xbf16>, vector<8x32xbf16>, vector<8x8xf32> -> vector<8x8xf32>
    %cst_25 = arith.constant 0.353553385 : f32
    %73 = vector.broadcast %cst_25 : f32 to vector<8x8xf32>
    %74 = arith.mulf %72, %73 : vector<8x8xf32>
    %75 = arith.addf %74, %21 : vector<8x8xf32>
    %cst_26 = arith.constant dense<0xFF800000> : vector<8xf32>
    %76 = vector.multi_reduction <maximumf>, %75, %cst_26 [1] : vector<8x8xf32> to vector<8xf32>
    %77 = vector.shape_cast %76 : vector<8xf32> to vector<8x1xf32>
    %78 = vector.broadcast %77 : vector<8x1xf32> to vector<8x8xf32>
    %79 = arith.subf %75, %78 : vector<8x8xf32>
    %80 = math.exp %79 : vector<8x8xf32>
    %cst_27 = arith.constant dense<0.000000e+00> : vector<8xf32>
    %81 = vector.multi_reduction <add>, %80, %cst_27 [1] : vector<8x8xf32> to vector<8xf32>
    %82 = vector.shape_cast %81 : vector<8xf32> to vector<8x1xf32>
    %83 = tpu.reciprocal %82 {approx = true} : vector<8x1xf32> -> vector<8x1xf32>
    %84 = vector.broadcast %83 : vector<8x1xf32> to vector<8x8xf32>
    %85 = arith.mulf %80, %84 : vector<8x8xf32>
    %86 = arith.truncf %85 : vector<8x8xf32> to vector<8x8xbf16>
    %cst_28 = arith.constant dense<0.000000e+00> : vector<8x32xf32>
    %87 = tpu.matmul %86, %71, %cst_28 {dimension_numbers = #tpu.dot_dimension_numbers<[1], [0], [0], [1], [0, 0, 1, 1], [], []>} : vector<8x8xbf16>, vector<8x32xbf16>, vector<8x32xf32> -> vector<8x32xf32>
    %88 = vector.extract_strided_slice %12 {offsets = [0, 96], sizes = [8, 32], strides = [1, 1]} : vector<8x128xf32> to vector<8x32xf32>
    %89 = arith.truncf %88 : vector<8x32xf32> to vector<8x32xbf16>
    %90 = vector.extract_strided_slice %13 {offsets = [0, 96], sizes = [8, 32], strides = [1, 1]} : vector<8x128xf32> to vector<8x32xf32>
    %91 = arith.truncf %90 : vector<8x32xf32> to vector<8x32xbf16>
    %92 = vector.extract_strided_slice %14 {offsets = [0, 96], sizes = [8, 32], strides = [1, 1]} : vector<8x128xf32> to vector<8x32xf32>
    %93 = arith.truncf %92 : vector<8x32xf32> to vector<8x32xbf16>
    %cst_29 = arith.constant dense<0.000000e+00> : vector<8x8xf32>
    %94 = tpu.matmul %89, %91, %cst_29 {dimension_numbers = #tpu.dot_dimension_numbers<[1], [1], [0], [0], [0, 0, 1, 0], [], []>} : vector<8x32xbf16>, vector<8x32xbf16>, vector<8x8xf32> -> vector<8x8xf32>
    %cst_30 = arith.constant 0.353553385 : f32
    %95 = vector.broadcast %cst_30 : f32 to vector<8x8xf32>
    %96 = arith.mulf %94, %95 : vector<8x8xf32>
    %97 = arith.addf %96, %21 : vector<8x8xf32>
    %cst_31 = arith.constant dense<0xFF800000> : vector<8xf32>
    %98 = vector.multi_reduction <maximumf>, %97, %cst_31 [1] : vector<8x8xf32> to vector<8xf32>
    %99 = vector.shape_cast %98 : vector<8xf32> to vector<8x1xf32>
    %100 = vector.broadcast %99 : vector<8x1xf32> to vector<8x8xf32>
    %101 = arith.subf %97, %100 : vector<8x8xf32>
    %102 = math.exp %101 : vector<8x8xf32>
    %cst_32 = arith.constant dense<0.000000e+00> : vector<8xf32>
    %103 = vector.multi_reduction <add>, %102, %cst_32 [1] : vector<8x8xf32> to vector<8xf32>
    %104 = vector.shape_cast %103 : vector<8xf32> to vector<8x1xf32>
    %105 = tpu.reciprocal %104 {approx = true} : vector<8x1xf32> -> vector<8x1xf32>
    %106 = vector.broadcast %105 : vector<8x1xf32> to vector<8x8xf32>
    %107 = arith.mulf %102, %106 : vector<8x8xf32>
    %108 = arith.truncf %107 : vector<8x8xf32> to vector<8x8xbf16>
    %cst_33 = arith.constant dense<0.000000e+00> : vector<8x32xf32>
    %109 = tpu.matmul %108, %93, %cst_33 {dimension_numbers = #tpu.dot_dimension_numbers<[1], [0], [0], [1], [0, 0, 1, 1], [], []>} : vector<8x8xbf16>, vector<8x32xbf16>, vector<8x32xf32> -> vector<8x32xf32>
    %110 = tpu.concatenate %43, %65, %87, %109 in 1 : vector<8x32xf32>, vector<8x32xf32>, vector<8x32xf32>, vector<8x32xf32> -> vector<8x128xf32>
    %111 = arith.truncf %110 : vector<8x128xf32> to vector<8x128xbf16>
    %c0_34 = arith.constant 0 : index
    %c0_35 = arith.constant 0 : index
    %c0_36 = arith.constant 0 : index
    %112 = vector.load %arg9[%c0_34, %c0_35, %c0_36] : memref<1x128x128xbf16, #tpu.memory_space<vmem>>, vector<1x128x128xbf16>
    %113 = vector.shape_cast %112 : vector<1x128x128xbf16> to vector<128x128xbf16>
    %cst_37 = arith.constant dense<0.000000e+00> : vector<8x128xf32>
    %114 = tpu.matmul %111, %113, %cst_37 {dimension_numbers = #tpu.dot_dimension_numbers<[1], [0], [0], [1], [0, 0, 1, 1], [], []>} : vector<8x128xbf16>, vector<128x128xbf16>, vector<8x128xf32> -> vector<8x128xf32>
    %c0_38 = arith.constant 0 : index
    %c0_39 = arith.constant 0 : index
    %c0_40 = arith.constant 0 : index
    %115 = vector.load %arg10[%c0_38, %c0_39, %c0_40] : memref<1x1x128xf32, #tpu.memory_space<vmem>>, vector<1x1x128xf32>
    %116 = vector.shape_cast %115 : vector<1x1x128xf32> to vector<1x128xf32>
    %117 = vector.broadcast %116 : vector<1x128xf32> to vector<8x128xf32>
    %118 = arith.addf %114, %117 : vector<8x128xf32>
    %119 = arith.addf %3, %118 : vector<8x128xf32>
    %c0_41 = arith.constant 0 : index
    %c0_42 = arith.constant 0 : index
    %c0_43 = arith.constant 0 : index
    %120 = vector.load %arg11[%c0_41, %c0_42, %c0_43] : memref<1x1x128xf32, #tpu.memory_space<vmem>>, vector<1x1x128xf32>
    %121 = vector.shape_cast %120 : vector<1x1x128xf32> to vector<1x128xf32>
    %c0_44 = arith.constant 0 : index
    %c0_45 = arith.constant 0 : index
    %c0_46 = arith.constant 0 : index
    %122 = vector.load %arg12[%c0_44, %c0_45, %c0_46] : memref<1x1x128xf32, #tpu.memory_space<vmem>>, vector<1x1x128xf32>
    %123 = vector.shape_cast %122 : vector<1x1x128xf32> to vector<1x128xf32>
    %124 = tpu.iota {dimensions = array<i32: 1>} : vector<8x128xi32>
    %c32_i32 = arith.constant 32 : i32
    %125 = vector.broadcast %c32_i32 : i32 to vector<8x128xi32>
    %126 = arith.cmpi slt, %124, %125 : vector<8x128xi32>
    %cst_47 = arith.constant dense<0.000000e+00> : vector<8xf32>
    %127 = vector.multi_reduction <add>, %119, %cst_47 [1] : vector<8x128xf32> to vector<8xf32>
    %128 = vector.shape_cast %127 : vector<8xf32> to vector<8x1xf32>
    %cst_48 = arith.constant 3.125000e-02 : f32
    %129 = vector.broadcast %cst_48 : f32 to vector<8x1xf32>
    %130 = arith.mulf %128, %129 : vector<8x1xf32>
    %131 = vector.broadcast %130 : vector<8x1xf32> to vector<8x128xf32>
    %132 = arith.subf %119, %131 : vector<8x128xf32>
    %cst_49 = arith.constant 0.000000e+00 : f32
    %133 = vector.broadcast %cst_49 : f32 to vector<8x128xf32>
    %134 = arith.select %126, %132, %133 : vector<8x128xi1>, vector<8x128xf32>
    %135 = arith.mulf %134, %134 : vector<8x128xf32>
    %cst_50 = arith.constant dense<0.000000e+00> : vector<8xf32>
    %136 = vector.multi_reduction <add>, %135, %cst_50 [1] : vector<8x128xf32> to vector<8xf32>
    %137 = vector.shape_cast %136 : vector<8xf32> to vector<8x1xf32>
    %cst_51 = arith.constant 3.125000e-02 : f32
    %138 = vector.broadcast %cst_51 : f32 to vector<8x1xf32>
    %139 = arith.mulf %137, %138 : vector<8x1xf32>
    %cst_52 = arith.constant 9.99999974E-6 : f32
    %140 = vector.broadcast %cst_52 : f32 to vector<8x1xf32>
    %141 = arith.addf %139, %140 : vector<8x1xf32>
    %142 = math.rsqrt %141 : vector<8x1xf32>
    %143 = vector.broadcast %142 : vector<8x1xf32> to vector<8x128xf32>
    %144 = arith.mulf %134, %143 : vector<8x128xf32>
    %145 = vector.broadcast %121 : vector<1x128xf32> to vector<8x128xf32>
    %146 = arith.mulf %144, %145 : vector<8x128xf32>
    %147 = vector.broadcast %123 : vector<1x128xf32> to vector<8x128xf32>
    %148 = arith.addf %146, %147 : vector<8x128xf32>
    %149 = arith.truncf %148 : vector<8x128xf32> to vector<8x128xbf16>
    %c0_53 = arith.constant 0 : index
    %c0_54 = arith.constant 0 : index
    %c0_55 = arith.constant 0 : index
    %150 = vector.load %arg13[%c0_53, %c0_54, %c0_55] : memref<1x128x128xbf16, #tpu.memory_space<vmem>>, vector<1x128x128xbf16>
    %151 = vector.shape_cast %150 : vector<1x128x128xbf16> to vector<128x128xbf16>
    %cst_56 = arith.constant dense<0.000000e+00> : vector<8x128xf32>
    %152 = tpu.matmul %149, %151, %cst_56 {dimension_numbers = #tpu.dot_dimension_numbers<[1], [0], [0], [1], [0, 0, 1, 1], [], []>} : vector<8x128xbf16>, vector<128x128xbf16>, vector<8x128xf32> -> vector<8x128xf32>
    %c0_57 = arith.constant 0 : index
    %c0_58 = arith.constant 0 : index
    %c0_59 = arith.constant 0 : index
    %153 = vector.load %arg14[%c0_57, %c0_58, %c0_59] : memref<1x1x128xf32, #tpu.memory_space<vmem>>, vector<1x1x128xf32>
    %154 = vector.shape_cast %153 : vector<1x1x128xf32> to vector<1x128xf32>
    %155 = vector.broadcast %154 : vector<1x128xf32> to vector<8x128xf32>
    %156 = arith.addf %152, %155 : vector<8x128xf32>
    %c0_60 = arith.constant 0 : index
    %c0_61 = arith.constant 0 : index
    %157 = vector.load %arg3[%c0_60, %c0_61] : memref<8x128xf32, #tpu.memory_space<vmem>>, vector<8x128xf32>
    %158 = arith.truncf %157 : vector<8x128xf32> to vector<8x128xbf16>
    %c0_62 = arith.constant 0 : index
    %c0_63 = arith.constant 0 : index
    %c0_64 = arith.constant 0 : index
    %159 = vector.load %arg15[%c0_62, %c0_63, %c0_64] : memref<1x128x256xbf16, #tpu.memory_space<vmem>>, vector<1x128x256xbf16>
    %160 = vector.shape_cast %159 : vector<1x128x256xbf16> to vector<128x256xbf16>
    %cst_65 = arith.constant dense<0.000000e+00> : vector<8x256xf32>
    %161 = tpu.matmul %158, %160, %cst_65 {dimension_numbers = #tpu.dot_dimension_numbers<[1], [0], [0], [1], [0, 0, 1, 1], [], []>} : vector<8x128xbf16>, vector<128x256xbf16>, vector<8x256xf32> -> vector<8x256xf32>
    %c0_66 = arith.constant 0 : index
    %c0_67 = arith.constant 0 : index
    %c0_68 = arith.constant 0 : index
    %162 = vector.load %arg16[%c0_66, %c0_67, %c0_68] : memref<1x1x256xf32, #tpu.memory_space<vmem>>, vector<1x1x256xf32>
    %163 = vector.shape_cast %162 : vector<1x1x256xf32> to vector<1x256xf32>
    %164 = vector.broadcast %163 : vector<1x256xf32> to vector<8x256xf32>
    %165 = arith.addf %161, %164 : vector<8x256xf32>
    %166 = vector.extract_strided_slice %165 {offsets = [0, 0], sizes = [8, 128], strides = [1, 1]} : vector<8x256xf32> to vector<8x128xf32>
    %167 = vector.extract_strided_slice %165 {offsets = [0, 128], sizes = [8, 128], strides = [1, 1]} : vector<8x256xf32> to vector<8x128xf32>
    %c0_69 = arith.constant 0 : index
    %c0_70 = arith.constant 0 : index
    %c0_71 = arith.constant 0 : index
    %168 = vector.load %arg6[%c0_69, %c0_70, %c0_71] : memref<1x1x8xf32, #tpu.memory_space<vmem>>, vector<1x1x8xf32>
    %169 = vector.shape_cast %168 : vector<1x1x8xf32> to vector<1x8xf32>
    %170 = vector.extract_strided_slice %156 {offsets = [0, 0], sizes = [8, 32], strides = [1, 1]} : vector<8x128xf32> to vector<8x32xf32>
    %171 = arith.truncf %170 : vector<8x32xf32> to vector<8x32xbf16>
    %172 = vector.extract_strided_slice %166 {offsets = [0, 0], sizes = [8, 32], strides = [1, 1]} : vector<8x128xf32> to vector<8x32xf32>
    %173 = arith.truncf %172 : vector<8x32xf32> to vector<8x32xbf16>
    %174 = vector.extract_strided_slice %167 {offsets = [0, 0], sizes = [8, 32], strides = [1, 1]} : vector<8x128xf32> to vector<8x32xf32>
    %175 = arith.truncf %174 : vector<8x32xf32> to vector<8x32xbf16>
    %cst_72 = arith.constant dense<0.000000e+00> : vector<8x8xf32>
    %176 = tpu.matmul %171, %173, %cst_72 {dimension_numbers = #tpu.dot_dimension_numbers<[1], [1], [0], [0], [0, 0, 1, 0], [], []>} : vector<8x32xbf16>, vector<8x32xbf16>, vector<8x8xf32> -> vector<8x8xf32>
    %cst_73 = arith.constant 0.353553385 : f32
    %177 = vector.broadcast %cst_73 : f32 to vector<8x8xf32>
    %178 = arith.mulf %176, %177 : vector<8x8xf32>
    %179 = vector.broadcast %169 : vector<1x8xf32> to vector<8x8xf32>
    %180 = arith.addf %178, %179 : vector<8x8xf32>
    %cst_74 = arith.constant dense<0xFF800000> : vector<8xf32>
    %181 = vector.multi_reduction <maximumf>, %180, %cst_74 [1] : vector<8x8xf32> to vector<8xf32>
    %182 = vector.shape_cast %181 : vector<8xf32> to vector<8x1xf32>
    %183 = vector.broadcast %182 : vector<8x1xf32> to vector<8x8xf32>
    %184 = arith.subf %180, %183 : vector<8x8xf32>
    %185 = math.exp %184 : vector<8x8xf32>
    %cst_75 = arith.constant dense<0.000000e+00> : vector<8xf32>
    %186 = vector.multi_reduction <add>, %185, %cst_75 [1] : vector<8x8xf32> to vector<8xf32>
    %187 = vector.shape_cast %186 : vector<8xf32> to vector<8x1xf32>
    %188 = tpu.reciprocal %187 {approx = true} : vector<8x1xf32> -> vector<8x1xf32>
    %189 = vector.broadcast %188 : vector<8x1xf32> to vector<8x8xf32>
    %190 = arith.mulf %185, %189 : vector<8x8xf32>
    %191 = arith.truncf %190 : vector<8x8xf32> to vector<8x8xbf16>
    %cst_76 = arith.constant dense<0.000000e+00> : vector<8x32xf32>
    %192 = tpu.matmul %191, %175, %cst_76 {dimension_numbers = #tpu.dot_dimension_numbers<[1], [0], [0], [1], [0, 0, 1, 1], [], []>} : vector<8x8xbf16>, vector<8x32xbf16>, vector<8x32xf32> -> vector<8x32xf32>
    %193 = vector.extract_strided_slice %156 {offsets = [0, 32], sizes = [8, 32], strides = [1, 1]} : vector<8x128xf32> to vector<8x32xf32>
    %194 = arith.truncf %193 : vector<8x32xf32> to vector<8x32xbf16>
    %195 = vector.extract_strided_slice %166 {offsets = [0, 32], sizes = [8, 32], strides = [1, 1]} : vector<8x128xf32> to vector<8x32xf32>
    %196 = arith.truncf %195 : vector<8x32xf32> to vector<8x32xbf16>
    %197 = vector.extract_strided_slice %167 {offsets = [0, 32], sizes = [8, 32], strides = [1, 1]} : vector<8x128xf32> to vector<8x32xf32>
    %198 = arith.truncf %197 : vector<8x32xf32> to vector<8x32xbf16>
    %cst_77 = arith.constant dense<0.000000e+00> : vector<8x8xf32>
    %199 = tpu.matmul %194, %196, %cst_77 {dimension_numbers = #tpu.dot_dimension_numbers<[1], [1], [0], [0], [0, 0, 1, 0], [], []>} : vector<8x32xbf16>, vector<8x32xbf16>, vector<8x8xf32> -> vector<8x8xf32>
    %cst_78 = arith.constant 0.353553385 : f32
    %200 = vector.broadcast %cst_78 : f32 to vector<8x8xf32>
    %201 = arith.mulf %199, %200 : vector<8x8xf32>
    %202 = vector.broadcast %169 : vector<1x8xf32> to vector<8x8xf32>
    %203 = arith.addf %201, %202 : vector<8x8xf32>
    %cst_79 = arith.constant dense<0xFF800000> : vector<8xf32>
    %204 = vector.multi_reduction <maximumf>, %203, %cst_79 [1] : vector<8x8xf32> to vector<8xf32>
    %205 = vector.shape_cast %204 : vector<8xf32> to vector<8x1xf32>
    %206 = vector.broadcast %205 : vector<8x1xf32> to vector<8x8xf32>
    %207 = arith.subf %203, %206 : vector<8x8xf32>
    %208 = math.exp %207 : vector<8x8xf32>
    %cst_80 = arith.constant dense<0.000000e+00> : vector<8xf32>
    %209 = vector.multi_reduction <add>, %208, %cst_80 [1] : vector<8x8xf32> to vector<8xf32>
    %210 = vector.shape_cast %209 : vector<8xf32> to vector<8x1xf32>
    %211 = tpu.reciprocal %210 {approx = true} : vector<8x1xf32> -> vector<8x1xf32>
    %212 = vector.broadcast %211 : vector<8x1xf32> to vector<8x8xf32>
    %213 = arith.mulf %208, %212 : vector<8x8xf32>
    %214 = arith.truncf %213 : vector<8x8xf32> to vector<8x8xbf16>
    %cst_81 = arith.constant dense<0.000000e+00> : vector<8x32xf32>
    %215 = tpu.matmul %214, %198, %cst_81 {dimension_numbers = #tpu.dot_dimension_numbers<[1], [0], [0], [1], [0, 0, 1, 1], [], []>} : vector<8x8xbf16>, vector<8x32xbf16>, vector<8x32xf32> -> vector<8x32xf32>
    %216 = vector.extract_strided_slice %156 {offsets = [0, 64], sizes = [8, 32], strides = [1, 1]} : vector<8x128xf32> to vector<8x32xf32>
    %217 = arith.truncf %216 : vector<8x32xf32> to vector<8x32xbf16>
    %218 = vector.extract_strided_slice %166 {offsets = [0, 64], sizes = [8, 32], strides = [1, 1]} : vector<8x128xf32> to vector<8x32xf32>
    %219 = arith.truncf %218 : vector<8x32xf32> to vector<8x32xbf16>
    %220 = vector.extract_strided_slice %167 {offsets = [0, 64], sizes = [8, 32], strides = [1, 1]} : vector<8x128xf32> to vector<8x32xf32>
    %221 = arith.truncf %220 : vector<8x32xf32> to vector<8x32xbf16>
    %cst_82 = arith.constant dense<0.000000e+00> : vector<8x8xf32>
    %222 = tpu.matmul %217, %219, %cst_82 {dimension_numbers = #tpu.dot_dimension_numbers<[1], [1], [0], [0], [0, 0, 1, 0], [], []>} : vector<8x32xbf16>, vector<8x32xbf16>, vector<8x8xf32> -> vector<8x8xf32>
    %cst_83 = arith.constant 0.353553385 : f32
    %223 = vector.broadcast %cst_83 : f32 to vector<8x8xf32>
    %224 = arith.mulf %222, %223 : vector<8x8xf32>
    %225 = vector.broadcast %169 : vector<1x8xf32> to vector<8x8xf32>
    %226 = arith.addf %224, %225 : vector<8x8xf32>
    %cst_84 = arith.constant dense<0xFF800000> : vector<8xf32>
    %227 = vector.multi_reduction <maximumf>, %226, %cst_84 [1] : vector<8x8xf32> to vector<8xf32>
    %228 = vector.shape_cast %227 : vector<8xf32> to vector<8x1xf32>
    %229 = vector.broadcast %228 : vector<8x1xf32> to vector<8x8xf32>
    %230 = arith.subf %226, %229 : vector<8x8xf32>
    %231 = math.exp %230 : vector<8x8xf32>
    %cst_85 = arith.constant dense<0.000000e+00> : vector<8xf32>
    %232 = vector.multi_reduction <add>, %231, %cst_85 [1] : vector<8x8xf32> to vector<8xf32>
    %233 = vector.shape_cast %232 : vector<8xf32> to vector<8x1xf32>
    %234 = tpu.reciprocal %233 {approx = true} : vector<8x1xf32> -> vector<8x1xf32>
    %235 = vector.broadcast %234 : vector<8x1xf32> to vector<8x8xf32>
    %236 = arith.mulf %231, %235 : vector<8x8xf32>
    %237 = arith.truncf %236 : vector<8x8xf32> to vector<8x8xbf16>
    %cst_86 = arith.constant dense<0.000000e+00> : vector<8x32xf32>
    %238 = tpu.matmul %237, %221, %cst_86 {dimension_numbers = #tpu.dot_dimension_numbers<[1], [0], [0], [1], [0, 0, 1, 1], [], []>} : vector<8x8xbf16>, vector<8x32xbf16>, vector<8x32xf32> -> vector<8x32xf32>
    %239 = vector.extract_strided_slice %156 {offsets = [0, 96], sizes = [8, 32], strides = [1, 1]} : vector<8x128xf32> to vector<8x32xf32>
    %240 = arith.truncf %239 : vector<8x32xf32> to vector<8x32xbf16>
    %241 = vector.extract_strided_slice %166 {offsets = [0, 96], sizes = [8, 32], strides = [1, 1]} : vector<8x128xf32> to vector<8x32xf32>
    %242 = arith.truncf %241 : vector<8x32xf32> to vector<8x32xbf16>
    %243 = vector.extract_strided_slice %167 {offsets = [0, 96], sizes = [8, 32], strides = [1, 1]} : vector<8x128xf32> to vector<8x32xf32>
    %244 = arith.truncf %243 : vector<8x32xf32> to vector<8x32xbf16>
    %cst_87 = arith.constant dense<0.000000e+00> : vector<8x8xf32>
    %245 = tpu.matmul %240, %242, %cst_87 {dimension_numbers = #tpu.dot_dimension_numbers<[1], [1], [0], [0], [0, 0, 1, 0], [], []>} : vector<8x32xbf16>, vector<8x32xbf16>, vector<8x8xf32> -> vector<8x8xf32>
    %cst_88 = arith.constant 0.353553385 : f32
    %246 = vector.broadcast %cst_88 : f32 to vector<8x8xf32>
    %247 = arith.mulf %245, %246 : vector<8x8xf32>
    %248 = vector.broadcast %169 : vector<1x8xf32> to vector<8x8xf32>
    %249 = arith.addf %247, %248 : vector<8x8xf32>
    %cst_89 = arith.constant dense<0xFF800000> : vector<8xf32>
    %250 = vector.multi_reduction <maximumf>, %249, %cst_89 [1] : vector<8x8xf32> to vector<8xf32>
    %251 = vector.shape_cast %250 : vector<8xf32> to vector<8x1xf32>
    %252 = vector.broadcast %251 : vector<8x1xf32> to vector<8x8xf32>
    %253 = arith.subf %249, %252 : vector<8x8xf32>
    %254 = math.exp %253 : vector<8x8xf32>
    %cst_90 = arith.constant dense<0.000000e+00> : vector<8xf32>
    %255 = vector.multi_reduction <add>, %254, %cst_90 [1] : vector<8x8xf32> to vector<8xf32>
    %256 = vector.shape_cast %255 : vector<8xf32> to vector<8x1xf32>
    %257 = tpu.reciprocal %256 {approx = true} : vector<8x1xf32> -> vector<8x1xf32>
    %258 = vector.broadcast %257 : vector<8x1xf32> to vector<8x8xf32>
    %259 = arith.mulf %254, %258 : vector<8x8xf32>
    %260 = arith.truncf %259 : vector<8x8xf32> to vector<8x8xbf16>
    %cst_91 = arith.constant dense<0.000000e+00> : vector<8x32xf32>
    %261 = tpu.matmul %260, %244, %cst_91 {dimension_numbers = #tpu.dot_dimension_numbers<[1], [0], [0], [1], [0, 0, 1, 1], [], []>} : vector<8x8xbf16>, vector<8x32xbf16>, vector<8x32xf32> -> vector<8x32xf32>
    %262 = tpu.concatenate %192, %215, %238, %261 in 1 : vector<8x32xf32>, vector<8x32xf32>, vector<8x32xf32>, vector<8x32xf32> -> vector<8x128xf32>
    %263 = arith.truncf %262 : vector<8x128xf32> to vector<8x128xbf16>
    %c0_92 = arith.constant 0 : index
    %c0_93 = arith.constant 0 : index
    %c0_94 = arith.constant 0 : index
    %264 = vector.load %arg17[%c0_92, %c0_93, %c0_94] : memref<1x128x128xbf16, #tpu.memory_space<vmem>>, vector<1x128x128xbf16>
    %265 = vector.shape_cast %264 : vector<1x128x128xbf16> to vector<128x128xbf16>
    %cst_95 = arith.constant dense<0.000000e+00> : vector<8x128xf32>
    %266 = tpu.matmul %263, %265, %cst_95 {dimension_numbers = #tpu.dot_dimension_numbers<[1], [0], [0], [1], [0, 0, 1, 1], [], []>} : vector<8x128xbf16>, vector<128x128xbf16>, vector<8x128xf32> -> vector<8x128xf32>
    %c0_96 = arith.constant 0 : index
    %c0_97 = arith.constant 0 : index
    %c0_98 = arith.constant 0 : index
    %267 = vector.load %arg18[%c0_96, %c0_97, %c0_98] : memref<1x1x128xf32, #tpu.memory_space<vmem>>, vector<1x1x128xf32>
    %268 = vector.shape_cast %267 : vector<1x1x128xf32> to vector<1x128xf32>
    %269 = vector.broadcast %268 : vector<1x128xf32> to vector<8x128xf32>
    %270 = arith.addf %266, %269 : vector<8x128xf32>
    %271 = arith.addf %148, %270 : vector<8x128xf32>
    %c0_99 = arith.constant 0 : index
    %c0_100 = arith.constant 0 : index
    %c0_101 = arith.constant 0 : index
    %272 = vector.load %arg19[%c0_99, %c0_100, %c0_101] : memref<1x1x128xf32, #tpu.memory_space<vmem>>, vector<1x1x128xf32>
    %273 = vector.shape_cast %272 : vector<1x1x128xf32> to vector<1x128xf32>
    %c0_102 = arith.constant 0 : index
    %c0_103 = arith.constant 0 : index
    %c0_104 = arith.constant 0 : index
    %274 = vector.load %arg20[%c0_102, %c0_103, %c0_104] : memref<1x1x128xf32, #tpu.memory_space<vmem>>, vector<1x1x128xf32>
    %275 = vector.shape_cast %274 : vector<1x1x128xf32> to vector<1x128xf32>
    %276 = tpu.iota {dimensions = array<i32: 1>} : vector<8x128xi32>
    %c32_i32_105 = arith.constant 32 : i32
    %277 = vector.broadcast %c32_i32_105 : i32 to vector<8x128xi32>
    %278 = arith.cmpi slt, %276, %277 : vector<8x128xi32>
    %cst_106 = arith.constant dense<0.000000e+00> : vector<8xf32>
    %279 = vector.multi_reduction <add>, %271, %cst_106 [1] : vector<8x128xf32> to vector<8xf32>
    %280 = vector.shape_cast %279 : vector<8xf32> to vector<8x1xf32>
    %cst_107 = arith.constant 3.125000e-02 : f32
    %281 = vector.broadcast %cst_107 : f32 to vector<8x1xf32>
    %282 = arith.mulf %280, %281 : vector<8x1xf32>
    %283 = vector.broadcast %282 : vector<8x1xf32> to vector<8x128xf32>
    %284 = arith.subf %271, %283 : vector<8x128xf32>
    %cst_108 = arith.constant 0.000000e+00 : f32
    %285 = vector.broadcast %cst_108 : f32 to vector<8x128xf32>
    %286 = arith.select %278, %284, %285 : vector<8x128xi1>, vector<8x128xf32>
    %287 = arith.mulf %286, %286 : vector<8x128xf32>
    %cst_109 = arith.constant dense<0.000000e+00> : vector<8xf32>
    %288 = vector.multi_reduction <add>, %287, %cst_109 [1] : vector<8x128xf32> to vector<8xf32>
    %289 = vector.shape_cast %288 : vector<8xf32> to vector<8x1xf32>
    %cst_110 = arith.constant 3.125000e-02 : f32
    %290 = vector.broadcast %cst_110 : f32 to vector<8x1xf32>
    %291 = arith.mulf %289, %290 : vector<8x1xf32>
    %cst_111 = arith.constant 9.99999974E-6 : f32
    %292 = vector.broadcast %cst_111 : f32 to vector<8x1xf32>
    %293 = arith.addf %291, %292 : vector<8x1xf32>
    %294 = math.rsqrt %293 : vector<8x1xf32>
    %295 = vector.broadcast %294 : vector<8x1xf32> to vector<8x128xf32>
    %296 = arith.mulf %286, %295 : vector<8x128xf32>
    %297 = vector.broadcast %273 : vector<1x128xf32> to vector<8x128xf32>
    %298 = arith.mulf %296, %297 : vector<8x128xf32>
    %299 = vector.broadcast %275 : vector<1x128xf32> to vector<8x128xf32>
    %300 = arith.addf %298, %299 : vector<8x128xf32>
    %301 = arith.truncf %300 : vector<8x128xf32> to vector<8x128xbf16>
    %c0_112 = arith.constant 0 : index
    %c0_113 = arith.constant 0 : index
    %c0_114 = arith.constant 0 : index
    %302 = vector.load %arg21[%c0_112, %c0_113, %c0_114] : memref<1x128x128xbf16, #tpu.memory_space<vmem>>, vector<1x128x128xbf16>
    %303 = vector.shape_cast %302 : vector<1x128x128xbf16> to vector<128x128xbf16>
    %cst_115 = arith.constant dense<0.000000e+00> : vector<8x128xf32>
    %304 = tpu.matmul %301, %303, %cst_115 {dimension_numbers = #tpu.dot_dimension_numbers<[1], [0], [0], [1], [0, 0, 1, 1], [], []>} : vector<8x128xbf16>, vector<128x128xbf16>, vector<8x128xf32> -> vector<8x128xf32>
    %c0_116 = arith.constant 0 : index
    %c0_117 = arith.constant 0 : index
    %c0_118 = arith.constant 0 : index
    %305 = vector.load %arg22[%c0_116, %c0_117, %c0_118] : memref<1x1x128xf32, #tpu.memory_space<vmem>>, vector<1x1x128xf32>
    %306 = vector.shape_cast %305 : vector<1x1x128xf32> to vector<1x128xf32>
    %307 = vector.broadcast %306 : vector<1x128xf32> to vector<8x128xf32>
    %308 = arith.addf %304, %307 : vector<8x128xf32>
    %cst_119 = arith.constant 0.000000e+00 : f32
    %309 = vector.broadcast %cst_119 : f32 to vector<8x128xf32>
    %310 = arith.maximumf %308, %309 : vector<8x128xf32>
    %311 = arith.truncf %310 : vector<8x128xf32> to vector<8x128xbf16>
    %c0_120 = arith.constant 0 : index
    %c0_121 = arith.constant 0 : index
    %c0_122 = arith.constant 0 : index
    %312 = vector.load %arg23[%c0_120, %c0_121, %c0_122] : memref<1x128x128xbf16, #tpu.memory_space<vmem>>, vector<1x128x128xbf16>
    %313 = vector.shape_cast %312 : vector<1x128x128xbf16> to vector<128x128xbf16>
    %cst_123 = arith.constant dense<0.000000e+00> : vector<8x128xf32>
    %314 = tpu.matmul %311, %313, %cst_123 {dimension_numbers = #tpu.dot_dimension_numbers<[1], [0], [0], [1], [0, 0, 1, 1], [], []>} : vector<8x128xbf16>, vector<128x128xbf16>, vector<8x128xf32> -> vector<8x128xf32>
    %c0_124 = arith.constant 0 : index
    %c0_125 = arith.constant 0 : index
    %c0_126 = arith.constant 0 : index
    %315 = vector.load %arg24[%c0_124, %c0_125, %c0_126] : memref<1x1x128xf32, #tpu.memory_space<vmem>>, vector<1x1x128xf32>
    %316 = vector.shape_cast %315 : vector<1x1x128xf32> to vector<1x128xf32>
    %317 = vector.broadcast %316 : vector<1x128xf32> to vector<8x128xf32>
    %318 = arith.addf %314, %317 : vector<8x128xf32>
    %319 = arith.addf %300, %318 : vector<8x128xf32>
    %c0_127 = arith.constant 0 : index
    %c0_128 = arith.constant 0 : index
    %c0_129 = arith.constant 0 : index
    %320 = vector.load %arg25[%c0_127, %c0_128, %c0_129] : memref<1x1x128xf32, #tpu.memory_space<vmem>>, vector<1x1x128xf32>
    %321 = vector.shape_cast %320 : vector<1x1x128xf32> to vector<1x128xf32>
    %c0_130 = arith.constant 0 : index
    %c0_131 = arith.constant 0 : index
    %c0_132 = arith.constant 0 : index
    %322 = vector.load %arg26[%c0_130, %c0_131, %c0_132] : memref<1x1x128xf32, #tpu.memory_space<vmem>>, vector<1x1x128xf32>
    %323 = vector.shape_cast %322 : vector<1x1x128xf32> to vector<1x128xf32>
    %324 = tpu.iota {dimensions = array<i32: 1>} : vector<8x128xi32>
    %c32_i32_133 = arith.constant 32 : i32
    %325 = vector.broadcast %c32_i32_133 : i32 to vector<8x128xi32>
    %326 = arith.cmpi slt, %324, %325 : vector<8x128xi32>
    %cst_134 = arith.constant dense<0.000000e+00> : vector<8xf32>
    %327 = vector.multi_reduction <add>, %319, %cst_134 [1] : vector<8x128xf32> to vector<8xf32>
    %328 = vector.shape_cast %327 : vector<8xf32> to vector<8x1xf32>
    %cst_135 = arith.constant 3.125000e-02 : f32
    %329 = vector.broadcast %cst_135 : f32 to vector<8x1xf32>
    %330 = arith.mulf %328, %329 : vector<8x1xf32>
    %331 = vector.broadcast %330 : vector<8x1xf32> to vector<8x128xf32>
    %332 = arith.subf %319, %331 : vector<8x128xf32>
    %cst_136 = arith.constant 0.000000e+00 : f32
    %333 = vector.broadcast %cst_136 : f32 to vector<8x128xf32>
    %334 = arith.select %326, %332, %333 : vector<8x128xi1>, vector<8x128xf32>
    %335 = arith.mulf %334, %334 : vector<8x128xf32>
    %cst_137 = arith.constant dense<0.000000e+00> : vector<8xf32>
    %336 = vector.multi_reduction <add>, %335, %cst_137 [1] : vector<8x128xf32> to vector<8xf32>
    %337 = vector.shape_cast %336 : vector<8xf32> to vector<8x1xf32>
    %cst_138 = arith.constant 3.125000e-02 : f32
    %338 = vector.broadcast %cst_138 : f32 to vector<8x1xf32>
    %339 = arith.mulf %337, %338 : vector<8x1xf32>
    %cst_139 = arith.constant 9.99999974E-6 : f32
    %340 = vector.broadcast %cst_139 : f32 to vector<8x1xf32>
    %341 = arith.addf %339, %340 : vector<8x1xf32>
    %342 = math.rsqrt %341 : vector<8x1xf32>
    %343 = vector.broadcast %342 : vector<8x1xf32> to vector<8x128xf32>
    %344 = arith.mulf %334, %343 : vector<8x128xf32>
    %345 = vector.broadcast %321 : vector<1x128xf32> to vector<8x128xf32>
    %346 = arith.mulf %344, %345 : vector<8x128xf32>
    %347 = vector.broadcast %323 : vector<1x128xf32> to vector<8x128xf32>
    %348 = arith.addf %346, %347 : vector<8x128xf32>
    %c0_140 = arith.constant 0 : index
    %c0_141 = arith.constant 0 : index
    %349 = vector.load %arg29[%c0_140, %c0_141] : memref<8x128xf32, #tpu.memory_space<vmem>>, vector<8x128xf32>
    tpu.vector_store %arg29[%c0_140, %c0_141], %348 {strides = array<i32>} : memref<8x128xf32, #tpu.memory_space<vmem>>, vector<8x128xf32>,
    %c1_i32 = arith.constant 1 : i32
    %350 = arith.cmpi eq, %arg1, %c1_i32 : i32
    %351 = arith.extui %350 : i1 to i32
    %c0_i32_142 = arith.constant 0 : i32
    %352 = arith.cmpi ne, %351, %c0_i32_142 : i32
    scf.if %352 {
      %c0_143 = arith.constant 0 : index
      %c0_144 = arith.constant 0 : index
      %353 = vector.load %arg27[%c0_143, %c0_144] : memref<1x128xf32, #tpu.memory_space<vmem>>, vector<1x128xf32>
      %c0_145 = arith.constant 0 : index
      %c0_146 = arith.constant 0 : index
      %354 = vector.load %arg28[%c0_145, %c0_146] : memref<1x128xf32, #tpu.memory_space<vmem>>, vector<1x128xf32>
      %355 = tpu.iota {dimensions = array<i32: 1>} : vector<8x128xi32>
      %c32_i32_147 = arith.constant 32 : i32
      %356 = vector.broadcast %c32_i32_147 : i32 to vector<8x128xi32>
      %357 = arith.cmpi slt, %355, %356 : vector<8x128xi32>
      %cst_148 = arith.constant dense<0.000000e+00> : vector<8xf32>
      %358 = vector.multi_reduction <add>, %348, %cst_148 [1] : vector<8x128xf32> to vector<8xf32>
      %359 = vector.shape_cast %358 : vector<8xf32> to vector<8x1xf32>
      %cst_149 = arith.constant 3.125000e-02 : f32
      %360 = vector.broadcast %cst_149 : f32 to vector<8x1xf32>
      %361 = arith.mulf %359, %360 : vector<8x1xf32>
      %362 = vector.broadcast %361 : vector<8x1xf32> to vector<8x128xf32>
      %363 = arith.subf %348, %362 : vector<8x128xf32>
      %cst_150 = arith.constant 0.000000e+00 : f32
      %364 = vector.broadcast %cst_150 : f32 to vector<8x128xf32>
      %365 = arith.select %357, %363, %364 : vector<8x128xi1>, vector<8x128xf32>
      %366 = arith.mulf %365, %365 : vector<8x128xf32>
      %cst_151 = arith.constant dense<0.000000e+00> : vector<8xf32>
      %367 = vector.multi_reduction <add>, %366, %cst_151 [1] : vector<8x128xf32> to vector<8xf32>
      %368 = vector.shape_cast %367 : vector<8xf32> to vector<8x1xf32>
      %cst_152 = arith.constant 3.125000e-02 : f32
      %369 = vector.broadcast %cst_152 : f32 to vector<8x1xf32>
      %370 = arith.mulf %368, %369 : vector<8x1xf32>
      %cst_153 = arith.constant 9.99999974E-6 : f32
      %371 = vector.broadcast %cst_153 : f32 to vector<8x1xf32>
      %372 = arith.addf %370, %371 : vector<8x1xf32>
      %373 = math.rsqrt %372 : vector<8x1xf32>
      %374 = vector.broadcast %373 : vector<8x1xf32> to vector<8x128xf32>
      %375 = arith.mulf %365, %374 : vector<8x128xf32>
      %376 = vector.broadcast %353 : vector<1x128xf32> to vector<8x128xf32>
      %377 = arith.mulf %375, %376 : vector<8x128xf32>
      %378 = vector.broadcast %354 : vector<1x128xf32> to vector<8x128xf32>
      %379 = arith.addf %377, %378 : vector<8x128xf32>
      %c0_154 = arith.constant 0 : index
      %c0_155 = arith.constant 0 : index
      %380 = vector.load %arg29[%c0_154, %c0_155] : memref<8x128xf32, #tpu.memory_space<vmem>>, vector<8x128xf32>
      tpu.vector_store %arg29[%c0_154, %c0_155], %379 {strides = array<i32>} : memref<8x128xf32, #tpu.memory_space<vmem>>, vector<8x128xf32>,
    } else {
    }
    return
  }
  func.func @transform_0(%arg0: i32, %arg1: i32) -> (i32, i32) {
    %c0_i32 = arith.constant 0 : i32
    %c0_i32_0 = arith.constant 0 : i32
    return %arg0, %c0_i32 : i32, i32
  }
  func.func @transform_1(%arg0: i32, %arg1: i32) -> (i32, i32) {
    %c0_i32 = arith.constant 0 : i32
    %c0_i32_0 = arith.constant 0 : i32
    return %arg0, %c0_i32 : i32, i32
  }
  func.func @transform_2(%arg0: i32, %arg1: i32) -> (i32, i32) {
    %c0_i32 = arith.constant 0 : i32
    %c0_i32_0 = arith.constant 0 : i32
    %c0_i32_1 = arith.constant 0 : i32
    return %c0_i32, %c0_i32_0 : i32, i32
  }
  func.func @transform_3(%arg0: i32, %arg1: i32) -> (i32, i32, i32) {
    %c0_i32 = arith.constant 0 : i32
    %c0_i32_0 = arith.constant 0 : i32
    %c0_i32_1 = arith.constant 0 : i32
    return %arg0, %c0_i32, %c0_i32_0 : i32, i32, i32
  }
  func.func @transform_4(%arg0: i32, %arg1: i32) -> (i32, i32, i32) {
    %c0_i32 = arith.constant 0 : i32
    %c0_i32_0 = arith.constant 0 : i32
    %c0_i32_1 = arith.constant 0 : i32
    return %arg0, %c0_i32, %c0_i32_0 : i32, i32, i32
  }
  func.func @transform_5(%arg0: i32, %arg1: i32) -> (i32, i32, i32) {
    %c0_i32 = arith.constant 0 : i32
    %c0_i32_0 = arith.constant 0 : i32
    %c0_i32_1 = arith.constant 0 : i32
    return %arg1, %c0_i32, %c0_i32_0 : i32, i32, i32
  }
  func.func @transform_6(%arg0: i32, %arg1: i32) -> (i32, i32, i32) {
    %c0_i32 = arith.constant 0 : i32
    %c0_i32_0 = arith.constant 0 : i32
    %c0_i32_1 = arith.constant 0 : i32
    return %arg1, %c0_i32, %c0_i32_0 : i32, i32, i32
  }
  func.func @transform_7(%arg0: i32, %arg1: i32) -> (i32, i32, i32) {
    %c0_i32 = arith.constant 0 : i32
    %c0_i32_0 = arith.constant 0 : i32
    %c0_i32_1 = arith.constant 0 : i32
    return %arg1, %c0_i32, %c0_i32_0 : i32, i32, i32
  }
  func.func @transform_8(%arg0: i32, %arg1: i32) -> (i32, i32, i32) {
    %c0_i32 = arith.constant 0 : i32
    %c0_i32_0 = arith.constant 0 : i32
    %c0_i32_1 = arith.constant 0 : i32
    return %arg1, %c0_i32, %c0_i32_0 : i32, i32, i32
  }
  func.func @transform_9(%arg0: i32, %arg1: i32) -> (i32, i32, i32) {
    %c0_i32 = arith.constant 0 : i32
    %c0_i32_0 = arith.constant 0 : i32
    %c0_i32_1 = arith.constant 0 : i32
    return %arg1, %c0_i32, %c0_i32_0 : i32, i32, i32
  }
  func.func @transform_10(%arg0: i32, %arg1: i32) -> (i32, i32, i32) {
    %c0_i32 = arith.constant 0 : i32
    %c0_i32_0 = arith.constant 0 : i32
    %c0_i32_1 = arith.constant 0 : i32
    return %arg1, %c0_i32, %c0_i32_0 : i32, i32, i32
  }
  func.func @transform_11(%arg0: i32, %arg1: i32) -> (i32, i32, i32) {
    %c0_i32 = arith.constant 0 : i32
    %c0_i32_0 = arith.constant 0 : i32
    %c0_i32_1 = arith.constant 0 : i32
    return %arg1, %c0_i32, %c0_i32_0 : i32, i32, i32
  }
  func.func @transform_12(%arg0: i32, %arg1: i32) -> (i32, i32, i32) {
    %c0_i32 = arith.constant 0 : i32
    %c0_i32_0 = arith.constant 0 : i32
    %c0_i32_1 = arith.constant 0 : i32
    return %arg1, %c0_i32, %c0_i32_0 : i32, i32, i32
  }
  func.func @transform_13(%arg0: i32, %arg1: i32) -> (i32, i32, i32) {
    %c0_i32 = arith.constant 0 : i32
    %c0_i32_0 = arith.constant 0 : i32
    %c0_i32_1 = arith.constant 0 : i32
    return %arg1, %c0_i32, %c0_i32_0 : i32, i32, i32
  }
  func.func @transform_14(%arg0: i32, %arg1: i32) -> (i32, i32, i32) {
    %c0_i32 = arith.constant 0 : i32
    %c0_i32_0 = arith.constant 0 : i32
    %c0_i32_1 = arith.constant 0 : i32
    return %arg1, %c0_i32, %c0_i32_0 : i32, i32, i32
  }
  func.func @transform_15(%arg0: i32, %arg1: i32) -> (i32, i32, i32) {
    %c0_i32 = arith.constant 0 : i32
    %c0_i32_0 = arith.constant 0 : i32
    %c0_i32_1 = arith.constant 0 : i32
    return %arg1, %c0_i32, %c0_i32_0 : i32, i32, i32
  }
  func.func @transform_16(%arg0: i32, %arg1: i32) -> (i32, i32, i32) {
    %c0_i32 = arith.constant 0 : i32
    %c0_i32_0 = arith.constant 0 : i32
    %c0_i32_1 = arith.constant 0 : i32
    return %arg1, %c0_i32, %c0_i32_0 : i32, i32, i32
  }
  func.func @transform_17(%arg0: i32, %arg1: i32) -> (i32, i32, i32) {
    %c0_i32 = arith.constant 0 : i32
    %c0_i32_0 = arith.constant 0 : i32
    %c0_i32_1 = arith.constant 0 : i32
    return %arg1, %c0_i32, %c0_i32_0 : i32, i32, i32
  }
  func.func @transform_18(%arg0: i32, %arg1: i32) -> (i32, i32, i32) {
    %c0_i32 = arith.constant 0 : i32
    %c0_i32_0 = arith.constant 0 : i32
    %c0_i32_1 = arith.constant 0 : i32
    return %arg1, %c0_i32, %c0_i32_0 : i32, i32, i32
  }
  func.func @transform_19(%arg0: i32, %arg1: i32) -> (i32, i32, i32) {
    %c0_i32 = arith.constant 0 : i32
    %c0_i32_0 = arith.constant 0 : i32
    %c0_i32_1 = arith.constant 0 : i32
    return %arg1, %c0_i32, %c0_i32_0 : i32, i32, i32
  }
  func.func @transform_20(%arg0: i32, %arg1: i32) -> (i32, i32, i32) {
    %c0_i32 = arith.constant 0 : i32
    %c0_i32_0 = arith.constant 0 : i32
    %c0_i32_1 = arith.constant 0 : i32
    return %arg1, %c0_i32, %c0_i32_0 : i32, i32, i32
  }
  func.func @transform_21(%arg0: i32, %arg1: i32) -> (i32, i32, i32) {
    %c0_i32 = arith.constant 0 : i32
    %c0_i32_0 = arith.constant 0 : i32
    %c0_i32_1 = arith.constant 0 : i32
    return %arg1, %c0_i32, %c0_i32_0 : i32, i32, i32
  }
  func.func @transform_22(%arg0: i32, %arg1: i32) -> (i32, i32, i32) {
    %c0_i32 = arith.constant 0 : i32
    %c0_i32_0 = arith.constant 0 : i32
    %c0_i32_1 = arith.constant 0 : i32
    return %arg1, %c0_i32, %c0_i32_0 : i32, i32, i32
  }
  func.func @transform_23(%arg0: i32, %arg1: i32) -> (i32, i32, i32) {
    %c0_i32 = arith.constant 0 : i32
    %c0_i32_0 = arith.constant 0 : i32
    %c0_i32_1 = arith.constant 0 : i32
    return %arg1, %c0_i32, %c0_i32_0 : i32, i32, i32
  }
  func.func @transform_24(%arg0: i32, %arg1: i32) -> (i32, i32, i32) {
    %c0_i32 = arith.constant 0 : i32
    %c0_i32_0 = arith.constant 0 : i32
    %c0_i32_1 = arith.constant 0 : i32
    return %arg1, %c0_i32, %c0_i32_0 : i32, i32, i32
  }
  func.func @transform_25(%arg0: i32, %arg1: i32) -> (i32, i32) {
    %c0_i32 = arith.constant 0 : i32
    %c0_i32_0 = arith.constant 0 : i32
    %c0_i32_1 = arith.constant 0 : i32
    return %c0_i32, %c0_i32_0 : i32, i32
  }
  func.func @transform_26(%arg0: i32, %arg1: i32) -> (i32, i32) {
    %c0_i32 = arith.constant 0 : i32
    %c0_i32_0 = arith.constant 0 : i32
    %c0_i32_1 = arith.constant 0 : i32
    return %c0_i32, %c0_i32_0 : i32, i32
  }
  func.func @transform_27(%arg0: i32, %arg1: i32) -> (i32, i32) {
    %c0_i32 = arith.constant 0 : i32
    %c0_i32_0 = arith.constant 0 : i32
    return %arg0, %c0_i32 : i32, i32
  }
}

</mosaic_0001>

<llo_original>
// kernel: seq2seq_transformer_forward.5
$region0: #{seq2seq_transformer_forward.5}
  #allocation0 [shape = 'u32[]', space=smem, size = 0x4, offset = 0x4, fixed_abs, tag = 'smem constant byte address 0x4 - core index']
  #allocation1 [shape = 'u32[72,128]{1,0:T(1,128)}', space=vmem, size = 0x9000, scoped, tag = 'internal scratch']
  %s0 = inlined_call_operand.vmem [shape: f32[16,128], index: 0, kind: input, shape index: {}]
  %s1 = inlined_call_operand.vmem [shape: bf16[128,128], index: 1, kind: input, shape index: {}]
  %s2 = inlined_call_operand.vmem [shape: f32[1,128], index: 2, kind: input, shape index: {}]
  %s3 = inlined_call_operand.vmem [shape: f32[16,128], index: 3, kind: output, shape index: {}]
  %s4 = sld [smem:[#allocation0]]
  $region45: #{seq2seq_transformer_forward.5} parent=0
    _
  %s6 = ssub.s32 1, %s4
  %s7 = scalar_select 0, %s6, %s4
  loop: start=0, step=1, limit=4
  $region2: #{seq2seq_transformer_forward.5} parent=0 // loop_pre_header
    _
  $region3: #{seq2seq_transformer_forward.5} parent=0 // loop_header
    %s9 = sphi 0, %s13
    %p10 = scmp.ge.s32.totalorder %s9, 4
    %s19 = sphi 0, %s21
    %s22 = sphi 0, %s19
    %s23 = sphi 0, %s22
    %s39 = sphi 0, %s23
    %s43 = sphi 0, %s43
    %s45 = sphi 0, %s43
    %s46 = sphi 0, %s45
    %s60 = sphi 0, %s46
    %s64 = sphi 0, %s64
    %s66 = sphi 0, %s64
    %s67 = sphi 0, %s66
    %s81 = sphi 0, %s67
    %s87 = sphi 0, %s89
    %s90 = sphi 0, %s87
    %s91 = sphi 0, %s90
    %s107 = sphi 0, %s91
  $region4: #{seq2seq_transformer_forward.5} parent=0 // loop_header_branch
    %12 = sbr.rel (%p10) target = $region8
  $region5: #{seq2seq_transformer_forward.5} parent=0 // loop_body
    %s14 = ssub.s32 %s9, 1
    %s15 = ssub.s32 %s9, 2
    %s16 = sadd.s32 %s9, 1
    %s17 = ssub.s32 %s9, %s16
    %p18 = scmp.eq.s32.totalorder %s17, 0
    %s20 = sadd.s32 %s19, 1
    %s21 = scalar_select %p18, %s19, %s20
    %p24 = pneg %p18
    %p25 = scmp.eq.s32.totalorder %s9, 1
    %p26 = por %p24, %p25
    %p27 = scmp.ne.s32.totalorder %s19, %s22
    %p28 = scmp.eq.s32.totalorder %s9, 0
    %p29 = por %p27, %p28
    %p30 = scmp.ne.s32.totalorder %s19, %s22
    %p31 = scmp.eq.s32.totalorder %s14, 1
    %p32 = por %p30, %p31
    %p33 = scmp.ne.s32.totalorder %s22, %s23
    %p34 = scmp.eq.s32.totalorder %s14, 0
    %p35 = por %p33, %p34
    %p36 = scmp.ne.s32.totalorder %s22, %s23
    %p37 = scmp.eq.s32.totalorder %s15, 1
    %p38 = por %p36, %p37
    %p40 = scmp.ne.s32.totalorder %s23, %s39
    %p41 = scmp.eq.s32.totalorder %s15, 0
    %p42 = por %p40, %p41
    %s44 = sadd.s32 %s43, 1
    %p47 = scmp.eq.s32.totalorder %s9, 1
    %p48 = scmp.ne.s32.totalorder %s43, %s45
    %p49 = scmp.eq.s32.totalorder %s9, 0
    %p50 = por %p48, %p49
    %p51 = scmp.ne.s32.totalorder %s43, %s45
    %p52 = scmp.eq.s32.totalorder %s14, 1
    %p53 = por %p51, %p52
    %p54 = scmp.ne.s32.totalorder %s45, %s46
    %p55 = scmp.eq.s32.totalorder %s14, 0
    %p56 = por %p54, %p55
    %p57 = scmp.ne.s32.totalorder %s45, %s46
    %p58 = scmp.eq.s32.totalorder %s15, 1
    %p59 = por %p57, %p58
    %p61 = scmp.ne.s32.totalorder %s46, %s60
    %p62 = scmp.eq.s32.totalorder %s15, 0
    %p63 = por %p61, %p62
    %s65 = sadd.s32 %s64, 1
    %p68 = scmp.eq.s32.totalorder %s9, 1
    %p69 = scmp.ne.s32.totalorder %s64, %s66
    %p70 = scmp.eq.s32.totalorder %s9, 0
    %p71 = por %p69, %p70
    %p72 = scmp.ne.s32.totalorder %s64, %s66
    %p73 = scmp.eq.s32.totalorder %s14, 1
    %p74 = por %p72, %p73
    %p75 = scmp.ne.s32.totalorder %s66, %s67
    %p76 = scmp.eq.s32.totalorder %s14, 0
    %p77 = por %p75, %p76
    %p78 = scmp.ne.s32.totalorder %s66, %s67
    %p79 = scmp.eq.s32.totalorder %s15, 1
    %p80 = por %p78, %p79
    %p82 = scmp.ne.s32.totalorder %s67, %s81
    %p83 = scmp.eq.s32.totalorder %s15, 0
    %p84 = por %p82, %p83
    %s85 = ssub.s32 %s9, %s16
    %p86 = scmp.eq.s32.totalorder %s85, 0
    %s88 = sadd.s32 %s87, 1
    %s89 = scalar_select %p86, %s87, %s88
    %p92 = pneg %p86
    %p93 = scmp.eq.s32.totalorder %s9, 1
    %p94 = por %p92, %p93
    %p95 = scmp.ne.s32.totalorder %s87, %s90
    %p96 = scmp.eq.s32.totalorder %s9, 0
    %p97 = por %p95, %p96
    %p98 = scmp.ne.s32.totalorder %s87, %s90
    %p99 = scmp.eq.s32.totalorder %s14, 1
    %p100 = por %p98, %p99
    %p101 = scmp.ne.s32.totalorder %s90, %s91
    %p102 = scmp.eq.s32.totalorder %s14, 0
    %p103 = por %p101, %p102
    %p104 = scmp.ne.s32.totalorder %s90, %s91
    %p105 = scmp.eq.s32.totalorder %s15, 1
    %p106 = por %p104, %p105
    %p108 = scmp.ne.s32.totalorder %s91, %s107
    %p109 = scmp.eq.s32.totalorder %s15, 0
    %p110 = por %p108, %p109
    %p111 = scmp.le.s32.totalorder 1, %s9
    %p112 = scmp.lt.s32.totalorder %s9, 3
    %p113 = pnand %p111, %p112
    %p114 = pneg %p113
    // Predicated region
    $region9: #{seq2seq_transformer_forward.5} parent=5 // pred_check
      _
    $region10: #{seq2seq_transformer_forward.5} parent=5 // pred_check_branch
      %116 = sbr.rel (%p113) target = $region12
    $region11: #{seq2seq_transformer_forward.5} parent=5 // pred_region
      %s117 = ssub.s32 %s9, 1
      // Predicated region
      $region13: #{seq2seq_transformer_forward.5} parent=11 // pred_check
        %p118 = pneg %p56
      $region14: #{seq2seq_transformer_forward.5} parent=11 // pred_check_branch
        %120 = sbr.rel (%p118) target = $region16
      $region15: #{seq2seq_transformer_forward.5} parent=11 // pred_region
        _
      $region16: #{seq2seq_transformer_forward.5} parent=11 // pred_fallthru
        _
      // Predicated region
      $region17: #{seq2seq_transformer_forward.5} parent=11 // pred_check
        %p121 = pneg %p77
      $region18: #{seq2seq_transformer_forward.5} parent=11 // pred_check_branch
        %123 = sbr.rel (%p121) target = $region20
      $region19: #{seq2seq_transformer_forward.5} parent=11 // pred_region
        _
      $region20: #{seq2seq_transformer_forward.5} parent=11 // pred_fallthru
        _
    $region12: #{seq2seq_transformer_forward.5} parent=5 // pred_fallthru
      _
    %p124 = scmp.lt.s32.totalorder %s9, 2
    // Predicated region
    $region21: #{seq2seq_transformer_forward.5} parent=5 // pred_check
      %p125 = pneg %p124
    $region22: #{seq2seq_transformer_forward.5} parent=5 // pred_check_branch
      %127 = sbr.rel (%p125) target = $region24
    $region23: #{seq2seq_transformer_forward.5} parent=5 // pred_region
      // Predicated region
      $region25: #{seq2seq_transformer_forward.5} parent=23 // pred_check
        %p128 = pneg %p29
      $region26: #{seq2seq_transformer_forward.5} parent=23 // pred_check_branch
        %130 = sbr.rel (%p128) target = $region28
      $region27: #{seq2seq_transformer_forward.5} parent=23 // pred_region
        %p131 = scmp.lt.s32.totalorder %s9, 1
        %s132 = scalar_select %p131, %s9, 1
        %s133 = smul.addr %s132, 8
        %s134 = scalar_lea.vmem %s0, %s133
      $region28: #{seq2seq_transformer_forward.5} parent=23 // pred_fallthru
        _
    $region24: #{seq2seq_transformer_forward.5} parent=5 // pred_fallthru
      _
    %p135 = scmp.le.s32.totalorder 1, %s9
    %p136 = scmp.lt.s32.totalorder %s9, 3
    %p137 = pnand %p135, %p136
    %p138 = pneg %p137
    // Predicated region
    $region29: #{seq2seq_transformer_forward.5} parent=5 // pred_check
      _
    $region30: #{seq2seq_transformer_forward.5} parent=5 // pred_check_branch
      %140 = sbr.rel (%p137) target = $region32
    $region31: #{seq2seq_transformer_forward.5} parent=5 // pred_region
      %s141 = ssub.s32 %s9, 1
      %p142 = scmp.lt.s32.totalorder %s14, 1
      %s143 = scalar_select %p142, %s14, 1
      %s144 = smul.addr %s143, 8
      %s145 = scalar_lea.vmem %s0, %s144
      %p146 = pneg %p35
      %p147 = pneg %p32
      %p148 = pneg %p56
      %p149 = pneg %p53
      %p150 = pneg %p77
      %p151 = pneg %p74
      %p152 = pneg %p103
      %p153 = pneg %p100
      %p154 = scmp.lt.s32.totalorder %s14, 1
      %s155 = scalar_select %p154, %s14, 1
      %s156 = smul.addr %s155, 8
      %s157 = scalar_lea.vmem %s3, %s156
      %p158 = scmp.lt.s32.totalorder %s14, 1
      %s159 = scalar_select %p158, %s14, 1
      %s160 = smul.addr %s159, 8
      %s161 = scalar_lea.vmem %s0, %s160
      %p162 = scmp.lt.s32.totalorder %s14, 1
      %s163 = scalar_select %p162, %s14, 1
      %s164 = smul.addr %s163, 8
      %s165 = scalar_lea.vmem %s3, %s164
      %v166 = vld [vmem:[%s161] sm:$0xff]
      %v167 = vpack.c.bf16 %v166, %v166
      %v168 = vld [vmem:[%s1] sm:$0xf]
      %v169 = vld [vmem:[%s1 + $0x4] sm:$0xf]
      %v170 = vld [vmem:[%s1 + $0x8] sm:$0xf]
      %v171 = vld [vmem:[%s1 + $0xc] sm:$0xf]
      %v172 = vld [vmem:[%s1 + $0x10] sm:$0xf]
      %v173 = vld [vmem:[%s1 + $0x14] sm:$0xf]
      %v174 = vld [vmem:[%s1 + $0x18] sm:$0xf]
      %v175 = vld [vmem:[%s1 + $0x1c] sm:$0xf]
      %v176 = vld [vmem:[%s1 + $0x20] sm:$0xf]
      %v177 = vld [vmem:[%s1 + $0x24] sm:$0xf]
      %v178 = vld [vmem:[%s1 + $0x28] sm:$0xf]
      %v179 = vld [vmem:[%s1 + $0x2c] sm:$0xf]
      %v180 = vld [vmem:[%s1 + $0x30] sm:$0xf]
      %v181 = vld [vmem:[%s1 + $0x34] sm:$0xf]
      %v182 = vld [vmem:[%s1 + $0x38] sm:$0xf]
      %v183 = vld [vmem:[%s1 + $0x3c] sm:$0xf]
      %v184 = vld [vmem:[%s2] sm:$0x1]
      %v186 = vperm.slane %v184, 0
      %v204 = vunpack.c.l.b16 %v168
      %v205 = vunpack.c.l.b16 %v169
      %v206 = vunpack.c.l.b16 %v170
      %v207 = vunpack.c.l.b16 %v171
      %v208 = vunpack.c.l.b16 %v172
      %v209 = vunpack.c.l.b16 %v173
      %v210 = vunpack.c.l.b16 %v174
      %v211 = vunpack.c.l.b16 %v175
      %v212 = vunpack.c.l.b16 %v176
      %v213 = vunpack.c.l.b16 %v177
      %v214 = vunpack.c.l.b16 %v178
      %v215 = vunpack.c.l.b16 %v179
      %v216 = vunpack.c.l.b16 %v180
      %v217 = vunpack.c.l.b16 %v181
      %v218 = vunpack.c.l.b16 %v182
      %v219 = vunpack.c.l.b16 %v183
      %v220 = vpack.c.b16 %v205, %v204
      %v221 = vpack.c.b16 %v207, %v206
      %v222 = vpack.c.b16 %v209, %v208
      %v223 = vpack.c.b16 %v211, %v210
      %v224 = vpack.c.b16 %v213, %v212
      %v225 = vpack.c.b16 %v215, %v214
      %v226 = vpack.c.b16 %v217, %v216
      %v227 = vpack.c.b16 %v219, %v218
      %236 = vmatpush.bf16.msra.mxu0 %v227
      %237 = vmatpush.bf16.msra.mxu0 %v226
      %238 = vmatpush.bf16.msra.mxu0 %v225
      %239 = vmatpush.bf16.msra.mxu0 %v224
      %240 = vmatpush.bf16.msra.mxu0 %v223
      %241 = vmatpush.bf16.msra.mxu0 %v222
      %242 = vmatpush.bf16.msra.mxu0 %v221
      %243 = vmatpush.bf16.msra.mxu0 %v220
      %244 = vmatmul.bf16.gmra.mxu0 %v167
      %v245 = vpop.f32.mrf.mxu0
      %v246 = vadd.f32 %v186, %v245
      %v247 = vpop.f32.mrf.mxu0
      %248 = vdwg.mxu0
      %249 = vst [vmem:[%s165] sm:$0xff] %v246
      %p250 = scmp.lt.s32.totalorder %s14, 1
      %s251 = scalar_select %p250, %s14, 1
      %s252 = smul.addr %s251, 8
      %s253 = scalar_lea.vmem %s3, %s252
      // Predicated region
      $region33: #{seq2seq_transformer_forward.5} parent=31 // pred_check
        %p254 = pneg %p100
      $region34: #{seq2seq_transformer_forward.5} parent=31 // pred_check_branch
        %256 = sbr.rel (%p254) target = $region36
      $region35: #{seq2seq_transformer_forward.5} parent=31 // pred_region
        _
      $region36: #{seq2seq_transformer_forward.5} parent=31 // pred_fallthru
        _
    $region32: #{seq2seq_transformer_forward.5} parent=5 // pred_fallthru
      _
    %p257 = scmp.le.s32.totalorder 2, %s9
    // Predicated region
    $region37: #{seq2seq_transformer_forward.5} parent=5 // pred_check
      %p258 = pneg %p257
    $region38: #{seq2seq_transformer_forward.5} parent=5 // pred_check_branch
      %260 = sbr.rel (%p258) target = $region40
    $region39: #{seq2seq_transformer_forward.5} parent=5 // pred_region
      %s261 = ssub.s32 %s9, 2
      // Predicated region
      $region41: #{seq2seq_transformer_forward.5} parent=39 // pred_check
        %p262 = pneg %p106
      $region42: #{seq2seq_transformer_forward.5} parent=39 // pred_check_branch
        %264 = sbr.rel (%p262) target = $region44
      $region43: #{seq2seq_transformer_forward.5} parent=39 // pred_region
        %p265 = scmp.lt.s32.totalorder %s15, 1
        %s266 = scalar_select %p265, %s15, 1
        %s267 = smul.addr %s266, 8
        %s268 = scalar_lea.vmem %s3, %s267
      $region44: #{seq2seq_transformer_forward.5} parent=39 // pred_fallthru
        _
    $region40: #{seq2seq_transformer_forward.5} parent=5 // pred_fallthru
      _
  $region6: #{seq2seq_transformer_forward.5} parent=0 // loop_footer
    %s13 = sadd.s32 1, %s9
  $region7: #{seq2seq_transformer_forward.5} parent=0 // loop_footer_branch
    %8 = sbr.rel target = $region3
  $region8: #{seq2seq_transformer_forward.5} parent=0 // loop_exit
    _

// kernel: seq2seq_transformer_forward.3
$region0: #{seq2seq_transformer_forward.3}
  #allocation0 [shape = 'u32[]', space=smem, size = 0x4, offset = 0x4, fixed_abs, tag = 'smem constant byte address 0x4 - core index']
  #allocation1 [shape = 'u32[72,128]{1,0:T(1,128)}', space=vmem, size = 0x9000, scoped, tag = 'internal scratch']
  %s0 = inlined_call_operand.vmem [shape: f32[16,128], index: 0, kind: input, shape index: {}]
  %s1 = inlined_call_operand.vmem [shape: f32[8,8], index: 1, kind: input, shape index: {}]
  %s2 = inlined_call_operand.vmem [shape: f32[2,1,8], index: 2, kind: input, shape index: {}]
  %s3 = inlined_call_operand.hbm [shape: bf16[2,128,384], index: 3, kind: input, shape index: {}]
  %s4 = inlined_call_operand.vmem [shape: f32[2,1,384], index: 4, kind: input, shape index: {}]
  %s5 = inlined_call_operand.hbm [shape: bf16[2,128,128], index: 5, kind: input, shape index: {}]
  %s6 = inlined_call_operand.vmem [shape: f32[2,1,128], index: 6, kind: input, shape index: {}, may-alias: {6,8,10,12,14}]
  %s7 = inlined_call_operand.vmem [shape: f32[2,1,128], index: 7, kind: input, shape index: {}, may-alias: {7,13}]
  %s8 = inlined_call_operand.vmem [shape: f32[2,1,128], index: 8, kind: input, shape index: {}, may-alias: {6,8,10,12,14}]
  %s9 = inlined_call_operand.hbm [shape: bf16[2,128,128], index: 9, kind: input, shape index: {}]
  %s10 = inlined_call_operand.vmem [shape: f32[2,1,128], index: 10, kind: input, shape index: {}, may-alias: {6,8,10,12,14}]
  %s11 = inlined_call_operand.hbm [shape: bf16[2,128,128], index: 11, kind: input, shape index: {}]
  %s12 = inlined_call_operand.vmem [shape: f32[2,1,128], index: 12, kind: input, shape index: {}, may-alias: {6,8,10,12,14}]
  %s13 = inlined_call_operand.vmem [shape: f32[2,1,128], index: 13, kind: input, shape index: {}, may-alias: {7,13}]
  %s14 = inlined_call_operand.vmem [shape: f32[2,1,128], index: 14, kind: input, shape index: {}, may-alias: {6,8,10,12,14}]
  %s15 = inlined_call_operand.vmem [shape: f32[1,128], index: 15, kind: input, shape index: {}]
  %s16 = inlined_call_operand.vmem [shape: f32[1,128], index: 16, kind: input, shape index: {}]
  %s17 = inlined_call_operand.vmem [shape: f32[16,128], index: 17, kind: output, shape index: {}]
  %s18 = sld [smem:[#allocation0]]
  $region125: #{seq2seq_transformer_forward.3} parent=0
    _
  %s20 = ssub.s32 1, %s18
  %s21 = scalar_select 0, %s20, %s18
  $region1: #{seq2seq_transformer_forward.3} parent=0
    #allocation2 [shape = 'u8[196608]{0}', space=vmem, size = 0x30000, scoped, tag = 'input window, operand 3']
    #allocation3 [shape = 's32[2]{0}', space=sflag, size = 0x8, scoped, tag = 'scoped memory for seq2seq_transformer_forward.3']
    #allocation4 [shape = 'u8[65536]{0}', space=vmem, size = 0x10000, scoped, tag = 'input window, operand 5']
    #allocation5 [shape = 's32[2]{0}', space=sflag, size = 0x8, scoped, tag = 'scoped memory for seq2seq_transformer_forward.3']
    #allocation6 [shape = 'u8[65536]{0}', space=vmem, size = 0x10000, scoped, tag = 'input window, operand 9']
    #allocation7 [shape = 'u8[65536]{0}', space=vmem, size = 0x10000, scoped, tag = 'input window, operand 11']
    #allocation8 [shape = 's32[2]{0}', space=sflag, size = 0x8, scoped, tag = 'scoped memory for seq2seq_transformer_forward.3']
    %22 = vsyncpa [#allocation3], 0
    %s23 = scalar_lea.sflag [#allocation3], 1
    %24 = vsyncpa %s23, 0
    %25 = vsyncpa [#allocation5], 0
    %s26 = scalar_lea.sflag [#allocation5], 1
    %27 = vsyncpa %s26, 0
    %28 = vsyncpa [#allocation8], 0
    %s29 = scalar_lea.sflag [#allocation8], 1
    %30 = vsyncpa %s29, 0
    loop: start=0, step=1, limit=6
    $region2: #{seq2seq_transformer_forward.3} parent=1 // loop_pre_header
      _
    $region3: #{seq2seq_transformer_forward.3} parent=1 // loop_header
      %s32 = sphi 0, %s36
      %p33 = scmp.ge.s32.totalorder %s32, 6
      %s39 = sphi 0, %s51
      %s40 = sphi 0, %s47
      %s41 = sphi 0, %s39
      %s42 = sphi 0, %s40
      %s43 = sphi 0, %s41
      %s44 = sphi 0, %s42
      %s54 = sphi 0, %s56
      %s57 = sphi 0, %s54
      %s58 = sphi 0, %s57
      %s74 = sphi 0, %s58
      %s78 = sphi 0, %s78
      %s80 = sphi 0, %s78
      %s81 = sphi 0, %s80
      %s95 = sphi 0, %s81
      %s101 = sphi 0, %s103
      %s104 = sphi 0, %s101
      %s105 = sphi 0, %s104
      %s121 = sphi 0, %s105
      %s127 = sphi 0, %s129
      %s130 = sphi 0, %s127
      %s131 = sphi 0, %s130
      %s147 = sphi 0, %s131
      %s153 = sphi 0, %s155
      %s156 = sphi 0, %s153
      %s157 = sphi 0, %s156
      %s173 = sphi 0, %s157
      %s179 = sphi 0, %s181
      %s182 = sphi 0, %s179
      %s183 = sphi 0, %s182
      %s199 = sphi 0, %s183
      %s205 = sphi 0, %s207
      %s208 = sphi 0, %s205
      %s209 = sphi 0, %s208
      %s225 = sphi 0, %s209
      %s231 = sphi 0, %s233
      %s234 = sphi 0, %s231
      %s235 = sphi 0, %s234
      %s251 = sphi 0, %s235
      %s257 = sphi 0, %s259
      %s260 = sphi 0, %s257
      %s261 = sphi 0, %s260
      %s277 = sphi 0, %s261
      %s283 = sphi 0, %s285
      %s286 = sphi 0, %s283
      %s287 = sphi 0, %s286
      %s303 = sphi 0, %s287
      %s309 = sphi 0, %s311
      %s312 = sphi 0, %s309
      %s313 = sphi 0, %s312
      %s329 = sphi 0, %s313
      %s335 = sphi 0, %s337
      %s338 = sphi 0, %s335
      %s339 = sphi 0, %s338
      %s355 = sphi 0, %s339
      %s361 = sphi 0, %s363
      %s364 = sphi 0, %s361
      %s365 = sphi 0, %s364
      %s381 = sphi 0, %s365
      %s387 = sphi 0, %s389
      %s390 = sphi 0, %s387
      %s391 = sphi 0, %s390
      %s407 = sphi 0, %s391
      %s413 = sphi 0, %s415
      %s416 = sphi 0, %s413
      %s417 = sphi 0, %s416
      %s433 = sphi 0, %s417
      %s437 = sphi 0, %s437
      %s439 = sphi 0, %s437
      %s440 = sphi 0, %s439
      %s454 = sphi 0, %s440
      %s458 = sphi 0, %s458
      %s460 = sphi 0, %s458
      %s461 = sphi 0, %s460
      %s475 = sphi 0, %s461
      %s481 = sphi 0, %s483
      %s484 = sphi 0, %s481
      %s485 = sphi 0, %s484
      %s501 = sphi 0, %s485
    $region4: #{seq2seq_transformer_forward.3} parent=1 // loop_header_branch
      %35 = sbr.rel (%p33) target = $region8
    $region5: #{seq2seq_transformer_forward.3} parent=1 // loop_body
      %s37 = ssub.s32 %s32, 1
      %s38 = ssub.s32 %s32, 2
      %s45 = sadd.s32 1, %s40
      %p46 = scmp.ge.s32.totalorder %s45, 2
      %s47 = scalar_select %p46, 0, %s45
      %s48 = sadd.s32 1, %s39
      %s49 = scalar_select %p46, %s48, %s39
      %p50 = scmp.ge.s32.totalorder %s49, 2
      %s51 = scalar_select %p50, 0, %s49
      %s52 = ssub.s32 %s39, %s51
      %p53 = scmp.eq.s32.totalorder %s52, 0
      %s55 = sadd.s32 %s54, 1
      %s56 = scalar_select %p53, %s54, %s55
      %p59 = pneg %p53
      %p60 = scmp.eq.s32.totalorder %s32, 3
      %p61 = por %p59, %p60
      %p62 = scmp.ne.s32.totalorder %s54, %s57
      %p63 = scmp.eq.s32.totalorder %s32, 0
      %p64 = por %p62, %p63
      %p65 = scmp.ne.s32.totalorder %s54, %s57
      %p66 = scmp.eq.s32.totalorder %s37, 3
      %p67 = por %p65, %p66
      %p68 = scmp.ne.s32.totalorder %s57, %s58
      %p69 = scmp.eq.s32.totalorder %s37, 0
      %p70 = por %p68, %p69
      %p71 = scmp.ne.s32.totalorder %s57, %s58
      %p72 = scmp.eq.s32.totalorder %s38, 3
      %p73 = por %p71, %p72
      %p75 = scmp.ne.s32.totalorder %s58, %s74
      %p76 = scmp.eq.s32.totalorder %s38, 0
      %p77 = por %p75, %p76
      %s79 = sadd.s32 %s78, 1
      %p82 = scmp.eq.s32.totalorder %s32, 3
      %p83 = scmp.ne.s32.totalorder %s78, %s80
      %p84 = scmp.eq.s32.totalorder %s32, 0
      %p85 = por %p83, %p84
      %p86 = scmp.ne.s32.totalorder %s78, %s80
      %p87 = scmp.eq.s32.totalorder %s37, 3
      %p88 = por %p86, %p87
      %p89 = scmp.ne.s32.totalorder %s80, %s81
      %p90 = scmp.eq.s32.totalorder %s37, 0
      %p91 = por %p89, %p90
      %p92 = scmp.ne.s32.totalorder %s80, %s81
      %p93 = scmp.eq.s32.totalorder %s38, 3
      %p94 = por %p92, %p93
      %p96 = scmp.ne.s32.totalorder %s81, %s95
      %p97 = scmp.eq.s32.totalorder %s38, 0
      %p98 = por %p96, %p97
      %s99 = ssub.s32 %s39, %s51
      %p100 = scmp.eq.s32.totalorder %s99, 0
      %s102 = sadd.s32 %s101, 1
      %s103 = scalar_select %p100, %s101, %s102
      %p106 = pneg %p100
      %p107 = scmp.eq.s32.totalorder %s32, 3
      %p108 = por %p106, %p107
      %p109 = scmp.ne.s32.totalorder %s101, %s104
      %p110 = scmp.eq.s32.totalorder %s32, 0
      %p111 = por %p109, %p110
      %p112 = scmp.ne.s32.totalorder %s101, %s104
      %p113 = scmp.eq.s32.totalorder %s37, 3
      %p114 = por %p112, %p113
      %p115 = scmp.ne.s32.totalorder %s104, %s105
      %p116 = scmp.eq.s32.totalorder %s37, 0
      %p117 = por %p115, %p116
      %p118 = scmp.ne.s32.totalorder %s104, %s105
      %p119 = scmp.eq.s32.totalorder %s38, 3
      %p120 = por %p118, %p119
      %p122 = scmp.ne.s32.totalorder %s105, %s121
      %p123 = scmp.eq.s32.totalorder %s38, 0
      %p124 = por %p122, %p123
      %s125 = ssub.s32 %s40, %s47
      %p126 = scmp.eq.s32.totalorder %s125, 0
      %s128 = sadd.s32 %s127, 1
      %s129 = scalar_select %p126, %s127, %s128
      %p132 = pneg %p126
      %p133 = scmp.eq.s32.totalorder %s32, 3
      %p134 = por %p132, %p133
      %p135 = scmp.ne.s32.totalorder %s127, %s130
      %p136 = scmp.eq.s32.totalorder %s32, 0
      %p137 = por %p135, %p136
      %p138 = scmp.ne.s32.totalorder %s127, %s130
      %p139 = scmp.eq.s32.totalorder %s37, 3
      %p140 = por %p138, %p139
      %p141 = scmp.ne.s32.totalorder %s130, %s131
      %p142 = scmp.eq.s32.totalorder %s37, 0
      %p143 = por %p141, %p142
      %p144 = scmp.ne.s32.totalorder %s130, %s131
      %p145 = scmp.eq.s32.totalorder %s38, 3
      %p146 = por %p144, %p145
      %p148 = scmp.ne.s32.totalorder %s131, %s147
      %p149 = scmp.eq.s32.totalorder %s38, 0
      %p150 = por %p148, %p149
      %s151 = ssub.s32 %s40, %s47
      %p152 = scmp.eq.s32.totalorder %s151, 0
      %s154 = sadd.s32 %s153, 1
      %s155 = scalar_select %p152, %s153, %s154
      %p158 = pneg %p152
      %p159 = scmp.eq.s32.totalorder %s32, 3
      %p160 = por %p158, %p159
      %p161 = scmp.ne.s32.totalorder %s153, %s156
      %p162 = scmp.eq.s32.totalorder %s32, 0
      %p163 = por %p161, %p162
      %p164 = scmp.ne.s32.totalorder %s153, %s156
      %p165 = scmp.eq.s32.totalorder %s37, 3
      %p166 = por %p164, %p165
      %p167 = scmp.ne.s32.totalorder %s156, %s157
      %p168 = scmp.eq.s32.totalorder %s37, 0
      %p169 = por %p167, %p168
      %p170 = scmp.ne.s32.totalorder %s156, %s157
      %p171 = scmp.eq.s32.totalorder %s38, 3
      %p172 = por %p170, %p171
      %p174 = scmp.ne.s32.totalorder %s157, %s173
      %p175 = scmp.eq.s32.totalorder %s38, 0
      %p176 = por %p174, %p175
      %s177 = ssub.s32 %s40, %s47
      %p178 = scmp.eq.s32.totalorder %s177, 0
      %s180 = sadd.s32 %s179, 1
      %s181 = scalar_select %p178, %s179, %s180
      %p184 = pneg %p178
      %p185 = scmp.eq.s32.totalorder %s32, 3
      %p186 = por %p184, %p185
      %p187 = scmp.ne.s32.totalorder %s179, %s182
      %p188 = scmp.eq.s32.totalorder %s32, 0
      %p189 = por %p187, %p188
      %p190 = scmp.ne.s32.totalorder %s179, %s182
      %p191 = scmp.eq.s32.totalorder %s37, 3
      %p192 = por %p190, %p191
      %p193 = scmp.ne.s32.totalorder %s182, %s183
      %p194 = scmp.eq.s32.totalorder %s37, 0
      %p195 = por %p193, %p194
      %p196 = scmp.ne.s32.totalorder %s182, %s183
      %p197 = scmp.eq.s32.totalorder %s38, 3
      %p198 = por %p196, %p197
      %p200 = scmp.ne.s32.totalorder %s183, %s199
      %p201 = scmp.eq.s32.totalorder %s38, 0
      %p202 = por %p200, %p201
      %s203 = ssub.s32 %s40, %s47
      %p204 = scmp.eq.s32.totalorder %s203, 0
      %s206 = sadd.s32 %s205, 1
      %s207 = scalar_select %p204, %s205, %s206
      %p210 = pneg %p204
      %p211 = scmp.eq.s32.totalorder %s32, 3
      %p212 = por %p210, %p211
      %p213 = scmp.ne.s32.totalorder %s205, %s208
      %p214 = scmp.eq.s32.totalorder %s32, 0
      %p215 = por %p213, %p214
      %p216 = scmp.ne.s32.totalorder %s205, %s208
      %p217 = scmp.eq.s32.totalorder %s37, 3
      %p218 = por %p216, %p217
      %p219 = scmp.ne.s32.totalorder %s208, %s209
      %p220 = scmp.eq.s32.totalorder %s37, 0
      %p221 = por %p219, %p220
      %p222 = scmp.ne.s32.totalorder %s208, %s209
      %p223 = scmp.eq.s32.totalorder %s38, 3
      %p224 = por %p222, %p223
      %p226 = scmp.ne.s32.totalorder %s209, %s225
      %p227 = scmp.eq.s32.totalorder %s38, 0
      %p228 = por %p226, %p227
      %s229 = ssub.s32 %s40, %s47
      %p230 = scmp.eq.s32.totalorder %s229, 0
      %s232 = sadd.s32 %s231, 1
      %s233 = scalar_select %p230, %s231, %s232
      %p236 = pneg %p230
      %p237 = scmp.eq.s32.totalorder %s32, 3
      %p238 = por %p236, %p237
      %p239 = scmp.ne.s32.totalorder %s231, %s234
      %p240 = scmp.eq.s32.totalorder %s32, 0
      %p241 = por %p239, %p240
      %p242 = scmp.ne.s32.totalorder %s231, %s234
      %p243 = scmp.eq.s32.totalorder %s37, 3
      %p244 = por %p242, %p243
      %p245 = scmp.ne.s32.totalorder %s234, %s235
      %p246 = scmp.eq.s32.totalorder %s37, 0
      %p247 = por %p245, %p246
      %p248 = scmp.ne.s32.totalorder %s234, %s235
      %p249 = scmp.eq.s32.totalorder %s38, 3
      %p250 = por %p248, %p249
      %p252 = scmp.ne.s32.totalorder %s235, %s251
      %p253 = scmp.eq.s32.totalorder %s38, 0
      %p254 = por %p252, %p253
      %s255 = ssub.s32 %s40, %s47
      %p256 = scmp.eq.s32.totalorder %s255, 0
      %s258 = sadd.s32 %s257, 1
      %s259 = scalar_select %p256, %s257, %s258
      %p262 = pneg %p256
      %p263 = scmp.eq.s32.totalorder %s32, 3
      %p264 = por %p262, %p263
      %p265 = scmp.ne.s32.totalorder %s257, %s260
      %p266 = scmp.eq.s32.totalorder %s32, 0
      %p267 = por %p265, %p266
      %p268 = scmp.ne.s32.totalorder %s257, %s260
      %p269 = scmp.eq.s32.totalorder %s37, 3
      %p270 = por %p268, %p269
      %p271 = scmp.ne.s32.totalorder %s260, %s261
      %p272 = scmp.eq.s32.totalorder %s37, 0
      %p273 = por %p271, %p272
      %p274 = scmp.ne.s32.totalorder %s260, %s261
      %p275 = scmp.eq.s32.totalorder %s38, 3
      %p276 = por %p274, %p275
      %p278 = scmp.ne.s32.totalorder %s261, %s277
      %p279 = scmp.eq.s32.totalorder %s38, 0
      %p280 = por %p278, %p279
      %s281 = ssub.s32 %s40, %s47
      %p282 = scmp.eq.s32.totalorder %s281, 0
      %s284 = sadd.s32 %s283, 1
      %s285 = scalar_select %p282, %s283, %s284
      %p288 = pneg %p282
      %p289 = scmp.eq.s32.totalorder %s32, 3
      %p290 = por %p288, %p289
      %p291 = scmp.ne.s32.totalorder %s283, %s286
      %p292 = scmp.eq.s32.totalorder %s32, 0
      %p293 = por %p291, %p292
      %p294 = scmp.ne.s32.totalorder %s283, %s286
      %p295 = scmp.eq.s32.totalorder %s37, 3
      %p296 = por %p294, %p295
      %p297 = scmp.ne.s32.totalorder %s286, %s287
      %p298 = scmp.eq.s32.totalorder %s37, 0
      %p299 = por %p297, %p298
      %p300 = scmp.ne.s32.totalorder %s286, %s287
      %p301 = scmp.eq.s32.totalorder %s38, 3
      %p302 = por %p300, %p301
      %p304 = scmp.ne.s32.totalorder %s287, %s303
      %p305 = scmp.eq.s32.totalorder %s38, 0
      %p306 = por %p304, %p305
      %s307 = ssub.s32 %s40, %s47
      %p308 = scmp.eq.s32.totalorder %s307, 0
      %s310 = sadd.s32 %s309, 1
      %s311 = scalar_select %p308, %s309, %s310
      %p314 = pneg %p308
      %p315 = scmp.eq.s32.totalorder %s32, 3
      %p316 = por %p314, %p315
      %p317 = scmp.ne.s32.totalorder %s309, %s312
      %p318 = scmp.eq.s32.totalorder %s32, 0
      %p319 = por %p317, %p318
      %p320 = scmp.ne.s32.totalorder %s309, %s312
      %p321 = scmp.eq.s32.totalorder %s37, 3
      %p322 = por %p320, %p321
      %p323 = scmp.ne.s32.totalorder %s312, %s313
      %p324 = scmp.eq.s32.totalorder %s37, 0
      %p325 = por %p323, %p324
      %p326 = scmp.ne.s32.totalorder %s312, %s313
      %p327 = scmp.eq.s32.totalorder %s38, 3
      %p328 = por %p326, %p327
      %p330 = scmp.ne.s32.totalorder %s313, %s329
      %p331 = scmp.eq.s32.totalorder %s38, 0
      %p332 = por %p330, %p331
      %s333 = ssub.s32 %s40, %s47
      %p334 = scmp.eq.s32.totalorder %s333, 0
      %s336 = sadd.s32 %s335, 1
      %s337 = scalar_select %p334, %s335, %s336
      %p340 = pneg %p334
      %p341 = scmp.eq.s32.totalorder %s32, 3
      %p342 = por %p340, %p341
      %p343 = scmp.ne.s32.totalorder %s335, %s338
      %p344 = scmp.eq.s32.totalorder %s32, 0
      %p345 = por %p343, %p344
      %p346 = scmp.ne.s32.totalorder %s335, %s338
      %p347 = scmp.eq.s32.totalorder %s37, 3
      %p348 = por %p346, %p347
      %p349 = scmp.ne.s32.totalorder %s338, %s339
      %p350 = scmp.eq.s32.totalorder %s37, 0
      %p351 = por %p349, %p350
      %p352 = scmp.ne.s32.totalorder %s338, %s339
      %p353 = scmp.eq.s32.totalorder %s38, 3
      %p354 = por %p352, %p353
      %p356 = scmp.ne.s32.totalorder %s339, %s355
      %p357 = scmp.eq.s32.totalorder %s38, 0
      %p358 = por %p356, %p357
      %s359 = ssub.s32 %s40, %s47
      %p360 = scmp.eq.s32.totalorder %s359, 0
      %s362 = sadd.s32 %s361, 1
      %s363 = scalar_select %p360, %s361, %s362
      %p366 = pneg %p360
      %p367 = scmp.eq.s32.totalorder %s32, 3
      %p368 = por %p366, %p367
      %p369 = scmp.ne.s32.totalorder %s361, %s364
      %p370 = scmp.eq.s32.totalorder %s32, 0
      %p371 = por %p369, %p370
      %p372 = scmp.ne.s32.totalorder %s361, %s364
      %p373 = scmp.eq.s32.totalorder %s37, 3
      %p374 = por %p372, %p373
      %p375 = scmp.ne.s32.totalorder %s364, %s365
      %p376 = scmp.eq.s32.totalorder %s37, 0
      %p377 = por %p375, %p376
      %p378 = scmp.ne.s32.totalorder %s364, %s365
      %p379 = scmp.eq.s32.totalorder %s38, 3
      %p380 = por %p378, %p379
      %p382 = scmp.ne.s32.totalorder %s365, %s381
      %p383 = scmp.eq.s32.totalorder %s38, 0
      %p384 = por %p382, %p383
      %s385 = ssub.s32 %s40, %s47
      %p386 = scmp.eq.s32.totalorder %s385, 0
      %s388 = sadd.s32 %s387, 1
      %s389 = scalar_select %p386, %s387, %s388
      %p392 = pneg %p386
      %p393 = scmp.eq.s32.totalorder %s32, 3
      %p394 = por %p392, %p393
      %p395 = scmp.ne.s32.totalorder %s387, %s390
      %p396 = scmp.eq.s32.totalorder %s32, 0
      %p397 = por %p395, %p396
      %p398 = scmp.ne.s32.totalorder %s387, %s390
      %p399 = scmp.eq.s32.totalorder %s37, 3
      %p400 = por %p398, %p399
      %p401 = scmp.ne.s32.totalorder %s390, %s391
      %p402 = scmp.eq.s32.totalorder %s37, 0
      %p403 = por %p401, %p402
      %p404 = scmp.ne.s32.totalorder %s390, %s391
      %p405 = scmp.eq.s32.totalorder %s38, 3
      %p406 = por %p404, %p405
      %p408 = scmp.ne.s32.totalorder %s391, %s407
      %p409 = scmp.eq.s32.totalorder %s38, 0
      %p410 = por %p408, %p409
      %s411 = ssub.s32 %s40, %s47
      %p412 = scmp.eq.s32.totalorder %s411, 0
      %s414 = sadd.s32 %s413, 1
      %s415 = scalar_select %p412, %s413, %s414
      %p418 = pneg %p412
      %p419 = scmp.eq.s32.totalorder %s32, 3
      %p420 = por %p418, %p419
      %p421 = scmp.ne.s32.totalorder %s413, %s416
      %p422 = scmp.eq.s32.totalorder %s32, 0
      %p423 = por %p421, %p422
      %p424 = scmp.ne.s32.totalorder %s413, %s416
      %p425 = scmp.eq.s32.totalorder %s37, 3
      %p426 = por %p424, %p425
      %p427 = scmp.ne.s32.totalorder %s416, %s417
      %p428 = scmp.eq.s32.totalorder %s37, 0
      %p429 = por %p427, %p428
      %p430 = scmp.ne.s32.totalorder %s416, %s417
      %p431 = scmp.eq.s32.totalorder %s38, 3
      %p432 = por %p430, %p431
      %p434 = scmp.ne.s32.totalorder %s417, %s433
      %p435 = scmp.eq.s32.totalorder %s38, 0
      %p436 = por %p434, %p435
      %s438 = sadd.s32 %s437, 1
      %p441 = scmp.eq.s32.totalorder %s32, 3
      %p442 = scmp.ne.s32.totalorder %s437, %s439
      %p443 = scmp.eq.s32.totalorder %s32, 0
      %p444 = por %p442, %p443
      %p445 = scmp.ne.s32.totalorder %s437, %s439
      %p446 = scmp.eq.s32.totalorder %s37, 3
      %p447 = por %p445, %p446
      %p448 = scmp.ne.s32.totalorder %s439, %s440
      %p449 = scmp.eq.s32.totalorder %s37, 0
      %p450 = por %p448, %p449
      %p451 = scmp.ne.s32.totalorder %s439, %s440
      %p452 = scmp.eq.s32.totalorder %s38, 3
      %p453 = por %p451, %p452
      %p455 = scmp.ne.s32.totalorder %s440, %s454
      %p456 = scmp.eq.s32.totalorder %s38, 0
      %p457 = por %p455, %p456
      %s459 = sadd.s32 %s458, 1
      %p462 = scmp.eq.s32.totalorder %s32, 3
      %p463 = scmp.ne.s32.totalorder %s458, %s460
      %p464 = scmp.eq.s32.totalorder %s32, 0
      %p465 = por %p463, %p464
      %p466 = scmp.ne.s32.totalorder %s458, %s460
      %p467 = scmp.eq.s32.totalorder %s37, 3
      %p468 = por %p466, %p467
      %p469 = scmp.ne.s32.totalorder %s460, %s461
      %p470 = scmp.eq.s32.totalorder %s37, 0
      %p471 = por %p469, %p470
      %p472 = scmp.ne.s32.totalorder %s460, %s461
      %p473 = scmp.eq.s32.totalorder %s38, 3
      %p474 = por %p472, %p473
      %p476 = scmp.ne.s32.totalorder %s461, %s475
      %p477 = scmp.eq.s32.totalorder %s38, 0
      %p478 = por %p476, %p477
      %s479 = ssub.s32 %s39, %s51
      %p480 = scmp.eq.s32.totalorder %s479, 0
      %s482 = sadd.s32 %s481, 1
      %s483 = scalar_select %p480, %s481, %s482
      %p486 = pneg %p480
      %p487 = scmp.eq.s32.totalorder %s32, 3
      %p488 = por %p486, %p487
      %p489 = scmp.ne.s32.totalorder %s481, %s484
      %p490 = scmp.eq.s32.totalorder %s32, 0
      %p491 = por %p489, %p490
      %p492 = scmp.ne.s32.totalorder %s481, %s484
      %p493 = scmp.eq.s32.totalorder %s37, 3
      %p494 = por %p492, %p493
      %p495 = scmp.ne.s32.totalorder %s484, %s485
      %p496 = scmp.eq.s32.totalorder %s37, 0
      %p497 = por %p495, %p496
      %p498 = scmp.ne.s32.totalorder %s484, %s485
      %p499 = scmp.eq.s32.totalorder %s38, 3
      %p500 = por %p498, %p499
      %p502 = scmp.ne.s32.totalorder %s485, %s501
      %p503 = scmp.eq.s32.totalorder %s38, 0
      %p504 = por %p502, %p503
      %p505 = scmp.le.s32.totalorder 1, %s32
      %p506 = scmp.lt.s32.totalorder %s32, 5
      %p507 = pnand %p505, %p506
      %p508 = pneg %p507
      // Predicated region
      $region9: #{seq2seq_transformer_forward.3} parent=5 // pred_check
        _
      $region10: #{seq2seq_transformer_forward.3} parent=5 // pred_check_branch
        %510 = sbr.rel (%p507) target = $region12
      $region11: #{seq2seq_transformer_forward.3} parent=5 // pred_region
        %s511 = ssub.s32 %s32, 1
        // Predicated region
        $region13: #{seq2seq_transformer_forward.3} parent=11 // pred_check
          %p512 = pneg %p91
        $region14: #{seq2seq_transformer_forward.3} parent=11 // pred_check_branch
          %514 = sbr.rel (%p512) target = $region16
        $region15: #{seq2seq_transformer_forward.3} parent=11 // pred_region
          _
        $region16: #{seq2seq_transformer_forward.3} parent=11 // pred_fallthru
          _
        // Predicated region
        $region17: #{seq2seq_transformer_forward.3} parent=11 // pred_check
          %p515 = pneg %p450
        $region18: #{seq2seq_transformer_forward.3} parent=11 // pred_check_branch
          %517 = sbr.rel (%p515) target = $region20
        $region19: #{seq2seq_transformer_forward.3} parent=11 // pred_region
          _
        $region20: #{seq2seq_transformer_forward.3} parent=11 // pred_fallthru
          _
        // Predicated region
        $region21: #{seq2seq_transformer_forward.3} parent=11 // pred_check
          %p518 = pneg %p471
        $region22: #{seq2seq_transformer_forward.3} parent=11 // pred_check_branch
          %520 = sbr.rel (%p518) target = $region24
        $region23: #{seq2seq_transformer_forward.3} parent=11 // pred_region
          _
        $region24: #{seq2seq_transformer_forward.3} parent=11 // pred_fallthru
          _
      $region12: #{seq2seq_transformer_forward.3} parent=5 // pred_fallthru
        _
      %p521 = scmp.lt.s32.totalorder %s32, 4
      // Predicated region
      $region25: #{seq2seq_transformer_forward.3} parent=5 // pred_check
        %p522 = pneg %p521
      $region26: #{seq2seq_transformer_forward.3} parent=5 // pred_check_branch
        %524 = sbr.rel (%p522) target = $region28
      $region27: #{seq2seq_transformer_forward.3} parent=5 // pred_region
        // Predicated region
        $region29: #{seq2seq_transformer_forward.3} parent=27 // pred_check
          %p525 = pneg %p64
        $region30: #{seq2seq_transformer_forward.3} parent=27 // pred_check_branch
          %527 = sbr.rel (%p525) target = $region32
        $region31: #{seq2seq_transformer_forward.3} parent=27 // pred_region
          %p528 = scmp.lt.s32.totalorder %s39, 1
          %s529 = scalar_select %p528, %s39, 1
          %s530 = smul.addr %s529, 8
          %s531 = scalar_lea.vmem %s0, %s530
        $region32: #{seq2seq_transformer_forward.3} parent=27 // pred_fallthru
          _
        // Predicated region
        $region33: #{seq2seq_transformer_forward.3} parent=27 // pred_check
          %p532 = pneg %p111
        $region34: #{seq2seq_transformer_forward.3} parent=27 // pred_check_branch
          %534 = sbr.rel (%p532) target = $region36
        $region35: #{seq2seq_transformer_forward.3} parent=27 // pred_region
          %p535 = scmp.lt.s32.totalorder %s39, 1
          %s536 = scalar_select %p535, %s39, 1
          %s537 = scalar_lea.vmem %s2, %s536
        $region36: #{seq2seq_transformer_forward.3} parent=27 // pred_fallthru
          _
        // Predicated region
        $region37: #{seq2seq_transformer_forward.3} parent=27 // pred_check
          %p538 = pneg %p137
        $region38: #{seq2seq_transformer_forward.3} parent=27 // pred_check_branch
          %540 = sbr.rel (%p538) target = $region40
        $region39: #{seq2seq_transformer_forward.3} parent=27 // pred_region
          %s541 = sand.u32 %s127, 1
          %s542 = scalar_lea.sflag [#allocation3], %s541
          %s543 = sand.u32 %s127, 1
          %s544 = smul.addr %s543, 192
          %s545 = scalar_lea.vmem [#allocation2], %s544
          %547 = vsyncadd %s542, 0
          %s548 = smul.addr %s40, 48
          %s549 = smul.addr %s548, 4
          %s550 = scalar_lea.hbm %s3, %s549
          %s551 = sshll.u32 %s550, 4
          %s552 = int_to_ptr.hbm [resolvable:$true] %s551
          %s553 = sshll.u32 %s545, 4
          %s554 = int_to_ptr.vmem [resolvable:$true] %s553
          %559 = dma.hbm_to_vmem [thread:$0]  %s552, 3072, %s554, %s542, 192, 192, 12
        $region40: #{seq2seq_transformer_forward.3} parent=27 // pred_fallthru
          _
        // Predicated region
        $region41: #{seq2seq_transformer_forward.3} parent=27 // pred_check
          %p560 = pneg %p163
        $region42: #{seq2seq_transformer_forward.3} parent=27 // pred_check_branch
          %562 = sbr.rel (%p560) target = $region44
        $region43: #{seq2seq_transformer_forward.3} parent=27 // pred_region
          %p563 = scmp.lt.s32.totalorder %s40, 1
          %s564 = scalar_select %p563, %s40, 1
          %s565 = smul.addr %s564, 3
          %s566 = scalar_lea.vmem %s4, %s565
        $region44: #{seq2seq_transformer_forward.3} parent=27 // pred_fallthru
          _
        // Predicated region
        $region45: #{seq2seq_transformer_forward.3} parent=27 // pred_check
          %p567 = pneg %p189
        $region46: #{seq2seq_transformer_forward.3} parent=27 // pred_check_branch
          %569 = sbr.rel (%p567) target = $region48
        $region47: #{seq2seq_transformer_forward.3} parent=27 // pred_region
          %s570 = sand.u32 %s32, 1
          %s571 = scalar_lea.sflag [#allocation5], %s570
          %s572 = sand.u32 %s179, 1
          %s573 = smul.addr %s572, 64
          %s574 = scalar_lea.vmem [#allocation4], %s573
          %576 = vsyncadd %s571, 0
          %s577 = smul.addr %s40, 16
          %s578 = smul.addr %s577, 4
          %s579 = scalar_lea.hbm %s5, %s578
          %s580 = sshll.u32 %s579, 4
          %s581 = int_to_ptr.hbm [resolvable:$true] %s580
          %s582 = sshll.u32 %s574, 4
          %s583 = int_to_ptr.vmem [resolvable:$true] %s582
          %588 = dma.hbm_to_vmem [thread:$0]  %s581, 1024, %s583, %s571, 64, 64, 4
        $region48: #{seq2seq_transformer_forward.3} parent=27 // pred_fallthru
          _
        // Predicated region
        $region49: #{seq2seq_transformer_forward.3} parent=27 // pred_check
          %p589 = pneg %p215
        $region50: #{seq2seq_transformer_forward.3} parent=27 // pred_check_branch
          %591 = sbr.rel (%p589) target = $region52
        $region51: #{seq2seq_transformer_forward.3} parent=27 // pred_region
          %p592 = scmp.lt.s32.totalorder %s40, 1
          %s593 = scalar_select %p592, %s40, 1
          %s594 = scalar_lea.vmem %s6, %s593
        $region52: #{seq2seq_transformer_forward.3} parent=27 // pred_fallthru
          _
        // Predicated region
        $region53: #{seq2seq_transformer_forward.3} parent=27 // pred_check
          %p595 = pneg %p241
        $region54: #{seq2seq_transformer_forward.3} parent=27 // pred_check_branch
          %597 = sbr.rel (%p595) target = $region56
        $region55: #{seq2seq_transformer_forward.3} parent=27 // pred_region
          %p598 = scmp.lt.s32.totalorder %s40, 1
          %s599 = scalar_select %p598, %s40, 1
          %s600 = scalar_lea.vmem %s7, %s599
        $region56: #{seq2seq_transformer_forward.3} parent=27 // pred_fallthru
          _
        // Predicated region
        $region57: #{seq2seq_transformer_forward.3} parent=27 // pred_check
          %p601 = pneg %p267
        $region58: #{seq2seq_transformer_forward.3} parent=27 // pred_check_branch
          %603 = sbr.rel (%p601) target = $region60
        $region59: #{seq2seq_transformer_forward.3} parent=27 // pred_region
          %p604 = scmp.lt.s32.totalorder %s40, 1
          %s605 = scalar_select %p604, %s40, 1
          %s606 = scalar_lea.vmem %s8, %s605
        $region60: #{seq2seq_transformer_forward.3} parent=27 // pred_fallthru
          _
        // Predicated region
        $region61: #{seq2seq_transformer_forward.3} parent=27 // pred_check
          %p607 = pneg %p293
        $region62: #{seq2seq_transformer_forward.3} parent=27 // pred_check_branch
          %609 = sbr.rel (%p607) target = $region64
        $region63: #{seq2seq_transformer_forward.3} parent=27 // pred_region
          %s610 = sand.u32 %s32, 1
          %s611 = scalar_lea.sflag [#allocation5], %s610
          %s612 = sand.u32 %s283, 1
          %s613 = smul.addr %s612, 64
          %s614 = scalar_lea.vmem [#allocation6], %s613
          %616 = vsyncadd %s611, 0
          %s617 = smul.addr %s40, 16
          %s618 = smul.addr %s617, 4
          %s619 = scalar_lea.hbm %s9, %s618
          %s620 = sshll.u32 %s619, 4
          %s621 = int_to_ptr.hbm [resolvable:$true] %s620
          %s622 = sshll.u32 %s614, 4
          %s623 = int_to_ptr.vmem [resolvable:$true] %s622
          %628 = dma.hbm_to_vmem [thread:$0]  %s621, 1024, %s623, %s611, 64, 64, 4
        $region64: #{seq2seq_transformer_forward.3} parent=27 // pred_fallthru
          _
        // Predicated region
        $region65: #{seq2seq_transformer_forward.3} parent=27 // pred_check
          %p629 = pneg %p319
        $region66: #{seq2seq_transformer_forward.3} parent=27 // pred_check_branch
          %631 = sbr.rel (%p629) target = $region68
        $region67: #{seq2seq_transformer_forward.3} parent=27 // pred_region
          %p632 = scmp.lt.s32.totalorder %s40, 1
          %s633 = scalar_select %p632, %s40, 1
          %s634 = scalar_lea.vmem %s10, %s633
        $region68: #{seq2seq_transformer_forward.3} parent=27 // pred_fallthru
          _
        // Predicated region
        $region69: #{seq2seq_transformer_forward.3} parent=27 // pred_check
          %p635 = pneg %p345
        $region70: #{seq2seq_transformer_forward.3} parent=27 // pred_check_branch
          %637 = sbr.rel (%p635) target = $region72
        $region71: #{seq2seq_transformer_forward.3} parent=27 // pred_region
          %s638 = sand.u32 %s335, 1
          %s639 = scalar_lea.sflag [#allocation8], %s638
          %s640 = sand.u32 %s335, 1
          %s641 = smul.addr %s640, 64
          %s642 = scalar_lea.vmem [#allocation7], %s641
          %644 = vsyncadd %s639, 0
          %s645 = smul.addr %s40, 16
          %s646 = smul.addr %s645, 4
          %s647 = scalar_lea.hbm %s11, %s646
          %s648 = sshll.u32 %s647, 4
          %s649 = int_to_ptr.hbm [resolvable:$true] %s648
          %s650 = sshll.u32 %s642, 4
          %s651 = int_to_ptr.vmem [resolvable:$true] %s650
          %656 = dma.hbm_to_vmem [thread:$0]  %s649, 1024, %s651, %s639, 64, 64, 4
        $region72: #{seq2seq_transformer_forward.3} parent=27 // pred_fallthru
          _
        // Predicated region
        $region73: #{seq2seq_transformer_forward.3} parent=27 // pred_check
          %p657 = pneg %p371
        $region74: #{seq2seq_transformer_forward.3} parent=27 // pred_check_branch
          %659 = sbr.rel (%p657) target = $region76
        $region75: #{seq2seq_transformer_forward.3} parent=27 // pred_region
          %p660 = scmp.lt.s32.totalorder %s40, 1
          %s661 = scalar_select %p660, %s40, 1
          %s662 = scalar_lea.vmem %s12, %s661
        $region76: #{seq2seq_transformer_forward.3} parent=27 // pred_fallthru
          _
        // Predicated region
        $region77: #{seq2seq_transformer_forward.3} parent=27 // pred_check
          %p663 = pneg %p397
        $region78: #{seq2seq_transformer_forward.3} parent=27 // pred_check_branch
          %665 = sbr.rel (%p663) target = $region80
        $region79: #{seq2seq_transformer_forward.3} parent=27 // pred_region
          %p666 = scmp.lt.s32.totalorder %s40, 1
          %s667 = scalar_select %p666, %s40, 1
          %s668 = scalar_lea.vmem %s13, %s667
        $region80: #{seq2seq_transformer_forward.3} parent=27 // pred_fallthru
          _
        // Predicated region
        $region81: #{seq2seq_transformer_forward.3} parent=27 // pred_check
          %p669 = pneg %p423
        $region82: #{seq2seq_transformer_forward.3} parent=27 // pred_check_branch
          %671 = sbr.rel (%p669) target = $region84
        $region83: #{seq2seq_transformer_forward.3} parent=27 // pred_region
          %p672 = scmp.lt.s32.totalorder %s40, 1
          %s673 = scalar_select %p672, %s40, 1
          %s674 = scalar_lea.vmem %s14, %s673
        $region84: #{seq2seq_transformer_forward.3} parent=27 // pred_fallthru
          _
      $region28: #{seq2seq_transformer_forward.3} parent=5 // pred_fallthru
        _
      %p675 = scmp.le.s32.totalorder 1, %s32
      %p676 = scmp.lt.s32.totalorder %s32, 5
      %p677 = pnand %p675, %p676
      %p678 = pneg %p677
      // Predicated region
      $region85: #{seq2seq_transformer_forward.3} parent=5 // pred_check
        _
      $region86: #{seq2seq_transformer_forward.3} parent=5 // pred_check_branch
        %680 = sbr.rel (%p677) target = $region88
      $region87: #{seq2seq_transformer_forward.3} parent=5 // pred_region
        %s681 = ssub.s32 %s32, 1
        %s682 = sand.u32 %s130, 1
        %s683 = scalar_lea.sflag [#allocation3], %s682
        %s684 = sand.u32 %s130, 1
        %s685 = smul.addr %s684, 192
        %s686 = scalar_lea.vmem [#allocation2], %s685
        // Predicated region
        $region89: #{seq2seq_transformer_forward.3} parent=87 // pred_check
          %p687 = pneg %p143
        $region90: #{seq2seq_transformer_forward.3} parent=87 // pred_check_branch
          %689 = sbr.rel (%p687) target = $region92
        $region91: #{seq2seq_transformer_forward.3} parent=87 // pred_region
          %691 = dma.done %s683, 3072
        $region92: #{seq2seq_transformer_forward.3} parent=87 // pred_fallthru
          _
        %s692 = sand.u32 %s37, 1
        %s693 = scalar_lea.sflag [#allocation5], %s692
        %s694 = sand.u32 %s182, 1
        %s695 = smul.addr %s694, 64
        %s696 = scalar_lea.vmem [#allocation4], %s695
        // Predicated region
        $region93: #{seq2seq_transformer_forward.3} parent=87 // pred_check
          %p697 = pneg %p195
        $region94: #{seq2seq_transformer_forward.3} parent=87 // pred_check_branch
          %699 = sbr.rel (%p697) target = $region96
        $region95: #{seq2seq_transformer_forward.3} parent=87 // pred_region
          %701 = dma.done %s693, 1024
        $region96: #{seq2seq_transformer_forward.3} parent=87 // pred_fallthru
          _
        %s702 = sand.u32 %s37, 1
        %s703 = scalar_lea.sflag [#allocation5], %s702
        %s704 = sand.u32 %s286, 1
        %s705 = smul.addr %s704, 64
        %s706 = scalar_lea.vmem [#allocation6], %s705
        // Predicated region
        $region97: #{seq2seq_transformer_forward.3} parent=87 // pred_check
          %p707 = pneg %p299
        $region98: #{seq2seq_transformer_forward.3} parent=87 // pred_check_branch
          %709 = sbr.rel (%p707) target = $region100
        $region99: #{seq2seq_transformer_forward.3} parent=87 // pred_region
          %711 = dma.done %s703, 1024
        $region100: #{seq2seq_transformer_forward.3} parent=87 // pred_fallthru
          _
        %s712 = sand.u32 %s338, 1
        %s713 = scalar_lea.sflag [#allocation8], %s712
        %s714 = sand.u32 %s338, 1
        %s715 = smul.addr %s714, 64
        %s716 = scalar_lea.vmem [#allocation7], %s715
        // Predicated region
        $region101: #{seq2seq_transformer_forward.3} parent=87 // pred_check
          %p717 = pneg %p351
        $region102: #{seq2seq_transformer_forward.3} parent=87 // pred_check_branch
          %719 = sbr.rel (%p717) target = $region104
        $region103: #{seq2seq_transformer_forward.3} parent=87 // pred_region
          %721 = dma.done %s713, 1024
        $region104: #{seq2seq_transformer_forward.3} parent=87 // pred_fallthru
          _
        %p722 = scmp.lt.s32.totalorder %s41, 1
        %s723 = scalar_select %p722, %s41, 1
        %s724 = smul.addr %s723, 8
        %s725 = scalar_lea.vmem %s0, %s724
        %p726 = pneg %p70
        %p727 = pneg %p67
        %p728 = pneg %p91
        %p729 = pneg %p88
        %p730 = scmp.lt.s32.totalorder %s41, 1
        %s731 = scalar_select %p730, %s41, 1
        %s732 = scalar_lea.vmem %s2, %s731
        %p733 = pneg %p117
        %p734 = pneg %p114
        %s735 = sand.u32 %s130, 1
        %s736 = scalar_lea.sflag [#allocation3], %s735
        %s737 = sand.u32 %s130, 1
        %s738 = smul.addr %s737, 192
        %s739 = scalar_lea.vmem [#allocation2], %s738
        %p740 = pneg %p143
        %p741 = pneg %p140
        %p742 = scmp.lt.s32.totalorder %s42, 1
        %s743 = scalar_select %p742, %s42, 1
        %s744 = smul.addr %s743, 3
        %s745 = scalar_lea.vmem %s4, %s744
        %p746 = pneg %p169
        %p747 = pneg %p166
        %s748 = sand.u32 %s37, 1
        %s749 = scalar_lea.sflag [#allocation5], %s748
        %s750 = sand.u32 %s182, 1
        %s751 = smul.addr %s750, 64
        %s752 = scalar_lea.vmem [#allocation4], %s751
        %p753 = pneg %p195
        %p754 = pneg %p192
        %p755 = scmp.lt.s32.totalorder %s42, 1
        %s756 = scalar_select %p755, %s42, 1
        %s757 = scalar_lea.vmem %s6, %s756
        %p758 = pneg %p221
        %p759 = pneg %p218
        %p760 = scmp.lt.s32.totalorder %s42, 1
        %s761 = scalar_select %p760, %s42, 1
        %s762 = scalar_lea.vmem %s7, %s761
        %p763 = pneg %p247
        %p764 = pneg %p244
        %p765 = scmp.lt.s32.totalorder %s42, 1
        %s766 = scalar_select %p765, %s42, 1
        %s767 = scalar_lea.vmem %s8, %s766
        %p768 = pneg %p273
        %p769 = pneg %p270
        %s770 = sand.u32 %s37, 1
        %s771 = scalar_lea.sflag [#allocation5], %s770
        %s772 = sand.u32 %s286, 1
        %s773 = smul.addr %s772, 64
        %s774 = scalar_lea.vmem [#allocation6], %s773
        %p775 = pneg %p299
        %p776 = pneg %p296
        %p777 = scmp.lt.s32.totalorder %s42, 1
        %s778 = scalar_select %p777, %s42, 1
        %s779 = scalar_lea.vmem %s10, %s778
        %p780 = pneg %p325
        %p781 = pneg %p322
        %s782 = sand.u32 %s338, 1
        %s783 = scalar_lea.sflag [#allocation8], %s782
        %s784 = sand.u32 %s338, 1
        %s785 = smul.addr %s784, 64
        %s786 = scalar_lea.vmem [#allocation7], %s785
        %p787 = pneg %p351
        %p788 = pneg %p348
        %p789 = scmp.lt.s32.totalorder %s42, 1
        %s790 = scalar_select %p789, %s42, 1
        %s791 = scalar_lea.vmem %s12, %s790
        %p792 = pneg %p377
        %p793 = pneg %p374
        %p794 = scmp.lt.s32.totalorder %s42, 1
        %s795 = scalar_select %p794, %s42, 1
        %s796 = scalar_lea.vmem %s13, %s795
        %p797 = pneg %p403
        %p798 = pneg %p400
        %p799 = scmp.lt.s32.totalorder %s42, 1
        %s800 = scalar_select %p799, %s42, 1
        %s801 = scalar_lea.vmem %s14, %s800
        %p802 = pneg %p429
        %p803 = pneg %p426
        %p804 = pneg %p450
        %p805 = pneg %p447
        %p806 = pneg %p471
        %p807 = pneg %p468
        %p808 = pneg %p497
        %p809 = pneg %p494
        %p810 = scmp.lt.s32.totalorder %s41, 1
        %s811 = scalar_select %p810, %s41, 1
        %s812 = smul.addr %s811, 8
        %s813 = scalar_lea.vmem %s17, %s812
        %p814 = scmp.lt.s32.totalorder %s41, 1
        %s815 = scalar_select %p814, %s41, 1
        %s816 = smul.addr %s815, 8
        %s817 = scalar_lea.vmem %s0, %s816
        %p818 = scmp.lt.s32.totalorder %s41, 1
        %s819 = scalar_select %p818, %s41, 1
        %s820 = scalar_lea.vmem %s2, %s819
        %p821 = scmp.lt.s32.totalorder %s42, 1
        %s822 = scalar_select %p821, %s42, 1
        %s823 = smul.addr %s822, 3
        %s824 = scalar_lea.vmem %s4, %s823
        %p825 = scmp.lt.s32.totalorder %s42, 1
        %s826 = scalar_select %p825, %s42, 1
        %s827 = scalar_lea.vmem %s6, %s826
        %p828 = scmp.lt.s32.totalorder %s42, 1
        %s829 = scalar_select %p828, %s42, 1
        %s830 = scalar_lea.vmem %s7, %s829
        %p831 = scmp.lt.s32.totalorder %s42, 1
        %s832 = scalar_select %p831, %s42, 1
        %s833 = scalar_lea.vmem %s8, %s832
        %p834 = scmp.lt.s32.totalorder %s42, 1
        %s835 = scalar_select %p834, %s42, 1
        %s836 = scalar_lea.vmem %s10, %s835
        %p837 = scmp.lt.s32.totalorder %s42, 1
        %s838 = scalar_select %p837, %s42, 1
        %s839 = scalar_lea.vmem %s12, %s838
        %p840 = scmp.lt.s32.totalorder %s42, 1
        %s841 = scalar_select %p840, %s42, 1
        %s842 = scalar_lea.vmem %s13, %s841
        %p843 = scmp.lt.s32.totalorder %s42, 1
        %s844 = scalar_select %p843, %s42, 1
        %s845 = scalar_lea.vmem %s14, %s844
        %p846 = scmp.lt.s32.totalorder %s41, 1
        %s847 = scalar_select %p846, %s41, 1
        %s848 = smul.addr %s847, 8
        %s849 = scalar_lea.vmem %s17, %s848
        %p851 = scmp.eq.s32.totalorder %s42, 0
        // Predicated region
        $region105: #{seq2seq_transformer_forward.3} parent=87 // pred_check
          %p852 = pneg %p851
        $region106: #{seq2seq_transformer_forward.3} parent=87 // pred_check_branch
          %854 = sbr.rel (%p852) target = $region108
        $region107: #{seq2seq_transformer_forward.3} parent=87 // pred_region
          %v855 = vld [vmem:[%s817] sm:$0xff]
          %856 = vst [vmem:[%s849] sm:$0xff] %v855
        $region108: #{seq2seq_transformer_forward.3} parent=87 // pred_fallthru
          _
        %v857 = vld [vmem:[%s849] sm:$0xff]
        %v858 = vpack.c.bf16 %v857, %v857
        %v859 = vld [vmem:[%s686] sm:$0xff]
        %v860 = vld [vmem:[%s686 + $0x8] sm:$0xf]
        %v861 = vld [vmem:[%s686 + $0xc] sm:$0xff]
        %v862 = vld [vmem:[%s686 + $0x14] sm:$0xf]
        %v863 = vld [vmem:[%s686 + $0x18] sm:$0xff]
        %v864 = vld [vmem:[%s686 + $0x20] sm:$0xf]
        %v865 = vld [vmem:[%s686 + $0x24] sm:$0xff]
        %v866 = vld [vmem:[%s686 + $0x2c] sm:$0xf]
        %v867 = vld [vmem:[%s686 + $0x30] sm:$0xff]
        %v868 = vld [vmem:[%s686 + $0x38] sm:$0xf]
        %v869 = vld [vmem:[%s686 + $0x3c] sm:$0xff]
        %v870 = vld [vmem:[%s686 + $0x44] sm:$0xf]
        %v871 = vld [vmem:[%s686 + $0x48] sm:$0xff]
        %v872 = vld [vmem:[%s686 + $0x50] sm:$0xf]
        %v873 = vld [vmem:[%s686 + $0x54] sm:$0xff]
        %v874 = vld [vmem:[%s686 + $0x5c] sm:$0xf]
        %v875 = vld [vmem:[%s686 + $0x60] sm:$0xff]
        %v876 = vld [vmem:[%s686 + $0x68] sm:$0xf]
        %v877 = vld [vmem:[%s686 + $0x6c] sm:$0xff]
        %v878 = vld [vmem:[%s686 + $0x74] sm:$0xf]
        %v879 = vld [vmem:[%s686 + $0x78] sm:$0xff]
        %v880 = vld [vmem:[%s686 + $0x80] sm:$0xf]
        %v881 = vld [vmem:[%s686 + $0x84] sm:$0xff]
        %v882 = vld [vmem:[%s686 + $0x8c] sm:$0xf]
        %v883 = vld [vmem:[%s686 + $0x90] sm:$0xff]
        %v884 = vld [vmem:[%s686 + $0x98] sm:$0xf]
        %v885 = vld [vmem:[%s686 + $0x9c] sm:$0xff]
        %v886 = vld [vmem:[%s686 + $0xa4] sm:$0xf]
        %v887 = vld [vmem:[%s686 + $0xa8] sm:$0xff]
        %v888 = vld [vmem:[%s686 + $0xb0] sm:$0xf]
        %v889 = vld [vmem:[%s686 + $0xb4] sm:$0xff]
        %v890 = vld [vmem:[%s686 + $0xbc] sm:$0xf]
        %v891 = vld [vmem:[%s824] sm:$0x7]
        %v893 = vperm.slane %v891, 0
        %v894 = vperm.slane %v891, 1
        %v895 = vperm.slane %v891, 2
        %v931 = vunpack.c.l.b16 %v859
        %v932 = vunpack.c.h.b16 %v859
        %v933 = vunpack.c.l.b16 %v860
        %v934 = vunpack.c.l.b16 %v861
        %v935 = vunpack.c.h.b16 %v861
        %v936 = vunpack.c.l.b16 %v862
        %v937 = vunpack.c.l.b16 %v863
        %v938 = vunpack.c.h.b16 %v863
        %v939 = vunpack.c.l.b16 %v864
        %v940 = vunpack.c.l.b16 %v865
        %v941 = vunpack.c.h.b16 %v865
        %v942 = vunpack.c.l.b16 %v866
        %v943 = vunpack.c.l.b16 %v867
        %v944 = vunpack.c.h.b16 %v867
        %v945 = vunpack.c.l.b16 %v868
        %v946 = vunpack.c.l.b16 %v869
        %v947 = vunpack.c.h.b16 %v869
        %v948 = vunpack.c.l.b16 %v870
        %v949 = vunpack.c.l.b16 %v871
        %v950 = vunpack.c.h.b16 %v871
        %v951 = vunpack.c.l.b16 %v872
        %v952 = vunpack.c.l.b16 %v873
        %v953 = vunpack.c.h.b16 %v873
        %v954 = vunpack.c.l.b16 %v874
        %v955 = vunpack.c.l.b16 %v875
        %v956 = vunpack.c.h.b16 %v875
        %v957 = vunpack.c.l.b16 %v876
        %v958 = vunpack.c.l.b16 %v877
        %v959 = vunpack.c.h.b16 %v877
        %v960 = vunpack.c.l.b16 %v878
        %v961 = vunpack.c.l.b16 %v879
        %v962 = vunpack.c.h.b16 %v879
        %v963 = vunpack.c.l.b16 %v880
        %v964 = vunpack.c.l.b16 %v881
        %v965 = vunpack.c.h.b16 %v881
        %v966 = vunpack.c.l.b16 %v882
        %v967 = vunpack.c.l.b16 %v883
        %v968 = vunpack.c.h.b16 %v883
        %v969 = vunpack.c.l.b16 %v884
        %v970 = vunpack.c.l.b16 %v885
        %v971 = vunpack.c.h.b16 %v885
        %v972 = vunpack.c.l.b16 %v886
        %v973 = vunpack.c.l.b16 %v887
        %v974 = vunpack.c.h.b16 %v887
        %v975 = vunpack.c.l.b16 %v888
        %v976 = vunpack.c.l.b16 %v889
        %v977 = vunpack.c.h.b16 %v889
        %v978 = vunpack.c.l.b16 %v890
        %v979 = vpack.c.b16 %v934, %v931
        %v980 = vpack.c.b16 %v935, %v932
        %v981 = vpack.c.b16 %v936, %v933
        %v982 = vpack.c.b16 %v940, %v937
        %v983 = vpack.c.b16 %v941, %v938
        %v984 = vpack.c.b16 %v942, %v939
        %v985 = vpack.c.b16 %v946, %v943
        %v986 = vpack.c.b16 %v947, %v944
        %v987 = vpack.c.b16 %v948, %v945
        %v988 = vpack.c.b16 %v952, %v949
        %v989 = vpack.c.b16 %v953, %v950
        %v990 = vpack.c.b16 %v954, %v951
        %v991 = vpack.c.b16 %v958, %v955
        %v992 = vpack.c.b16 %v959, %v956
        %v993 = vpack.c.b16 %v960, %v957
        %v994 = vpack.c.b16 %v964, %v961
        %v995 = vpack.c.b16 %v965, %v962
        %v996 = vpack.c.b16 %v966, %v963
        %v997 = vpack.c.b16 %v970, %v967
        %v998 = vpack.c.b16 %v971, %v968
        %v999 = vpack.c.b16 %v972, %v969
        %v1000 = vpack.c.b16 %v976, %v973
        %v1001 = vpack.c.b16 %v977, %v974
        %v1002 = vpack.c.b16 %v978, %v975
        %1027 = vmatpush.bf16.msra.mxu0 %v1000
        %1028 = vmatpush.bf16.msra.mxu0 %v997
        %1029 = vmatpush.bf16.msra.mxu0 %v994
        %1030 = vmatpush.bf16.msra.mxu0 %v991
        %1031 = vmatpush.bf16.msra.mxu0 %v988
        %1032 = vmatpush.bf16.msra.mxu0 %v985
        %1033 = vmatpush.bf16.msra.mxu0 %v982
        %1034 = vmatpush.bf16.msra.mxu0 %v979
        %1035 = vmatmul.bf16.gmra.mxu0 %v858
        %v1036 = vpop.f32.mrf.mxu0
        %v1037 = vadd.f32 %v893, %v1036
        %v1038 = vpop.f32.mrf.mxu0
        %1039 = vdwg.mxu0
        %1040 = vmatpush.bf16.msra.mxu0 %v1001
        %1041 = vmatpush.bf16.msra.mxu0 %v998
        %1042 = vmatpush.bf16.msra.mxu0 %v995
        %1043 = vmatpush.bf16.msra.mxu0 %v992
        %1044 = vmatpush.bf16.msra.mxu0 %v989
        %1045 = vmatpush.bf16.msra.mxu0 %v986
        %1046 = vmatpush.bf16.msra.mxu0 %v983
        %1047 = vmatpush.bf16.msra.mxu0 %v980
        %1048 = vmatmul.bf16.gmra.mxu0 %v858
        %v1049 = vpop.f32.mrf.mxu0
        %v1050 = vadd.f32 %v894, %v1049
        %v1051 = vpop.f32.mrf.mxu0
        %1052 = vdwg.mxu0
        %1053 = vmatpush.bf16.msra.mxu0 %v1002
        %1054 = vmatpush.bf16.msra.mxu0 %v999
        %1055 = vmatpush.bf16.msra.mxu0 %v996
        %1056 = vmatpush.bf16.msra.mxu0 %v993
        %1057 = vmatpush.bf16.msra.mxu0 %v990
        %1058 = vmatpush.bf16.msra.mxu0 %v987
        %1059 = vmatpush.bf16.msra.mxu0 %v984
        %1060 = vmatpush.bf16.msra.mxu0 %v981
        %1061 = vmatmul.bf16.gmra.mxu0 %v858
        %v1062 = vpop.f32.mrf.mxu0
        %v1063 = vadd.f32 %v895, %v1062
        %v1064 = vpop.f32.mrf.mxu0
        %1065 = vdwg.mxu0
        %v1066 = vld [vmem:[%s1] sm:$0xff]
        %v1067 = vld [vmem:[%s820] sm:$0x1]
        %v1069 = vperm.slane %v1067, 0
        %v1071 = vadd.f32 %v1066, %v1069
        %v1072 = vmax.f32 %v1071, -1e+09
        %v1073 = vpack.c.bf16 %v1037, %v1037
        %v1074 = vpack.c.bf16 %v1050, %v1050
        %v1075 = vpack.c.bf16 %v1063, %v1063
        %vm1076 = vcmask 261120
        %v1078 = vsel %vm1076, %v1073, 0
        %v1081 = vsel %vm1076, %v1074, 0
        %1083 = vmatpush.bf16.xpose.msra.mxu0 0
        %1084 = vmatpush.bf16.xpose.msra.mxu0 0
        %1085 = vmatpush.bf16.xpose.msra.mxu0 0
        %1086 = vmatpush.bf16.xpose.msra.mxu0 0
        %1087 = vmatpush.bf16.xpose.msra.mxu0 0
        %1088 = vmatpush.bf16.xpose.msra.mxu0 0
        %1089 = vmatpush.bf16.xpose.msra.mxu0 0
        %1090 = vmatpush.bf16.xpose.msra.mxu0 %v1081
        %1091 = vmatmul.bf16.gmra.mxu0 %v1078
        %v1092 = vpop.f32.mrf.mxu0
        %v1093 = vadd.f32 0.0, %v1092
        %v1094 = vpop.f32.mrf.mxu0
        %1095 = vdwg.mxu0
        %v1096 = vmul.f32 %v1093, 0.35355338
        %v1097 = vadd.f32 %v1096, %v1072
        %vm1098 = vcmask 64512
        %v1099 = vsel %vm1098, %v1097, -inf
        %1100 = vmax.xlane.f32.xlu0 %v1099
        %v1101 = vpop.xlane.xlu0 %1100
        %v1102 = vsub.f32 %v1097, %v1101
        %v1103 = vmul.f32 %v1102, 1.442695
        %v1104 = vpow.pop %v1103
        %v1105 = vsel %vm1098, %v1104, 0.0
        %1106 = vadd.xlane.f32.xlu0 %v1105
        %v1107 = vpop.xlane.xlu0 %1106
        %v1108 = vrcp.pop %v1107
        %v1109 = vmul.f32 %v1104, %v1108
        %v1110 = vpack.c.bf16 %v1109, %v1109
        %v1112 = vsel %vm1098, %v1110, 0
        %vm1114 = vcmask 1043456
        %v1116 = vsel %vm1114, %v1075, 0
        %1118 = vmatpush.bf16.msra.mxu0 0
        %1119 = vmatpush.bf16.msra.mxu0 0
        %1120 = vmatpush.bf16.msra.mxu0 0
        %1121 = vmatpush.bf16.msra.mxu0 0
        %1122 = vmatpush.bf16.msra.mxu0 0
        %1123 = vmatpush.bf16.msra.mxu0 0
        %1124 = vmatpush.bf16.msra.mxu0 0
        %1125 = vmatpush.bf16.msra.mxu0 %v1116
        %1126 = vmatmul.bf16.gmra.mxu0 %v1112
        %v1127 = vpop.f32.mrf.mxu0
        %v1128 = vadd.f32 0.0, %v1127
        %v1129 = vpop.f32.mrf.mxu0
        %1130 = vdwg.mxu0
        %1132 = vrot.lane.b32.xlu0 %v1073, 96
        %v1133 = vpop.permute.xlu0 %1132
        %1135 = vrot.lane.b32.xlu0 %v1074, 96
        %v1136 = vpop.permute.xlu0 %1135
        %v1138 = vsel %vm1076, %v1133, 0
        %v1141 = vsel %vm1076, %v1136, 0
        %1143 = vmatpush.bf16.xpose.msra.mxu0 0
        %1144 = vmatpush.bf16.xpose.msra.mxu0 0
        %1145 = vmatpush.bf16.xpose.msra.mxu0 0
        %1146 = vmatpush.bf16.xpose.msra.mxu0 0
        %1147 = vmatpush.bf16.xpose.msra.mxu0 0
        %1148 = vmatpush.bf16.xpose.msra.mxu0 0
        %1149 = vmatpush.bf16.xpose.msra.mxu0 0
        %1150 = vmatpush.bf16.xpose.msra.mxu0 %v1141
        %1151 = vmatmul.bf16.gmra.mxu0 %v1138
        %v1152 = vpop.f32.mrf.mxu0
        %v1153 = vadd.f32 0.0, %v1152
        %v1154 = vpop.f32.mrf.mxu0
        %1155 = vdwg.mxu0
        %v1156 = vmul.f32 %v1153, 0.35355338
        %v1157 = vadd.f32 %v1156, %v1072
        %v1158 = vsel %vm1098, %v1157, -inf
        %1159 = vmax.xlane.f32.xlu0 %v1158
        %v1160 = vpop.xlane.xlu0 %1159
        %v1161 = vsub.f32 %v1157, %v1160
        %v1162 = vmul.f32 %v1161, 1.442695
        %v1163 = vpow.pop %v1162
        %v1164 = vsel %vm1098, %v1163, 0.0
        %1165 = vadd.xlane.f32.xlu0 %v1164
        %v1166 = vpop.xlane.xlu0 %1165
        %v1167 = vrcp.pop %v1166
        %v1168 = vmul.f32 %v1163, %v1167
        %v1169 = vpack.c.bf16 %v1168, %v1168
        %1171 = vrot.lane.b32.xlu0 %v1075, 96
        %v1172 = vpop.permute.xlu0 %1171
        %v1174 = vsel %vm1098, %v1169, 0
        %v1177 = vsel %vm1114, %v1172, 0
        %1179 = vmatpush.bf16.msra.mxu0 0
        %1180 = vmatpush.bf16.msra.mxu0 0
        %1181 = vmatpush.bf16.msra.mxu0 0
        %1182 = vmatpush.bf16.msra.mxu0 0
        %1183 = vmatpush.bf16.msra.mxu0 0
        %1184 = vmatpush.bf16.msra.mxu0 0
        %1185 = vmatpush.bf16.msra.mxu0 0
        %1186 = vmatpush.bf16.msra.mxu0 %v1177
        %1187 = vmatmul.bf16.gmra.mxu0 %v1174
        %v1188 = vpop.f32.mrf.mxu0
        %v1189 = vadd.f32 0.0, %v1188
        %v1190 = vpop.f32.mrf.mxu0
        %1191 = vdwg.mxu0
        %1192 = vrot.lane.b32.xlu0 %v1073, 64
        %v1193 = vpop.permute.xlu0 %1192
        %1194 = vrot.lane.b32.xlu0 %v1074, 64
        %v1195 = vpop.permute.xlu0 %1194
        %v1197 = vsel %vm1076, %v1193, 0
        %v1200 = vsel %vm1076, %v1195, 0
        %1202 = vmatpush.bf16.xpose.msra.mxu0 0
        %1203 = vmatpush.bf16.xpose.msra.mxu0 0
        %1204 = vmatpush.bf16.xpose.msra.mxu0 0
        %1205 = vmatpush.bf16.xpose.msra.mxu0 0
        %1206 = vmatpush.bf16.xpose.msra.mxu0 0
        %1207 = vmatpush.bf16.xpose.msra.mxu0 0
        %1208 = vmatpush.bf16.xpose.msra.mxu0 0
        %1209 = vmatpush.bf16.xpose.msra.mxu0 %v1200
        %1210 = vmatmul.bf16.gmra.mxu0 %v1197
        %v1211 = vpop.f32.mrf.mxu0
        %v1212 = vadd.f32 0.0, %v1211
        %v1213 = vpop.f32.mrf.mxu0
        %1214 = vdwg.mxu0
        %v1215 = vmul.f32 %v1212, 0.35355338
        %v1216 = vadd.f32 %v1215, %v1072
        %v1217 = vsel %vm1098, %v1216, -inf
        %1218 = vmax.xlane.f32.xlu0 %v1217
        %v1219 = vpop.xlane.xlu0 %1218
        %v1220 = vsub.f32 %v1216, %v1219
        %v1221 = vmul.f32 %v1220, 1.442695
        %v1222 = vpow.pop %v1221
        %v1223 = vsel %vm1098, %v1222, 0.0
        %1224 = vadd.xlane.f32.xlu0 %v1223
        %v1225 = vpop.xlane.xlu0 %1224
        %v1226 = vrcp.pop %v1225
        %v1227 = vmul.f32 %v1222, %v1226
        %v1228 = vpack.c.bf16 %v1227, %v1227
        %1229 = vrot.lane.b32.xlu0 %v1075, 64
        %v1230 = vpop.permute.xlu0 %1229
        %v1232 = vsel %vm1098, %v1228, 0
        %v1235 = vsel %vm1114, %v1230, 0
        %1237 = vmatpush.bf16.msra.mxu0 0
        %1238 = vmatpush.bf16.msra.mxu0 0
        %1239 = vmatpush.bf16.msra.mxu0 0
        %1240 = vmatpush.bf16.msra.mxu0 0
        %1241 = vmatpush.bf16.msra.mxu0 0
        %1242 = vmatpush.bf16.msra.mxu0 0
        %1243 = vmatpush.bf16.msra.mxu0 0
        %1244 = vmatpush.bf16.msra.mxu0 %v1235
        %1245 = vmatmul.bf16.gmra.mxu0 %v1232
        %v1246 = vpop.f32.mrf.mxu0
        %v1247 = vadd.f32 0.0, %v1246
        %v1248 = vpop.f32.mrf.mxu0
        %1249 = vdwg.mxu0
        %1250 = vrot.lane.b32.xlu0 %v1073, 32
        %v1251 = vpop.permute.xlu0 %1250
        %1252 = vrot.lane.b32.xlu0 %v1074, 32
        %v1253 = vpop.permute.xlu0 %1252
        %v1255 = vsel %vm1076, %v1251, 0
        %v1258 = vsel %vm1076, %v1253, 0
        %1260 = vmatpush.bf16.xpose.msra.mxu0 0
        %1261 = vmatpush.bf16.xpose.msra.mxu0 0
        %1262 = vmatpush.bf16.xpose.msra.mxu0 0
        %1263 = vmatpush.bf16.xpose.msra.mxu0 0
        %1264 = vmatpush.bf16.xpose.msra.mxu0 0
        %1265 = vmatpush.bf16.xpose.msra.mxu0 0
        %1266 = vmatpush.bf16.xpose.msra.mxu0 0
        %1267 = vmatpush.bf16.xpose.msra.mxu0 %v1258
        %1268 = vmatmul.bf16.gmra.mxu0 %v1255
        %v1269 = vpop.f32.mrf.mxu0
        %v1270 = vadd.f32 0.0, %v1269
        %v1271 = vpop.f32.mrf.mxu0
        %1272 = vdwg.mxu0
        %v1273 = vmul.f32 %v1270, 0.35355338
        %v1274 = vadd.f32 %v1273, %v1072
        %v1275 = vsel %vm1098, %v1274, -inf
        %1276 = vmax.xlane.f32.xlu0 %v1275
        %v1277 = vpop.xlane.xlu0 %1276
        %v1278 = vsub.f32 %v1274, %v1277
        %v1279 = vmul.f32 %v1278, 1.442695
        %v1280 = vpow.pop %v1279
        %v1281 = vsel %vm1098, %v1280, 0.0
        %1282 = vadd.xlane.f32.xlu0 %v1281
        %v1283 = vpop.xlane.xlu0 %1282
        %v1284 = vrcp.pop %v1283
        %v1285 = vmul.f32 %v1280, %v1284
        %v1286 = vpack.c.bf16 %v1285, %v1285
        %1287 = vrot.lane.b32.xlu0 %v1075, 32
        %v1288 = vpop.permute.xlu0 %1287
        %v1290 = vsel %vm1098, %v1286, 0
        %v1293 = vsel %vm1114, %v1288, 0
        %1295 = vmatpush.bf16.msra.mxu0 0
        %1296 = vmatpush.bf16.msra.mxu0 0
        %1297 = vmatpush.bf16.msra.mxu0 0
        %1298 = vmatpush.bf16.msra.mxu0 0
        %1299 = vmatpush.bf16.msra.mxu0 0
        %1300 = vmatpush.bf16.msra.mxu0 0
        %1301 = vmatpush.bf16.msra.mxu0 0
        %1302 = vmatpush.bf16.msra.mxu0 %v1293
        %1303 = vmatmul.bf16.gmra.mxu0 %v1290
        %v1304 = vpop.f32.mrf.mxu0
        %v1305 = vadd.f32 0.0, %v1304
        %v1306 = vpop.f32.mrf.mxu0
        %1307 = vdwg.mxu0
        %1309 = vrot.lane.b32.xlu0 %v1189, 32
        %v1310 = vpop.permute.xlu0 %1309
        %1313 = vrot.lane.b32.xlu0 %v1247, 64
        %v1314 = vpop.permute.xlu0 %1313
        %1317 = vrot.lane.b32.xlu0 %v1305, 96
        %v1318 = vpop.permute.xlu0 %1317
        %v1320 = vsel %vm1076, %v1128, %v1310
        %vm1321 = vcmask 523264
        %v1322 = vsel %vm1321, %v1320, %v1314
        %vm1323 = vcmask 785408
        %v1324 = vsel %vm1323, %v1322, %v1318
        %v1325 = vpack.c.bf16 %v1324, %v1324
        %v1326 = vld [vmem:[%s696] sm:$0xf]
        %v1327 = vld [vmem:[%s696 + $0x4] sm:$0xf]
        %v1328 = vld [vmem:[%s696 + $0x8] sm:$0xf]
        %v1329 = vld [vmem:[%s696 + $0xc] sm:$0xf]
        %v1330 = vld [vmem:[%s696 + $0x10] sm:$0xf]
        %v1331 = vld [vmem:[%s696 + $0x14] sm:$0xf]
        %v1332 = vld [vmem:[%s696 + $0x18] sm:$0xf]
        %v1333 = vld [vmem:[%s696 + $0x1c] sm:$0xf]
        %v1334 = vld [vmem:[%s696 + $0x20] sm:$0xf]
        %v1335 = vld [vmem:[%s696 + $0x24] sm:$0xf]
        %v1336 = vld [vmem:[%s696 + $0x28] sm:$0xf]
        %v1337 = vld [vmem:[%s696 + $0x2c] sm:$0xf]
        %v1338 = vld [vmem:[%s696 + $0x30] sm:$0xf]
        %v1339 = vld [vmem:[%s696 + $0x34] sm:$0xf]
        %v1340 = vld [vmem:[%s696 + $0x38] sm:$0xf]
        %v1341 = vld [vmem:[%s696 + $0x3c] sm:$0xf]
        %v1342 = vld [vmem:[%s827] sm:$0x1]
        %v1344 = vperm.slane %v1342, 0
        %v1362 = vunpack.c.l.b16 %v1326
        %v1363 = vunpack.c.l.b16 %v1327
        %v1364 = vunpack.c.l.b16 %v1328
        %v1365 = vunpack.c.l.b16 %v1329
        %v1366 = vunpack.c.l.b16 %v1330
        %v1367 = vunpack.c.l.b16 %v1331
        %v1368 = vunpack.c.l.b16 %v1332
        %v1369 = vunpack.c.l.b16 %v1333
        %v1370 = vunpack.c.l.b16 %v1334
        %v1371 = vunpack.c.l.b16 %v1335
        %v1372 = vunpack.c.l.b16 %v1336
        %v1373 = vunpack.c.l.b16 %v1337
        %v1374 = vunpack.c.l.b16 %v1338
        %v1375 = vunpack.c.l.b16 %v1339
        %v1376 = vunpack.c.l.b16 %v1340
        %v1377 = vunpack.c.l.b16 %v1341
        %v1378 = vpack.c.b16 %v1363, %v1362
        %v1379 = vpack.c.b16 %v1365, %v1364
        %v1380 = vpack.c.b16 %v1367, %v1366
        %v1381 = vpack.c.b16 %v1369, %v1368
        %v1382 = vpack.c.b16 %v1371, %v1370
        %v1383 = vpack.c.b16 %v1373, %v1372
        %v1384 = vpack.c.b16 %v1375, %v1374
        %v1385 = vpack.c.b16 %v1377, %v1376
        %1394 = vmatpush.bf16.msra.mxu0 %v1385
        %1395 = vmatpush.bf16.msra.mxu0 %v1384
        %1396 = vmatpush.bf16.msra.mxu0 %v1383
        %1397 = vmatpush.bf16.msra.mxu0 %v1382
        %1398 = vmatpush.bf16.msra.mxu0 %v1381
        %1399 = vmatpush.bf16.msra.mxu0 %v1380
        %1400 = vmatpush.bf16.msra.mxu0 %v1379
        %1401 = vmatpush.bf16.msra.mxu0 %v1378
        %1402 = vmatmul.bf16.gmra.mxu0 %v1325
        %v1403 = vpop.f32.mrf.mxu0
        %v1404 = vadd.f32 %v1344, %v1403
        %v1405 = vpop.f32.mrf.mxu0
        %1406 = vdwg.mxu0
        %v1407 = vadd.f32 %v857, %v1404
        %v1408 = vld [vmem:[%s830] sm:$0x1]
        %v1409 = vld [vmem:[%s833] sm:$0x1]
        %v1410 = vlaneseq
        %v1411 = vand.u32 %v1410, 127
        %vm1412 = vcmp.lt.s32.totalorder %v1411, 32
        %1413 = vadd.xlane.f32.xlu0 %v1407
        %v1414 = vpop.xlane.xlu0 %1413
        %v1415 = vmul.f32 %v1414, 0.03125
        %v1416 = vsub.f32 %v1407, %v1415
        %v1417 = vsel %vm1412, %v1416, 0.0
        %v1418 = vmul.f32 %v1417, %v1417
        %1419 = vadd.xlane.f32.xlu0 %v1418
        %v1420 = vpop.xlane.xlu0 %1419
        %v1421 = vmul.f32 %v1420, 0.03125
        %v1422 = vadd.f32 %v1421, 1e-05
        %v1423 = vrsqrt.pop %v1422
        %v1424 = vmul.f32 %v1423, %v1422
        %v1425 = vmul.f32 %v1424, %v1423
        %v1426 = vmul.f32 0.5, %v1425
        %v1427 = vsub.f32 1.5, %v1426
        %v1428 = vmul.f32 %v1423, %v1427
        %vm1429 = vweird.f32 %v1422
        %vm1430 = vweird.f32 %v1423
        %vm1431 = vmor %vm1429, %vm1430
        %v1432 = vsel %vm1431, %v1423, %v1428
        %v1433 = vmul.f32 %v1417, %v1432
        %v1435 = vperm.slane %v1408, 0
        %v1437 = vmul.f32 %v1433, %v1435
        %v1439 = vperm.slane %v1409, 0
        %v1441 = vadd.f32 %v1437, %v1439
        %v1442 = vpack.c.bf16 %v1441, %v1441
        %v1443 = vld [vmem:[%s706] sm:$0xf]
        %v1444 = vld [vmem:[%s706 + $0x4] sm:$0xf]
        %v1445 = vld [vmem:[%s706 + $0x8] sm:$0xf]
        %v1446 = vld [vmem:[%s706 + $0xc] sm:$0xf]
        %v1447 = vld [vmem:[%s706 + $0x10] sm:$0xf]
        %v1448 = vld [vmem:[%s706 + $0x14] sm:$0xf]
        %v1449 = vld [vmem:[%s706 + $0x18] sm:$0xf]
        %v1450 = vld [vmem:[%s706 + $0x1c] sm:$0xf]
        %v1451 = vld [vmem:[%s706 + $0x20] sm:$0xf]
        %v1452 = vld [vmem:[%s706 + $0x24] sm:$0xf]
        %v1453 = vld [vmem:[%s706 + $0x28] sm:$0xf]
        %v1454 = vld [vmem:[%s706 + $0x2c] sm:$0xf]
        %v1455 = vld [vmem:[%s706 + $0x30] sm:$0xf]
        %v1456 = vld [vmem:[%s706 + $0x34] sm:$0xf]
        %v1457 = vld [vmem:[%s706 + $0x38] sm:$0xf]
        %v1458 = vld [vmem:[%s706 + $0x3c] sm:$0xf]
        %v1459 = vld [vmem:[%s836] sm:$0x1]
        %v1461 = vperm.slane %v1459, 0
        %v1479 = vunpack.c.l.b16 %v1443
        %v1480 = vunpack.c.l.b16 %v1444
        %v1481 = vunpack.c.l.b16 %v1445
        %v1482 = vunpack.c.l.b16 %v1446
        %v1483 = vunpack.c.l.b16 %v1447
        %v1484 = vunpack.c.l.b16 %v1448
        %v1485 = vunpack.c.l.b16 %v1449
        %v1486 = vunpack.c.l.b16 %v1450
        %v1487 = vunpack.c.l.b16 %v1451
        %v1488 = vunpack.c.l.b16 %v1452
        %v1489 = vunpack.c.l.b16 %v1453
        %v1490 = vunpack.c.l.b16 %v1454
        %v1491 = vunpack.c.l.b16 %v1455
        %v1492 = vunpack.c.l.b16 %v1456
        %v1493 = vunpack.c.l.b16 %v1457
        %v1494 = vunpack.c.l.b16 %v1458
        %v1495 = vpack.c.b16 %v1480, %v1479
        %v1496 = vpack.c.b16 %v1482, %v1481
        %v1497 = vpack.c.b16 %v1484, %v1483
        %v1498 = vpack.c.b16 %v1486, %v1485
        %v1499 = vpack.c.b16 %v1488, %v1487
        %v1500 = vpack.c.b16 %v1490, %v1489
        %v1501 = vpack.c.b16 %v1492, %v1491
        %v1502 = vpack.c.b16 %v1494, %v1493
        %1511 = vmatpush.bf16.msra.mxu0 %v1502
        %1512 = vmatpush.bf16.msra.mxu0 %v1501
        %1513 = vmatpush.bf16.msra.mxu0 %v1500
        %1514 = vmatpush.bf16.msra.mxu0 %v1499
        %1515 = vmatpush.bf16.msra.mxu0 %v1498
        %1516 = vmatpush.bf16.msra.mxu0 %v1497
        %1517 = vmatpush.bf16.msra.mxu0 %v1496
        %1518 = vmatpush.bf16.msra.mxu0 %v1495
        %1519 = vmatmul.bf16.gmra.mxu0 %v1442
        %v1520 = vpop.f32.mrf.mxu0
        %v1521 = vadd.f32 %v1461, %v1520
        %v1522 = vpop.f32.mrf.mxu0
        %1523 = vdwg.mxu0
        %v1524 = vmax.f32 %v1521, 0.0
        %v1525 = vpack.c.bf16 %v1524, %v1524
        %v1526 = vld [vmem:[%s716] sm:$0xf]
        %v1527 = vld [vmem:[%s716 + $0x4] sm:$0xf]
        %v1528 = vld [vmem:[%s716 + $0x8] sm:$0xf]
        %v1529 = vld [vmem:[%s716 + $0xc] sm:$0xf]
        %v1530 = vld [vmem:[%s716 + $0x10] sm:$0xf]
        %v1531 = vld [vmem:[%s716 + $0x14] sm:$0xf]
        %v1532 = vld [vmem:[%s716 + $0x18] sm:$0xf]
        %v1533 = vld [vmem:[%s716 + $0x1c] sm:$0xf]
        %v1534 = vld [vmem:[%s716 + $0x20] sm:$0xf]
        %v1535 = vld [vmem:[%s716 + $0x24] sm:$0xf]
        %v1536 = vld [vmem:[%s716 + $0x28] sm:$0xf]
        %v1537 = vld [vmem:[%s716 + $0x2c] sm:$0xf]
        %v1538 = vld [vmem:[%s716 + $0x30] sm:$0xf]
        %v1539 = vld [vmem:[%s716 + $0x34] sm:$0xf]
        %v1540 = vld [vmem:[%s716 + $0x38] sm:$0xf]
        %v1541 = vld [vmem:[%s716 + $0x3c] sm:$0xf]
        %v1542 = vld [vmem:[%s839] sm:$0x1]
        %v1544 = vperm.slane %v1542, 0
        %v1562 = vunpack.c.l.b16 %v1526
        %v1563 = vunpack.c.l.b16 %v1527
        %v1564 = vunpack.c.l.b16 %v1528
        %v1565 = vunpack.c.l.b16 %v1529
        %v1566 = vunpack.c.l.b16 %v1530
        %v1567 = vunpack.c.l.b16 %v1531
        %v1568 = vunpack.c.l.b16 %v1532
        %v1569 = vunpack.c.l.b16 %v1533
        %v1570 = vunpack.c.l.b16 %v1534
        %v1571 = vunpack.c.l.b16 %v1535
        %v1572 = vunpack.c.l.b16 %v1536
        %v1573 = vunpack.c.l.b16 %v1537
        %v1574 = vunpack.c.l.b16 %v1538
        %v1575 = vunpack.c.l.b16 %v1539
        %v1576 = vunpack.c.l.b16 %v1540
        %v1577 = vunpack.c.l.b16 %v1541
        %v1578 = vpack.c.b16 %v1563, %v1562
        %v1579 = vpack.c.b16 %v1565, %v1564
        %v1580 = vpack.c.b16 %v1567, %v1566
        %v1581 = vpack.c.b16 %v1569, %v1568
        %v1582 = vpack.c.b16 %v1571, %v1570
        %v1583 = vpack.c.b16 %v1573, %v1572
        %v1584 = vpack.c.b16 %v1575, %v1574
        %v1585 = vpack.c.b16 %v1577, %v1576
        %1594 = vmatpush.bf16.msra.mxu0 %v1585
        %1595 = vmatpush.bf16.msra.mxu0 %v1584
        %1596 = vmatpush.bf16.msra.mxu0 %v1583
        %1597 = vmatpush.bf16.msra.mxu0 %v1582
        %1598 = vmatpush.bf16.msra.mxu0 %v1581
        %1599 = vmatpush.bf16.msra.mxu0 %v1580
        %1600 = vmatpush.bf16.msra.mxu0 %v1579
        %1601 = vmatpush.bf16.msra.mxu0 %v1578
        %1602 = vmatmul.bf16.gmra.mxu0 %v1525
        %v1603 = vpop.f32.mrf.mxu0
        %v1604 = vadd.f32 %v1544, %v1603
        %v1605 = vpop.f32.mrf.mxu0
        %1606 = vdwg.mxu0
        %v1607 = vadd.f32 %v1441, %v1604
        %v1608 = vld [vmem:[%s842] sm:$0x1]
        %v1609 = vld [vmem:[%s845] sm:$0x1]
        %1610 = vadd.xlane.f32.xlu0 %v1607
        %v1611 = vpop.xlane.xlu0 %1610
        %v1612 = vmul.f32 %v1611, 0.03125
        %v1613 = vsub.f32 %v1607, %v1612
        %v1614 = vsel %vm1412, %v1613, 0.0
        %v1615 = vmul.f32 %v1614, %v1614
        %1616 = vadd.xlane.f32.xlu0 %v1615
        %v1617 = vpop.xlane.xlu0 %1616
        %v1618 = vmul.f32 %v1617, 0.03125
        %v1619 = vadd.f32 %v1618, 1e-05
        %v1620 = vrsqrt.pop %v1619
        %v1621 = vmul.f32 %v1620, %v1619
        %v1622 = vmul.f32 %v1621, %v1620
        %v1623 = vmul.f32 0.5, %v1622
        %v1624 = vsub.f32 1.5, %v1623
        %v1625 = vmul.f32 %v1620, %v1624
        %vm1626 = vweird.f32 %v1619
        %vm1627 = vweird.f32 %v1620
        %vm1628 = vmor %vm1626, %vm1627
        %v1629 = vsel %vm1628, %v1620, %v1625
        %v1630 = vmul.f32 %v1614, %v1629
        %v1632 = vperm.slane %v1608, 0
        %v1634 = vmul.f32 %v1630, %v1632
        %v1636 = vperm.slane %v1609, 0
        %v1638 = vadd.f32 %v1634, %v1636
        %1639 = vst [vmem:[%s849] sm:$0xff] %v1638
        %p1640 = scmp.eq.s32.totalorder %s42, 1
        // Predicated region
        $region109: #{seq2seq_transformer_forward.3} parent=87 // pred_check
          %p1641 = pneg %p1640
        $region110: #{seq2seq_transformer_forward.3} parent=87 // pred_check_branch
          %1643 = sbr.rel (%p1641) target = $region112
        $region111: #{seq2seq_transformer_forward.3} parent=87 // pred_region
          %v1644 = vld [vmem:[%s15] sm:$0x1]
          %v1645 = vld [vmem:[%s16] sm:$0x1]
          %1646 = vadd.xlane.f32.xlu0 %v1638
          %v1647 = vpop.xlane.xlu0 %1646
          %v1648 = vmul.f32 %v1647, 0.03125
          %v1649 = vsub.f32 %v1638, %v1648
          %v1650 = vsel %vm1412, %v1649, 0.0
          %v1651 = vmul.f32 %v1650, %v1650
          %1652 = vadd.xlane.f32.xlu0 %v1651
          %v1653 = vpop.xlane.xlu0 %1652
          %v1654 = vmul.f32 %v1653, 0.03125
          %v1655 = vadd.f32 %v1654, 1e-05
          %v1656 = vrsqrt.pop %v1655
          %v1657 = vmul.f32 %v1656, %v1655
          %v1658 = vmul.f32 %v1657, %v1656
          %v1659 = vmul.f32 0.5, %v1658
          %v1660 = vsub.f32 1.5, %v1659
          %v1661 = vmul.f32 %v1656, %v1660
          %vm1662 = vweird.f32 %v1655
          %vm1663 = vweird.f32 %v1656
          %vm1664 = vmor %vm1662, %vm1663
          %v1665 = vsel %vm1664, %v1656, %v1661
          %v1666 = vmul.f32 %v1650, %v1665
          %v1668 = vperm.slane %v1644, 0
          %v1670 = vmul.f32 %v1666, %v1668
          %v1672 = vperm.slane %v1645, 0
          %v1674 = vadd.f32 %v1670, %v1672
          %1675 = vst [vmem:[%s849] sm:$0xff] %v1674
        $region112: #{seq2seq_transformer_forward.3} parent=87 // pred_fallthru
          _
        %p1676 = scmp.lt.s32.totalorder %s41, 1
        %s1677 = scalar_select %p1676, %s41, 1
        %s1678 = smul.addr %s1677, 8
        %s1679 = scalar_lea.vmem %s17, %s1678
        // Predicated region
        $region113: #{seq2seq_transformer_forward.3} parent=87 // pred_check
          %p1680 = pneg %p494
        $region114: #{seq2seq_transformer_forward.3} parent=87 // pred_check_branch
          %1682 = sbr.rel (%p1680) target = $region116
        $region115: #{seq2seq_transformer_forward.3} parent=87 // pred_region
          _
        $region116: #{seq2seq_transformer_forward.3} parent=87 // pred_fallthru
          _
      $region88: #{seq2seq_transformer_forward.3} parent=5 // pred_fallthru
        _
      %p1683 = scmp.le.s32.totalorder 2, %s32
      // Predicated region
      $region117: #{seq2seq_transformer_forward.3} parent=5 // pred_check
        %p1684 = pneg %p1683
      $region118: #{seq2seq_transformer_forward.3} parent=5 // pred_check_branch
        %1686 = sbr.rel (%p1684) target = $region120
      $region119: #{seq2seq_transformer_forward.3} parent=5 // pred_region
        %s1687 = ssub.s32 %s32, 2
        // Predicated region
        $region121: #{seq2seq_transformer_forward.3} parent=119 // pred_check
          %p1688 = pneg %p500
        $region122: #{seq2seq_transformer_forward.3} parent=119 // pred_check_branch
          %1690 = sbr.rel (%p1688) target = $region124
        $region123: #{seq2seq_transformer_forward.3} parent=119 // pred_region
          %p1691 = scmp.lt.s32.totalorder %s43, 1
          %s1692 = scalar_select %p1691, %s43, 1
          %s1693 = smul.addr %s1692, 8
          %s1694 = scalar_lea.vmem %s17, %s1693
        $region124: #{seq2seq_transformer_forward.3} parent=119 // pred_fallthru
          _
      $region120: #{seq2seq_transformer_forward.3} parent=5 // pred_fallthru
        _
    $region6: #{seq2seq_transformer_forward.3} parent=1 // loop_footer
      %s36 = sadd.s32 1, %s32
    $region7: #{seq2seq_transformer_forward.3} parent=1 // loop_footer_branch
      %31 = sbr.rel target = $region3
    $region8: #{seq2seq_transformer_forward.3} parent=1 // loop_exit
      _
    %1695 = vsyncpa [#allocation3], 1
    %s1696 = scalar_lea.sflag [#allocation3], 1
    %1697 = vsyncpa %s1696, 1
    %1698 = vsyncpa [#allocation5], 1
    %s1699 = scalar_lea.sflag [#allocation5], 1
    %1700 = vsyncpa %s1699, 1
    %1701 = vsyncpa [#allocation8], 1
    %s1702 = scalar_lea.sflag [#allocation8], 1
    %1703 = vsyncpa %s1702, 1

// kernel: seq2seq_transformer_forward.4
$region0: #{seq2seq_transformer_forward.4}
  #allocation0 [shape = 'u32[]', space=smem, size = 0x4, offset = 0x4, fixed_abs, tag = 'smem constant byte address 0x4 - core index']
  #allocation1 [shape = 'u32[72,128]{1,0:T(1,128)}', space=vmem, size = 0x9000, scoped, tag = 'internal scratch']
  %s0 = inlined_call_operand.vmem [shape: f32[16,128], index: 0, kind: input, shape index: {}]
  %s1 = inlined_call_operand.vmem [shape: f32[16,128], index: 1, kind: input, shape index: {}]
  %s2 = inlined_call_operand.vmem [shape: f32[8,8], index: 2, kind: input, shape index: {}]
  %s3 = inlined_call_operand.vmem [shape: f32[2,1,8], index: 3, kind: input, shape index: {}]
  %s4 = inlined_call_operand.vmem [shape: f32[2,1,8], index: 4, kind: input, shape index: {}]
  %s5 = inlined_call_operand.hbm [shape: bf16[2,128,384], index: 5, kind: input, shape index: {}]
  %s6 = inlined_call_operand.vmem [shape: f32[2,1,384], index: 6, kind: input, shape index: {}]
  %s7 = inlined_call_operand.vmem [shape: bf16[2,128,128], index: 7, kind: input, shape index: {}]
  %s8 = inlined_call_operand.vmem [shape: f32[2,1,128], index: 8, kind: input, shape index: {}, may-alias: {8,10,12,16,18,20,22,24}]
  %s9 = inlined_call_operand.vmem [shape: f32[2,1,128], index: 9, kind: input, shape index: {}, may-alias: {9,17,23}]
  %s10 = inlined_call_operand.vmem [shape: f32[2,1,128], index: 10, kind: input, shape index: {}, may-alias: {8,10,12,16,18,20,22,24}]
  %s11 = inlined_call_operand.hbm [shape: bf16[2,128,128], index: 11, kind: input, shape index: {}]
  %s12 = inlined_call_operand.vmem [shape: f32[2,1,128], index: 12, kind: input, shape index: {}, may-alias: {8,10,12,16,18,20,22,24}]
  %s13 = inlined_call_operand.hbm [shape: bf16[2,128,256], index: 13, kind: input, shape index: {}]
  %s14 = inlined_call_operand.vmem [shape: f32[2,1,256], index: 14, kind: input, shape index: {}]
  %s15 = inlined_call_operand.hbm [shape: bf16[2,128,128], index: 15, kind: input, shape index: {}]
  %s16 = inlined_call_operand.vmem [shape: f32[2,1,128], index: 16, kind: input, shape index: {}, may-alias: {8,10,12,16,18,20,22,24}]
  %s17 = inlined_call_operand.vmem [shape: f32[2,1,128], index: 17, kind: input, shape index: {}, may-alias: {9,17,23}]
  %s18 = inlined_call_operand.vmem [shape: f32[2,1,128], index: 18, kind: input, shape index: {}, may-alias: {8,10,12,16,18,20,22,24}]
  %s19 = inlined_call_operand.hbm [shape: bf16[2,128,128], index: 19, kind: input, shape index: {}]
  %s20 = inlined_call_operand.vmem [shape: f32[2,1,128], index: 20, kind: input, shape index: {}, may-alias: {8,10,12,16,18,20,22,24}]
  %s21 = inlined_call_operand.hbm [shape: bf16[2,128,128], index: 21, kind: input, shape index: {}]
  %s22 = inlined_call_operand.vmem [shape: f32[2,1,128], index: 22, kind: input, shape index: {}, may-alias: {8,10,12,16,18,20,22,24}]
  %s23 = inlined_call_operand.vmem [shape: f32[2,1,128], index: 23, kind: input, shape index: {}, may-alias: {9,17,23}]
  %s24 = inlined_call_operand.vmem [shape: f32[2,1,128], index: 24, kind: input, shape index: {}, may-alias: {8,10,12,16,18,20,22,24}]
  %s25 = inlined_call_operand.vmem [shape: f32[1,128], index: 25, kind: input, shape index: {}]
  %s26 = inlined_call_operand.vmem [shape: f32[1,128], index: 26, kind: input, shape index: {}]
  %s27 = inlined_call_operand.vmem [shape: f32[16,128], index: 27, kind: output, shape index: {}]
  %s28 = sld [smem:[#allocation0]]
  $region173: #{seq2seq_transformer_forward.4} parent=0
    _
  %s30 = ssub.s32 1, %s28
  %s31 = scalar_select 0, %s30, %s28
  $region1: #{seq2seq_transformer_forward.4} parent=0
    #allocation2 [shape = 'u8[196608]{0}', space=vmem, size = 0x30000, scoped, tag = 'input window, operand 5']
    #allocation3 [shape = 's32[2]{0}', space=sflag, size = 0x8, scoped, tag = 'scoped memory for seq2seq_transformer_forward.4']
    #allocation4 [shape = 'u8[65536]{0}', space=vmem, size = 0x10000, scoped, tag = 'input window, operand 11']
    #allocation5 [shape = 's32[2]{0}', space=sflag, size = 0x8, scoped, tag = 'scoped memory for seq2seq_transformer_forward.4']
    #allocation6 [shape = 'u8[131072]{0}', space=vmem, size = 0x20000, scoped, tag = 'input window, operand 13']
    #allocation7 [shape = 'u8[65536]{0}', space=vmem, size = 0x10000, scoped, tag = 'input window, operand 15']
    #allocation8 [shape = 's32[2]{0}', space=sflag, size = 0x8, scoped, tag = 'scoped memory for seq2seq_transformer_forward.4']
    #allocation9 [shape = 'u8[65536]{0}', space=vmem, size = 0x10000, scoped, tag = 'input window, operand 19']
    #allocation10 [shape = 'u8[65536]{0}', space=vmem, size = 0x10000, scoped, tag = 'input window, operand 21']
    #allocation11 [shape = 's32[2]{0}', space=sflag, size = 0x8, scoped, tag = 'scoped memory for seq2seq_transformer_forward.4']
    %32 = vsyncpa [#allocation3], 0
    %s33 = scalar_lea.sflag [#allocation3], 1
    %34 = vsyncpa %s33, 0
    %35 = vsyncpa [#allocation5], 0
    %s36 = scalar_lea.sflag [#allocation5], 1
    %37 = vsyncpa %s36, 0
    %38 = vsyncpa [#allocation8], 0
    %s39 = scalar_lea.sflag [#allocation8], 1
    %40 = vsyncpa %s39, 0
    %41 = vsyncpa [#allocation11], 0
    %s42 = scalar_lea.sflag [#allocation11], 1
    %43 = vsyncpa %s42, 0
    loop: start=0, step=1, limit=6
    $region2: #{seq2seq_transformer_forward.4} parent=1 // loop_pre_header
      _
    $region3: #{seq2seq_transformer_forward.4} parent=1 // loop_header
      %s45 = sphi 0, %s49
      %p46 = scmp.ge.s32.totalorder %s45, 6
      %s52 = sphi 0, %s64
      %s53 = sphi 0, %s60
      %s54 = sphi 0, %s52
      %s55 = sphi 0, %s53
      %s56 = sphi 0, %s54
      %s57 = sphi 0, %s55
      %s67 = sphi 0, %s69
      %s70 = sphi 0, %s67
      %s71 = sphi 0, %s70
      %s87 = sphi 0, %s71
      %s93 = sphi 0, %s95
      %s96 = sphi 0, %s93
      %s97 = sphi 0, %s96
      %s113 = sphi 0, %s97
      %s117 = sphi 0, %s117
      %s119 = sphi 0, %s117
      %s120 = sphi 0, %s119
      %s134 = sphi 0, %s120
      %s140 = sphi 0, %s142
      %s143 = sphi 0, %s140
      %s144 = sphi 0, %s143
      %s160 = sphi 0, %s144
      %s166 = sphi 0, %s168
      %s169 = sphi 0, %s166
      %s170 = sphi 0, %s169
      %s186 = sphi 0, %s170
      %s192 = sphi 0, %s194
      %s195 = sphi 0, %s192
      %s196 = sphi 0, %s195
      %s212 = sphi 0, %s196
      %s218 = sphi 0, %s220
      %s221 = sphi 0, %s218
      %s222 = sphi 0, %s221
      %s238 = sphi 0, %s222
      %s244 = sphi 0, %s246
      %s247 = sphi 0, %s244
      %s248 = sphi 0, %s247
      %s264 = sphi 0, %s248
      %s270 = sphi 0, %s272
      %s273 = sphi 0, %s270
      %s274 = sphi 0, %s273
      %s290 = sphi 0, %s274
      %s296 = sphi 0, %s298
      %s299 = sphi 0, %s296
      %s300 = sphi 0, %s299
      %s316 = sphi 0, %s300
      %s322 = sphi 0, %s324
      %s325 = sphi 0, %s322
      %s326 = sphi 0, %s325
      %s342 = sphi 0, %s326
      %s348 = sphi 0, %s350
      %s351 = sphi 0, %s348
      %s352 = sphi 0, %s351
      %s368 = sphi 0, %s352
      %s374 = sphi 0, %s376
      %s377 = sphi 0, %s374
      %s378 = sphi 0, %s377
      %s394 = sphi 0, %s378
      %s400 = sphi 0, %s402
      %s403 = sphi 0, %s400
      %s404 = sphi 0, %s403
      %s420 = sphi 0, %s404
      %s426 = sphi 0, %s428
      %s429 = sphi 0, %s426
      %s430 = sphi 0, %s429
      %s446 = sphi 0, %s430
      %s452 = sphi 0, %s454
      %s455 = sphi 0, %s452
      %s456 = sphi 0, %s455
      %s472 = sphi 0, %s456
      %s478 = sphi 0, %s480
      %s481 = sphi 0, %s478
      %s482 = sphi 0, %s481
      %s498 = sphi 0, %s482
      %s504 = sphi 0, %s506
      %s507 = sphi 0, %s504
      %s508 = sphi 0, %s507
      %s524 = sphi 0, %s508
      %s530 = sphi 0, %s532
      %s533 = sphi 0, %s530
      %s534 = sphi 0, %s533
      %s550 = sphi 0, %s534
      %s556 = sphi 0, %s558
      %s559 = sphi 0, %s556
      %s560 = sphi 0, %s559
      %s576 = sphi 0, %s560
      %s582 = sphi 0, %s584
      %s585 = sphi 0, %s582
      %s586 = sphi 0, %s585
      %s602 = sphi 0, %s586
      %s608 = sphi 0, %s610
      %s611 = sphi 0, %s608
      %s612 = sphi 0, %s611
      %s628 = sphi 0, %s612
      %s634 = sphi 0, %s636
      %s637 = sphi 0, %s634
      %s638 = sphi 0, %s637
      %s654 = sphi 0, %s638
      %s660 = sphi 0, %s662
      %s663 = sphi 0, %s660
      %s664 = sphi 0, %s663
      %s680 = sphi 0, %s664
      %s686 = sphi 0, %s688
      %s689 = sphi 0, %s686
      %s690 = sphi 0, %s689
      %s706 = sphi 0, %s690
      %s710 = sphi 0, %s710
      %s712 = sphi 0, %s710
      %s713 = sphi 0, %s712
      %s727 = sphi 0, %s713
      %s731 = sphi 0, %s731
      %s733 = sphi 0, %s731
      %s734 = sphi 0, %s733
      %s748 = sphi 0, %s734
      %s754 = sphi 0, %s756
      %s757 = sphi 0, %s754
      %s758 = sphi 0, %s757
      %s774 = sphi 0, %s758
    $region4: #{seq2seq_transformer_forward.4} parent=1 // loop_header_branch
      %48 = sbr.rel (%p46) target = $region8
    $region5: #{seq2seq_transformer_forward.4} parent=1 // loop_body
      %s50 = ssub.s32 %s45, 1
      %s51 = ssub.s32 %s45, 2
      %s58 = sadd.s32 1, %s53
      %p59 = scmp.ge.s32.totalorder %s58, 2
      %s60 = scalar_select %p59, 0, %s58
      %s61 = sadd.s32 1, %s52
      %s62 = scalar_select %p59, %s61, %s52
      %p63 = scmp.ge.s32.totalorder %s62, 2
      %s64 = scalar_select %p63, 0, %s62
      %s65 = ssub.s32 %s52, %s64
      %p66 = scmp.eq.s32.totalorder %s65, 0
      %s68 = sadd.s32 %s67, 1
      %s69 = scalar_select %p66, %s67, %s68
      %p72 = pneg %p66
      %p73 = scmp.eq.s32.totalorder %s45, 3
      %p74 = por %p72, %p73
      %p75 = scmp.ne.s32.totalorder %s67, %s70
      %p76 = scmp.eq.s32.totalorder %s45, 0
      %p77 = por %p75, %p76
      %p78 = scmp.ne.s32.totalorder %s67, %s70
      %p79 = scmp.eq.s32.totalorder %s50, 3
      %p80 = por %p78, %p79
      %p81 = scmp.ne.s32.totalorder %s70, %s71
      %p82 = scmp.eq.s32.totalorder %s50, 0
      %p83 = por %p81, %p82
      %p84 = scmp.ne.s32.totalorder %s70, %s71
      %p85 = scmp.eq.s32.totalorder %s51, 3
      %p86 = por %p84, %p85
      %p88 = scmp.ne.s32.totalorder %s71, %s87
      %p89 = scmp.eq.s32.totalorder %s51, 0
      %p90 = por %p88, %p89
      %s91 = ssub.s32 %s52, %s64
      %p92 = scmp.eq.s32.totalorder %s91, 0
      %s94 = sadd.s32 %s93, 1
      %s95 = scalar_select %p92, %s93, %s94
      %p98 = pneg %p92
      %p99 = scmp.eq.s32.totalorder %s45, 3
      %p100 = por %p98, %p99
      %p101 = scmp.ne.s32.totalorder %s93, %s96
      %p102 = scmp.eq.s32.totalorder %s45, 0
      %p103 = por %p101, %p102
      %p104 = scmp.ne.s32.totalorder %s93, %s96
      %p105 = scmp.eq.s32.totalorder %s50, 3
      %p106 = por %p104, %p105
      %p107 = scmp.ne.s32.totalorder %s96, %s97
      %p108 = scmp.eq.s32.totalorder %s50, 0
      %p109 = por %p107, %p108
      %p110 = scmp.ne.s32.totalorder %s96, %s97
      %p111 = scmp.eq.s32.totalorder %s51, 3
      %p112 = por %p110, %p111
      %p114 = scmp.ne.s32.totalorder %s97, %s113
      %p115 = scmp.eq.s32.totalorder %s51, 0
      %p116 = por %p114, %p115
      %s118 = sadd.s32 %s117, 1
      %p121 = scmp.eq.s32.totalorder %s45, 3
      %p122 = scmp.ne.s32.totalorder %s117, %s119
      %p123 = scmp.eq.s32.totalorder %s45, 0
      %p124 = por %p122, %p123
      %p125 = scmp.ne.s32.totalorder %s117, %s119
      %p126 = scmp.eq.s32.totalorder %s50, 3
      %p127 = por %p125, %p126
      %p128 = scmp.ne.s32.totalorder %s119, %s120
      %p129 = scmp.eq.s32.totalorder %s50, 0
      %p130 = por %p128, %p129
      %p131 = scmp.ne.s32.totalorder %s119, %s120
      %p132 = scmp.eq.s32.totalorder %s51, 3
      %p133 = por %p131, %p132
      %p135 = scmp.ne.s32.totalorder %s120, %s134
      %p136 = scmp.eq.s32.totalorder %s51, 0
      %p137 = por %p135, %p136
      %s138 = ssub.s32 %s52, %s64
      %p139 = scmp.eq.s32.totalorder %s138, 0
      %s141 = sadd.s32 %s140, 1
      %s142 = scalar_select %p139, %s140, %s141
      %p145 = pneg %p139
      %p146 = scmp.eq.s32.totalorder %s45, 3
      %p147 = por %p145, %p146
      %p148 = scmp.ne.s32.totalorder %s140, %s143
      %p149 = scmp.eq.s32.totalorder %s45, 0
      %p150 = por %p148, %p149
      %p151 = scmp.ne.s32.totalorder %s140, %s143
      %p152 = scmp.eq.s32.totalorder %s50, 3
      %p153 = por %p151, %p152
      %p154 = scmp.ne.s32.totalorder %s143, %s144
      %p155 = scmp.eq.s32.totalorder %s50, 0
      %p156 = por %p154, %p155
      %p157 = scmp.ne.s32.totalorder %s143, %s144
      %p158 = scmp.eq.s32.totalorder %s51, 3
      %p159 = por %p157, %p158
      %p161 = scmp.ne.s32.totalorder %s144, %s160
      %p162 = scmp.eq.s32.totalorder %s51, 0
      %p163 = por %p161, %p162
      %s164 = ssub.s32 %s52, %s64
      %p165 = scmp.eq.s32.totalorder %s164, 0
      %s167 = sadd.s32 %s166, 1
      %s168 = scalar_select %p165, %s166, %s167
      %p171 = pneg %p165
      %p172 = scmp.eq.s32.totalorder %s45, 3
      %p173 = por %p171, %p172
      %p174 = scmp.ne.s32.totalorder %s166, %s169
      %p175 = scmp.eq.s32.totalorder %s45, 0
      %p176 = por %p174, %p175
      %p177 = scmp.ne.s32.totalorder %s166, %s169
      %p178 = scmp.eq.s32.totalorder %s50, 3
      %p179 = por %p177, %p178
      %p180 = scmp.ne.s32.totalorder %s169, %s170
      %p181 = scmp.eq.s32.totalorder %s50, 0
      %p182 = por %p180, %p181
      %p183 = scmp.ne.s32.totalorder %s169, %s170
      %p184 = scmp.eq.s32.totalorder %s51, 3
      %p185 = por %p183, %p184
      %p187 = scmp.ne.s32.totalorder %s170, %s186
      %p188 = scmp.eq.s32.totalorder %s51, 0
      %p189 = por %p187, %p188
      %s190 = ssub.s32 %s53, %s60
      %p191 = scmp.eq.s32.totalorder %s190, 0
      %s193 = sadd.s32 %s192, 1
      %s194 = scalar_select %p191, %s192, %s193
      %p197 = pneg %p191
      %p198 = scmp.eq.s32.totalorder %s45, 3
      %p199 = por %p197, %p198
      %p200 = scmp.ne.s32.totalorder %s192, %s195
      %p201 = scmp.eq.s32.totalorder %s45, 0
      %p202 = por %p200, %p201
      %p203 = scmp.ne.s32.totalorder %s192, %s195
      %p204 = scmp.eq.s32.totalorder %s50, 3
      %p205 = por %p203, %p204
      %p206 = scmp.ne.s32.totalorder %s195, %s196
      %p207 = scmp.eq.s32.totalorder %s50, 0
      %p208 = por %p206, %p207
      %p209 = scmp.ne.s32.totalorder %s195, %s196
      %p210 = scmp.eq.s32.totalorder %s51, 3
      %p211 = por %p209, %p210
      %p213 = scmp.ne.s32.totalorder %s196, %s212
      %p214 = scmp.eq.s32.totalorder %s51, 0
      %p215 = por %p213, %p214
      %s216 = ssub.s32 %s53, %s60
      %p217 = scmp.eq.s32.totalorder %s216, 0
      %s219 = sadd.s32 %s218, 1
      %s220 = scalar_select %p217, %s218, %s219
      %p223 = pneg %p217
      %p224 = scmp.eq.s32.totalorder %s45, 3
      %p225 = por %p223, %p224
      %p226 = scmp.ne.s32.totalorder %s218, %s221
      %p227 = scmp.eq.s32.totalorder %s45, 0
      %p228 = por %p226, %p227
      %p229 = scmp.ne.s32.totalorder %s218, %s221
      %p230 = scmp.eq.s32.totalorder %s50, 3
      %p231 = por %p229, %p230
      %p232 = scmp.ne.s32.totalorder %s221, %s222
      %p233 = scmp.eq.s32.totalorder %s50, 0
      %p234 = por %p232, %p233
      %p235 = scmp.ne.s32.totalorder %s221, %s222
      %p236 = scmp.eq.s32.totalorder %s51, 3
      %p237 = por %p235, %p236
      %p239 = scmp.ne.s32.totalorder %s222, %s238
      %p240 = scmp.eq.s32.totalorder %s51, 0
      %p241 = por %p239, %p240
      %s242 = ssub.s32 %s53, %s60
      %p243 = scmp.eq.s32.totalorder %s242, 0
      %s245 = sadd.s32 %s244, 1
      %s246 = scalar_select %p243, %s244, %s245
      %p249 = pneg %p243
      %p250 = scmp.eq.s32.totalorder %s45, 3
      %p251 = por %p249, %p250
      %p252 = scmp.ne.s32.totalorder %s244, %s247
      %p253 = scmp.eq.s32.totalorder %s45, 0
      %p254 = por %p252, %p253
      %p255 = scmp.ne.s32.totalorder %s244, %s247
      %p256 = scmp.eq.s32.totalorder %s50, 3
      %p257 = por %p255, %p256
      %p258 = scmp.ne.s32.totalorder %s247, %s248
      %p259 = scmp.eq.s32.totalorder %s50, 0
      %p260 = por %p258, %p259
      %p261 = scmp.ne.s32.totalorder %s247, %s248
      %p262 = scmp.eq.s32.totalorder %s51, 3
      %p263 = por %p261, %p262
      %p265 = scmp.ne.s32.totalorder %s248, %s264
      %p266 = scmp.eq.s32.totalorder %s51, 0
      %p267 = por %p265, %p266
      %s268 = ssub.s32 %s53, %s60
      %p269 = scmp.eq.s32.totalorder %s268, 0
      %s271 = sadd.s32 %s270, 1
      %s272 = scalar_select %p269, %s270, %s271
      %p275 = pneg %p269
      %p276 = scmp.eq.s32.totalorder %s45, 3
      %p277 = por %p275, %p276
      %p278 = scmp.ne.s32.totalorder %s270, %s273
      %p279 = scmp.eq.s32.totalorder %s45, 0
      %p280 = por %p278, %p279
      %p281 = scmp.ne.s32.totalorder %s270, %s273
      %p282 = scmp.eq.s32.totalorder %s50, 3
      %p283 = por %p281, %p282
      %p284 = scmp.ne.s32.totalorder %s273, %s274
      %p285 = scmp.eq.s32.totalorder %s50, 0
      %p286 = por %p284, %p285
      %p287 = scmp.ne.s32.totalorder %s273, %s274
      %p288 = scmp.eq.s32.totalorder %s51, 3
      %p289 = por %p287, %p288
      %p291 = scmp.ne.s32.totalorder %s274, %s290
      %p292 = scmp.eq.s32.totalorder %s51, 0
      %p293 = por %p291, %p292
      %s294 = ssub.s32 %s53, %s60
      %p295 = scmp.eq.s32.totalorder %s294, 0
      %s297 = sadd.s32 %s296, 1
      %s298 = scalar_select %p295, %s296, %s297
      %p301 = pneg %p295
      %p302 = scmp.eq.s32.totalorder %s45, 3
      %p303 = por %p301, %p302
      %p304 = scmp.ne.s32.totalorder %s296, %s299
      %p305 = scmp.eq.s32.totalorder %s45, 0
      %p306 = por %p304, %p305
      %p307 = scmp.ne.s32.totalorder %s296, %s299
      %p308 = scmp.eq.s32.totalorder %s50, 3
      %p309 = por %p307, %p308
      %p310 = scmp.ne.s32.totalorder %s299, %s300
      %p311 = scmp.eq.s32.totalorder %s50, 0
      %p312 = por %p310, %p311
      %p313 = scmp.ne.s32.totalorder %s299, %s300
      %p314 = scmp.eq.s32.totalorder %s51, 3
      %p315 = por %p313, %p314
      %p317 = scmp.ne.s32.totalorder %s300, %s316
      %p318 = scmp.eq.s32.totalorder %s51, 0
      %p319 = por %p317, %p318
      %s320 = ssub.s32 %s53, %s60
      %p321 = scmp.eq.s32.totalorder %s320, 0
      %s323 = sadd.s32 %s322, 1
      %s324 = scalar_select %p321, %s322, %s323
      %p327 = pneg %p321
      %p328 = scmp.eq.s32.totalorder %s45, 3
      %p329 = por %p327, %p328
      %p330 = scmp.ne.s32.totalorder %s322, %s325
      %p331 = scmp.eq.s32.totalorder %s45, 0
      %p332 = por %p330, %p331
      %p333 = scmp.ne.s32.totalorder %s322, %s325
      %p334 = scmp.eq.s32.totalorder %s50, 3
      %p335 = por %p333, %p334
      %p336 = scmp.ne.s32.totalorder %s325, %s326
      %p337 = scmp.eq.s32.totalorder %s50, 0
      %p338 = por %p336, %p337
      %p339 = scmp.ne.s32.totalorder %s325, %s326
      %p340 = scmp.eq.s32.totalorder %s51, 3
      %p341 = por %p339, %p340
      %p343 = scmp.ne.s32.totalorder %s326, %s342
      %p344 = scmp.eq.s32.totalorder %s51, 0
      %p345 = por %p343, %p344
      %s346 = ssub.s32 %s53, %s60
      %p347 = scmp.eq.s32.totalorder %s346, 0
      %s349 = sadd.s32 %s348, 1
      %s350 = scalar_select %p347, %s348, %s349
      %p353 = pneg %p347
      %p354 = scmp.eq.s32.totalorder %s45, 3
      %p355 = por %p353, %p354
      %p356 = scmp.ne.s32.totalorder %s348, %s351
      %p357 = scmp.eq.s32.totalorder %s45, 0
      %p358 = por %p356, %p357
      %p359 = scmp.ne.s32.totalorder %s348, %s351
      %p360 = scmp.eq.s32.totalorder %s50, 3
      %p361 = por %p359, %p360
      %p362 = scmp.ne.s32.totalorder %s351, %s352
      %p363 = scmp.eq.s32.totalorder %s50, 0
      %p364 = por %p362, %p363
      %p365 = scmp.ne.s32.totalorder %s351, %s352
      %p366 = scmp.eq.s32.totalorder %s51, 3
      %p367 = por %p365, %p366
      %p369 = scmp.ne.s32.totalorder %s352, %s368
      %p370 = scmp.eq.s32.totalorder %s51, 0
      %p371 = por %p369, %p370
      %s372 = ssub.s32 %s53, %s60
      %p373 = scmp.eq.s32.totalorder %s372, 0
      %s375 = sadd.s32 %s374, 1
      %s376 = scalar_select %p373, %s374, %s375
      %p379 = pneg %p373
      %p380 = scmp.eq.s32.totalorder %s45, 3
      %p381 = por %p379, %p380
      %p382 = scmp.ne.s32.totalorder %s374, %s377
      %p383 = scmp.eq.s32.totalorder %s45, 0
      %p384 = por %p382, %p383
      %p385 = scmp.ne.s32.totalorder %s374, %s377
      %p386 = scmp.eq.s32.totalorder %s50, 3
      %p387 = por %p385, %p386
      %p388 = scmp.ne.s32.totalorder %s377, %s378
      %p389 = scmp.eq.s32.totalorder %s50, 0
      %p390 = por %p388, %p389
      %p391 = scmp.ne.s32.totalorder %s377, %s378
      %p392 = scmp.eq.s32.totalorder %s51, 3
      %p393 = por %p391, %p392
      %p395 = scmp.ne.s32.totalorder %s378, %s394
      %p396 = scmp.eq.s32.totalorder %s51, 0
      %p397 = por %p395, %p396
      %s398 = ssub.s32 %s53, %s60
      %p399 = scmp.eq.s32.totalorder %s398, 0
      %s401 = sadd.s32 %s400, 1
      %s402 = scalar_select %p399, %s400, %s401
      %p405 = pneg %p399
      %p406 = scmp.eq.s32.totalorder %s45, 3
      %p407 = por %p405, %p406
      %p408 = scmp.ne.s32.totalorder %s400, %s403
      %p409 = scmp.eq.s32.totalorder %s45, 0
      %p410 = por %p408, %p409
      %p411 = scmp.ne.s32.totalorder %s400, %s403
      %p412 = scmp.eq.s32.totalorder %s50, 3
      %p413 = por %p411, %p412
      %p414 = scmp.ne.s32.totalorder %s403, %s404
      %p415 = scmp.eq.s32.totalorder %s50, 0
      %p416 = por %p414, %p415
      %p417 = scmp.ne.s32.totalorder %s403, %s404
      %p418 = scmp.eq.s32.totalorder %s51, 3
      %p419 = por %p417, %p418
      %p421 = scmp.ne.s32.totalorder %s404, %s420
      %p422 = scmp.eq.s32.totalorder %s51, 0
      %p423 = por %p421, %p422
      %s424 = ssub.s32 %s53, %s60
      %p425 = scmp.eq.s32.totalorder %s424, 0
      %s427 = sadd.s32 %s426, 1
      %s428 = scalar_select %p425, %s426, %s427
      %p431 = pneg %p425
      %p432 = scmp.eq.s32.totalorder %s45, 3
      %p433 = por %p431, %p432
      %p434 = scmp.ne.s32.totalorder %s426, %s429
      %p435 = scmp.eq.s32.totalorder %s45, 0
      %p436 = por %p434, %p435
      %p437 = scmp.ne.s32.totalorder %s426, %s429
      %p438 = scmp.eq.s32.totalorder %s50, 3
      %p439 = por %p437, %p438
      %p440 = scmp.ne.s32.totalorder %s429, %s430
      %p441 = scmp.eq.s32.totalorder %s50, 0
      %p442 = por %p440, %p441
      %p443 = scmp.ne.s32.totalorder %s429, %s430
      %p444 = scmp.eq.s32.totalorder %s51, 3
      %p445 = por %p443, %p444
      %p447 = scmp.ne.s32.totalorder %s430, %s446
      %p448 = scmp.eq.s32.totalorder %s51, 0
      %p449 = por %p447, %p448
      %s450 = ssub.s32 %s53, %s60
      %p451 = scmp.eq.s32.totalorder %s450, 0
      %s453 = sadd.s32 %s452, 1
      %s454 = scalar_select %p451, %s452, %s453
      %p457 = pneg %p451
      %p458 = scmp.eq.s32.totalorder %s45, 3
      %p459 = por %p457, %p458
      %p460 = scmp.ne.s32.totalorder %s452, %s455
      %p461 = scmp.eq.s32.totalorder %s45, 0
      %p462 = por %p460, %p461
      %p463 = scmp.ne.s32.totalorder %s452, %s455
      %p464 = scmp.eq.s32.totalorder %s50, 3
      %p465 = por %p463, %p464
      %p466 = scmp.ne.s32.totalorder %s455, %s456
      %p467 = scmp.eq.s32.totalorder %s50, 0
      %p468 = por %p466, %p467
      %p469 = scmp.ne.s32.totalorder %s455, %s456
      %p470 = scmp.eq.s32.totalorder %s51, 3
      %p471 = por %p469, %p470
      %p473 = scmp.ne.s32.totalorder %s456, %s472
      %p474 = scmp.eq.s32.totalorder %s51, 0
      %p475 = por %p473, %p474
      %s476 = ssub.s32 %s53, %s60
      %p477 = scmp.eq.s32.totalorder %s476, 0
      %s479 = sadd.s32 %s478, 1
      %s480 = scalar_select %p477, %s478, %s479
      %p483 = pneg %p477
      %p484 = scmp.eq.s32.totalorder %s45, 3
      %p485 = por %p483, %p484
      %p486 = scmp.ne.s32.totalorder %s478, %s481
      %p487 = scmp.eq.s32.totalorder %s45, 0
      %p488 = por %p486, %p487
      %p489 = scmp.ne.s32.totalorder %s478, %s481
      %p490 = scmp.eq.s32.totalorder %s50, 3
      %p491 = por %p489, %p490
      %p492 = scmp.ne.s32.totalorder %s481, %s482
      %p493 = scmp.eq.s32.totalorder %s50, 0
      %p494 = por %p492, %p493
      %p495 = scmp.ne.s32.totalorder %s481, %s482
      %p496 = scmp.eq.s32.totalorder %s51, 3
      %p497 = por %p495, %p496
      %p499 = scmp.ne.s32.totalorder %s482, %s498
      %p500 = scmp.eq.s32.totalorder %s51, 0
      %p501 = por %p499, %p500
      %s502 = ssub.s32 %s53, %s60
      %p503 = scmp.eq.s32.totalorder %s502, 0
      %s505 = sadd.s32 %s504, 1
      %s506 = scalar_select %p503, %s504, %s505
      %p509 = pneg %p503
      %p510 = scmp.eq.s32.totalorder %s45, 3
      %p511 = por %p509, %p510
      %p512 = scmp.ne.s32.totalorder %s504, %s507
      %p513 = scmp.eq.s32.totalorder %s45, 0
      %p514 = por %p512, %p513
      %p515 = scmp.ne.s32.totalorder %s504, %s507
      %p516 = scmp.eq.s32.totalorder %s50, 3
      %p517 = por %p515, %p516
      %p518 = scmp.ne.s32.totalorder %s507, %s508
      %p519 = scmp.eq.s32.totalorder %s50, 0
      %p520 = por %p518, %p519
      %p521 = scmp.ne.s32.totalorder %s507, %s508
      %p522 = scmp.eq.s32.totalorder %s51, 3
      %p523 = por %p521, %p522
      %p525 = scmp.ne.s32.totalorder %s508, %s524
      %p526 = scmp.eq.s32.totalorder %s51, 0
      %p527 = por %p525, %p526
      %s528 = ssub.s32 %s53, %s60
      %p529 = scmp.eq.s32.totalorder %s528, 0
      %s531 = sadd.s32 %s530, 1
      %s532 = scalar_select %p529, %s530, %s531
      %p535 = pneg %p529
      %p536 = scmp.eq.s32.totalorder %s45, 3
      %p537 = por %p535, %p536
      %p538 = scmp.ne.s32.totalorder %s530, %s533
      %p539 = scmp.eq.s32.totalorder %s45, 0
      %p540 = por %p538, %p539
      %p541 = scmp.ne.s32.totalorder %s530, %s533
      %p542 = scmp.eq.s32.totalorder %s50, 3
      %p543 = por %p541, %p542
      %p544 = scmp.ne.s32.totalorder %s533, %s534
      %p545 = scmp.eq.s32.totalorder %s50, 0
      %p546 = por %p544, %p545
      %p547 = scmp.ne.s32.totalorder %s533, %s534
      %p548 = scmp.eq.s32.totalorder %s51, 3
      %p549 = por %p547, %p548
      %p551 = scmp.ne.s32.totalorder %s534, %s550
      %p552 = scmp.eq.s32.totalorder %s51, 0
      %p553 = por %p551, %p552
      %s554 = ssub.s32 %s53, %s60
      %p555 = scmp.eq.s32.totalorder %s554, 0
      %s557 = sadd.s32 %s556, 1
      %s558 = scalar_select %p555, %s556, %s557
      %p561 = pneg %p555
      %p562 = scmp.eq.s32.totalorder %s45, 3
      %p563 = por %p561, %p562
      %p564 = scmp.ne.s32.totalorder %s556, %s559
      %p565 = scmp.eq.s32.totalorder %s45, 0
      %p566 = por %p564, %p565
      %p567 = scmp.ne.s32.totalorder %s556, %s559
      %p568 = scmp.eq.s32.totalorder %s50, 3
      %p569 = por %p567, %p568
      %p570 = scmp.ne.s32.totalorder %s559, %s560
      %p571 = scmp.eq.s32.totalorder %s50, 0
      %p572 = por %p570, %p571
      %p573 = scmp.ne.s32.totalorder %s559, %s560
      %p574 = scmp.eq.s32.totalorder %s51, 3
      %p575 = por %p573, %p574
      %p577 = scmp.ne.s32.totalorder %s560, %s576
      %p578 = scmp.eq.s32.totalorder %s51, 0
      %p579 = por %p577, %p578
      %s580 = ssub.s32 %s53, %s60
      %p581 = scmp.eq.s32.totalorder %s580, 0
      %s583 = sadd.s32 %s582, 1
      %s584 = scalar_select %p581, %s582, %s583
      %p587 = pneg %p581
      %p588 = scmp.eq.s32.totalorder %s45, 3
      %p589 = por %p587, %p588
      %p590 = scmp.ne.s32.totalorder %s582, %s585
      %p591 = scmp.eq.s32.totalorder %s45, 0
      %p592 = por %p590, %p591
      %p593 = scmp.ne.s32.totalorder %s582, %s585
      %p594 = scmp.eq.s32.totalorder %s50, 3
      %p595 = por %p593, %p594
      %p596 = scmp.ne.s32.totalorder %s585, %s586
      %p597 = scmp.eq.s32.totalorder %s50, 0
      %p598 = por %p596, %p597
      %p599 = scmp.ne.s32.totalorder %s585, %s586
      %p600 = scmp.eq.s32.totalorder %s51, 3
      %p601 = por %p599, %p600
      %p603 = scmp.ne.s32.totalorder %s586, %s602
      %p604 = scmp.eq.s32.totalorder %s51, 0
      %p605 = por %p603, %p604
      %s606 = ssub.s32 %s53, %s60
      %p607 = scmp.eq.s32.totalorder %s606, 0
      %s609 = sadd.s32 %s608, 1
      %s610 = scalar_select %p607, %s608, %s609
      %p613 = pneg %p607
      %p614 = scmp.eq.s32.totalorder %s45, 3
      %p615 = por %p613, %p614
      %p616 = scmp.ne.s32.totalorder %s608, %s611
      %p617 = scmp.eq.s32.totalorder %s45, 0
      %p618 = por %p616, %p617
      %p619 = scmp.ne.s32.totalorder %s608, %s611
      %p620 = scmp.eq.s32.totalorder %s50, 3
      %p621 = por %p619, %p620
      %p622 = scmp.ne.s32.totalorder %s611, %s612
      %p623 = scmp.eq.s32.totalorder %s50, 0
      %p624 = por %p622, %p623
      %p625 = scmp.ne.s32.totalorder %s611, %s612
      %p626 = scmp.eq.s32.totalorder %s51, 3
      %p627 = por %p625, %p626
      %p629 = scmp.ne.s32.totalorder %s612, %s628
      %p630 = scmp.eq.s32.totalorder %s51, 0
      %p631 = por %p629, %p630
      %s632 = ssub.s32 %s53, %s60
      %p633 = scmp.eq.s32.totalorder %s632, 0
      %s635 = sadd.s32 %s634, 1
      %s636 = scalar_select %p633, %s634, %s635
      %p639 = pneg %p633
      %p640 = scmp.eq.s32.totalorder %s45, 3
      %p641 = por %p639, %p640
      %p642 = scmp.ne.s32.totalorder %s634, %s637
      %p643 = scmp.eq.s32.totalorder %s45, 0
      %p644 = por %p642, %p643
      %p645 = scmp.ne.s32.totalorder %s634, %s637
      %p646 = scmp.eq.s32.totalorder %s50, 3
      %p647 = por %p645, %p646
      %p648 = scmp.ne.s32.totalorder %s637, %s638
      %p649 = scmp.eq.s32.totalorder %s50, 0
      %p650 = por %p648, %p649
      %p651 = scmp.ne.s32.totalorder %s637, %s638
      %p652 = scmp.eq.s32.totalorder %s51, 3
      %p653 = por %p651, %p652
      %p655 = scmp.ne.s32.totalorder %s638, %s654
      %p656 = scmp.eq.s32.totalorder %s51, 0
      %p657 = por %p655, %p656
      %s658 = ssub.s32 %s53, %s60
      %p659 = scmp.eq.s32.totalorder %s658, 0
      %s661 = sadd.s32 %s660, 1
      %s662 = scalar_select %p659, %s660, %s661
      %p665 = pneg %p659
      %p666 = scmp.eq.s32.totalorder %s45, 3
      %p667 = por %p665, %p666
      %p668 = scmp.ne.s32.totalorder %s660, %s663
      %p669 = scmp.eq.s32.totalorder %s45, 0
      %p670 = por %p668, %p669
      %p671 = scmp.ne.s32.totalorder %s660, %s663
      %p672 = scmp.eq.s32.totalorder %s50, 3
      %p673 = por %p671, %p672
      %p674 = scmp.ne.s32.totalorder %s663, %s664
      %p675 = scmp.eq.s32.totalorder %s50, 0
      %p676 = por %p674, %p675
      %p677 = scmp.ne.s32.totalorder %s663, %s664
      %p678 = scmp.eq.s32.totalorder %s51, 3
      %p679 = por %p677, %p678
      %p681 = scmp.ne.s32.totalorder %s664, %s680
      %p682 = scmp.eq.s32.totalorder %s51, 0
      %p683 = por %p681, %p682
      %s684 = ssub.s32 %s53, %s60
      %p685 = scmp.eq.s32.totalorder %s684, 0
      %s687 = sadd.s32 %s686, 1
      %s688 = scalar_select %p685, %s686, %s687
      %p691 = pneg %p685
      %p692 = scmp.eq.s32.totalorder %s45, 3
      %p693 = por %p691, %p692
      %p694 = scmp.ne.s32.totalorder %s686, %s689
      %p695 = scmp.eq.s32.totalorder %s45, 0
      %p696 = por %p694, %p695
      %p697 = scmp.ne.s32.totalorder %s686, %s689
      %p698 = scmp.eq.s32.totalorder %s50, 3
      %p699 = por %p697, %p698
      %p700 = scmp.ne.s32.totalorder %s689, %s690
      %p701 = scmp.eq.s32.totalorder %s50, 0
      %p702 = por %p700, %p701
      %p703 = scmp.ne.s32.totalorder %s689, %s690
      %p704 = scmp.eq.s32.totalorder %s51, 3
      %p705 = por %p703, %p704
      %p707 = scmp.ne.s32.totalorder %s690, %s706
      %p708 = scmp.eq.s32.totalorder %s51, 0
      %p709 = por %p707, %p708
      %s711 = sadd.s32 %s710, 1
      %p714 = scmp.eq.s32.totalorder %s45, 3
      %p715 = scmp.ne.s32.totalorder %s710, %s712
      %p716 = scmp.eq.s32.totalorder %s45, 0
      %p717 = por %p715, %p716
      %p718 = scmp.ne.s32.totalorder %s710, %s712
      %p719 = scmp.eq.s32.totalorder %s50, 3
      %p720 = por %p718, %p719
      %p721 = scmp.ne.s32.totalorder %s712, %s713
      %p722 = scmp.eq.s32.totalorder %s50, 0
      %p723 = por %p721, %p722
      %p724 = scmp.ne.s32.totalorder %s712, %s713
      %p725 = scmp.eq.s32.totalorder %s51, 3
      %p726 = por %p724, %p725
      %p728 = scmp.ne.s32.totalorder %s713, %s727
      %p729 = scmp.eq.s32.totalorder %s51, 0
      %p730 = por %p728, %p729
      %s732 = sadd.s32 %s731, 1
      %p735 = scmp.eq.s32.totalorder %s45, 3
      %p736 = scmp.ne.s32.totalorder %s731, %s733
      %p737 = scmp.eq.s32.totalorder %s45, 0
      %p738 = por %p736, %p737
      %p739 = scmp.ne.s32.totalorder %s731, %s733
      %p740 = scmp.eq.s32.totalorder %s50, 3
      %p741 = por %p739, %p740
      %p742 = scmp.ne.s32.totalorder %s733, %s734
      %p743 = scmp.eq.s32.totalorder %s50, 0
      %p744 = por %p742, %p743
      %p745 = scmp.ne.s32.totalorder %s733, %s734
      %p746 = scmp.eq.s32.totalorder %s51, 3
      %p747 = por %p745, %p746
      %p749 = scmp.ne.s32.totalorder %s734, %s748
      %p750 = scmp.eq.s32.totalorder %s51, 0
      %p751 = por %p749, %p750
      %s752 = ssub.s32 %s52, %s64
      %p753 = scmp.eq.s32.totalorder %s752, 0
      %s755 = sadd.s32 %s754, 1
      %s756 = scalar_select %p753, %s754, %s755
      %p759 = pneg %p753
      %p760 = scmp.eq.s32.totalorder %s45, 3
      %p761 = por %p759, %p760
      %p762 = scmp.ne.s32.totalorder %s754, %s757
      %p763 = scmp.eq.s32.totalorder %s45, 0
      %p764 = por %p762, %p763
      %p765 = scmp.ne.s32.totalorder %s754, %s757
      %p766 = scmp.eq.s32.totalorder %s50, 3
      %p767 = por %p765, %p766
      %p768 = scmp.ne.s32.totalorder %s757, %s758
      %p769 = scmp.eq.s32.totalorder %s50, 0
      %p770 = por %p768, %p769
      %p771 = scmp.ne.s32.totalorder %s757, %s758
      %p772 = scmp.eq.s32.totalorder %s51, 3
      %p773 = por %p771, %p772
      %p775 = scmp.ne.s32.totalorder %s758, %s774
      %p776 = scmp.eq.s32.totalorder %s51, 0
      %p777 = por %p775, %p776
      %p778 = scmp.le.s32.totalorder 1, %s45
      %p779 = scmp.lt.s32.totalorder %s45, 5
      %p780 = pnand %p778, %p779
      %p781 = pneg %p780
      // Predicated region
      $region9: #{seq2seq_transformer_forward.4} parent=5 // pred_check
        _
      $region10: #{seq2seq_transformer_forward.4} parent=5 // pred_check_branch
        %783 = sbr.rel (%p780) target = $region12
      $region11: #{seq2seq_transformer_forward.4} parent=5 // pred_region
        %s784 = ssub.s32 %s45, 1
        // Predicated region
        $region13: #{seq2seq_transformer_forward.4} parent=11 // pred_check
          %p785 = pneg %p130
        $region14: #{seq2seq_transformer_forward.4} parent=11 // pred_check_branch
          %787 = sbr.rel (%p785) target = $region16
        $region15: #{seq2seq_transformer_forward.4} parent=11 // pred_region
          _
        $region16: #{seq2seq_transformer_forward.4} parent=11 // pred_fallthru
          _
        // Predicated region
        $region17: #{seq2seq_transformer_forward.4} parent=11 // pred_check
          %p788 = pneg %p723
        $region18: #{seq2seq_transformer_forward.4} parent=11 // pred_check_branch
          %790 = sbr.rel (%p788) target = $region20
        $region19: #{seq2seq_transformer_forward.4} parent=11 // pred_region
          _
        $region20: #{seq2seq_transformer_forward.4} parent=11 // pred_fallthru
          _
        // Predicated region
        $region21: #{seq2seq_transformer_forward.4} parent=11 // pred_check
          %p791 = pneg %p744
        $region22: #{seq2seq_transformer_forward.4} parent=11 // pred_check_branch
          %793 = sbr.rel (%p791) target = $region24
        $region23: #{seq2seq_transformer_forward.4} parent=11 // pred_region
          _
        $region24: #{seq2seq_transformer_forward.4} parent=11 // pred_fallthru
          _
      $region12: #{seq2seq_transformer_forward.4} parent=5 // pred_fallthru
        _
      %p794 = scmp.lt.s32.totalorder %s45, 4
      // Predicated region
      $region25: #{seq2seq_transformer_forward.4} parent=5 // pred_check
        %p795 = pneg %p794
      $region26: #{seq2seq_transformer_forward.4} parent=5 // pred_check_branch
        %797 = sbr.rel (%p795) target = $region28
      $region27: #{seq2seq_transformer_forward.4} parent=5 // pred_region
        // Predicated region
        $region29: #{seq2seq_transformer_forward.4} parent=27 // pred_check
          %p798 = pneg %p77
        $region30: #{seq2seq_transformer_forward.4} parent=27 // pred_check_branch
          %800 = sbr.rel (%p798) target = $region32
        $region31: #{seq2seq_transformer_forward.4} parent=27 // pred_region
          %p801 = scmp.lt.s32.totalorder %s52, 1
          %s802 = scalar_select %p801, %s52, 1
          %s803 = smul.addr %s802, 8
          %s804 = scalar_lea.vmem %s0, %s803
        $region32: #{seq2seq_transformer_forward.4} parent=27 // pred_fallthru
          _
        // Predicated region
        $region33: #{seq2seq_transformer_forward.4} parent=27 // pred_check
          %p805 = pneg %p103
        $region34: #{seq2seq_transformer_forward.4} parent=27 // pred_check_branch
          %807 = sbr.rel (%p805) target = $region36
        $region35: #{seq2seq_transformer_forward.4} parent=27 // pred_region
          %p808 = scmp.lt.s32.totalorder %s52, 1
          %s809 = scalar_select %p808, %s52, 1
          %s810 = smul.addr %s809, 8
          %s811 = scalar_lea.vmem %s1, %s810
        $region36: #{seq2seq_transformer_forward.4} parent=27 // pred_fallthru
          _
        // Predicated region
        $region37: #{seq2seq_transformer_forward.4} parent=27 // pred_check
          %p812 = pneg %p150
        $region38: #{seq2seq_transformer_forward.4} parent=27 // pred_check_branch
          %814 = sbr.rel (%p812) target = $region40
        $region39: #{seq2seq_transformer_forward.4} parent=27 // pred_region
          %p815 = scmp.lt.s32.totalorder %s52, 1
          %s816 = scalar_select %p815, %s52, 1
          %s817 = scalar_lea.vmem %s3, %s816
        $region40: #{seq2seq_transformer_forward.4} parent=27 // pred_fallthru
          _
        // Predicated region
        $region41: #{seq2seq_transformer_forward.4} parent=27 // pred_check
          %p818 = pneg %p176
        $region42: #{seq2seq_transformer_forward.4} parent=27 // pred_check_branch
          %820 = sbr.rel (%p818) target = $region44
        $region43: #{seq2seq_transformer_forward.4} parent=27 // pred_region
          %p821 = scmp.lt.s32.totalorder %s52, 1
          %s822 = scalar_select %p821, %s52, 1
          %s823 = scalar_lea.vmem %s4, %s822
        $region44: #{seq2seq_transformer_forward.4} parent=27 // pred_fallthru
          _
        // Predicated region
        $region45: #{seq2seq_transformer_forward.4} parent=27 // pred_check
          %p824 = pneg %p202
        $region46: #{seq2seq_transformer_forward.4} parent=27 // pred_check_branch
          %826 = sbr.rel (%p824) target = $region48
        $region47: #{seq2seq_transformer_forward.4} parent=27 // pred_region
          %s827 = sand.u32 %s192, 1
          %s828 = scalar_lea.sflag [#allocation3], %s827
          %s829 = sand.u32 %s192, 1
          %s830 = smul.addr %s829, 192
          %s831 = scalar_lea.vmem [#allocation2], %s830
          %833 = vsyncadd %s828, 0
          %s834 = smul.addr %s53, 48
          %s835 = smul.addr %s834, 4
          %s836 = scalar_lea.hbm %s5, %s835
          %s837 = sshll.u32 %s836, 4
          %s838 = int_to_ptr.hbm [resolvable:$true] %s837
          %s839 = sshll.u32 %s831, 4
          %s840 = int_to_ptr.vmem [resolvable:$true] %s839
          %845 = dma.hbm_to_vmem [thread:$0]  %s838, 3072, %s840, %s828, 192, 192, 12
        $region48: #{seq2seq_transformer_forward.4} parent=27 // pred_fallthru
          _
        // Predicated region
        $region49: #{seq2seq_transformer_forward.4} parent=27 // pred_check
          %p846 = pneg %p228
        $region50: #{seq2seq_transformer_forward.4} parent=27 // pred_check_branch
          %848 = sbr.rel (%p846) target = $region52
        $region51: #{seq2seq_transformer_forward.4} parent=27 // pred_region
          %p849 = scmp.lt.s32.totalorder %s53, 1
          %s850 = scalar_select %p849, %s53, 1
          %s851 = smul.addr %s850, 3
          %s852 = scalar_lea.vmem %s6, %s851
        $region52: #{seq2seq_transformer_forward.4} parent=27 // pred_fallthru
          _
        // Predicated region
        $region53: #{seq2seq_transformer_forward.4} parent=27 // pred_check
          %p853 = pneg %p254
        $region54: #{seq2seq_transformer_forward.4} parent=27 // pred_check_branch
          %855 = sbr.rel (%p853) target = $region56
        $region55: #{seq2seq_transformer_forward.4} parent=27 // pred_region
          %p856 = scmp.lt.s32.totalorder %s53, 1
          %s857 = scalar_select %p856, %s53, 1
          %s858 = smul.addr %s857, 16
          %s859 = smul.addr %s858, 4
          %s860 = scalar_lea.vmem %s7, %s859
        $region56: #{seq2seq_transformer_forward.4} parent=27 // pred_fallthru
          _
        // Predicated region
        $region57: #{seq2seq_transformer_forward.4} parent=27 // pred_check
          %p861 = pneg %p280
        $region58: #{seq2seq_transformer_forward.4} parent=27 // pred_check_branch
          %863 = sbr.rel (%p861) target = $region60
        $region59: #{seq2seq_transformer_forward.4} parent=27 // pred_region
          %p864 = scmp.lt.s32.totalorder %s53, 1
          %s865 = scalar_select %p864, %s53, 1
          %s866 = scalar_lea.vmem %s8, %s865
        $region60: #{seq2seq_transformer_forward.4} parent=27 // pred_fallthru
          _
        // Predicated region
        $region61: #{seq2seq_transformer_forward.4} parent=27 // pred_check
          %p867 = pneg %p306
        $region62: #{seq2seq_transformer_forward.4} parent=27 // pred_check_branch
          %869 = sbr.rel (%p867) target = $region64
        $region63: #{seq2seq_transformer_forward.4} parent=27 // pred_region
          %p870 = scmp.lt.s32.totalorder %s53, 1
          %s871 = scalar_select %p870, %s53, 1
          %s872 = scalar_lea.vmem %s9, %s871
        $region64: #{seq2seq_transformer_forward.4} parent=27 // pred_fallthru
          _
        // Predicated region
        $region65: #{seq2seq_transformer_forward.4} parent=27 // pred_check
          %p873 = pneg %p332
        $region66: #{seq2seq_transformer_forward.4} parent=27 // pred_check_branch
          %875 = sbr.rel (%p873) target = $region68
        $region67: #{seq2seq_transformer_forward.4} parent=27 // pred_region
          %p876 = scmp.lt.s32.totalorder %s53, 1
          %s877 = scalar_select %p876, %s53, 1
          %s878 = scalar_lea.vmem %s10, %s877
        $region68: #{seq2seq_transformer_forward.4} parent=27 // pred_fallthru
          _
        // Predicated region
        $region69: #{seq2seq_transformer_forward.4} parent=27 // pred_check
          %p879 = pneg %p358
        $region70: #{seq2seq_transformer_forward.4} parent=27 // pred_check_branch
          %881 = sbr.rel (%p879) target = $region72
        $region71: #{seq2seq_transformer_forward.4} parent=27 // pred_region
          %s882 = sand.u32 %s45, 1
          %s883 = scalar_lea.sflag [#allocation5], %s882
          %s884 = sand.u32 %s348, 1
          %s885 = smul.addr %s884, 64
          %s886 = scalar_lea.vmem [#allocation4], %s885
          %888 = vsyncadd %s883, 0
          %s889 = smul.addr %s53, 16
          %s890 = smul.addr %s889, 4
          %s891 = scalar_lea.hbm %s11, %s890
          %s892 = sshll.u32 %s891, 4
          %s893 = int_to_ptr.hbm [resolvable:$true] %s892
          %s894 = sshll.u32 %s886, 4
          %s895 = int_to_ptr.vmem [resolvable:$true] %s894
          %900 = dma.hbm_to_vmem [thread:$0]  %s893, 1024, %s895, %s883, 64, 64, 4
        $region72: #{seq2seq_transformer_forward.4} parent=27 // pred_fallthru
          _
        // Predicated region
        $region73: #{seq2seq_transformer_forward.4} parent=27 // pred_check
          %p901 = pneg %p384
        $region74: #{seq2seq_transformer_forward.4} parent=27 // pred_check_branch
          %903 = sbr.rel (%p901) target = $region76
        $region75: #{seq2seq_transformer_forward.4} parent=27 // pred_region
          %p904 = scmp.lt.s32.totalorder %s53, 1
          %s905 = scalar_select %p904, %s53, 1
          %s906 = scalar_lea.vmem %s12, %s905
        $region76: #{seq2seq_transformer_forward.4} parent=27 // pred_fallthru
          _
        // Predicated region
        $region77: #{seq2seq_transformer_forward.4} parent=27 // pred_check
          %p907 = pneg %p410
        $region78: #{seq2seq_transformer_forward.4} parent=27 // pred_check_branch
          %909 = sbr.rel (%p907) target = $region80
        $region79: #{seq2seq_transformer_forward.4} parent=27 // pred_region
          %s910 = sand.u32 %s45, 1
          %s911 = scalar_lea.sflag [#allocation5], %s910
          %s912 = sand.u32 %s400, 1
          %s913 = smul.addr %s912, 128
          %s914 = scalar_lea.vmem [#allocation6], %s913
          %916 = vsyncadd %s911, 0
          %s917 = smul.addr %s53, 32
          %s918 = smul.addr %s917, 4
          %s919 = scalar_lea.hbm %s13, %s918
          %s920 = sshll.u32 %s919, 4
          %s921 = int_to_ptr.hbm [resolvable:$true] %s920
          %s922 = sshll.u32 %s914, 4
          %s923 = int_to_ptr.vmem [resolvable:$true] %s922
          %928 = dma.hbm_to_vmem [thread:$0]  %s921, 2048, %s923, %s911, 128, 128, 8
        $region80: #{seq2seq_transformer_forward.4} parent=27 // pred_fallthru
          _
        // Predicated region
        $region81: #{seq2seq_transformer_forward.4} parent=27 // pred_check
          %p929 = pneg %p436
        $region82: #{seq2seq_transformer_forward.4} parent=27 // pred_check_branch
          %931 = sbr.rel (%p929) target = $region84
        $region83: #{seq2seq_transformer_forward.4} parent=27 // pred_region
          %p932 = scmp.lt.s32.totalorder %s53, 1
          %s933 = scalar_select %p932, %s53, 1
          %s934 = smul.addr %s933, 2
          %s935 = scalar_lea.vmem %s14, %s934
        $region84: #{seq2seq_transformer_forward.4} parent=27 // pred_fallthru
          _
        // Predicated region
        $region85: #{seq2seq_transformer_forward.4} parent=27 // pred_check
          %p936 = pneg %p462
        $region86: #{seq2seq_transformer_forward.4} parent=27 // pred_check_branch
          %938 = sbr.rel (%p936) target = $region88
        $region87: #{seq2seq_transformer_forward.4} parent=27 // pred_region
          %s939 = sand.u32 %s45, 1
          %s940 = scalar_lea.sflag [#allocation8], %s939
          %s941 = sand.u32 %s452, 1
          %s942 = smul.addr %s941, 64
          %s943 = scalar_lea.vmem [#allocation7], %s942
          %945 = vsyncadd %s940, 0
          %s946 = smul.addr %s53, 16
          %s947 = smul.addr %s946, 4
          %s948 = scalar_lea.hbm %s15, %s947
          %s949 = sshll.u32 %s948, 4
          %s950 = int_to_ptr.hbm [resolvable:$true] %s949
          %s951 = sshll.u32 %s943, 4
          %s952 = int_to_ptr.vmem [resolvable:$true] %s951
          %957 = dma.hbm_to_vmem [thread:$0]  %s950, 1024, %s952, %s940, 64, 64, 4
        $region88: #{seq2seq_transformer_forward.4} parent=27 // pred_fallthru
          _
        // Predicated region
        $region89: #{seq2seq_transformer_forward.4} parent=27 // pred_check
          %p958 = pneg %p488
        $region90: #{seq2seq_transformer_forward.4} parent=27 // pred_check_branch
          %960 = sbr.rel (%p958) target = $region92
        $region91: #{seq2seq_transformer_forward.4} parent=27 // pred_region
          %p961 = scmp.lt.s32.totalorder %s53, 1
          %s962 = scalar_select %p961, %s53, 1
          %s963 = scalar_lea.vmem %s16, %s962
        $region92: #{seq2seq_transformer_forward.4} parent=27 // pred_fallthru
          _
        // Predicated region
        $region93: #{seq2seq_transformer_forward.4} parent=27 // pred_check
          %p964 = pneg %p514
        $region94: #{seq2seq_transformer_forward.4} parent=27 // pred_check_branch
          %966 = sbr.rel (%p964) target = $region96
        $region95: #{seq2seq_transformer_forward.4} parent=27 // pred_region
          %p967 = scmp.lt.s32.totalorder %s53, 1
          %s968 = scalar_select %p967, %s53, 1
          %s969 = scalar_lea.vmem %s17, %s968
        $region96: #{seq2seq_transformer_forward.4} parent=27 // pred_fallthru
          _
        // Predicated region
        $region97: #{seq2seq_transformer_forward.4} parent=27 // pred_check
          %p970 = pneg %p540
        $region98: #{seq2seq_transformer_forward.4} parent=27 // pred_check_branch
          %972 = sbr.rel (%p970) target = $region100
        $region99: #{seq2seq_transformer_forward.4} parent=27 // pred_region
          %p973 = scmp.lt.s32.totalorder %s53, 1
          %s974 = scalar_select %p973, %s53, 1
          %s975 = scalar_lea.vmem %s18, %s974
        $region100: #{seq2seq_transformer_forward.4} parent=27 // pred_fallthru
          _
        // Predicated region
        $region101: #{seq2seq_transformer_forward.4} parent=27 // pred_check
          %p976 = pneg %p566
        $region102: #{seq2seq_transformer_forward.4} parent=27 // pred_check_branch
          %978 = sbr.rel (%p976) target = $region104
        $region103: #{seq2seq_transformer_forward.4} parent=27 // pred_region
          %s979 = sand.u32 %s45, 1
          %s980 = scalar_lea.sflag [#allocation8], %s979
          %s981 = sand.u32 %s556, 1
          %s982 = smul.addr %s981, 64
          %s983 = scalar_lea.vmem [#allocation9], %s982
          %985 = vsyncadd %s980, 0
          %s986 = smul.addr %s53, 16
          %s987 = smul.addr %s986, 4
          %s988 = scalar_lea.hbm %s19, %s987
          %s989 = sshll.u32 %s988, 4
          %s990 = int_to_ptr.hbm [resolvable:$true] %s989
          %s991 = sshll.u32 %s983, 4
          %s992 = int_to_ptr.vmem [resolvable:$true] %s991
          %997 = dma.hbm_to_vmem [thread:$0]  %s990, 1024, %s992, %s980, 64, 64, 4
        $region104: #{seq2seq_transformer_forward.4} parent=27 // pred_fallthru
          _
        // Predicated region
        $region105: #{seq2seq_transformer_forward.4} parent=27 // pred_check
          %p998 = pneg %p592
        $region106: #{seq2seq_transformer_forward.4} parent=27 // pred_check_branch
          %1000 = sbr.rel (%p998) target = $region108
        $region107: #{seq2seq_transformer_forward.4} parent=27 // pred_region
          %p1001 = scmp.lt.s32.totalorder %s53, 1
          %s1002 = scalar_select %p1001, %s53, 1
          %s1003 = scalar_lea.vmem %s20, %s1002
        $region108: #{seq2seq_transformer_forward.4} parent=27 // pred_fallthru
          _
        // Predicated region
        $region109: #{seq2seq_transformer_forward.4} parent=27 // pred_check
          %p1004 = pneg %p618
        $region110: #{seq2seq_transformer_forward.4} parent=27 // pred_check_branch
          %1006 = sbr.rel (%p1004) target = $region112
        $region111: #{seq2seq_transformer_forward.4} parent=27 // pred_region
          %s1007 = sand.u32 %s608, 1
          %s1008 = scalar_lea.sflag [#allocation11], %s1007
          %s1009 = sand.u32 %s608, 1
          %s1010 = smul.addr %s1009, 64
          %s1011 = scalar_lea.vmem [#allocation10], %s1010
          %1013 = vsyncadd %s1008, 0
          %s1014 = smul.addr %s53, 16
          %s1015 = smul.addr %s1014, 4
          %s1016 = scalar_lea.hbm %s21, %s1015
          %s1017 = sshll.u32 %s1016, 4
          %s1018 = int_to_ptr.hbm [resolvable:$true] %s1017
          %s1019 = sshll.u32 %s1011, 4
          %s1020 = int_to_ptr.vmem [resolvable:$true] %s1019
          %1025 = dma.hbm_to_vmem [thread:$0]  %s1018, 1024, %s1020, %s1008, 64, 64, 4
        $region112: #{seq2seq_transformer_forward.4} parent=27 // pred_fallthru
          _
        // Predicated region
        $region113: #{seq2seq_transformer_forward.4} parent=27 // pred_check
          %p1026 = pneg %p644
        $region114: #{seq2seq_transformer_forward.4} parent=27 // pred_check_branch
          %1028 = sbr.rel (%p1026) target = $region116
        $region115: #{seq2seq_transformer_forward.4} parent=27 // pred_region
          %p1029 = scmp.lt.s32.totalorder %s53, 1
          %s1030 = scalar_select %p1029, %s53, 1
          %s1031 = scalar_lea.vmem %s22, %s1030
        $region116: #{seq2seq_transformer_forward.4} parent=27 // pred_fallthru
          _
        // Predicated region
        $region117: #{seq2seq_transformer_forward.4} parent=27 // pred_check
          %p1032 = pneg %p670
        $region118: #{seq2seq_transformer_forward.4} parent=27 // pred_check_branch
          %1034 = sbr.rel (%p1032) target = $region120
        $region119: #{seq2seq_transformer_forward.4} parent=27 // pred_region
          %p1035 = scmp.lt.s32.totalorder %s53, 1
          %s1036 = scalar_select %p1035, %s53, 1
          %s1037 = scalar_lea.vmem %s23, %s1036
        $region120: #{seq2seq_transformer_forward.4} parent=27 // pred_fallthru
          _
        // Predicated region
        $region121: #{seq2seq_transformer_forward.4} parent=27 // pred_check
          %p1038 = pneg %p696
        $region122: #{seq2seq_transformer_forward.4} parent=27 // pred_check_branch
          %1040 = sbr.rel (%p1038) target = $region124
        $region123: #{seq2seq_transformer_forward.4} parent=27 // pred_region
          %p1041 = scmp.lt.s32.totalorder %s53, 1
          %s1042 = scalar_select %p1041, %s53, 1
          %s1043 = scalar_lea.vmem %s24, %s1042
        $region124: #{seq2seq_transformer_forward.4} parent=27 // pred_fallthru
          _
      $region28: #{seq2seq_transformer_forward.4} parent=5 // pred_fallthru
        _
      %p1044 = scmp.le.s32.totalorder 1, %s45
      %p1045 = scmp.lt.s32.totalorder %s45, 5
      %p1046 = pnand %p1044, %p1045
      %p1047 = pneg %p1046
      // Predicated region
      $region125: #{seq2seq_transformer_forward.4} parent=5 // pred_check
        _
      $region126: #{seq2seq_transformer_forward.4} parent=5 // pred_check_branch
        %1049 = sbr.rel (%p1046) target = $region128
      $region127: #{seq2seq_transformer_forward.4} parent=5 // pred_region
        %s1050 = ssub.s32 %s45, 1
        %s1051 = sand.u32 %s195, 1
        %s1052 = scalar_lea.sflag [#allocation3], %s1051
        %s1053 = sand.u32 %s195, 1
        %s1054 = smul.addr %s1053, 192
        %s1055 = scalar_lea.vmem [#allocation2], %s1054
        // Predicated region
        $region129: #{seq2seq_transformer_forward.4} parent=127 // pred_check
          %p1056 = pneg %p208
        $region130: #{seq2seq_transformer_forward.4} parent=127 // pred_check_branch
          %1058 = sbr.rel (%p1056) target = $region132
        $region131: #{seq2seq_transformer_forward.4} parent=127 // pred_region
          %1060 = dma.done %s1052, 3072
        $region132: #{seq2seq_transformer_forward.4} parent=127 // pred_fallthru
          _
        %s1061 = sand.u32 %s50, 1
        %s1062 = scalar_lea.sflag [#allocation5], %s1061
        %s1063 = sand.u32 %s351, 1
        %s1064 = smul.addr %s1063, 64
        %s1065 = scalar_lea.vmem [#allocation4], %s1064
        // Predicated region
        $region133: #{seq2seq_transformer_forward.4} parent=127 // pred_check
          %p1066 = pneg %p364
        $region134: #{seq2seq_transformer_forward.4} parent=127 // pred_check_branch
          %1068 = sbr.rel (%p1066) target = $region136
        $region135: #{seq2seq_transformer_forward.4} parent=127 // pred_region
          %1070 = dma.done %s1062, 1024
        $region136: #{seq2seq_transformer_forward.4} parent=127 // pred_fallthru
          _
        %s1071 = sand.u32 %s50, 1
        %s1072 = scalar_lea.sflag [#allocation5], %s1071
        %s1073 = sand.u32 %s403, 1
        %s1074 = smul.addr %s1073, 128
        %s1075 = scalar_lea.vmem [#allocation6], %s1074
        // Predicated region
        $region137: #{seq2seq_transformer_forward.4} parent=127 // pred_check
          %p1076 = pneg %p416
        $region138: #{seq2seq_transformer_forward.4} parent=127 // pred_check_branch
          %1078 = sbr.rel (%p1076) target = $region140
        $region139: #{seq2seq_transformer_forward.4} parent=127 // pred_region
          %1080 = dma.done %s1072, 2048
        $region140: #{seq2seq_transformer_forward.4} parent=127 // pred_fallthru
          _
        %s1081 = sand.u32 %s50, 1
        %s1082 = scalar_lea.sflag [#allocation8], %s1081
        %s1083 = sand.u32 %s455, 1
        %s1084 = smul.addr %s1083, 64
        %s1085 = scalar_lea.vmem [#allocation7], %s1084
        // Predicated region
        $region141: #{seq2seq_transformer_forward.4} parent=127 // pred_check
          %p1086 = pneg %p468
        $region142: #{seq2seq_transformer_forward.4} parent=127 // pred_check_branch
          %1088 = sbr.rel (%p1086) target = $region144
        $region143: #{seq2seq_transformer_forward.4} parent=127 // pred_region
          %1090 = dma.done %s1082, 1024
        $region144: #{seq2seq_transformer_forward.4} parent=127 // pred_fallthru
          _
        %s1091 = sand.u32 %s50, 1
        %s1092 = scalar_lea.sflag [#allocation8], %s1091
        %s1093 = sand.u32 %s559, 1
        %s1094 = smul.addr %s1093, 64
        %s1095 = scalar_lea.vmem [#allocation9], %s1094
        // Predicated region
        $region145: #{seq2seq_transformer_forward.4} parent=127 // pred_check
          %p1096 = pneg %p572
        $region146: #{seq2seq_transformer_forward.4} parent=127 // pred_check_branch
          %1098 = sbr.rel (%p1096) target = $region148
        $region147: #{seq2seq_transformer_forward.4} parent=127 // pred_region
          %1100 = dma.done %s1092, 1024
        $region148: #{seq2seq_transformer_forward.4} parent=127 // pred_fallthru
          _
        %s1101 = sand.u32 %s611, 1
        %s1102 = scalar_lea.sflag [#allocation11], %s1101
        %s1103 = sand.u32 %s611, 1
        %s1104 = smul.addr %s1103, 64
        %s1105 = scalar_lea.vmem [#allocation10], %s1104
        // Predicated region
        $region149: #{seq2seq_transformer_forward.4} parent=127 // pred_check
          %p1106 = pneg %p624
        $region150: #{seq2seq_transformer_forward.4} parent=127 // pred_check_branch
          %1108 = sbr.rel (%p1106) target = $region152
        $region151: #{seq2seq_transformer_forward.4} parent=127 // pred_region
          %1110 = dma.done %s1102, 1024
        $region152: #{seq2seq_transformer_forward.4} parent=127 // pred_fallthru
          _
        %p1111 = scmp.lt.s32.totalorder %s54, 1
        %s1112 = scalar_select %p1111, %s54, 1
        %s1113 = smul.addr %s1112, 8
        %s1114 = scalar_lea.vmem %s0, %s1113
        %p1115 = pneg %p83
        %p1116 = pneg %p80
        %p1117 = scmp.lt.s32.totalorder %s54, 1
        %s1118 = scalar_select %p1117, %s54, 1
        %s1119 = smul.addr %s1118, 8
        %s1120 = scalar_lea.vmem %s1, %s1119
        %p1121 = pneg %p109
        %p1122 = pneg %p106
        %p1123 = pneg %p130
        %p1124 = pneg %p127
        %p1125 = scmp.lt.s32.totalorder %s54, 1
        %s1126 = scalar_select %p1125, %s54, 1
        %s1127 = scalar_lea.vmem %s3, %s1126
        %p1128 = pneg %p156
        %p1129 = pneg %p153
        %p1130 = scmp.lt.s32.totalorder %s54, 1
        %s1131 = scalar_select %p1130, %s54, 1
        %s1132 = scalar_lea.vmem %s4, %s1131
        %p1133 = pneg %p182
        %p1134 = pneg %p179
        %s1135 = sand.u32 %s195, 1
        %s1136 = scalar_lea.sflag [#allocation3], %s1135
        %s1137 = sand.u32 %s195, 1
        %s1138 = smul.addr %s1137, 192
        %s1139 = scalar_lea.vmem [#allocation2], %s1138
        %p1140 = pneg %p208
        %p1141 = pneg %p205
        %p1142 = scmp.lt.s32.totalorder %s55, 1
        %s1143 = scalar_select %p1142, %s55, 1
        %s1144 = smul.addr %s1143, 3
        %s1145 = scalar_lea.vmem %s6, %s1144
        %p1146 = pneg %p234
        %p1147 = pneg %p231
        %p1148 = scmp.lt.s32.totalorder %s55, 1
        %s1149 = scalar_select %p1148, %s55, 1
        %s1150 = smul.addr %s1149, 16
        %s1151 = smul.addr %s1150, 4
        %s1152 = scalar_lea.vmem %s7, %s1151
        %p1153 = pneg %p260
        %p1154 = pneg %p257
        %p1155 = scmp.lt.s32.totalorder %s55, 1
        %s1156 = scalar_select %p1155, %s55, 1
        %s1157 = scalar_lea.vmem %s8, %s1156
        %p1158 = pneg %p286
        %p1159 = pneg %p283
        %p1160 = scmp.lt.s32.totalorder %s55, 1
        %s1161 = scalar_select %p1160, %s55, 1
        %s1162 = scalar_lea.vmem %s9, %s1161
        %p1163 = pneg %p312
        %p1164 = pneg %p309
        %p1165 = scmp.lt.s32.totalorder %s55, 1
        %s1166 = scalar_select %p1165, %s55, 1
        %s1167 = scalar_lea.vmem %s10, %s1166
        %p1168 = pneg %p338
        %p1169 = pneg %p335
        %s1170 = sand.u32 %s50, 1
        %s1171 = scalar_lea.sflag [#allocation5], %s1170
        %s1172 = sand.u32 %s351, 1
        %s1173 = smul.addr %s1172, 64
        %s1174 = scalar_lea.vmem [#allocation4], %s1173
        %p1175 = pneg %p364
        %p1176 = pneg %p361
        %p1177 = scmp.lt.s32.totalorder %s55, 1
        %s1178 = scalar_select %p1177, %s55, 1
        %s1179 = scalar_lea.vmem %s12, %s1178
        %p1180 = pneg %p390
        %p1181 = pneg %p387
        %s1182 = sand.u32 %s50, 1
        %s1183 = scalar_lea.sflag [#allocation5], %s1182
        %s1184 = sand.u32 %s403, 1
        %s1185 = smul.addr %s1184, 128
        %s1186 = scalar_lea.vmem [#allocation6], %s1185
        %p1187 = pneg %p416
        %p1188 = pneg %p413
        %p1189 = scmp.lt.s32.totalorder %s55, 1
        %s1190 = scalar_select %p1189, %s55, 1
        %s1191 = smul.addr %s1190, 2
        %s1192 = scalar_lea.vmem %s14, %s1191
        %p1193 = pneg %p442
        %p1194 = pneg %p439
        %s1195 = sand.u32 %s50, 1
        %s1196 = scalar_lea.sflag [#allocation8], %s1195
        %s1197 = sand.u32 %s455, 1
        %s1198 = smul.addr %s1197, 64
        %s1199 = scalar_lea.vmem [#allocation7], %s1198
        %p1200 = pneg %p468
        %p1201 = pneg %p465
        %p1202 = scmp.lt.s32.totalorder %s55, 1
        %s1203 = scalar_select %p1202, %s55, 1
        %s1204 = scalar_lea.vmem %s16, %s1203
        %p1205 = pneg %p494
        %p1206 = pneg %p491
        %p1207 = scmp.lt.s32.totalorder %s55, 1
        %s1208 = scalar_select %p1207, %s55, 1
        %s1209 = scalar_lea.vmem %s17, %s1208
        %p1210 = pneg %p520
        %p1211 = pneg %p517
        %p1212 = scmp.lt.s32.totalorder %s55, 1
        %s1213 = scalar_select %p1212, %s55, 1
        %s1214 = scalar_lea.vmem %s18, %s1213
        %p1215 = pneg %p546
        %p1216 = pneg %p543
        %s1217 = sand.u32 %s50, 1
        %s1218 = scalar_lea.sflag [#allocation8], %s1217
        %s1219 = sand.u32 %s559, 1
        %s1220 = smul.addr %s1219, 64
        %s1221 = scalar_lea.vmem [#allocation9], %s1220
        %p1222 = pneg %p572
        %p1223 = pneg %p569
        %p1224 = scmp.lt.s32.totalorder %s55, 1
        %s1225 = scalar_select %p1224, %s55, 1
        %s1226 = scalar_lea.vmem %s20, %s1225
        %p1227 = pneg %p598
        %p1228 = pneg %p595
        %s1229 = sand.u32 %s611, 1
        %s1230 = scalar_lea.sflag [#allocation11], %s1229
        %s1231 = sand.u32 %s611, 1
        %s1232 = smul.addr %s1231, 64
        %s1233 = scalar_lea.vmem [#allocation10], %s1232
        %p1234 = pneg %p624
        %p1235 = pneg %p621
        %p1236 = scmp.lt.s32.totalorder %s55, 1
        %s1237 = scalar_select %p1236, %s55, 1
        %s1238 = scalar_lea.vmem %s22, %s1237
        %p1239 = pneg %p650
        %p1240 = pneg %p647
        %p1241 = scmp.lt.s32.totalorder %s55, 1
        %s1242 = scalar_select %p1241, %s55, 1
        %s1243 = scalar_lea.vmem %s23, %s1242
        %p1244 = pneg %p676
        %p1245 = pneg %p673
        %p1246 = scmp.lt.s32.totalorder %s55, 1
        %s1247 = scalar_select %p1246, %s55, 1
        %s1248 = scalar_lea.vmem %s24, %s1247
        %p1249 = pneg %p702
        %p1250 = pneg %p699
        %p1251 = pneg %p723
        %p1252 = pneg %p720
        %p1253 = pneg %p744
        %p1254 = pneg %p741
        %p1255 = pneg %p770
        %p1256 = pneg %p767
        %p1257 = scmp.lt.s32.totalorder %s54, 1
        %s1258 = scalar_select %p1257, %s54, 1
        %s1259 = smul.addr %s1258, 8
        %s1260 = scalar_lea.vmem %s27, %s1259
        %p1261 = scmp.lt.s32.totalorder %s54, 1
        %s1262 = scalar_select %p1261, %s54, 1
        %s1263 = smul.addr %s1262, 8
        %s1264 = scalar_lea.vmem %s0, %s1263
        %p1265 = scmp.lt.s32.totalorder %s54, 1
        %s1266 = scalar_select %p1265, %s54, 1
        %s1267 = smul.addr %s1266, 8
        %s1268 = scalar_lea.vmem %s1, %s1267
        %p1269 = scmp.lt.s32.totalorder %s54, 1
        %s1270 = scalar_select %p1269, %s54, 1
        %s1271 = scalar_lea.vmem %s3, %s1270
        %p1272 = scmp.lt.s32.totalorder %s54, 1
        %s1273 = scalar_select %p1272, %s54, 1
        %s1274 = scalar_lea.vmem %s4, %s1273
        %p1275 = scmp.lt.s32.totalorder %s55, 1
        %s1276 = scalar_select %p1275, %s55, 1
        %s1277 = smul.addr %s1276, 3
        %s1278 = scalar_lea.vmem %s6, %s1277
        %p1279 = scmp.lt.s32.totalorder %s55, 1
        %s1280 = scalar_select %p1279, %s55, 1
        %s1281 = smul.addr %s1280, 16
        %s1282 = smul.addr %s1281, 4
        %s1283 = scalar_lea.vmem %s7, %s1282
        %p1284 = scmp.lt.s32.totalorder %s55, 1
        %s1285 = scalar_select %p1284, %s55, 1
        %s1286 = scalar_lea.vmem %s8, %s1285
        %p1287 = scmp.lt.s32.totalorder %s55, 1
        %s1288 = scalar_select %p1287, %s55, 1
        %s1289 = scalar_lea.vmem %s9, %s1288
        %p1290 = scmp.lt.s32.totalorder %s55, 1
        %s1291 = scalar_select %p1290, %s55, 1
        %s1292 = scalar_lea.vmem %s10, %s1291
        %p1293 = scmp.lt.s32.totalorder %s55, 1
        %s1294 = scalar_select %p1293, %s55, 1
        %s1295 = scalar_lea.vmem %s12, %s1294
        %p1296 = scmp.lt.s32.totalorder %s55, 1
        %s1297 = scalar_select %p1296, %s55, 1
        %s1298 = smul.addr %s1297, 2
        %s1299 = scalar_lea.vmem %s14, %s1298
        %p1300 = scmp.lt.s32.totalorder %s55, 1
        %s1301 = scalar_select %p1300, %s55, 1
        %s1302 = scalar_lea.vmem %s16, %s1301
        %p1303 = scmp.lt.s32.totalorder %s55, 1
        %s1304 = scalar_select %p1303, %s55, 1
        %s1305 = scalar_lea.vmem %s17, %s1304
        %p1306 = scmp.lt.s32.totalorder %s55, 1
        %s1307 = scalar_select %p1306, %s55, 1
        %s1308 = scalar_lea.vmem %s18, %s1307
        %p1309 = scmp.lt.s32.totalorder %s55, 1
        %s1310 = scalar_select %p1309, %s55, 1
        %s1311 = scalar_lea.vmem %s20, %s1310
        %p1312 = scmp.lt.s32.totalorder %s55, 1
        %s1313 = scalar_select %p1312, %s55, 1
        %s1314 = scalar_lea.vmem %s22, %s1313
        %p1315 = scmp.lt.s32.totalorder %s55, 1
        %s1316 = scalar_select %p1315, %s55, 1
        %s1317 = scalar_lea.vmem %s23, %s1316
        %p1318 = scmp.lt.s32.totalorder %s55, 1
        %s1319 = scalar_select %p1318, %s55, 1
        %s1320 = scalar_lea.vmem %s24, %s1319
        %p1321 = scmp.lt.s32.totalorder %s54, 1
        %s1322 = scalar_select %p1321, %s54, 1
        %s1323 = smul.addr %s1322, 8
        %s1324 = scalar_lea.vmem %s27, %s1323
        %p1326 = scmp.eq.s32.totalorder %s55, 0
        // Predicated region
        $region153: #{seq2seq_transformer_forward.4} parent=127 // pred_check
          %p1327 = pneg %p1326
        $region154: #{seq2seq_transformer_forward.4} parent=127 // pred_check_branch
          %1329 = sbr.rel (%p1327) target = $region156
        $region155: #{seq2seq_transformer_forward.4} parent=127 // pred_region
          %v1330 = vld [vmem:[%s1264] sm:$0xff]
          %1331 = vst [vmem:[%s1324] sm:$0xff] %v1330
        $region156: #{seq2seq_transformer_forward.4} parent=127 // pred_fallthru
          _
        %v1332 = vld [vmem:[%s1324] sm:$0xff]
        %v1333 = vpack.c.bf16 %v1332, %v1332
        %v1334 = vld [vmem:[%s1055] sm:$0xff]
        %v1335 = vld [vmem:[%s1055 + $0x8] sm:$0xf]
        %v1336 = vld [vmem:[%s1055 + $0xc] sm:$0xff]
        %v1337 = vld [vmem:[%s1055 + $0x14] sm:$0xf]
        %v1338 = vld [vmem:[%s1055 + $0x18] sm:$0xff]
        %v1339 = vld [vmem:[%s1055 + $0x20] sm:$0xf]
        %v1340 = vld [vmem:[%s1055 + $0x24] sm:$0xff]
        %v1341 = vld [vmem:[%s1055 + $0x2c] sm:$0xf]
        %v1342 = vld [vmem:[%s1055 + $0x30] sm:$0xff]
        %v1343 = vld [vmem:[%s1055 + $0x38] sm:$0xf]
        %v1344 = vld [vmem:[%s1055 + $0x3c] sm:$0xff]
        %v1345 = vld [vmem:[%s1055 + $0x44] sm:$0xf]
        %v1346 = vld [vmem:[%s1055 + $0x48] sm:$0xff]
        %v1347 = vld [vmem:[%s1055 + $0x50] sm:$0xf]
        %v1348 = vld [vmem:[%s1055 + $0x54] sm:$0xff]
        %v1349 = vld [vmem:[%s1055 + $0x5c] sm:$0xf]
        %v1350 = vld [vmem:[%s1055 + $0x60] sm:$0xff]
        %v1351 = vld [vmem:[%s1055 + $0x68] sm:$0xf]
        %v1352 = vld [vmem:[%s1055 + $0x6c] sm:$0xff]
        %v1353 = vld [vmem:[%s1055 + $0x74] sm:$0xf]
        %v1354 = vld [vmem:[%s1055 + $0x78] sm:$0xff]
        %v1355 = vld [vmem:[%s1055 + $0x80] sm:$0xf]
        %v1356 = vld [vmem:[%s1055 + $0x84] sm:$0xff]
        %v1357 = vld [vmem:[%s1055 + $0x8c] sm:$0xf]
        %v1358 = vld [vmem:[%s1055 + $0x90] sm:$0xff]
        %v1359 = vld [vmem:[%s1055 + $0x98] sm:$0xf]
        %v1360 = vld [vmem:[%s1055 + $0x9c] sm:$0xff]
        %v1361 = vld [vmem:[%s1055 + $0xa4] sm:$0xf]
        %v1362 = vld [vmem:[%s1055 + $0xa8] sm:$0xff]
        %v1363 = vld [vmem:[%s1055 + $0xb0] sm:$0xf]
        %v1364 = vld [vmem:[%s1055 + $0xb4] sm:$0xff]
        %v1365 = vld [vmem:[%s1055 + $0xbc] sm:$0xf]
        %v1366 = vld [vmem:[%s1278] sm:$0x7]
        %v1368 = vperm.slane %v1366, 0
        %v1369 = vperm.slane %v1366, 1
        %v1370 = vperm.slane %v1366, 2
        %v1406 = vunpack.c.l.b16 %v1334
        %v1407 = vunpack.c.h.b16 %v1334
        %v1408 = vunpack.c.l.b16 %v1335
        %v1409 = vunpack.c.l.b16 %v1336
        %v1410 = vunpack.c.h.b16 %v1336
        %v1411 = vunpack.c.l.b16 %v1337
        %v1412 = vunpack.c.l.b16 %v1338
        %v1413 = vunpack.c.h.b16 %v1338
        %v1414 = vunpack.c.l.b16 %v1339
        %v1415 = vunpack.c.l.b16 %v1340
        %v1416 = vunpack.c.h.b16 %v1340
        %v1417 = vunpack.c.l.b16 %v1341
        %v1418 = vunpack.c.l.b16 %v1342
        %v1419 = vunpack.c.h.b16 %v1342
        %v1420 = vunpack.c.l.b16 %v1343
        %v1421 = vunpack.c.l.b16 %v1344
        %v1422 = vunpack.c.h.b16 %v1344
        %v1423 = vunpack.c.l.b16 %v1345
        %v1424 = vunpack.c.l.b16 %v1346
        %v1425 = vunpack.c.h.b16 %v1346
        %v1426 = vunpack.c.l.b16 %v1347
        %v1427 = vunpack.c.l.b16 %v1348
        %v1428 = vunpack.c.h.b16 %v1348
        %v1429 = vunpack.c.l.b16 %v1349
        %v1430 = vunpack.c.l.b16 %v1350
        %v1431 = vunpack.c.h.b16 %v1350
        %v1432 = vunpack.c.l.b16 %v1351
        %v1433 = vunpack.c.l.b16 %v1352
        %v1434 = vunpack.c.h.b16 %v1352
        %v1435 = vunpack.c.l.b16 %v1353
        %v1436 = vunpack.c.l.b16 %v1354
        %v1437 = vunpack.c.h.b16 %v1354
        %v1438 = vunpack.c.l.b16 %v1355
        %v1439 = vunpack.c.l.b16 %v1356
        %v1440 = vunpack.c.h.b16 %v1356
        %v1441 = vunpack.c.l.b16 %v1357
        %v1442 = vunpack.c.l.b16 %v1358
        %v1443 = vunpack.c.h.b16 %v1358
        %v1444 = vunpack.c.l.b16 %v1359
        %v1445 = vunpack.c.l.b16 %v1360
        %v1446 = vunpack.c.h.b16 %v1360
        %v1447 = vunpack.c.l.b16 %v1361
        %v1448 = vunpack.c.l.b16 %v1362
        %v1449 = vunpack.c.h.b16 %v1362
        %v1450 = vunpack.c.l.b16 %v1363
        %v1451 = vunpack.c.l.b16 %v1364
        %v1452 = vunpack.c.h.b16 %v1364
        %v1453 = vunpack.c.l.b16 %v1365
        %v1454 = vpack.c.b16 %v1409, %v1406
        %v1455 = vpack.c.b16 %v1410, %v1407
        %v1456 = vpack.c.b16 %v1411, %v1408
        %v1457 = vpack.c.b16 %v1415, %v1412
        %v1458 = vpack.c.b16 %v1416, %v1413
        %v1459 = vpack.c.b16 %v1417, %v1414
        %v1460 = vpack.c.b16 %v1421, %v1418
        %v1461 = vpack.c.b16 %v1422, %v1419
        %v1462 = vpack.c.b16 %v1423, %v1420
        %v1463 = vpack.c.b16 %v1427, %v1424
        %v1464 = vpack.c.b16 %v1428, %v1425
        %v1465 = vpack.c.b16 %v1429, %v1426
        %v1466 = vpack.c.b16 %v1433, %v1430
        %v1467 = vpack.c.b16 %v1434, %v1431
        %v1468 = vpack.c.b16 %v1435, %v1432
        %v1469 = vpack.c.b16 %v1439, %v1436
        %v1470 = vpack.c.b16 %v1440, %v1437
        %v1471 = vpack.c.b16 %v1441, %v1438
        %v1472 = vpack.c.b16 %v1445, %v1442
        %v1473 = vpack.c.b16 %v1446, %v1443
        %v1474 = vpack.c.b16 %v1447, %v1444
        %v1475 = vpack.c.b16 %v1451, %v1448
        %v1476 = vpack.c.b16 %v1452, %v1449
        %v1477 = vpack.c.b16 %v1453, %v1450
        %1502 = vmatpush.bf16.msra.mxu0 %v1475
        %1503 = vmatpush.bf16.msra.mxu0 %v1472
        %1504 = vmatpush.bf16.msra.mxu0 %v1469
        %1505 = vmatpush.bf16.msra.mxu0 %v1466
        %1506 = vmatpush.bf16.msra.mxu0 %v1463
        %1507 = vmatpush.bf16.msra.mxu0 %v1460
        %1508 = vmatpush.bf16.msra.mxu0 %v1457
        %1509 = vmatpush.bf16.msra.mxu0 %v1454
        %1510 = vmatmul.bf16.gmra.mxu0 %v1333
        %v1511 = vpop.f32.mrf.mxu0
        %v1512 = vadd.f32 %v1368, %v1511
        %v1513 = vpop.f32.mrf.mxu0
        %1514 = vdwg.mxu0
        %1515 = vmatpush.bf16.msra.mxu0 %v1476
        %1516 = vmatpush.bf16.msra.mxu0 %v1473
        %1517 = vmatpush.bf16.msra.mxu0 %v1470
        %1518 = vmatpush.bf16.msra.mxu0 %v1467
        %1519 = vmatpush.bf16.msra.mxu0 %v1464
        %1520 = vmatpush.bf16.msra.mxu0 %v1461
        %1521 = vmatpush.bf16.msra.mxu0 %v1458
        %1522 = vmatpush.bf16.msra.mxu0 %v1455
        %1523 = vmatmul.bf16.gmra.mxu0 %v1333
        %v1524 = vpop.f32.mrf.mxu0
        %v1525 = vadd.f32 %v1369, %v1524
        %v1526 = vpop.f32.mrf.mxu0
        %1527 = vdwg.mxu0
        %1528 = vmatpush.bf16.msra.mxu0 %v1477
        %1529 = vmatpush.bf16.msra.mxu0 %v1474
        %1530 = vmatpush.bf16.msra.mxu0 %v1471
        %1531 = vmatpush.bf16.msra.mxu0 %v1468
        %1532 = vmatpush.bf16.msra.mxu0 %v1465
        %1533 = vmatpush.bf16.msra.mxu0 %v1462
        %1534 = vmatpush.bf16.msra.mxu0 %v1459
        %1535 = vmatpush.bf16.msra.mxu0 %v1456
        %1536 = vmatmul.bf16.gmra.mxu0 %v1333
        %v1537 = vpop.f32.mrf.mxu0
        %v1538 = vadd.f32 %v1370, %v1537
        %v1539 = vpop.f32.mrf.mxu0
        %1540 = vdwg.mxu0
        %v1541 = vld [vmem:[%s2] sm:$0xff]
        %v1542 = vld [vmem:[%s1271] sm:$0x1]
        %v1544 = vperm.slane %v1542, 0
        %v1546 = vadd.f32 %v1541, %v1544
        %v1547 = vmax.f32 %v1546, -1e+09
        %v1548 = vpack.c.bf16 %v1512, %v1512
        %v1549 = vpack.c.bf16 %v1525, %v1525
        %v1550 = vpack.c.bf16 %v1538, %v1538
        %vm1551 = vcmask 261120
        %v1553 = vsel %vm1551, %v1548, 0
        %v1556 = vsel %vm1551, %v1549, 0
        %1558 = vmatpush.bf16.xpose.msra.mxu0 0
        %1559 = vmatpush.bf16.xpose.msra.mxu0 0
        %1560 = vmatpush.bf16.xpose.msra.mxu0 0
        %1561 = vmatpush.bf16.xpose.msra.mxu0 0
        %1562 = vmatpush.bf16.xpose.msra.mxu0 0
        %1563 = vmatpush.bf16.xpose.msra.mxu0 0
        %1564 = vmatpush.bf16.xpose.msra.mxu0 0
        %1565 = vmatpush.bf16.xpose.msra.mxu0 %v1556
        %1566 = vmatmul.bf16.gmra.mxu0 %v1553
        %v1567 = vpop.f32.mrf.mxu0
        %v1568 = vadd.f32 0.0, %v1567
        %v1569 = vpop.f32.mrf.mxu0
        %1570 = vdwg.mxu0
        %v1571 = vmul.f32 %v1568, 0.35355338
        %v1572 = vadd.f32 %v1571, %v1547
        %vm1573 = vcmask 64512
        %v1574 = vsel %vm1573, %v1572, -inf
        %1575 = vmax.xlane.f32.xlu0 %v1574
        %v1576 = vpop.xlane.xlu0 %1575
        %v1577 = vsub.f32 %v1572, %v1576
        %v1578 = vmul.f32 %v1577, 1.442695
        %v1579 = vpow.pop %v1578
        %v1580 = vsel %vm1573, %v1579, 0.0
        %1581 = vadd.xlane.f32.xlu0 %v1580
        %v1582 = vpop.xlane.xlu0 %1581
        %v1583 = vrcp.pop %v1582
        %v1584 = vmul.f32 %v1579, %v1583
        %v1585 = vpack.c.bf16 %v1584, %v1584
        %v1587 = vsel %vm1573, %v1585, 0
        %vm1589 = vcmask 1043456
        %v1591 = vsel %vm1589, %v1550, 0
        %1593 = vmatpush.bf16.msra.mxu0 0
        %1594 = vmatpush.bf16.msra.mxu0 0
        %1595 = vmatpush.bf16.msra.mxu0 0
        %1596 = vmatpush.bf16.msra.mxu0 0
        %1597 = vmatpush.bf16.msra.mxu0 0
        %1598 = vmatpush.bf16.msra.mxu0 0
        %1599 = vmatpush.bf16.msra.mxu0 0
        %1600 = vmatpush.bf16.msra.mxu0 %v1591
        %1601 = vmatmul.bf16.gmra.mxu0 %v1587
        %v1602 = vpop.f32.mrf.mxu0
        %v1603 = vadd.f32 0.0, %v1602
        %v1604 = vpop.f32.mrf.mxu0
        %1605 = vdwg.mxu0
        %1607 = vrot.lane.b32.xlu0 %v1548, 96
        %v1608 = vpop.permute.xlu0 %1607
        %1610 = vrot.lane.b32.xlu0 %v1549, 96
        %v1611 = vpop.permute.xlu0 %1610
        %v1613 = vsel %vm1551, %v1608, 0
        %v1616 = vsel %vm1551, %v1611, 0
        %1618 = vmatpush.bf16.xpose.msra.mxu0 0
        %1619 = vmatpush.bf16.xpose.msra.mxu0 0
        %1620 = vmatpush.bf16.xpose.msra.mxu0 0
        %1621 = vmatpush.bf16.xpose.msra.mxu0 0
        %1622 = vmatpush.bf16.xpose.msra.mxu0 0
        %1623 = vmatpush.bf16.xpose.msra.mxu0 0
        %1624 = vmatpush.bf16.xpose.msra.mxu0 0
        %1625 = vmatpush.bf16.xpose.msra.mxu0 %v1616
        %1626 = vmatmul.bf16.gmra.mxu0 %v1613
        %v1627 = vpop.f32.mrf.mxu0
        %v1628 = vadd.f32 0.0, %v1627
        %v1629 = vpop.f32.mrf.mxu0
        %1630 = vdwg.mxu0
        %v1631 = vmul.f32 %v1628, 0.35355338
        %v1632 = vadd.f32 %v1631, %v1547
        %v1633 = vsel %vm1573, %v1632, -inf
        %1634 = vmax.xlane.f32.xlu0 %v1633
        %v1635 = vpop.xlane.xlu0 %1634
        %v1636 = vsub.f32 %v1632, %v1635
        %v1637 = vmul.f32 %v1636, 1.442695
        %v1638 = vpow.pop %v1637
        %v1639 = vsel %vm1573, %v1638, 0.0
        %1640 = vadd.xlane.f32.xlu0 %v1639
        %v1641 = vpop.xlane.xlu0 %1640
        %v1642 = vrcp.pop %v1641
        %v1643 = vmul.f32 %v1638, %v1642
        %v1644 = vpack.c.bf16 %v1643, %v1643
        %1646 = vrot.lane.b32.xlu0 %v1550, 96
        %v1647 = vpop.permute.xlu0 %1646
        %v1649 = vsel %vm1573, %v1644, 0
        %v1652 = vsel %vm1589, %v1647, 0
        %1654 = vmatpush.bf16.msra.mxu0 0
        %1655 = vmatpush.bf16.msra.mxu0 0
        %1656 = vmatpush.bf16.msra.mxu0 0
        %1657 = vmatpush.bf16.msra.mxu0 0
        %1658 = vmatpush.bf16.msra.mxu0 0
        %1659 = vmatpush.bf16.msra.mxu0 0
        %1660 = vmatpush.bf16.msra.mxu0 0
        %1661 = vmatpush.bf16.msra.mxu0 %v1652
        %1662 = vmatmul.bf16.gmra.mxu0 %v1649
        %v1663 = vpop.f32.mrf.mxu0
        %v1664 = vadd.f32 0.0, %v1663
        %v1665 = vpop.f32.mrf.mxu0
        %1666 = vdwg.mxu0
        %1667 = vrot.lane.b32.xlu0 %v1548, 64
        %v1668 = vpop.permute.xlu0 %1667
        %1669 = vrot.lane.b32.xlu0 %v1549, 64
        %v1670 = vpop.permute.xlu0 %1669
        %v1672 = vsel %vm1551, %v1668, 0
        %v1675 = vsel %vm1551, %v1670, 0
        %1677 = vmatpush.bf16.xpose.msra.mxu0 0
        %1678 = vmatpush.bf16.xpose.msra.mxu0 0
        %1679 = vmatpush.bf16.xpose.msra.mxu0 0
        %1680 = vmatpush.bf16.xpose.msra.mxu0 0
        %1681 = vmatpush.bf16.xpose.msra.mxu0 0
        %1682 = vmatpush.bf16.xpose.msra.mxu0 0
        %1683 = vmatpush.bf16.xpose.msra.mxu0 0
        %1684 = vmatpush.bf16.xpose.msra.mxu0 %v1675
        %1685 = vmatmul.bf16.gmra.mxu0 %v1672
        %v1686 = vpop.f32.mrf.mxu0
        %v1687 = vadd.f32 0.0, %v1686
        %v1688 = vpop.f32.mrf.mxu0
        %1689 = vdwg.mxu0
        %v1690 = vmul.f32 %v1687, 0.35355338
        %v1691 = vadd.f32 %v1690, %v1547
        %v1692 = vsel %vm1573, %v1691, -inf
        %1693 = vmax.xlane.f32.xlu0 %v1692
        %v1694 = vpop.xlane.xlu0 %1693
        %v1695 = vsub.f32 %v1691, %v1694
        %v1696 = vmul.f32 %v1695, 1.442695
        %v1697 = vpow.pop %v1696
        %v1698 = vsel %vm1573, %v1697, 0.0
        %1699 = vadd.xlane.f32.xlu0 %v1698
        %v1700 = vpop.xlane.xlu0 %1699
        %v1701 = vrcp.pop %v1700
        %v1702 = vmul.f32 %v1697, %v1701
        %v1703 = vpack.c.bf16 %v1702, %v1702
        %1704 = vrot.lane.b32.xlu0 %v1550, 64
        %v1705 = vpop.permute.xlu0 %1704
        %v1707 = vsel %vm1573, %v1703, 0
        %v1710 = vsel %vm1589, %v1705, 0
        %1712 = vmatpush.bf16.msra.mxu0 0
        %1713 = vmatpush.bf16.msra.mxu0 0
        %1714 = vmatpush.bf16.msra.mxu0 0
        %1715 = vmatpush.bf16.msra.mxu0 0
        %1716 = vmatpush.bf16.msra.mxu0 0
        %1717 = vmatpush.bf16.msra.mxu0 0
        %1718 = vmatpush.bf16.msra.mxu0 0
        %1719 = vmatpush.bf16.msra.mxu0 %v1710
        %1720 = vmatmul.bf16.gmra.mxu0 %v1707
        %v1721 = vpop.f32.mrf.mxu0
        %v1722 = vadd.f32 0.0, %v1721
        %v1723 = vpop.f32.mrf.mxu0
        %1724 = vdwg.mxu0
        %1725 = vrot.lane.b32.xlu0 %v1548, 32
        %v1726 = vpop.permute.xlu0 %1725
        %1727 = vrot.lane.b32.xlu0 %v1549, 32
        %v1728 = vpop.permute.xlu0 %1727
        %v1730 = vsel %vm1551, %v1726, 0
        %v1733 = vsel %vm1551, %v1728, 0
        %1735 = vmatpush.bf16.xpose.msra.mxu0 0
        %1736 = vmatpush.bf16.xpose.msra.mxu0 0
        %1737 = vmatpush.bf16.xpose.msra.mxu0 0
        %1738 = vmatpush.bf16.xpose.msra.mxu0 0
        %1739 = vmatpush.bf16.xpose.msra.mxu0 0
        %1740 = vmatpush.bf16.xpose.msra.mxu0 0
        %1741 = vmatpush.bf16.xpose.msra.mxu0 0
        %1742 = vmatpush.bf16.xpose.msra.mxu0 %v1733
        %1743 = vmatmul.bf16.gmra.mxu0 %v1730
        %v1744 = vpop.f32.mrf.mxu0
        %v1745 = vadd.f32 0.0, %v1744
        %v1746 = vpop.f32.mrf.mxu0
        %1747 = vdwg.mxu0
        %v1748 = vmul.f32 %v1745, 0.35355338
        %v1749 = vadd.f32 %v1748, %v1547
        %v1750 = vsel %vm1573, %v1749, -inf
        %1751 = vmax.xlane.f32.xlu0 %v1750
        %v1752 = vpop.xlane.xlu0 %1751
        %v1753 = vsub.f32 %v1749, %v1752
        %v1754 = vmul.f32 %v1753, 1.442695
        %v1755 = vpow.pop %v1754
        %v1756 = vsel %vm1573, %v1755, 0.0
        %1757 = vadd.xlane.f32.xlu0 %v1756
        %v1758 = vpop.xlane.xlu0 %1757
        %v1759 = vrcp.pop %v1758
        %v1760 = vmul.f32 %v1755, %v1759
        %v1761 = vpack.c.bf16 %v1760, %v1760
        %1762 = vrot.lane.b32.xlu0 %v1550, 32
        %v1763 = vpop.permute.xlu0 %1762
        %v1765 = vsel %vm1573, %v1761, 0
        %v1768 = vsel %vm1589, %v1763, 0
        %1770 = vmatpush.bf16.msra.mxu0 0
        %1771 = vmatpush.bf16.msra.mxu0 0
        %1772 = vmatpush.bf16.msra.mxu0 0
        %1773 = vmatpush.bf16.msra.mxu0 0
        %1774 = vmatpush.bf16.msra.mxu0 0
        %1775 = vmatpush.bf16.msra.mxu0 0
        %1776 = vmatpush.bf16.msra.mxu0 0
        %1777 = vmatpush.bf16.msra.mxu0 %v1768
        %1778 = vmatmul.bf16.gmra.mxu0 %v1765
        %v1779 = vpop.f32.mrf.mxu0
        %v1780 = vadd.f32 0.0, %v1779
        %v1781 = vpop.f32.mrf.mxu0
        %1782 = vdwg.mxu0
        %1784 = vrot.lane.b32.xlu0 %v1664, 32
        %v1785 = vpop.permute.xlu0 %1784
        %1788 = vrot.lane.b32.xlu0 %v1722, 64
        %v1789 = vpop.permute.xlu0 %1788
        %1792 = vrot.lane.b32.xlu0 %v1780, 96
        %v1793 = vpop.permute.xlu0 %1792
        %v1795 = vsel %vm1551, %v1603, %v1785
        %vm1796 = vcmask 523264
        %v1797 = vsel %vm1796, %v1795, %v1789
        %vm1798 = vcmask 785408
        %v1799 = vsel %vm1798, %v1797, %v1793
        %v1800 = vpack.c.bf16 %v1799, %v1799
        %v1801 = vld [vmem:[%s1283] sm:$0xf]
        %v1802 = vld [vmem:[%s1283 + $0x4] sm:$0xf]
        %v1803 = vld [vmem:[%s1283 + $0x8] sm:$0xf]
        %v1804 = vld [vmem:[%s1283 + $0xc] sm:$0xf]
        %v1805 = vld [vmem:[%s1283 + $0x10] sm:$0xf]
        %v1806 = vld [vmem:[%s1283 + $0x14] sm:$0xf]
        %v1807 = vld [vmem:[%s1283 + $0x18] sm:$0xf]
        %v1808 = vld [vmem:[%s1283 + $0x1c] sm:$0xf]
        %v1809 = vld [vmem:[%s1283 + $0x20] sm:$0xf]
        %v1810 = vld [vmem:[%s1283 + $0x24] sm:$0xf]
        %v1811 = vld [vmem:[%s1283 + $0x28] sm:$0xf]
        %v1812 = vld [vmem:[%s1283 + $0x2c] sm:$0xf]
        %v1813 = vld [vmem:[%s1283 + $0x30] sm:$0xf]
        %v1814 = vld [vmem:[%s1283 + $0x34] sm:$0xf]
        %v1815 = vld [vmem:[%s1283 + $0x38] sm:$0xf]
        %v1816 = vld [vmem:[%s1283 + $0x3c] sm:$0xf]
        %v1817 = vld [vmem:[%s1286] sm:$0x1]
        %v1819 = vperm.slane %v1817, 0
        %v1837 = vunpack.c.l.b16 %v1801
        %v1838 = vunpack.c.l.b16 %v1802
        %v1839 = vunpack.c.l.b16 %v1803
        %v1840 = vunpack.c.l.b16 %v1804
        %v1841 = vunpack.c.l.b16 %v1805
        %v1842 = vunpack.c.l.b16 %v1806
        %v1843 = vunpack.c.l.b16 %v1807
        %v1844 = vunpack.c.l.b16 %v1808
        %v1845 = vunpack.c.l.b16 %v1809
        %v1846 = vunpack.c.l.b16 %v1810
        %v1847 = vunpack.c.l.b16 %v1811
        %v1848 = vunpack.c.l.b16 %v1812
        %v1849 = vunpack.c.l.b16 %v1813
        %v1850 = vunpack.c.l.b16 %v1814
        %v1851 = vunpack.c.l.b16 %v1815
        %v1852 = vunpack.c.l.b16 %v1816
        %v1853 = vpack.c.b16 %v1838, %v1837
        %v1854 = vpack.c.b16 %v1840, %v1839
        %v1855 = vpack.c.b16 %v1842, %v1841
        %v1856 = vpack.c.b16 %v1844, %v1843
        %v1857 = vpack.c.b16 %v1846, %v1845
        %v1858 = vpack.c.b16 %v1848, %v1847
        %v1859 = vpack.c.b16 %v1850, %v1849
        %v1860 = vpack.c.b16 %v1852, %v1851
        %1869 = vmatpush.bf16.msra.mxu0 %v1860
        %1870 = vmatpush.bf16.msra.mxu0 %v1859
        %1871 = vmatpush.bf16.msra.mxu0 %v1858
        %1872 = vmatpush.bf16.msra.mxu0 %v1857
        %1873 = vmatpush.bf16.msra.mxu0 %v1856
        %1874 = vmatpush.bf16.msra.mxu0 %v1855
        %1875 = vmatpush.bf16.msra.mxu0 %v1854
        %1876 = vmatpush.bf16.msra.mxu0 %v1853
        %1877 = vmatmul.bf16.gmra.mxu0 %v1800
        %v1878 = vpop.f32.mrf.mxu0
        %v1879 = vadd.f32 %v1819, %v1878
        %v1880 = vpop.f32.mrf.mxu0
        %1881 = vdwg.mxu0
        %v1882 = vadd.f32 %v1332, %v1879
        %v1883 = vld [vmem:[%s1289] sm:$0x1]
        %v1884 = vld [vmem:[%s1292] sm:$0x1]
        %v1885 = vlaneseq
        %v1886 = vand.u32 %v1885, 127
        %vm1887 = vcmp.lt.s32.totalorder %v1886, 32
        %1888 = vadd.xlane.f32.xlu0 %v1882
        %v1889 = vpop.xlane.xlu0 %1888
        %v1890 = vmul.f32 %v1889, 0.03125
        %v1891 = vsub.f32 %v1882, %v1890
        %v1892 = vsel %vm1887, %v1891, 0.0
        %v1893 = vmul.f32 %v1892, %v1892
        %1894 = vadd.xlane.f32.xlu0 %v1893
        %v1895 = vpop.xlane.xlu0 %1894
        %v1896 = vmul.f32 %v1895, 0.03125
        %v1897 = vadd.f32 %v1896, 1e-05
        %v1898 = vrsqrt.pop %v1897
        %v1899 = vmul.f32 %v1898, %v1897
        %v1900 = vmul.f32 %v1899, %v1898
        %v1901 = vmul.f32 0.5, %v1900
        %v1902 = vsub.f32 1.5, %v1901
        %v1903 = vmul.f32 %v1898, %v1902
        %vm1904 = vweird.f32 %v1897
        %vm1905 = vweird.f32 %v1898
        %vm1906 = vmor %vm1904, %vm1905
        %v1907 = vsel %vm1906, %v1898, %v1903
        %v1908 = vmul.f32 %v1892, %v1907
        %v1910 = vperm.slane %v1883, 0
        %v1912 = vmul.f32 %v1908, %v1910
        %v1914 = vperm.slane %v1884, 0
        %v1916 = vadd.f32 %v1912, %v1914
        %v1917 = vpack.c.bf16 %v1916, %v1916
        %v1918 = vld [vmem:[%s1065] sm:$0xf]
        %v1919 = vld [vmem:[%s1065 + $0x4] sm:$0xf]
        %v1920 = vld [vmem:[%s1065 + $0x8] sm:$0xf]
        %v1921 = vld [vmem:[%s1065 + $0xc] sm:$0xf]
        %v1922 = vld [vmem:[%s1065 + $0x10] sm:$0xf]
        %v1923 = vld [vmem:[%s1065 + $0x14] sm:$0xf]
        %v1924 = vld [vmem:[%s1065 + $0x18] sm:$0xf]
        %v1925 = vld [vmem:[%s1065 + $0x1c] sm:$0xf]
        %v1926 = vld [vmem:[%s1065 + $0x20] sm:$0xf]
        %v1927 = vld [vmem:[%s1065 + $0x24] sm:$0xf]
        %v1928 = vld [vmem:[%s1065 + $0x28] sm:$0xf]
        %v1929 = vld [vmem:[%s1065 + $0x2c] sm:$0xf]
        %v1930 = vld [vmem:[%s1065 + $0x30] sm:$0xf]
        %v1931 = vld [vmem:[%s1065 + $0x34] sm:$0xf]
        %v1932 = vld [vmem:[%s1065 + $0x38] sm:$0xf]
        %v1933 = vld [vmem:[%s1065 + $0x3c] sm:$0xf]
        %v1934 = vld [vmem:[%s1295] sm:$0x1]
        %v1936 = vperm.slane %v1934, 0
        %v1954 = vunpack.c.l.b16 %v1918
        %v1955 = vunpack.c.l.b16 %v1919
        %v1956 = vunpack.c.l.b16 %v1920
        %v1957 = vunpack.c.l.b16 %v1921
        %v1958 = vunpack.c.l.b16 %v1922
        %v1959 = vunpack.c.l.b16 %v1923
        %v1960 = vunpack.c.l.b16 %v1924
        %v1961 = vunpack.c.l.b16 %v1925
        %v1962 = vunpack.c.l.b16 %v1926
        %v1963 = vunpack.c.l.b16 %v1927
        %v1964 = vunpack.c.l.b16 %v1928
        %v1965 = vunpack.c.l.b16 %v1929
        %v1966 = vunpack.c.l.b16 %v1930
        %v1967 = vunpack.c.l.b16 %v1931
        %v1968 = vunpack.c.l.b16 %v1932
        %v1969 = vunpack.c.l.b16 %v1933
        %v1970 = vpack.c.b16 %v1955, %v1954
        %v1971 = vpack.c.b16 %v1957, %v1956
        %v1972 = vpack.c.b16 %v1959, %v1958
        %v1973 = vpack.c.b16 %v1961, %v1960
        %v1974 = vpack.c.b16 %v1963, %v1962
        %v1975 = vpack.c.b16 %v1965, %v1964
        %v1976 = vpack.c.b16 %v1967, %v1966
        %v1977 = vpack.c.b16 %v1969, %v1968
        %1986 = vmatpush.bf16.msra.mxu0 %v1977
        %1987 = vmatpush.bf16.msra.mxu0 %v1976
        %1988 = vmatpush.bf16.msra.mxu0 %v1975
        %1989 = vmatpush.bf16.msra.mxu0 %v1974
        %1990 = vmatpush.bf16.msra.mxu0 %v1973
        %1991 = vmatpush.bf16.msra.mxu0 %v1972
        %1992 = vmatpush.bf16.msra.mxu0 %v1971
        %1993 = vmatpush.bf16.msra.mxu0 %v1970
        %1994 = vmatmul.bf16.gmra.mxu0 %v1917
        %v1995 = vpop.f32.mrf.mxu0
        %v1996 = vadd.f32 %v1936, %v1995
        %v1997 = vpop.f32.mrf.mxu0
        %1998 = vdwg.mxu0
        %v1999 = vld [vmem:[%s1268] sm:$0xff]
        %v2000 = vpack.c.bf16 %v1999, %v1999
        %v2001 = vld [vmem:[%s1075] sm:$0xff]
        %v2002 = vld [vmem:[%s1075 + $0x8] sm:$0xff]
        %v2003 = vld [vmem:[%s1075 + $0x10] sm:$0xff]
        %v2004 = vld [vmem:[%s1075 + $0x18] sm:$0xff]
        %v2005 = vld [vmem:[%s1075 + $0x20] sm:$0xff]
        %v2006 = vld [vmem:[%s1075 + $0x28] sm:$0xff]
        %v2007 = vld [vmem:[%s1075 + $0x30] sm:$0xff]
        %v2008 = vld [vmem:[%s1075 + $0x38] sm:$0xff]
        %v2009 = vld [vmem:[%s1075 + $0x40] sm:$0xff]
        %v2010 = vld [vmem:[%s1075 + $0x48] sm:$0xff]
        %v2011 = vld [vmem:[%s1075 + $0x50] sm:$0xff]
        %v2012 = vld [vmem:[%s1075 + $0x58] sm:$0xff]
        %v2013 = vld [vmem:[%s1075 + $0x60] sm:$0xff]
        %v2014 = vld [vmem:[%s1075 + $0x68] sm:$0xff]
        %v2015 = vld [vmem:[%s1075 + $0x70] sm:$0xff]
        %v2016 = vld [vmem:[%s1075 + $0x78] sm:$0xff]
        %v2017 = vld [vmem:[%s1299] sm:$0x3]
        %v2019 = vperm.slane %v2017, 0
        %v2020 = vperm.slane %v2017, 1
        %v2039 = vunpack.c.l.b16 %v2001
        %v2040 = vunpack.c.h.b16 %v2001
        %v2041 = vunpack.c.l.b16 %v2002
        %v2042 = vunpack.c.h.b16 %v2002
        %v2043 = vunpack.c.l.b16 %v2003
        %v2044 = vunpack.c.h.b16 %v2003
        %v2045 = vunpack.c.l.b16 %v2004
        %v2046 = vunpack.c.h.b16 %v2004
        %v2047 = vunpack.c.l.b16 %v2005
        %v2048 = vunpack.c.h.b16 %v2005
        %v2049 = vunpack.c.l.b16 %v2006
        %v2050 = vunpack.c.h.b16 %v2006
        %v2051 = vunpack.c.l.b16 %v2007
        %v2052 = vunpack.c.h.b16 %v2007
        %v2053 = vunpack.c.l.b16 %v2008
        %v2054 = vunpack.c.h.b16 %v2008
        %v2055 = vunpack.c.l.b16 %v2009
        %v2056 = vunpack.c.h.b16 %v2009
        %v2057 = vunpack.c.l.b16 %v2010
        %v2058 = vunpack.c.h.b16 %v2010
        %v2059 = vunpack.c.l.b16 %v2011
        %v2060 = vunpack.c.h.b16 %v2011
        %v2061 = vunpack.c.l.b16 %v2012
        %v2062 = vunpack.c.h.b16 %v2012
        %v2063 = vunpack.c.l.b16 %v2013
        %v2064 = vunpack.c.h.b16 %v2013
        %v2065 = vunpack.c.l.b16 %v2014
        %v2066 = vunpack.c.h.b16 %v2014
        %v2067 = vunpack.c.l.b16 %v2015
        %v2068 = vunpack.c.h.b16 %v2015
        %v2069 = vunpack.c.l.b16 %v2016
        %v2070 = vunpack.c.h.b16 %v2016
        %v2071 = vpack.c.b16 %v2041, %v2039
        %v2072 = vpack.c.b16 %v2042, %v2040
        %v2073 = vpack.c.b16 %v2045, %v2043
        %v2074 = vpack.c.b16 %v2046, %v2044
        %v2075 = vpack.c.b16 %v2049, %v2047
        %v2076 = vpack.c.b16 %v2050, %v2048
        %v2077 = vpack.c.b16 %v2053, %v2051
        %v2078 = vpack.c.b16 %v2054, %v2052
        %v2079 = vpack.c.b16 %v2057, %v2055
        %v2080 = vpack.c.b16 %v2058, %v2056
        %v2081 = vpack.c.b16 %v2061, %v2059
        %v2082 = vpack.c.b16 %v2062, %v2060
        %v2083 = vpack.c.b16 %v2065, %v2063
        %v2084 = vpack.c.b16 %v2066, %v2064
        %v2085 = vpack.c.b16 %v2069, %v2067
        %v2086 = vpack.c.b16 %v2070, %v2068
        %2103 = vmatpush.bf16.msra.mxu0 %v2085
        %2104 = vmatpush.bf16.msra.mxu0 %v2083
        %2105 = vmatpush.bf16.msra.mxu0 %v2081
        %2106 = vmatpush.bf16.msra.mxu0 %v2079
        %2107 = vmatpush.bf16.msra.mxu0 %v2077
        %2108 = vmatpush.bf16.msra.mxu0 %v2075
        %2109 = vmatpush.bf16.msra.mxu0 %v2073
        %2110 = vmatpush.bf16.msra.mxu0 %v2071
        %2111 = vmatmul.bf16.gmra.mxu0 %v2000
        %v2112 = vpop.f32.mrf.mxu0
        %v2113 = vadd.f32 %v2019, %v2112
        %v2114 = vpop.f32.mrf.mxu0
        %2115 = vdwg.mxu0
        %2116 = vmatpush.bf16.msra.mxu0 %v2086
        %2117 = vmatpush.bf16.msra.mxu0 %v2084
        %2118 = vmatpush.bf16.msra.mxu0 %v2082
        %2119 = vmatpush.bf16.msra.mxu0 %v2080
        %2120 = vmatpush.bf16.msra.mxu0 %v2078
        %2121 = vmatpush.bf16.msra.mxu0 %v2076
        %2122 = vmatpush.bf16.msra.mxu0 %v2074
        %2123 = vmatpush.bf16.msra.mxu0 %v2072
        %2124 = vmatmul.bf16.gmra.mxu0 %v2000
        %v2125 = vpop.f32.mrf.mxu0
        %v2126 = vadd.f32 %v2020, %v2125
        %v2127 = vpop.f32.mrf.mxu0
        %2128 = vdwg.mxu0
        %v2129 = vld [vmem:[%s1274] sm:$0x1]
        %v2130 = vpack.c.bf16 %v1996, %v1996
        %v2131 = vpack.c.bf16 %v2113, %v2113
        %v2132 = vpack.c.bf16 %v2126, %v2126
        %v2134 = vsel %vm1551, %v2130, 0
        %v2137 = vsel %vm1551, %v2131, 0
        %2139 = vmatpush.bf16.xpose.msra.mxu0 0
        %2140 = vmatpush.bf16.xpose.msra.mxu0 0
        %2141 = vmatpush.bf16.xpose.msra.mxu0 0
        %2142 = vmatpush.bf16.xpose.msra.mxu0 0
        %2143 = vmatpush.bf16.xpose.msra.mxu0 0
        %2144 = vmatpush.bf16.xpose.msra.mxu0 0
        %2145 = vmatpush.bf16.xpose.msra.mxu0 0
        %2146 = vmatpush.bf16.xpose.msra.mxu0 %v2137
        %2147 = vmatmul.bf16.gmra.mxu0 %v2134
        %v2148 = vpop.f32.mrf.mxu0
        %v2149 = vadd.f32 0.0, %v2148
        %v2150 = vpop.f32.mrf.mxu0
        %2151 = vdwg.mxu0
        %v2152 = vmul.f32 %v2149, 0.35355338
        %v2154 = vperm.slane %v2129, 0
        %v2156 = vadd.f32 %v2152, %v2154
        %v2157 = vsel %vm1573, %v2156, -inf
        %2158 = vmax.xlane.f32.xlu0 %v2157
        %v2159 = vpop.xlane.xlu0 %2158
        %v2160 = vsub.f32 %v2156, %v2159
        %v2161 = vmul.f32 %v2160, 1.442695
        %v2162 = vpow.pop %v2161
        %v2163 = vsel %vm1573, %v2162, 0.0
        %2164 = vadd.xlane.f32.xlu0 %v2163
        %v2165 = vpop.xlane.xlu0 %2164
        %v2166 = vrcp.pop %v2165
        %v2167 = vmul.f32 %v2162, %v2166
        %v2168 = vpack.c.bf16 %v2167, %v2167
        %v2170 = vsel %vm1573, %v2168, 0
        %v2173 = vsel %vm1589, %v2132, 0
        %2175 = vmatpush.bf16.msra.mxu0 0
        %2176 = vmatpush.bf16.msra.mxu0 0
        %2177 = vmatpush.bf16.msra.mxu0 0
        %2178 = vmatpush.bf16.msra.mxu0 0
        %2179 = vmatpush.bf16.msra.mxu0 0
        %2180 = vmatpush.bf16.msra.mxu0 0
        %2181 = vmatpush.bf16.msra.mxu0 0
        %2182 = vmatpush.bf16.msra.mxu0 %v2173
        %2183 = vmatmul.bf16.gmra.mxu0 %v2170
        %v2184 = vpop.f32.mrf.mxu0
        %v2185 = vadd.f32 0.0, %v2184
        %v2186 = vpop.f32.mrf.mxu0
        %2187 = vdwg.mxu0
        %2189 = vrot.lane.b32.xlu0 %v2130, 96
        %v2190 = vpop.permute.xlu0 %2189
        %2192 = vrot.lane.b32.xlu0 %v2131, 96
        %v2193 = vpop.permute.xlu0 %2192
        %v2195 = vsel %vm1551, %v2190, 0
        %v2198 = vsel %vm1551, %v2193, 0
        %2200 = vmatpush.bf16.xpose.msra.mxu0 0
        %2201 = vmatpush.bf16.xpose.msra.mxu0 0
        %2202 = vmatpush.bf16.xpose.msra.mxu0 0
        %2203 = vmatpush.bf16.xpose.msra.mxu0 0
        %2204 = vmatpush.bf16.xpose.msra.mxu0 0
        %2205 = vmatpush.bf16.xpose.msra.mxu0 0
        %2206 = vmatpush.bf16.xpose.msra.mxu0 0
        %2207 = vmatpush.bf16.xpose.msra.mxu0 %v2198
        %2208 = vmatmul.bf16.gmra.mxu0 %v2195
        %v2209 = vpop.f32.mrf.mxu0
        %v2210 = vadd.f32 0.0, %v2209
        %v2211 = vpop.f32.mrf.mxu0
        %2212 = vdwg.mxu0
        %v2213 = vmul.f32 %v2210, 0.35355338
        %v2214 = vadd.f32 %v2213, %v2154
        %v2215 = vsel %vm1573, %v2214, -inf
        %2216 = vmax.xlane.f32.xlu0 %v2215
        %v2217 = vpop.xlane.xlu0 %2216
        %v2218 = vsub.f32 %v2214, %v2217
        %v2219 = vmul.f32 %v2218, 1.442695
        %v2220 = vpow.pop %v2219
        %v2221 = vsel %vm1573, %v2220, 0.0
        %2222 = vadd.xlane.f32.xlu0 %v2221
        %v2223 = vpop.xlane.xlu0 %2222
        %v2224 = vrcp.pop %v2223
        %v2225 = vmul.f32 %v2220, %v2224
        %v2226 = vpack.c.bf16 %v2225, %v2225
        %2228 = vrot.lane.b32.xlu0 %v2132, 96
        %v2229 = vpop.permute.xlu0 %2228
        %v2231 = vsel %vm1573, %v2226, 0
        %v2234 = vsel %vm1589, %v2229, 0
        %2236 = vmatpush.bf16.msra.mxu0 0
        %2237 = vmatpush.bf16.msra.mxu0 0
        %2238 = vmatpush.bf16.msra.mxu0 0
        %2239 = vmatpush.bf16.msra.mxu0 0
        %2240 = vmatpush.bf16.msra.mxu0 0
        %2241 = vmatpush.bf16.msra.mxu0 0
        %2242 = vmatpush.bf16.msra.mxu0 0
        %2243 = vmatpush.bf16.msra.mxu0 %v2234
        %2244 = vmatmul.bf16.gmra.mxu0 %v2231
        %v2245 = vpop.f32.mrf.mxu0
        %v2246 = vadd.f32 0.0, %v2245
        %v2247 = vpop.f32.mrf.mxu0
        %2248 = vdwg.mxu0
        %2249 = vrot.lane.b32.xlu0 %v2130, 64
        %v2250 = vpop.permute.xlu0 %2249
        %2251 = vrot.lane.b32.xlu0 %v2131, 64
        %v2252 = vpop.permute.xlu0 %2251
        %v2254 = vsel %vm1551, %v2250, 0
        %v2257 = vsel %vm1551, %v2252, 0
        %2259 = vmatpush.bf16.xpose.msra.mxu0 0
        %2260 = vmatpush.bf16.xpose.msra.mxu0 0
        %2261 = vmatpush.bf16.xpose.msra.mxu0 0
        %2262 = vmatpush.bf16.xpose.msra.mxu0 0
        %2263 = vmatpush.bf16.xpose.msra.mxu0 0
        %2264 = vmatpush.bf16.xpose.msra.mxu0 0
        %2265 = vmatpush.bf16.xpose.msra.mxu0 0
        %2266 = vmatpush.bf16.xpose.msra.mxu0 %v2257
        %2267 = vmatmul.bf16.gmra.mxu0 %v2254
        %v2268 = vpop.f32.mrf.mxu0
        %v2269 = vadd.f32 0.0, %v2268
        %v2270 = vpop.f32.mrf.mxu0
        %2271 = vdwg.mxu0
        %v2272 = vmul.f32 %v2269, 0.35355338
        %v2273 = vadd.f32 %v2272, %v2154
        %v2274 = vsel %vm1573, %v2273, -inf
        %2275 = vmax.xlane.f32.xlu0 %v2274
        %v2276 = vpop.xlane.xlu0 %2275
        %v2277 = vsub.f32 %v2273, %v2276
        %v2278 = vmul.f32 %v2277, 1.442695
        %v2279 = vpow.pop %v2278
        %v2280 = vsel %vm1573, %v2279, 0.0
        %2281 = vadd.xlane.f32.xlu0 %v2280
        %v2282 = vpop.xlane.xlu0 %2281
        %v2283 = vrcp.pop %v2282
        %v2284 = vmul.f32 %v2279, %v2283
        %v2285 = vpack.c.bf16 %v2284, %v2284
        %2286 = vrot.lane.b32.xlu0 %v2132, 64
        %v2287 = vpop.permute.xlu0 %2286
        %v2289 = vsel %vm1573, %v2285, 0
        %v2292 = vsel %vm1589, %v2287, 0
        %2294 = vmatpush.bf16.msra.mxu0 0
        %2295 = vmatpush.bf16.msra.mxu0 0
        %2296 = vmatpush.bf16.msra.mxu0 0
        %2297 = vmatpush.bf16.msra.mxu0 0
        %2298 = vmatpush.bf16.msra.mxu0 0
        %2299 = vmatpush.bf16.msra.mxu0 0
        %2300 = vmatpush.bf16.msra.mxu0 0
        %2301 = vmatpush.bf16.msra.mxu0 %v2292
        %2302 = vmatmul.bf16.gmra.mxu0 %v2289
        %v2303 = vpop.f32.mrf.mxu0
        %v2304 = vadd.f32 0.0, %v2303
        %v2305 = vpop.f32.mrf.mxu0
        %2306 = vdwg.mxu0
        %2307 = vrot.lane.b32.xlu0 %v2130, 32
        %v2308 = vpop.permute.xlu0 %2307
        %2309 = vrot.lane.b32.xlu0 %v2131, 32
        %v2310 = vpop.permute.xlu0 %2309
        %v2312 = vsel %vm1551, %v2308, 0
        %v2315 = vsel %vm1551, %v2310, 0
        %2317 = vmatpush.bf16.xpose.msra.mxu0 0
        %2318 = vmatpush.bf16.xpose.msra.mxu0 0
        %2319 = vmatpush.bf16.xpose.msra.mxu0 0
        %2320 = vmatpush.bf16.xpose.msra.mxu0 0
        %2321 = vmatpush.bf16.xpose.msra.mxu0 0
        %2322 = vmatpush.bf16.xpose.msra.mxu0 0
        %2323 = vmatpush.bf16.xpose.msra.mxu0 0
        %2324 = vmatpush.bf16.xpose.msra.mxu0 %v2315
        %2325 = vmatmul.bf16.gmra.mxu0 %v2312
        %v2326 = vpop.f32.mrf.mxu0
        %v2327 = vadd.f32 0.0, %v2326
        %v2328 = vpop.f32.mrf.mxu0
        %2329 = vdwg.mxu0
        %v2330 = vmul.f32 %v2327, 0.35355338
        %v2331 = vadd.f32 %v2330, %v2154
        %v2332 = vsel %vm1573, %v2331, -inf
        %2333 = vmax.xlane.f32.xlu0 %v2332
        %v2334 = vpop.xlane.xlu0 %2333
        %v2335 = vsub.f32 %v2331, %v2334
        %v2336 = vmul.f32 %v2335, 1.442695
        %v2337 = vpow.pop %v2336
        %v2338 = vsel %vm1573, %v2337, 0.0
        %2339 = vadd.xlane.f32.xlu0 %v2338
        %v2340 = vpop.xlane.xlu0 %2339
        %v2341 = vrcp.pop %v2340
        %v2342 = vmul.f32 %v2337, %v2341
        %v2343 = vpack.c.bf16 %v2342, %v2342
        %2344 = vrot.lane.b32.xlu0 %v2132, 32
        %v2345 = vpop.permute.xlu0 %2344
        %v2347 = vsel %vm1573, %v2343, 0
        %v2350 = vsel %vm1589, %v2345, 0
        %2352 = vmatpush.bf16.msra.mxu0 0
        %2353 = vmatpush.bf16.msra.mxu0 0
        %2354 = vmatpush.bf16.msra.mxu0 0
        %2355 = vmatpush.bf16.msra.mxu0 0
        %2356 = vmatpush.bf16.msra.mxu0 0
        %2357 = vmatpush.bf16.msra.mxu0 0
        %2358 = vmatpush.bf16.msra.mxu0 0
        %2359 = vmatpush.bf16.msra.mxu0 %v2350
        %2360 = vmatmul.bf16.gmra.mxu0 %v2347
        %v2361 = vpop.f32.mrf.mxu0
        %v2362 = vadd.f32 0.0, %v2361
        %v2363 = vpop.f32.mrf.mxu0
        %2364 = vdwg.mxu0
        %2366 = vrot.lane.b32.xlu0 %v2246, 32
        %v2367 = vpop.permute.xlu0 %2366
        %2370 = vrot.lane.b32.xlu0 %v2304, 64
        %v2371 = vpop.permute.xlu0 %2370
        %2374 = vrot.lane.b32.xlu0 %v2362, 96
        %v2375 = vpop.permute.xlu0 %2374
        %v2377 = vsel %vm1551, %v2185, %v2367
        %v2378 = vsel %vm1796, %v2377, %v2371
        %v2379 = vsel %vm1798, %v2378, %v2375
        %v2380 = vpack.c.bf16 %v2379, %v2379
        %v2381 = vld [vmem:[%s1085] sm:$0xf]
        %v2382 = vld [vmem:[%s1085 + $0x4] sm:$0xf]
        %v2383 = vld [vmem:[%s1085 + $0x8] sm:$0xf]
        %v2384 = vld [vmem:[%s1085 + $0xc] sm:$0xf]
        %v2385 = vld [vmem:[%s1085 + $0x10] sm:$0xf]
        %v2386 = vld [vmem:[%s1085 + $0x14] sm:$0xf]
        %v2387 = vld [vmem:[%s1085 + $0x18] sm:$0xf]
        %v2388 = vld [vmem:[%s1085 + $0x1c] sm:$0xf]
        %v2389 = vld [vmem:[%s1085 + $0x20] sm:$0xf]
        %v2390 = vld [vmem:[%s1085 + $0x24] sm:$0xf]
        %v2391 = vld [vmem:[%s1085 + $0x28] sm:$0xf]
        %v2392 = vld [vmem:[%s1085 + $0x2c] sm:$0xf]
        %v2393 = vld [vmem:[%s1085 + $0x30] sm:$0xf]
        %v2394 = vld [vmem:[%s1085 + $0x34] sm:$0xf]
        %v2395 = vld [vmem:[%s1085 + $0x38] sm:$0xf]
        %v2396 = vld [vmem:[%s1085 + $0x3c] sm:$0xf]
        %v2397 = vld [vmem:[%s1302] sm:$0x1]
        %v2399 = vperm.slane %v2397, 0
        %v2417 = vunpack.c.l.b16 %v2381
        %v2418 = vunpack.c.l.b16 %v2382
        %v2419 = vunpack.c.l.b16 %v2383
        %v2420 = vunpack.c.l.b16 %v2384
        %v2421 = vunpack.c.l.b16 %v2385
        %v2422 = vunpack.c.l.b16 %v2386
        %v2423 = vunpack.c.l.b16 %v2387
        %v2424 = vunpack.c.l.b16 %v2388
        %v2425 = vunpack.c.l.b16 %v2389
        %v2426 = vunpack.c.l.b16 %v2390
        %v2427 = vunpack.c.l.b16 %v2391
        %v2428 = vunpack.c.l.b16 %v2392
        %v2429 = vunpack.c.l.b16 %v2393
        %v2430 = vunpack.c.l.b16 %v2394
        %v2431 = vunpack.c.l.b16 %v2395
        %v2432 = vunpack.c.l.b16 %v2396
        %v2433 = vpack.c.b16 %v2418, %v2417
        %v2434 = vpack.c.b16 %v2420, %v2419
        %v2435 = vpack.c.b16 %v2422, %v2421
        %v2436 = vpack.c.b16 %v2424, %v2423
        %v2437 = vpack.c.b16 %v2426, %v2425
        %v2438 = vpack.c.b16 %v2428, %v2427
        %v2439 = vpack.c.b16 %v2430, %v2429
        %v2440 = vpack.c.b16 %v2432, %v2431
        %2449 = vmatpush.bf16.msra.mxu0 %v2440
        %2450 = vmatpush.bf16.msra.mxu0 %v2439
        %2451 = vmatpush.bf16.msra.mxu0 %v2438
        %2452 = vmatpush.bf16.msra.mxu0 %v2437
        %2453 = vmatpush.bf16.msra.mxu0 %v2436
        %2454 = vmatpush.bf16.msra.mxu0 %v2435
        %2455 = vmatpush.bf16.msra.mxu0 %v2434
        %2456 = vmatpush.bf16.msra.mxu0 %v2433
        %2457 = vmatmul.bf16.gmra.mxu0 %v2380
        %v2458 = vpop.f32.mrf.mxu0
        %v2459 = vadd.f32 %v2399, %v2458
        %v2460 = vpop.f32.mrf.mxu0
        %2461 = vdwg.mxu0
        %v2462 = vadd.f32 %v1916, %v2459
        %v2463 = vld [vmem:[%s1305] sm:$0x1]
        %v2464 = vld [vmem:[%s1308] sm:$0x1]
        %2465 = vadd.xlane.f32.xlu0 %v2462
        %v2466 = vpop.xlane.xlu0 %2465
        %v2467 = vmul.f32 %v2466, 0.03125
        %v2468 = vsub.f32 %v2462, %v2467
        %v2469 = vsel %vm1887, %v2468, 0.0
        %v2470 = vmul.f32 %v2469, %v2469
        %2471 = vadd.xlane.f32.xlu0 %v2470
        %v2472 = vpop.xlane.xlu0 %2471
        %v2473 = vmul.f32 %v2472, 0.03125
        %v2474 = vadd.f32 %v2473, 1e-05
        %v2475 = vrsqrt.pop %v2474
        %v2476 = vmul.f32 %v2475, %v2474
        %v2477 = vmul.f32 %v2476, %v2475
        %v2478 = vmul.f32 0.5, %v2477
        %v2479 = vsub.f32 1.5, %v2478
        %v2480 = vmul.f32 %v2475, %v2479
        %vm2481 = vweird.f32 %v2474
        %vm2482 = vweird.f32 %v2475
        %vm2483 = vmor %vm2481, %vm2482
        %v2484 = vsel %vm2483, %v2475, %v2480
        %v2485 = vmul.f32 %v2469, %v2484
        %v2487 = vperm.slane %v2463, 0
        %v2489 = vmul.f32 %v2485, %v2487
        %v2491 = vperm.slane %v2464, 0
        %v2493 = vadd.f32 %v2489, %v2491
        %v2494 = vpack.c.bf16 %v2493, %v2493
        %v2495 = vld [vmem:[%s1095] sm:$0xf]
        %v2496 = vld [vmem:[%s1095 + $0x4] sm:$0xf]
        %v2497 = vld [vmem:[%s1095 + $0x8] sm:$0xf]
        %v2498 = vld [vmem:[%s1095 + $0xc] sm:$0xf]
        %v2499 = vld [vmem:[%s1095 + $0x10] sm:$0xf]
        %v2500 = vld [vmem:[%s1095 + $0x14] sm:$0xf]
        %v2501 = vld [vmem:[%s1095 + $0x18] sm:$0xf]
        %v2502 = vld [vmem:[%s1095 + $0x1c] sm:$0xf]
        %v2503 = vld [vmem:[%s1095 + $0x20] sm:$0xf]
        %v2504 = vld [vmem:[%s1095 + $0x24] sm:$0xf]
        %v2505 = vld [vmem:[%s1095 + $0x28] sm:$0xf]
        %v2506 = vld [vmem:[%s1095 + $0x2c] sm:$0xf]
        %v2507 = vld [vmem:[%s1095 + $0x30] sm:$0xf]
        %v2508 = vld [vmem:[%s1095 + $0x34] sm:$0xf]
        %v2509 = vld [vmem:[%s1095 + $0x38] sm:$0xf]
        %v2510 = vld [vmem:[%s1095 + $0x3c] sm:$0xf]
        %v2511 = vld [vmem:[%s1311] sm:$0x1]
        %v2513 = vperm.slane %v2511, 0
        %v2531 = vunpack.c.l.b16 %v2495
        %v2532 = vunpack.c.l.b16 %v2496
        %v2533 = vunpack.c.l.b16 %v2497
        %v2534 = vunpack.c.l.b16 %v2498
        %v2535 = vunpack.c.l.b16 %v2499
        %v2536 = vunpack.c.l.b16 %v2500
        %v2537 = vunpack.c.l.b16 %v2501
        %v2538 = vunpack.c.l.b16 %v2502
        %v2539 = vunpack.c.l.b16 %v2503
        %v2540 = vunpack.c.l.b16 %v2504
        %v2541 = vunpack.c.l.b16 %v2505
        %v2542 = vunpack.c.l.b16 %v2506
        %v2543 = vunpack.c.l.b16 %v2507
        %v2544 = vunpack.c.l.b16 %v2508
        %v2545 = vunpack.c.l.b16 %v2509
        %v2546 = vunpack.c.l.b16 %v2510
        %v2547 = vpack.c.b16 %v2532, %v2531
        %v2548 = vpack.c.b16 %v2534, %v2533
        %v2549 = vpack.c.b16 %v2536, %v2535
        %v2550 = vpack.c.b16 %v2538, %v2537
        %v2551 = vpack.c.b16 %v2540, %v2539
        %v2552 = vpack.c.b16 %v2542, %v2541
        %v2553 = vpack.c.b16 %v2544, %v2543
        %v2554 = vpack.c.b16 %v2546, %v2545
        %2563 = vmatpush.bf16.msra.mxu0 %v2554
        %2564 = vmatpush.bf16.msra.mxu0 %v2553
        %2565 = vmatpush.bf16.msra.mxu0 %v2552
        %2566 = vmatpush.bf16.msra.mxu0 %v2551
        %2567 = vmatpush.bf16.msra.mxu0 %v2550
        %2568 = vmatpush.bf16.msra.mxu0 %v2549
        %2569 = vmatpush.bf16.msra.mxu0 %v2548
        %2570 = vmatpush.bf16.msra.mxu0 %v2547
        %2571 = vmatmul.bf16.gmra.mxu0 %v2494
        %v2572 = vpop.f32.mrf.mxu0
        %v2573 = vadd.f32 %v2513, %v2572
        %v2574 = vpop.f32.mrf.mxu0
        %2575 = vdwg.mxu0
        %v2576 = vmax.f32 %v2573, 0.0
        %v2577 = vpack.c.bf16 %v2576, %v2576
        %v2578 = vld [vmem:[%s1105] sm:$0xf]
        %v2579 = vld [vmem:[%s1105 + $0x4] sm:$0xf]
        %v2580 = vld [vmem:[%s1105 + $0x8] sm:$0xf]
        %v2581 = vld [vmem:[%s1105 + $0xc] sm:$0xf]
        %v2582 = vld [vmem:[%s1105 + $0x10] sm:$0xf]
        %v2583 = vld [vmem:[%s1105 + $0x14] sm:$0xf]
        %v2584 = vld [vmem:[%s1105 + $0x18] sm:$0xf]
        %v2585 = vld [vmem:[%s1105 + $0x1c] sm:$0xf]
        %v2586 = vld [vmem:[%s1105 + $0x20] sm:$0xf]
        %v2587 = vld [vmem:[%s1105 + $0x24] sm:$0xf]
        %v2588 = vld [vmem:[%s1105 + $0x28] sm:$0xf]
        %v2589 = vld [vmem:[%s1105 + $0x2c] sm:$0xf]
        %v2590 = vld [vmem:[%s1105 + $0x30] sm:$0xf]
        %v2591 = vld [vmem:[%s1105 + $0x34] sm:$0xf]
        %v2592 = vld [vmem:[%s1105 + $0x38] sm:$0xf]
        %v2593 = vld [vmem:[%s1105 + $0x3c] sm:$0xf]
        %v2594 = vld [vmem:[%s1314] sm:$0x1]
        %v2596 = vperm.slane %v2594, 0
        %v2614 = vunpack.c.l.b16 %v2578
        %v2615 = vunpack.c.l.b16 %v2579
        %v2616 = vunpack.c.l.b16 %v2580
        %v2617 = vunpack.c.l.b16 %v2581
        %v2618 = vunpack.c.l.b16 %v2582
        %v2619 = vunpack.c.l.b16 %v2583
        %v2620 = vunpack.c.l.b16 %v2584
        %v2621 = vunpack.c.l.b16 %v2585
        %v2622 = vunpack.c.l.b16 %v2586
        %v2623 = vunpack.c.l.b16 %v2587
        %v2624 = vunpack.c.l.b16 %v2588
        %v2625 = vunpack.c.l.b16 %v2589
        %v2626 = vunpack.c.l.b16 %v2590
        %v2627 = vunpack.c.l.b16 %v2591
        %v2628 = vunpack.c.l.b16 %v2592
        %v2629 = vunpack.c.l.b16 %v2593
        %v2630 = vpack.c.b16 %v2615, %v2614
        %v2631 = vpack.c.b16 %v2617, %v2616
        %v2632 = vpack.c.b16 %v2619, %v2618
        %v2633 = vpack.c.b16 %v2621, %v2620
        %v2634 = vpack.c.b16 %v2623, %v2622
        %v2635 = vpack.c.b16 %v2625, %v2624
        %v2636 = vpack.c.b16 %v2627, %v2626
        %v2637 = vpack.c.b16 %v2629, %v2628
        %2646 = vmatpush.bf16.msra.mxu0 %v2637
        %2647 = vmatpush.bf16.msra.mxu0 %v2636
        %2648 = vmatpush.bf16.msra.mxu0 %v2635
        %2649 = vmatpush.bf16.msra.mxu0 %v2634
        %2650 = vmatpush.bf16.msra.mxu0 %v2633
        %2651 = vmatpush.bf16.msra.mxu0 %v2632
        %2652 = vmatpush.bf16.msra.mxu0 %v2631
        %2653 = vmatpush.bf16.msra.mxu0 %v2630
        %2654 = vmatmul.bf16.gmra.mxu0 %v2577
        %v2655 = vpop.f32.mrf.mxu0
        %v2656 = vadd.f32 %v2596, %v2655
        %v2657 = vpop.f32.mrf.mxu0
        %2658 = vdwg.mxu0
        %v2659 = vadd.f32 %v2493, %v2656
        %v2660 = vld [vmem:[%s1317] sm:$0x1]
        %v2661 = vld [vmem:[%s1320] sm:$0x1]
        %2662 = vadd.xlane.f32.xlu0 %v2659
        %v2663 = vpop.xlane.xlu0 %2662
        %v2664 = vmul.f32 %v2663, 0.03125
        %v2665 = vsub.f32 %v2659, %v2664
        %v2666 = vsel %vm1887, %v2665, 0.0
        %v2667 = vmul.f32 %v2666, %v2666
        %2668 = vadd.xlane.f32.xlu0 %v2667
        %v2669 = vpop.xlane.xlu0 %2668
        %v2670 = vmul.f32 %v2669, 0.03125
        %v2671 = vadd.f32 %v2670, 1e-05
        %v2672 = vrsqrt.pop %v2671
        %v2673 = vmul.f32 %v2672, %v2671
        %v2674 = vmul.f32 %v2673, %v2672
        %v2675 = vmul.f32 0.5, %v2674
        %v2676 = vsub.f32 1.5, %v2675
        %v2677 = vmul.f32 %v2672, %v2676
        %vm2678 = vweird.f32 %v2671
        %vm2679 = vweird.f32 %v2672
        %vm2680 = vmor %vm2678, %vm2679
        %v2681 = vsel %vm2680, %v2672, %v2677
        %v2682 = vmul.f32 %v2666, %v2681
        %v2684 = vperm.slane %v2660, 0
        %v2686 = vmul.f32 %v2682, %v2684
        %v2688 = vperm.slane %v2661, 0
        %v2690 = vadd.f32 %v2686, %v2688
        %2691 = vst [vmem:[%s1324] sm:$0xff] %v2690
        %p2692 = scmp.eq.s32.totalorder %s55, 1
        // Predicated region
        $region157: #{seq2seq_transformer_forward.4} parent=127 // pred_check
          %p2693 = pneg %p2692
        $region158: #{seq2seq_transformer_forward.4} parent=127 // pred_check_branch
          %2695 = sbr.rel (%p2693) target = $region160
        $region159: #{seq2seq_transformer_forward.4} parent=127 // pred_region
          %v2696 = vld [vmem:[%s25] sm:$0x1]
          %v2697 = vld [vmem:[%s26] sm:$0x1]
          %2698 = vadd.xlane.f32.xlu0 %v2690
          %v2699 = vpop.xlane.xlu0 %2698
          %v2700 = vmul.f32 %v2699, 0.03125
          %v2701 = vsub.f32 %v2690, %v2700
          %v2702 = vsel %vm1887, %v2701, 0.0
          %v2703 = vmul.f32 %v2702, %v2702
          %2704 = vadd.xlane.f32.xlu0 %v2703
          %v2705 = vpop.xlane.xlu0 %2704
          %v2706 = vmul.f32 %v2705, 0.03125
          %v2707 = vadd.f32 %v2706, 1e-05
          %v2708 = vrsqrt.pop %v2707
          %v2709 = vmul.f32 %v2708, %v2707
          %v2710 = vmul.f32 %v2709, %v2708
          %v2711 = vmul.f32 0.5, %v2710
          %v2712 = vsub.f32 1.5, %v2711
          %v2713 = vmul.f32 %v2708, %v2712
          %vm2714 = vweird.f32 %v2707
          %vm2715 = vweird.f32 %v2708
          %vm2716 = vmor %vm2714, %vm2715
          %v2717 = vsel %vm2716, %v2708, %v2713
          %v2718 = vmul.f32 %v2702, %v2717
          %v2720 = vperm.slane %v2696, 0
          %v2722 = vmul.f32 %v2718, %v2720
          %v2724 = vperm.slane %v2697, 0
          %v2726 = vadd.f32 %v2722, %v2724
          %2727 = vst [vmem:[%s1324] sm:$0xff] %v2726
        $region160: #{seq2seq_transformer_forward.4} parent=127 // pred_fallthru
          _
        %p2728 = scmp.lt.s32.totalorder %s54, 1
        %s2729 = scalar_select %p2728, %s54, 1
        %s2730 = smul.addr %s2729, 8
        %s2731 = scalar_lea.vmem %s27, %s2730
        // Predicated region
        $region161: #{seq2seq_transformer_forward.4} parent=127 // pred_check
          %p2732 = pneg %p767
        $region162: #{seq2seq_transformer_forward.4} parent=127 // pred_check_branch
          %2734 = sbr.rel (%p2732) target = $region164
        $region163: #{seq2seq_transformer_forward.4} parent=127 // pred_region
          _
        $region164: #{seq2seq_transformer_forward.4} parent=127 // pred_fallthru
          _
      $region128: #{seq2seq_transformer_forward.4} parent=5 // pred_fallthru
        _
      %p2735 = scmp.le.s32.totalorder 2, %s45
      // Predicated region
      $region165: #{seq2seq_transformer_forward.4} parent=5 // pred_check
        %p2736 = pneg %p2735
      $region166: #{seq2seq_transformer_forward.4} parent=5 // pred_check_branch
        %2738 = sbr.rel (%p2736) target = $region168
      $region167: #{seq2seq_transformer_forward.4} parent=5 // pred_region
        %s2739 = ssub.s32 %s45, 2
        // Predicated region
        $region169: #{seq2seq_transformer_forward.4} parent=167 // pred_check
          %p2740 = pneg %p773
        $region170: #{seq2seq_transformer_forward.4} parent=167 // pred_check_branch
          %2742 = sbr.rel (%p2740) target = $region172
        $region171: #{seq2seq_transformer_forward.4} parent=167 // pred_region
          %p2743 = scmp.lt.s32.totalorder %s56, 1
          %s2744 = scalar_select %p2743, %s56, 1
          %s2745 = smul.addr %s2744, 8
          %s2746 = scalar_lea.vmem %s27, %s2745
        $region172: #{seq2seq_transformer_forward.4} parent=167 // pred_fallthru
          _
      $region168: #{seq2seq_transformer_forward.4} parent=5 // pred_fallthru
        _
    $region6: #{seq2seq_transformer_forward.4} parent=1 // loop_footer
      %s49 = sadd.s32 1, %s45
    $region7: #{seq2seq_transformer_forward.4} parent=1 // loop_footer_branch
      %44 = sbr.rel target = $region3
    $region8: #{seq2seq_transformer_forward.4} parent=1 // loop_exit
      _
    %2747 = vsyncpa [#allocation3], 1
    %s2748 = scalar_lea.sflag [#allocation3], 1
    %2749 = vsyncpa %s2748, 1
    %2750 = vsyncpa [#allocation5], 1
    %s2751 = scalar_lea.sflag [#allocation5], 1
    %2752 = vsyncpa %s2751, 1
    %2753 = vsyncpa [#allocation8], 1
    %s2754 = scalar_lea.sflag [#allocation8], 1
    %2755 = vsyncpa %s2754, 1
    %2756 = vsyncpa [#allocation11], 1
    %s2757 = scalar_lea.sflag [#allocation11], 1
    %2758 = vsyncpa %s2757, 1

</llo_original>
